<compile_context>
chip_gen: v6e
topology: v6e:2x2x1
jax: 0.10.0
libtpu: 0.0.40
codegen_flags: <defaults>
</compile_context>

<pallas_src>
import functools

import jax
import jax.numpy as jnp
from jax.experimental import pallas as pl
from jax.experimental.pallas import tpu as pltpu

_LANE = 128


def _flat_dims(H, W):
    """Guard/pad size and flat length of the padded (C, flat) activation buffer."""
    guard = ((W + 1 + _LANE - 1) // _LANE) * _LANE   # >= W+1, lane aligned
    return guard, H * W + 2 * guard


def _rdb5c_kernel(x_ref, w1_ref, b1_ref, w2_ref, b2_ref, w3_ref, b3_ref,
                  w4_ref, b4_ref, w5_ref, b5_ref, w1x1_ref,
                  o_ref, feat, *, nf, gc, H, W):
    HW = H * W
    INT, _ = _flat_dims(H, W)          # interior starts at a lane-aligned offset

    # Column masks canceling the left/right wrap-around of the flattened,
    # row-padded-only layout.  Computed once, applied on the cheap (Cout) side.
    col = jax.lax.broadcasted_iota(jnp.int32, (1, HW), 1) % W
    mask_l = (col != 0).astype(jnp.float32)        # kw = 0 taps: kill w == 0
    mask_r = (col != W - 1).astype(jnp.float32)    # kw = 2 taps: kill w == W-1

    # Stage the input into the shared padded feature buffer (bf16).
    feat[...] = jnp.zeros_like(feat)
    x_f32 = x_ref[0]                               # (nf, HW) f32
    feat[0:nf, INT:INT + HW] = x_f32.astype(jnp.bfloat16)

    def conv3x3(cin, w_ref, b_ref):
        """3x3 'same' conv over the first `cin` channels of `feat`.

        w_ref: (9, cout, cin) bf16 tap-major, b_ref: (cout, 1) f32.
        Returns (cout, HW) f32 pre-activation (bias added).
        """
        accs = [None, None, None]                  # grouped by kw
        for kh in range(3):
            for kw in range(3):
                start = INT + (kh - 1) * W + (kw - 1)
                s = feat[0:cin, start:start + HW]          # (cin, HW) bf16
                c = jnp.dot(w_ref[kh * 3 + kw], s,
                            preferred_element_type=jnp.float32)
                accs[kw] = c if accs[kw] is None else accs[kw] + c
        return (accs[1] + accs[0] * mask_l + accs[2] * mask_r) + b_ref[...]

    def lrelu(a):
        return jnp.maximum(a, 0.2 * a)

    def store(c0, cnum, val):                      # write a segment's interior
        feat[c0:c0 + cnum, INT:INT + HW] = val.astype(jnp.bfloat16)

    def interior(c0, cnum):                        # read a segment's interior
        return feat[c0:c0 + cnum, INT:INT + HW].astype(jnp.float32)

    # x1 = lrelu(conv1(x))
    store(nf, gc, lrelu(conv3x3(nf, w1_ref, b1_ref)))

    # x2 = lrelu(conv2(cat(x, x1))) + conv1x1(x)      (conv1x1 fused in)
    y1x1 = jnp.dot(w1x1_ref[...], feat[0:nf, INT:INT + HW],
                   preferred_element_type=jnp.float32)
    store(nf + gc, gc, lrelu(conv3x3(nf + gc, w2_ref, b2_ref)) + y1x1)

    # x3 = lrelu(conv3(cat(x, x1, x2)))
    store(nf + 2 * gc, gc, lrelu(conv3x3(nf + 2 * gc, w3_ref, b3_ref)))

    # x4 = lrelu(conv4(cat(x, x1, x2, x3))) + x2
    store(nf + 3 * gc, gc,
          lrelu(conv3x3(nf + 3 * gc, w4_ref, b4_ref)) + interior(nf + gc, gc))

    # out = conv5(cat(x, x1, x2, x3, x4)) * 0.2 + x    (GaussianNoise = id, eval)
    x5 = conv3x3(nf + 4 * gc, w5_ref, b5_ref)
    o_ref[0] = (x5 * jnp.float32(0.2) + x_f32).astype(o_ref.dtype)


# ------------------------------- JAX wrapper --------------------------------


def _prep_conv_w(w_oihw):
    """OIHW (cout, cin, 3, 3) -> tap-major (9, cout, cin) bf16."""
    cout, cin = w_oihw.shape[0], w_oihw.shape[1]
    return (jnp.transpose(w_oihw, (2, 3, 0, 1))
            .reshape(9, cout, cin).astype(jnp.bfloat16))


def _full_spec(arr):
    nd = arr.ndim
    return pl.BlockSpec(arr.shape, lambda n: (0,) * nd)


def residual_dense_block_5c(x, params):
    """ResidualDenseBlock_5C forward (inference).  x: (N, nf, H, W) f32 NCHW."""
    N, nf, H, W = x.shape
    gc = params["w1"].shape[0]
    assert nf % 16 == 0 and gc % 16 == 0, "nf/gc must be multiples of 16"
    HW = H * W
    _, L = _flat_dims(H, W)

    ws = [_prep_conv_w(params[f"w{i}"]) for i in range(1, 6)]
    bs = [params[f"b{i}"].astype(jnp.float32).reshape(-1, 1) for i in range(1, 6)]
    w1x1 = params["w1x1"][:, :, 0, 0].astype(jnp.bfloat16)      # (gc, nf)

    x2d = x.reshape(N, nf, HW)                 # NCHW with flattened spatial (free)

    in_specs = [pl.BlockSpec((1, nf, HW), lambda n: (n, 0, 0))]
    flat_args = [x2d]
    for w, b in zip(ws, bs):
        in_specs += [_full_spec(w), _full_spec(b)]
        flat_args += [w, b]
    in_specs.append(_full_spec(w1x1))
    flat_args.append(w1x1)

    kern = functools.partial(_rdb5c_kernel, nf=nf, gc=gc, H=H, W=W)

    out = pl.pallas_call(
        kern,
        out_shape=jax.ShapeDtypeStruct((N, nf, HW), jnp.float32),
        grid_spec=pltpu.PrefetchScalarGridSpec(
            num_scalar_prefetch=0,
            grid=(N,),
            in_specs=in_specs,
            out_specs=pl.BlockSpec((1, nf, HW), lambda n: (n, 0, 0)),
            scratch_shapes=[pltpu.VMEM((nf + 4 * gc, L), jnp.bfloat16)],
        ),
        compiler_params=pltpu.CompilerParams(
            dimension_semantics=("parallel",),
            vmem_limit_bytes=64 * 1024 * 1024,
        ),
    )(*flat_args)

    return out.reshape(N, nf, H, W)


# ------------------------- params + f32 reference ---------------------------


def init_rdb_params(key, nf=64, gc=32):
    """Synthetic weights, PyTorch layouts: conv-k OIHW, conv1x1 (gc, nf, 1, 1)."""
    keys = jax.random.split(key, 6)
    params = {}
    in_chs = [nf, nf + gc, nf + 2 * gc, nf + 3 * gc, nf + 4 * gc]
    out_chs = [gc, gc, gc, gc, nf]
    for i in range(5):
        cin, cout = in_chs[i], out_chs[i]
        std = 0.1 * (2.0 / (cin * 9)) ** 0.5    # kaiming * 0.1 (initialize_weights)
        params[f"w{i+1}"] = std * jax.random.normal(
            keys[i], (cout, cin, 3, 3), jnp.float32)
        params[f"b{i+1}"] = jnp.zeros((cout,), jnp.float32)
    params["w1x1"] = ((2.0 / nf) ** 0.5 *
                      jax.random.normal(keys[5], (gc, nf, 1, 1), jnp.float32))
    return params


def _ref_forward(x, params):
    """Pure-JAX f32 reference of the PyTorch block (inference mode)."""
    dn = ("NCHW", "OIHW", "NCHW")

    def conv(x, w, b=None):
        y = jax.lax.conv_general_dilated(
            x, w, (1, 1), "SAME", dimension_numbers=dn,
            precision=jax.lax.Precision.HIGHEST)
        return y if b is None else y + b[None, :, None, None]

    lrelu = lambda a: jnp.where(a >= 0, a, 0.2 * a)
    x1 = lrelu(conv(x, params["w1"], params["b1"]))
    x2 = (lrelu(conv(jnp.concatenate([x, x1], 1), params["w2"], params["b2"]))
          + conv(x, params["w1x1"]))
    x3 = lrelu(conv(jnp.concatenate([x, x1, x2], 1), params["w3"], params["b3"]))
    x4 = (lrelu(conv(jnp.concatenate([x, x1, x2, x3], 1),
                     params["w4"], params["b4"])) + x2)
    x5 = conv(jnp.concatenate([x, x1, x2, x3, x4], 1), params["w5"], params["b5"])
    return x5 * 0.2 + x


if __name__ == "__main__":
    key = jax.random.PRNGKey(0)
    nf, gc = 32, 16
    N, H, W = 2, 16, 16

    kx, kp = jax.random.split(key)
    x = jax.random.normal(kx, (N, nf, H, W), jnp.float32)
    params = init_rdb_params(kp, nf=nf, gc=gc)

    fwd = jax.jit(residual_dense_block_5c)
    out = fwd(x, params)
    jax.block_until_ready(out)

    assert out.shape == (N, nf, H, W), out.shape
    assert bool(jnp.all(jnp.isfinite(out)))

    ref = _ref_forward(x, params)
    max_err = float(jnp.max(jnp.abs(out - ref)))
    assert max_err < 2e-2, f"max |err| vs f32 reference = {max_err}"

    print("KERNEL_OK")
</pallas_src>

<mosaic_0001>
module attributes {stable_mosaic.version = 11 : i64} {
  func.func @_rdb5c_kernel(%arg0: i32, %arg1: memref<1x32x256xf32, #tpu.memory_space<vmem>>, %arg2: memref<9x16x32xbf16, #tpu.memory_space<vmem>>, %arg3: memref<16x1xf32, #tpu.memory_space<vmem>>, %arg4: memref<9x16x48xbf16, #tpu.memory_space<vmem>>, %arg5: memref<16x1xf32, #tpu.memory_space<vmem>>, %arg6: memref<9x16x64xbf16, #tpu.memory_space<vmem>>, %arg7: memref<16x1xf32, #tpu.memory_space<vmem>>, %arg8: memref<9x16x80xbf16, #tpu.memory_space<vmem>>, %arg9: memref<16x1xf32, #tpu.memory_space<vmem>>, %arg10: memref<9x32x96xbf16, #tpu.memory_space<vmem>>, %arg11: memref<32x1xf32, #tpu.memory_space<vmem>>, %arg12: memref<16x32xbf16, #tpu.memory_space<vmem>>, %arg13: memref<1x32x256xf32, #tpu.memory_space<vmem>>, %arg14: memref<96x512xbf16, #tpu.memory_space<vmem>>) attributes {dimension_semantics = [#tpu.dimension_semantics<parallel>], iteration_bounds = array<i64: 2>, scalar_prefetch = 0 : i64, scratch_operands = 1 : i64, tpu.core_type = #tpu.core_type<tc>, window_params = [{transform_indices = @transform_0, window_bounds = array<i64: 1, 32, 256>}, {pipeline_mode = #tpu.pipeline_mode<synchronous>, transform_indices = @transform_1, window_bounds = array<i64: 9, 16, 32>}, {pipeline_mode = #tpu.pipeline_mode<synchronous>, transform_indices = @transform_2, window_bounds = array<i64: 16, 1>}, {pipeline_mode = #tpu.pipeline_mode<synchronous>, transform_indices = @transform_3, window_bounds = array<i64: 9, 16, 48>}, {pipeline_mode = #tpu.pipeline_mode<synchronous>, transform_indices = @transform_4, window_bounds = array<i64: 16, 1>}, {pipeline_mode = #tpu.pipeline_mode<synchronous>, transform_indices = @transform_5, window_bounds = array<i64: 9, 16, 64>}, {pipeline_mode = #tpu.pipeline_mode<synchronous>, transform_indices = @transform_6, window_bounds = array<i64: 16, 1>}, {pipeline_mode = #tpu.pipeline_mode<synchronous>, transform_indices = @transform_7, window_bounds = array<i64: 9, 16, 80>}, {pipeline_mode = #tpu.pipeline_mode<synchronous>, transform_indices = @transform_8, window_bounds = array<i64: 16, 1>}, {pipeline_mode = #tpu.pipeline_mode<synchronous>, transform_indices = @transform_9, window_bounds = array<i64: 9, 32, 96>}, {pipeline_mode = #tpu.pipeline_mode<synchronous>, transform_indices = @transform_10, window_bounds = array<i64: 32, 1>}, {pipeline_mode = #tpu.pipeline_mode<synchronous>, transform_indices = @transform_11, window_bounds = array<i64: 16, 32>}, {transform_indices = @transform_12, window_bounds = array<i64: 1, 32, 256>}]} {
    %0 = tpu.iota {dimensions = array<i32: 1>} : vector<1x256xi32>
    %c16_i32 = arith.constant 16 : i32
    %c0_i32 = arith.constant 0 : i32
    %1 = arith.cmpi eq, %c16_i32, %c0_i32 : i32
    %c1_i32 = arith.constant 1 : i32
    %2 = arith.select %1, %c1_i32, %c16_i32 : i32
    %3 = vector.broadcast %2 : i32 to vector<1x256xi32>
    %4 = arith.remsi %0, %3 : vector<1x256xi32>
    %c0_i32_0 = arith.constant 0 : i32
    %5 = vector.broadcast %c0_i32_0 : i32 to vector<1x256xi32>
    %6 = arith.cmpi ne, %4, %5 : vector<1x256xi32>
    %c0_i32_1 = arith.constant 0 : i32
    %7 = vector.broadcast %c0_i32_1 : i32 to vector<1x256xi32>
    %8 = arith.cmpi slt, %4, %7 : vector<1x256xi32>
    %c0_i32_2 = arith.constant 0 : i32
    %9 = arith.cmpi slt, %2, %c0_i32_2 : i32
    %10 = vector.broadcast %9 : i1 to vector<1x256xi1>
    %11 = vector.broadcast %10 : vector<1x256xi1> to vector<1x256xi1>
    %12 = arith.xori %8, %11 : vector<1x256xi1>
    %13 = arith.andi %12, %6 : vector<1x256xi1>
    %14 = vector.broadcast %2 : i32 to vector<1x256xi32>
    %15 = arith.addi %4, %14 : vector<1x256xi32>
    %16 = arith.select %13, %15, %4 : vector<1x256xi1>, vector<1x256xi32>
    %c0_i32_3 = arith.constant 0 : i32
    %17 = vector.broadcast %c0_i32_3 : i32 to vector<1x256xi32>
    %18 = arith.cmpi ne, %16, %17 : vector<1x256xi32>
    %19 = arith.extui %18 : vector<1x256xi1> to vector<1x256xi32>
    %20 = arith.sitofp %19 : vector<1x256xi32> to vector<1x256xf32>
    %c15_i32 = arith.constant 15 : i32
    %21 = vector.broadcast %c15_i32 : i32 to vector<1x256xi32>
    %22 = arith.cmpi ne, %16, %21 : vector<1x256xi32>
    %23 = arith.extui %22 : vector<1x256xi1> to vector<1x256xi32>
    %24 = arith.sitofp %23 : vector<1x256xi32> to vector<1x256xf32>
    %cst = arith.constant 0.000000e+00 : bf16
    %25 = vector.broadcast %cst : bf16 to vector<96x512xbf16>
    %c0 = arith.constant 0 : index
    %c0_4 = arith.constant 0 : index
    %26 = vector.load %arg14[%c0, %c0_4] : memref<96x512xbf16, #tpu.memory_space<vmem>>, vector<96x512xbf16>
    tpu.vector_store %arg14[%c0, %c0_4], %25 {strides = array<i32>} : memref<96x512xbf16, #tpu.memory_space<vmem>>, vector<96x512xbf16>,
    %c0_5 = arith.constant 0 : index
    %c0_6 = arith.constant 0 : index
    %c0_7 = arith.constant 0 : index
    %27 = vector.load %arg1[%c0_5, %c0_6, %c0_7] : memref<1x32x256xf32, #tpu.memory_space<vmem>>, vector<1x32x256xf32>
    %28 = vector.shape_cast %27 : vector<1x32x256xf32> to vector<32x256xf32>
    %29 = arith.truncf %28 : vector<32x256xf32> to vector<32x256xbf16>
    %c0_8 = arith.constant 0 : index
    %c128 = arith.constant 128 : index
    %30 = vector.load %arg14[%c0_8, %c128] : memref<96x512xbf16, #tpu.memory_space<vmem>>, vector<32x256xbf16>
    tpu.vector_store %arg14[%c0_8, %c128], %29 {strides = array<i32>} : memref<96x512xbf16, #tpu.memory_space<vmem>>, vector<32x256xbf16>,
    %c0_9 = arith.constant 0 : index
    %c111 = arith.constant 111 : index
    %31 = vector.load %arg14[%c0_9, %c111] : memref<96x512xbf16, #tpu.memory_space<vmem>>, vector<32x256xbf16>
    %c0_10 = arith.constant 0 : index
    %c0_11 = arith.constant 0 : index
    %c0_12 = arith.constant 0 : index
    %32 = vector.load %arg2[%c0_10, %c0_11, %c0_12] : memref<9x16x32xbf16, #tpu.memory_space<vmem>>, vector<1x16x32xbf16>
    %33 = vector.shape_cast %32 : vector<1x16x32xbf16> to vector<16x32xbf16>
    %cst_13 = arith.constant dense<0.000000e+00> : vector<16x256xf32>
    %34 = tpu.matmul %33, %31, %cst_13 {dimension_numbers = #tpu.dot_dimension_numbers<[1], [0], [0], [1], [0, 0, 1, 1], [], []>} : vector<16x32xbf16>, vector<32x256xbf16>, vector<16x256xf32> -> vector<16x256xf32>
    %c0_14 = arith.constant 0 : index
    %c112 = arith.constant 112 : index
    %35 = vector.load %arg14[%c0_14, %c112] : memref<96x512xbf16, #tpu.memory_space<vmem>>, vector<32x256xbf16>
    %c1 = arith.constant 1 : index
    %c0_15 = arith.constant 0 : index
    %c0_16 = arith.constant 0 : index
    %36 = vector.load %arg2[%c1, %c0_15, %c0_16] : memref<9x16x32xbf16, #tpu.memory_space<vmem>>, vector<1x16x32xbf16>
    %37 = vector.shape_cast %36 : vector<1x16x32xbf16> to vector<16x32xbf16>
    %cst_17 = arith.constant dense<0.000000e+00> : vector<16x256xf32>
    %38 = tpu.matmul %37, %35, %cst_17 {dimension_numbers = #tpu.dot_dimension_numbers<[1], [0], [0], [1], [0, 0, 1, 1], [], []>} : vector<16x32xbf16>, vector<32x256xbf16>, vector<16x256xf32> -> vector<16x256xf32>
    %c0_18 = arith.constant 0 : index
    %c113 = arith.constant 113 : index
    %39 = vector.load %arg14[%c0_18, %c113] : memref<96x512xbf16, #tpu.memory_space<vmem>>, vector<32x256xbf16>
    %c2 = arith.constant 2 : index
    %c0_19 = arith.constant 0 : index
    %c0_20 = arith.constant 0 : index
    %40 = vector.load %arg2[%c2, %c0_19, %c0_20] : memref<9x16x32xbf16, #tpu.memory_space<vmem>>, vector<1x16x32xbf16>
    %41 = vector.shape_cast %40 : vector<1x16x32xbf16> to vector<16x32xbf16>
    %cst_21 = arith.constant dense<0.000000e+00> : vector<16x256xf32>
    %42 = tpu.matmul %41, %39, %cst_21 {dimension_numbers = #tpu.dot_dimension_numbers<[1], [0], [0], [1], [0, 0, 1, 1], [], []>} : vector<16x32xbf16>, vector<32x256xbf16>, vector<16x256xf32> -> vector<16x256xf32>
    %c0_22 = arith.constant 0 : index
    %c127 = arith.constant 127 : index
    %43 = vector.load %arg14[%c0_22, %c127] : memref<96x512xbf16, #tpu.memory_space<vmem>>, vector<32x256xbf16>
    %c3 = arith.constant 3 : index
    %c0_23 = arith.constant 0 : index
    %c0_24 = arith.constant 0 : index
    %44 = vector.load %arg2[%c3, %c0_23, %c0_24] : memref<9x16x32xbf16, #tpu.memory_space<vmem>>, vector<1x16x32xbf16>
    %45 = vector.shape_cast %44 : vector<1x16x32xbf16> to vector<16x32xbf16>
    %cst_25 = arith.constant dense<0.000000e+00> : vector<16x256xf32>
    %46 = tpu.matmul %45, %43, %cst_25 {dimension_numbers = #tpu.dot_dimension_numbers<[1], [0], [0], [1], [0, 0, 1, 1], [], []>} : vector<16x32xbf16>, vector<32x256xbf16>, vector<16x256xf32> -> vector<16x256xf32>
    %47 = arith.addf %34, %46 : vector<16x256xf32>
    %c0_26 = arith.constant 0 : index
    %c128_27 = arith.constant 128 : index
    %48 = vector.load %arg14[%c0_26, %c128_27] : memref<96x512xbf16, #tpu.memory_space<vmem>>, vector<32x256xbf16>
    %c4 = arith.constant 4 : index
    %c0_28 = arith.constant 0 : index
    %c0_29 = arith.constant 0 : index
    %49 = vector.load %arg2[%c4, %c0_28, %c0_29] : memref<9x16x32xbf16, #tpu.memory_space<vmem>>, vector<1x16x32xbf16>
    %50 = vector.shape_cast %49 : vector<1x16x32xbf16> to vector<16x32xbf16>
    %cst_30 = arith.constant dense<0.000000e+00> : vector<16x256xf32>
    %51 = tpu.matmul %50, %48, %cst_30 {dimension_numbers = #tpu.dot_dimension_numbers<[1], [0], [0], [1], [0, 0, 1, 1], [], []>} : vector<16x32xbf16>, vector<32x256xbf16>, vector<16x256xf32> -> vector<16x256xf32>
    %52 = arith.addf %38, %51 : vector<16x256xf32>
    %c0_31 = arith.constant 0 : index
    %c129 = arith.constant 129 : index
    %53 = vector.load %arg14[%c0_31, %c129] : memref<96x512xbf16, #tpu.memory_space<vmem>>, vector<32x256xbf16>
    %c5 = arith.constant 5 : index
    %c0_32 = arith.constant 0 : index
    %c0_33 = arith.constant 0 : index
    %54 = vector.load %arg2[%c5, %c0_32, %c0_33] : memref<9x16x32xbf16, #tpu.memory_space<vmem>>, vector<1x16x32xbf16>
    %55 = vector.shape_cast %54 : vector<1x16x32xbf16> to vector<16x32xbf16>
    %cst_34 = arith.constant dense<0.000000e+00> : vector<16x256xf32>
    %56 = tpu.matmul %55, %53, %cst_34 {dimension_numbers = #tpu.dot_dimension_numbers<[1], [0], [0], [1], [0, 0, 1, 1], [], []>} : vector<16x32xbf16>, vector<32x256xbf16>, vector<16x256xf32> -> vector<16x256xf32>
    %57 = arith.addf %42, %56 : vector<16x256xf32>
    %c0_35 = arith.constant 0 : index
    %c143 = arith.constant 143 : index
    %58 = vector.load %arg14[%c0_35, %c143] : memref<96x512xbf16, #tpu.memory_space<vmem>>, vector<32x256xbf16>
    %c6 = arith.constant 6 : index
    %c0_36 = arith.constant 0 : index
    %c0_37 = arith.constant 0 : index
    %59 = vector.load %arg2[%c6, %c0_36, %c0_37] : memref<9x16x32xbf16, #tpu.memory_space<vmem>>, vector<1x16x32xbf16>
    %60 = vector.shape_cast %59 : vector<1x16x32xbf16> to vector<16x32xbf16>
    %cst_38 = arith.constant dense<0.000000e+00> : vector<16x256xf32>
    %61 = tpu.matmul %60, %58, %cst_38 {dimension_numbers = #tpu.dot_dimension_numbers<[1], [0], [0], [1], [0, 0, 1, 1], [], []>} : vector<16x32xbf16>, vector<32x256xbf16>, vector<16x256xf32> -> vector<16x256xf32>
    %62 = arith.addf %47, %61 : vector<16x256xf32>
    %c0_39 = arith.constant 0 : index
    %c144 = arith.constant 144 : index
    %63 = vector.load %arg14[%c0_39, %c144] : memref<96x512xbf16, #tpu.memory_space<vmem>>, vector<32x256xbf16>
    %c7 = arith.constant 7 : index
    %c0_40 = arith.constant 0 : index
    %c0_41 = arith.constant 0 : index
    %64 = vector.load %arg2[%c7, %c0_40, %c0_41] : memref<9x16x32xbf16, #tpu.memory_space<vmem>>, vector<1x16x32xbf16>
    %65 = vector.shape_cast %64 : vector<1x16x32xbf16> to vector<16x32xbf16>
    %cst_42 = arith.constant dense<0.000000e+00> : vector<16x256xf32>
    %66 = tpu.matmul %65, %63, %cst_42 {dimension_numbers = #tpu.dot_dimension_numbers<[1], [0], [0], [1], [0, 0, 1, 1], [], []>} : vector<16x32xbf16>, vector<32x256xbf16>, vector<16x256xf32> -> vector<16x256xf32>
    %67 = arith.addf %52, %66 : vector<16x256xf32>
    %c0_43 = arith.constant 0 : index
    %c145 = arith.constant 145 : index
    %68 = vector.load %arg14[%c0_43, %c145] : memref<96x512xbf16, #tpu.memory_space<vmem>>, vector<32x256xbf16>
    %c8 = arith.constant 8 : index
    %c0_44 = arith.constant 0 : index
    %c0_45 = arith.constant 0 : index
    %69 = vector.load %arg2[%c8, %c0_44, %c0_45] : memref<9x16x32xbf16, #tpu.memory_space<vmem>>, vector<1x16x32xbf16>
    %70 = vector.shape_cast %69 : vector<1x16x32xbf16> to vector<16x32xbf16>
    %cst_46 = arith.constant dense<0.000000e+00> : vector<16x256xf32>
    %71 = tpu.matmul %70, %68, %cst_46 {dimension_numbers = #tpu.dot_dimension_numbers<[1], [0], [0], [1], [0, 0, 1, 1], [], []>} : vector<16x32xbf16>, vector<32x256xbf16>, vector<16x256xf32> -> vector<16x256xf32>
    %72 = arith.addf %57, %71 : vector<16x256xf32>
    %73 = vector.broadcast %20 : vector<1x256xf32> to vector<16x256xf32>
    %74 = arith.mulf %62, %73 : vector<16x256xf32>
    %75 = arith.addf %67, %74 : vector<16x256xf32>
    %76 = vector.broadcast %24 : vector<1x256xf32> to vector<16x256xf32>
    %77 = arith.mulf %72, %76 : vector<16x256xf32>
    %78 = arith.addf %75, %77 : vector<16x256xf32>
    %c0_47 = arith.constant 0 : index
    %c0_48 = arith.constant 0 : index
    %79 = vector.load %arg3[%c0_47, %c0_48] : memref<16x1xf32, #tpu.memory_space<vmem>>, vector<16x1xf32>
    %80 = vector.broadcast %79 : vector<16x1xf32> to vector<16x256xf32>
    %81 = arith.addf %78, %80 : vector<16x256xf32>
    %cst_49 = arith.constant 2.000000e-01 : f32
    %82 = vector.broadcast %cst_49 : f32 to vector<16x256xf32>
    %83 = arith.mulf %82, %81 : vector<16x256xf32>
    %84 = arith.maximumf %81, %83 : vector<16x256xf32>
    %85 = arith.truncf %84 : vector<16x256xf32> to vector<16x256xbf16>
    %c32 = arith.constant 32 : index
    %c128_50 = arith.constant 128 : index
    %86 = vector.load %arg14[%c32, %c128_50] : memref<96x512xbf16, #tpu.memory_space<vmem>>, vector<16x256xbf16>
    tpu.vector_store %arg14[%c32, %c128_50], %85 {strides = array<i32>} : memref<96x512xbf16, #tpu.memory_space<vmem>>, vector<16x256xbf16>,
    %c0_51 = arith.constant 0 : index
    %c0_52 = arith.constant 0 : index
    %87 = vector.load %arg12[%c0_51, %c0_52] : memref<16x32xbf16, #tpu.memory_space<vmem>>, vector<16x32xbf16>
    %c0_53 = arith.constant 0 : index
    %c128_54 = arith.constant 128 : index
    %88 = vector.load %arg14[%c0_53, %c128_54] : memref<96x512xbf16, #tpu.memory_space<vmem>>, vector<32x256xbf16>
    %cst_55 = arith.constant dense<0.000000e+00> : vector<16x256xf32>
    %89 = tpu.matmul %87, %88, %cst_55 {dimension_numbers = #tpu.dot_dimension_numbers<[1], [0], [0], [1], [0, 0, 1, 1], [], []>} : vector<16x32xbf16>, vector<32x256xbf16>, vector<16x256xf32> -> vector<16x256xf32>
    %c0_56 = arith.constant 0 : index
    %c111_57 = arith.constant 111 : index
    %90 = vector.load %arg14[%c0_56, %c111_57] : memref<96x512xbf16, #tpu.memory_space<vmem>>, vector<48x256xbf16>
    %c0_58 = arith.constant 0 : index
    %c0_59 = arith.constant 0 : index
    %c0_60 = arith.constant 0 : index
    %91 = vector.load %arg4[%c0_58, %c0_59, %c0_60] : memref<9x16x48xbf16, #tpu.memory_space<vmem>>, vector<1x16x48xbf16>
    %92 = vector.shape_cast %91 : vector<1x16x48xbf16> to vector<16x48xbf16>
    %cst_61 = arith.constant dense<0.000000e+00> : vector<16x256xf32>
    %93 = tpu.matmul %92, %90, %cst_61 {dimension_numbers = #tpu.dot_dimension_numbers<[1], [0], [0], [1], [0, 0, 1, 1], [], []>} : vector<16x48xbf16>, vector<48x256xbf16>, vector<16x256xf32> -> vector<16x256xf32>
    %c0_62 = arith.constant 0 : index
    %c112_63 = arith.constant 112 : index
    %94 = vector.load %arg14[%c0_62, %c112_63] : memref<96x512xbf16, #tpu.memory_space<vmem>>, vector<48x256xbf16>
    %c1_64 = arith.constant 1 : index
    %c0_65 = arith.constant 0 : index
    %c0_66 = arith.constant 0 : index
    %95 = vector.load %arg4[%c1_64, %c0_65, %c0_66] : memref<9x16x48xbf16, #tpu.memory_space<vmem>>, vector<1x16x48xbf16>
    %96 = vector.shape_cast %95 : vector<1x16x48xbf16> to vector<16x48xbf16>
    %cst_67 = arith.constant dense<0.000000e+00> : vector<16x256xf32>
    %97 = tpu.matmul %96, %94, %cst_67 {dimension_numbers = #tpu.dot_dimension_numbers<[1], [0], [0], [1], [0, 0, 1, 1], [], []>} : vector<16x48xbf16>, vector<48x256xbf16>, vector<16x256xf32> -> vector<16x256xf32>
    %c0_68 = arith.constant 0 : index
    %c113_69 = arith.constant 113 : index
    %98 = vector.load %arg14[%c0_68, %c113_69] : memref<96x512xbf16, #tpu.memory_space<vmem>>, vector<48x256xbf16>
    %c2_70 = arith.constant 2 : index
    %c0_71 = arith.constant 0 : index
    %c0_72 = arith.constant 0 : index
    %99 = vector.load %arg4[%c2_70, %c0_71, %c0_72] : memref<9x16x48xbf16, #tpu.memory_space<vmem>>, vector<1x16x48xbf16>
    %100 = vector.shape_cast %99 : vector<1x16x48xbf16> to vector<16x48xbf16>
    %cst_73 = arith.constant dense<0.000000e+00> : vector<16x256xf32>
    %101 = tpu.matmul %100, %98, %cst_73 {dimension_numbers = #tpu.dot_dimension_numbers<[1], [0], [0], [1], [0, 0, 1, 1], [], []>} : vector<16x48xbf16>, vector<48x256xbf16>, vector<16x256xf32> -> vector<16x256xf32>
    %c0_74 = arith.constant 0 : index
    %c127_75 = arith.constant 127 : index
    %102 = vector.load %arg14[%c0_74, %c127_75] : memref<96x512xbf16, #tpu.memory_space<vmem>>, vector<48x256xbf16>
    %c3_76 = arith.constant 3 : index
    %c0_77 = arith.constant 0 : index
    %c0_78 = arith.constant 0 : index
    %103 = vector.load %arg4[%c3_76, %c0_77, %c0_78] : memref<9x16x48xbf16, #tpu.memory_space<vmem>>, vector<1x16x48xbf16>
    %104 = vector.shape_cast %103 : vector<1x16x48xbf16> to vector<16x48xbf16>
    %cst_79 = arith.constant dense<0.000000e+00> : vector<16x256xf32>
    %105 = tpu.matmul %104, %102, %cst_79 {dimension_numbers = #tpu.dot_dimension_numbers<[1], [0], [0], [1], [0, 0, 1, 1], [], []>} : vector<16x48xbf16>, vector<48x256xbf16>, vector<16x256xf32> -> vector<16x256xf32>
    %106 = arith.addf %93, %105 : vector<16x256xf32>
    %c0_80 = arith.constant 0 : index
    %c128_81 = arith.constant 128 : index
    %107 = vector.load %arg14[%c0_80, %c128_81] : memref<96x512xbf16, #tpu.memory_space<vmem>>, vector<48x256xbf16>
    %c4_82 = arith.constant 4 : index
    %c0_83 = arith.constant 0 : index
    %c0_84 = arith.constant 0 : index
    %108 = vector.load %arg4[%c4_82, %c0_83, %c0_84] : memref<9x16x48xbf16, #tpu.memory_space<vmem>>, vector<1x16x48xbf16>
    %109 = vector.shape_cast %108 : vector<1x16x48xbf16> to vector<16x48xbf16>
    %cst_85 = arith.constant dense<0.000000e+00> : vector<16x256xf32>
    %110 = tpu.matmul %109, %107, %cst_85 {dimension_numbers = #tpu.dot_dimension_numbers<[1], [0], [0], [1], [0, 0, 1, 1], [], []>} : vector<16x48xbf16>, vector<48x256xbf16>, vector<16x256xf32> -> vector<16x256xf32>
    %111 = arith.addf %97, %110 : vector<16x256xf32>
    %c0_86 = arith.constant 0 : index
    %c129_87 = arith.constant 129 : index
    %112 = vector.load %arg14[%c0_86, %c129_87] : memref<96x512xbf16, #tpu.memory_space<vmem>>, vector<48x256xbf16>
    %c5_88 = arith.constant 5 : index
    %c0_89 = arith.constant 0 : index
    %c0_90 = arith.constant 0 : index
    %113 = vector.load %arg4[%c5_88, %c0_89, %c0_90] : memref<9x16x48xbf16, #tpu.memory_space<vmem>>, vector<1x16x48xbf16>
    %114 = vector.shape_cast %113 : vector<1x16x48xbf16> to vector<16x48xbf16>
    %cst_91 = arith.constant dense<0.000000e+00> : vector<16x256xf32>
    %115 = tpu.matmul %114, %112, %cst_91 {dimension_numbers = #tpu.dot_dimension_numbers<[1], [0], [0], [1], [0, 0, 1, 1], [], []>} : vector<16x48xbf16>, vector<48x256xbf16>, vector<16x256xf32> -> vector<16x256xf32>
    %116 = arith.addf %101, %115 : vector<16x256xf32>
    %c0_92 = arith.constant 0 : index
    %c143_93 = arith.constant 143 : index
    %117 = vector.load %arg14[%c0_92, %c143_93] : memref<96x512xbf16, #tpu.memory_space<vmem>>, vector<48x256xbf16>
    %c6_94 = arith.constant 6 : index
    %c0_95 = arith.constant 0 : index
    %c0_96 = arith.constant 0 : index
    %118 = vector.load %arg4[%c6_94, %c0_95, %c0_96] : memref<9x16x48xbf16, #tpu.memory_space<vmem>>, vector<1x16x48xbf16>
    %119 = vector.shape_cast %118 : vector<1x16x48xbf16> to vector<16x48xbf16>
    %cst_97 = arith.constant dense<0.000000e+00> : vector<16x256xf32>
    %120 = tpu.matmul %119, %117, %cst_97 {dimension_numbers = #tpu.dot_dimension_numbers<[1], [0], [0], [1], [0, 0, 1, 1], [], []>} : vector<16x48xbf16>, vector<48x256xbf16>, vector<16x256xf32> -> vector<16x256xf32>
    %121 = arith.addf %106, %120 : vector<16x256xf32>
    %c0_98 = arith.constant 0 : index
    %c144_99 = arith.constant 144 : index
    %122 = vector.load %arg14[%c0_98, %c144_99] : memref<96x512xbf16, #tpu.memory_space<vmem>>, vector<48x256xbf16>
    %c7_100 = arith.constant 7 : index
    %c0_101 = arith.constant 0 : index
    %c0_102 = arith.constant 0 : index
    %123 = vector.load %arg4[%c7_100, %c0_101, %c0_102] : memref<9x16x48xbf16, #tpu.memory_space<vmem>>, vector<1x16x48xbf16>
    %124 = vector.shape_cast %123 : vector<1x16x48xbf16> to vector<16x48xbf16>
    %cst_103 = arith.constant dense<0.000000e+00> : vector<16x256xf32>
    %125 = tpu.matmul %124, %122, %cst_103 {dimension_numbers = #tpu.dot_dimension_numbers<[1], [0], [0], [1], [0, 0, 1, 1], [], []>} : vector<16x48xbf16>, vector<48x256xbf16>, vector<16x256xf32> -> vector<16x256xf32>
    %126 = arith.addf %111, %125 : vector<16x256xf32>
    %c0_104 = arith.constant 0 : index
    %c145_105 = arith.constant 145 : index
    %127 = vector.load %arg14[%c0_104, %c145_105] : memref<96x512xbf16, #tpu.memory_space<vmem>>, vector<48x256xbf16>
    %c8_106 = arith.constant 8 : index
    %c0_107 = arith.constant 0 : index
    %c0_108 = arith.constant 0 : index
    %128 = vector.load %arg4[%c8_106, %c0_107, %c0_108] : memref<9x16x48xbf16, #tpu.memory_space<vmem>>, vector<1x16x48xbf16>
    %129 = vector.shape_cast %128 : vector<1x16x48xbf16> to vector<16x48xbf16>
    %cst_109 = arith.constant dense<0.000000e+00> : vector<16x256xf32>
    %130 = tpu.matmul %129, %127, %cst_109 {dimension_numbers = #tpu.dot_dimension_numbers<[1], [0], [0], [1], [0, 0, 1, 1], [], []>} : vector<16x48xbf16>, vector<48x256xbf16>, vector<16x256xf32> -> vector<16x256xf32>
    %131 = arith.addf %116, %130 : vector<16x256xf32>
    %132 = vector.broadcast %20 : vector<1x256xf32> to vector<16x256xf32>
    %133 = arith.mulf %121, %132 : vector<16x256xf32>
    %134 = arith.addf %126, %133 : vector<16x256xf32>
    %135 = vector.broadcast %24 : vector<1x256xf32> to vector<16x256xf32>
    %136 = arith.mulf %131, %135 : vector<16x256xf32>
    %137 = arith.addf %134, %136 : vector<16x256xf32>
    %c0_110 = arith.constant 0 : index
    %c0_111 = arith.constant 0 : index
    %138 = vector.load %arg5[%c0_110, %c0_111] : memref<16x1xf32, #tpu.memory_space<vmem>>, vector<16x1xf32>
    %139 = vector.broadcast %138 : vector<16x1xf32> to vector<16x256xf32>
    %140 = arith.addf %137, %139 : vector<16x256xf32>
    %cst_112 = arith.constant 2.000000e-01 : f32
    %141 = vector.broadcast %cst_112 : f32 to vector<16x256xf32>
    %142 = arith.mulf %141, %140 : vector<16x256xf32>
    %143 = arith.maximumf %140, %142 : vector<16x256xf32>
    %144 = arith.addf %143, %89 : vector<16x256xf32>
    %145 = arith.truncf %144 : vector<16x256xf32> to vector<16x256xbf16>
    %c48 = arith.constant 48 : index
    %c128_113 = arith.constant 128 : index
    %146 = vector.load %arg14[%c48, %c128_113] : memref<96x512xbf16, #tpu.memory_space<vmem>>, vector<16x256xbf16>
    tpu.vector_store %arg14[%c48, %c128_113], %145 {strides = array<i32>} : memref<96x512xbf16, #tpu.memory_space<vmem>>, vector<16x256xbf16>,
    %c0_114 = arith.constant 0 : index
    %c111_115 = arith.constant 111 : index
    %147 = vector.load %arg14[%c0_114, %c111_115] : memref<96x512xbf16, #tpu.memory_space<vmem>>, vector<64x256xbf16>
    %c0_116 = arith.constant 0 : index
    %c0_117 = arith.constant 0 : index
    %c0_118 = arith.constant 0 : index
    %148 = vector.load %arg6[%c0_116, %c0_117, %c0_118] : memref<9x16x64xbf16, #tpu.memory_space<vmem>>, vector<1x16x64xbf16>
    %149 = vector.shape_cast %148 : vector<1x16x64xbf16> to vector<16x64xbf16>
    %cst_119 = arith.constant dense<0.000000e+00> : vector<16x256xf32>
    %150 = tpu.matmul %149, %147, %cst_119 {dimension_numbers = #tpu.dot_dimension_numbers<[1], [0], [0], [1], [0, 0, 1, 1], [], []>} : vector<16x64xbf16>, vector<64x256xbf16>, vector<16x256xf32> -> vector<16x256xf32>
    %c0_120 = arith.constant 0 : index
    %c112_121 = arith.constant 112 : index
    %151 = vector.load %arg14[%c0_120, %c112_121] : memref<96x512xbf16, #tpu.memory_space<vmem>>, vector<64x256xbf16>
    %c1_122 = arith.constant 1 : index
    %c0_123 = arith.constant 0 : index
    %c0_124 = arith.constant 0 : index
    %152 = vector.load %arg6[%c1_122, %c0_123, %c0_124] : memref<9x16x64xbf16, #tpu.memory_space<vmem>>, vector<1x16x64xbf16>
    %153 = vector.shape_cast %152 : vector<1x16x64xbf16> to vector<16x64xbf16>
    %cst_125 = arith.constant dense<0.000000e+00> : vector<16x256xf32>
    %154 = tpu.matmul %153, %151, %cst_125 {dimension_numbers = #tpu.dot_dimension_numbers<[1], [0], [0], [1], [0, 0, 1, 1], [], []>} : vector<16x64xbf16>, vector<64x256xbf16>, vector<16x256xf32> -> vector<16x256xf32>
    %c0_126 = arith.constant 0 : index
    %c113_127 = arith.constant 113 : index
    %155 = vector.load %arg14[%c0_126, %c113_127] : memref<96x512xbf16, #tpu.memory_space<vmem>>, vector<64x256xbf16>
    %c2_128 = arith.constant 2 : index
    %c0_129 = arith.constant 0 : index
    %c0_130 = arith.constant 0 : index
    %156 = vector.load %arg6[%c2_128, %c0_129, %c0_130] : memref<9x16x64xbf16, #tpu.memory_space<vmem>>, vector<1x16x64xbf16>
    %157 = vector.shape_cast %156 : vector<1x16x64xbf16> to vector<16x64xbf16>
    %cst_131 = arith.constant dense<0.000000e+00> : vector<16x256xf32>
    %158 = tpu.matmul %157, %155, %cst_131 {dimension_numbers = #tpu.dot_dimension_numbers<[1], [0], [0], [1], [0, 0, 1, 1], [], []>} : vector<16x64xbf16>, vector<64x256xbf16>, vector<16x256xf32> -> vector<16x256xf32>
    %c0_132 = arith.constant 0 : index
    %c127_133 = arith.constant 127 : index
    %159 = vector.load %arg14[%c0_132, %c127_133] : memref<96x512xbf16, #tpu.memory_space<vmem>>, vector<64x256xbf16>
    %c3_134 = arith.constant 3 : index
    %c0_135 = arith.constant 0 : index
    %c0_136 = arith.constant 0 : index
    %160 = vector.load %arg6[%c3_134, %c0_135, %c0_136] : memref<9x16x64xbf16, #tpu.memory_space<vmem>>, vector<1x16x64xbf16>
    %161 = vector.shape_cast %160 : vector<1x16x64xbf16> to vector<16x64xbf16>
    %cst_137 = arith.constant dense<0.000000e+00> : vector<16x256xf32>
    %162 = tpu.matmul %161, %159, %cst_137 {dimension_numbers = #tpu.dot_dimension_numbers<[1], [0], [0], [1], [0, 0, 1, 1], [], []>} : vector<16x64xbf16>, vector<64x256xbf16>, vector<16x256xf32> -> vector<16x256xf32>
    %163 = arith.addf %150, %162 : vector<16x256xf32>
    %c0_138 = arith.constant 0 : index
    %c128_139 = arith.constant 128 : index
    %164 = vector.load %arg14[%c0_138, %c128_139] : memref<96x512xbf16, #tpu.memory_space<vmem>>, vector<64x256xbf16>
    %c4_140 = arith.constant 4 : index
    %c0_141 = arith.constant 0 : index
    %c0_142 = arith.constant 0 : index
    %165 = vector.load %arg6[%c4_140, %c0_141, %c0_142] : memref<9x16x64xbf16, #tpu.memory_space<vmem>>, vector<1x16x64xbf16>
    %166 = vector.shape_cast %165 : vector<1x16x64xbf16> to vector<16x64xbf16>
    %cst_143 = arith.constant dense<0.000000e+00> : vector<16x256xf32>
    %167 = tpu.matmul %166, %164, %cst_143 {dimension_numbers = #tpu.dot_dimension_numbers<[1], [0], [0], [1], [0, 0, 1, 1], [], []>} : vector<16x64xbf16>, vector<64x256xbf16>, vector<16x256xf32> -> vector<16x256xf32>
    %168 = arith.addf %154, %167 : vector<16x256xf32>
    %c0_144 = arith.constant 0 : index
    %c129_145 = arith.constant 129 : index
    %169 = vector.load %arg14[%c0_144, %c129_145] : memref<96x512xbf16, #tpu.memory_space<vmem>>, vector<64x256xbf16>
    %c5_146 = arith.constant 5 : index
    %c0_147 = arith.constant 0 : index
    %c0_148 = arith.constant 0 : index
    %170 = vector.load %arg6[%c5_146, %c0_147, %c0_148] : memref<9x16x64xbf16, #tpu.memory_space<vmem>>, vector<1x16x64xbf16>
    %171 = vector.shape_cast %170 : vector<1x16x64xbf16> to vector<16x64xbf16>
    %cst_149 = arith.constant dense<0.000000e+00> : vector<16x256xf32>
    %172 = tpu.matmul %171, %169, %cst_149 {dimension_numbers = #tpu.dot_dimension_numbers<[1], [0], [0], [1], [0, 0, 1, 1], [], []>} : vector<16x64xbf16>, vector<64x256xbf16>, vector<16x256xf32> -> vector<16x256xf32>
    %173 = arith.addf %158, %172 : vector<16x256xf32>
    %c0_150 = arith.constant 0 : index
    %c143_151 = arith.constant 143 : index
    %174 = vector.load %arg14[%c0_150, %c143_151] : memref<96x512xbf16, #tpu.memory_space<vmem>>, vector<64x256xbf16>
    %c6_152 = arith.constant 6 : index
    %c0_153 = arith.constant 0 : index
    %c0_154 = arith.constant 0 : index
    %175 = vector.load %arg6[%c6_152, %c0_153, %c0_154] : memref<9x16x64xbf16, #tpu.memory_space<vmem>>, vector<1x16x64xbf16>
    %176 = vector.shape_cast %175 : vector<1x16x64xbf16> to vector<16x64xbf16>
    %cst_155 = arith.constant dense<0.000000e+00> : vector<16x256xf32>
    %177 = tpu.matmul %176, %174, %cst_155 {dimension_numbers = #tpu.dot_dimension_numbers<[1], [0], [0], [1], [0, 0, 1, 1], [], []>} : vector<16x64xbf16>, vector<64x256xbf16>, vector<16x256xf32> -> vector<16x256xf32>
    %178 = arith.addf %163, %177 : vector<16x256xf32>
    %c0_156 = arith.constant 0 : index
    %c144_157 = arith.constant 144 : index
    %179 = vector.load %arg14[%c0_156, %c144_157] : memref<96x512xbf16, #tpu.memory_space<vmem>>, vector<64x256xbf16>
    %c7_158 = arith.constant 7 : index
    %c0_159 = arith.constant 0 : index
    %c0_160 = arith.constant 0 : index
    %180 = vector.load %arg6[%c7_158, %c0_159, %c0_160] : memref<9x16x64xbf16, #tpu.memory_space<vmem>>, vector<1x16x64xbf16>
    %181 = vector.shape_cast %180 : vector<1x16x64xbf16> to vector<16x64xbf16>
    %cst_161 = arith.constant dense<0.000000e+00> : vector<16x256xf32>
    %182 = tpu.matmul %181, %179, %cst_161 {dimension_numbers = #tpu.dot_dimension_numbers<[1], [0], [0], [1], [0, 0, 1, 1], [], []>} : vector<16x64xbf16>, vector<64x256xbf16>, vector<16x256xf32> -> vector<16x256xf32>
    %183 = arith.addf %168, %182 : vector<16x256xf32>
    %c0_162 = arith.constant 0 : index
    %c145_163 = arith.constant 145 : index
    %184 = vector.load %arg14[%c0_162, %c145_163] : memref<96x512xbf16, #tpu.memory_space<vmem>>, vector<64x256xbf16>
    %c8_164 = arith.constant 8 : index
    %c0_165 = arith.constant 0 : index
    %c0_166 = arith.constant 0 : index
    %185 = vector.load %arg6[%c8_164, %c0_165, %c0_166] : memref<9x16x64xbf16, #tpu.memory_space<vmem>>, vector<1x16x64xbf16>
    %186 = vector.shape_cast %185 : vector<1x16x64xbf16> to vector<16x64xbf16>
    %cst_167 = arith.constant dense<0.000000e+00> : vector<16x256xf32>
    %187 = tpu.matmul %186, %184, %cst_167 {dimension_numbers = #tpu.dot_dimension_numbers<[1], [0], [0], [1], [0, 0, 1, 1], [], []>} : vector<16x64xbf16>, vector<64x256xbf16>, vector<16x256xf32> -> vector<16x256xf32>
    %188 = arith.addf %173, %187 : vector<16x256xf32>
    %189 = vector.broadcast %20 : vector<1x256xf32> to vector<16x256xf32>
    %190 = arith.mulf %178, %189 : vector<16x256xf32>
    %191 = arith.addf %183, %190 : vector<16x256xf32>
    %192 = vector.broadcast %24 : vector<1x256xf32> to vector<16x256xf32>
    %193 = arith.mulf %188, %192 : vector<16x256xf32>
    %194 = arith.addf %191, %193 : vector<16x256xf32>
    %c0_168 = arith.constant 0 : index
    %c0_169 = arith.constant 0 : index
    %195 = vector.load %arg7[%c0_168, %c0_169] : memref<16x1xf32, #tpu.memory_space<vmem>>, vector<16x1xf32>
    %196 = vector.broadcast %195 : vector<16x1xf32> to vector<16x256xf32>
    %197 = arith.addf %194, %196 : vector<16x256xf32>
    %cst_170 = arith.constant 2.000000e-01 : f32
    %198 = vector.broadcast %cst_170 : f32 to vector<16x256xf32>
    %199 = arith.mulf %198, %197 : vector<16x256xf32>
    %200 = arith.maximumf %197, %199 : vector<16x256xf32>
    %201 = arith.truncf %200 : vector<16x256xf32> to vector<16x256xbf16>
    %c64 = arith.constant 64 : index
    %c128_171 = arith.constant 128 : index
    %202 = vector.load %arg14[%c64, %c128_171] : memref<96x512xbf16, #tpu.memory_space<vmem>>, vector<16x256xbf16>
    tpu.vector_store %arg14[%c64, %c128_171], %201 {strides = array<i32>} : memref<96x512xbf16, #tpu.memory_space<vmem>>, vector<16x256xbf16>,
    %c0_172 = arith.constant 0 : index
    %c111_173 = arith.constant 111 : index
    %203 = vector.load %arg14[%c0_172, %c111_173] : memref<96x512xbf16, #tpu.memory_space<vmem>>, vector<80x256xbf16>
    %c0_174 = arith.constant 0 : index
    %c0_175 = arith.constant 0 : index
    %c0_176 = arith.constant 0 : index
    %204 = vector.load %arg8[%c0_174, %c0_175, %c0_176] : memref<9x16x80xbf16, #tpu.memory_space<vmem>>, vector<1x16x80xbf16>
    %205 = vector.shape_cast %204 : vector<1x16x80xbf16> to vector<16x80xbf16>
    %cst_177 = arith.constant dense<0.000000e+00> : vector<16x256xf32>
    %206 = tpu.matmul %205, %203, %cst_177 {dimension_numbers = #tpu.dot_dimension_numbers<[1], [0], [0], [1], [0, 0, 1, 1], [], []>} : vector<16x80xbf16>, vector<80x256xbf16>, vector<16x256xf32> -> vector<16x256xf32>
    %c0_178 = arith.constant 0 : index
    %c112_179 = arith.constant 112 : index
    %207 = vector.load %arg14[%c0_178, %c112_179] : memref<96x512xbf16, #tpu.memory_space<vmem>>, vector<80x256xbf16>
    %c1_180 = arith.constant 1 : index
    %c0_181 = arith.constant 0 : index
    %c0_182 = arith.constant 0 : index
    %208 = vector.load %arg8[%c1_180, %c0_181, %c0_182] : memref<9x16x80xbf16, #tpu.memory_space<vmem>>, vector<1x16x80xbf16>
    %209 = vector.shape_cast %208 : vector<1x16x80xbf16> to vector<16x80xbf16>
    %cst_183 = arith.constant dense<0.000000e+00> : vector<16x256xf32>
    %210 = tpu.matmul %209, %207, %cst_183 {dimension_numbers = #tpu.dot_dimension_numbers<[1], [0], [0], [1], [0, 0, 1, 1], [], []>} : vector<16x80xbf16>, vector<80x256xbf16>, vector<16x256xf32> -> vector<16x256xf32>
    %c0_184 = arith.constant 0 : index
    %c113_185 = arith.constant 113 : index
    %211 = vector.load %arg14[%c0_184, %c113_185] : memref<96x512xbf16, #tpu.memory_space<vmem>>, vector<80x256xbf16>
    %c2_186 = arith.constant 2 : index
    %c0_187 = arith.constant 0 : index
    %c0_188 = arith.constant 0 : index
    %212 = vector.load %arg8[%c2_186, %c0_187, %c0_188] : memref<9x16x80xbf16, #tpu.memory_space<vmem>>, vector<1x16x80xbf16>
    %213 = vector.shape_cast %212 : vector<1x16x80xbf16> to vector<16x80xbf16>
    %cst_189 = arith.constant dense<0.000000e+00> : vector<16x256xf32>
    %214 = tpu.matmul %213, %211, %cst_189 {dimension_numbers = #tpu.dot_dimension_numbers<[1], [0], [0], [1], [0, 0, 1, 1], [], []>} : vector<16x80xbf16>, vector<80x256xbf16>, vector<16x256xf32> -> vector<16x256xf32>
    %c0_190 = arith.constant 0 : index
    %c127_191 = arith.constant 127 : index
    %215 = vector.load %arg14[%c0_190, %c127_191] : memref<96x512xbf16, #tpu.memory_space<vmem>>, vector<80x256xbf16>
    %c3_192 = arith.constant 3 : index
    %c0_193 = arith.constant 0 : index
    %c0_194 = arith.constant 0 : index
    %216 = vector.load %arg8[%c3_192, %c0_193, %c0_194] : memref<9x16x80xbf16, #tpu.memory_space<vmem>>, vector<1x16x80xbf16>
    %217 = vector.shape_cast %216 : vector<1x16x80xbf16> to vector<16x80xbf16>
    %cst_195 = arith.constant dense<0.000000e+00> : vector<16x256xf32>
    %218 = tpu.matmul %217, %215, %cst_195 {dimension_numbers = #tpu.dot_dimension_numbers<[1], [0], [0], [1], [0, 0, 1, 1], [], []>} : vector<16x80xbf16>, vector<80x256xbf16>, vector<16x256xf32> -> vector<16x256xf32>
    %219 = arith.addf %206, %218 : vector<16x256xf32>
    %c0_196 = arith.constant 0 : index
    %c128_197 = arith.constant 128 : index
    %220 = vector.load %arg14[%c0_196, %c128_197] : memref<96x512xbf16, #tpu.memory_space<vmem>>, vector<80x256xbf16>
    %c4_198 = arith.constant 4 : index
    %c0_199 = arith.constant 0 : index
    %c0_200 = arith.constant 0 : index
    %221 = vector.load %arg8[%c4_198, %c0_199, %c0_200] : memref<9x16x80xbf16, #tpu.memory_space<vmem>>, vector<1x16x80xbf16>
    %222 = vector.shape_cast %221 : vector<1x16x80xbf16> to vector<16x80xbf16>
    %cst_201 = arith.constant dense<0.000000e+00> : vector<16x256xf32>
    %223 = tpu.matmul %222, %220, %cst_201 {dimension_numbers = #tpu.dot_dimension_numbers<[1], [0], [0], [1], [0, 0, 1, 1], [], []>} : vector<16x80xbf16>, vector<80x256xbf16>, vector<16x256xf32> -> vector<16x256xf32>
    %224 = arith.addf %210, %223 : vector<16x256xf32>
    %c0_202 = arith.constant 0 : index
    %c129_203 = arith.constant 129 : index
    %225 = vector.load %arg14[%c0_202, %c129_203] : memref<96x512xbf16, #tpu.memory_space<vmem>>, vector<80x256xbf16>
    %c5_204 = arith.constant 5 : index
    %c0_205 = arith.constant 0 : index
    %c0_206 = arith.constant 0 : index
    %226 = vector.load %arg8[%c5_204, %c0_205, %c0_206] : memref<9x16x80xbf16, #tpu.memory_space<vmem>>, vector<1x16x80xbf16>
    %227 = vector.shape_cast %226 : vector<1x16x80xbf16> to vector<16x80xbf16>
    %cst_207 = arith.constant dense<0.000000e+00> : vector<16x256xf32>
    %228 = tpu.matmul %227, %225, %cst_207 {dimension_numbers = #tpu.dot_dimension_numbers<[1], [0], [0], [1], [0, 0, 1, 1], [], []>} : vector<16x80xbf16>, vector<80x256xbf16>, vector<16x256xf32> -> vector<16x256xf32>
    %229 = arith.addf %214, %228 : vector<16x256xf32>
    %c0_208 = arith.constant 0 : index
    %c143_209 = arith.constant 143 : index
    %230 = vector.load %arg14[%c0_208, %c143_209] : memref<96x512xbf16, #tpu.memory_space<vmem>>, vector<80x256xbf16>
    %c6_210 = arith.constant 6 : index
    %c0_211 = arith.constant 0 : index
    %c0_212 = arith.constant 0 : index
    %231 = vector.load %arg8[%c6_210, %c0_211, %c0_212] : memref<9x16x80xbf16, #tpu.memory_space<vmem>>, vector<1x16x80xbf16>
    %232 = vector.shape_cast %231 : vector<1x16x80xbf16> to vector<16x80xbf16>
    %cst_213 = arith.constant dense<0.000000e+00> : vector<16x256xf32>
    %233 = tpu.matmul %232, %230, %cst_213 {dimension_numbers = #tpu.dot_dimension_numbers<[1], [0], [0], [1], [0, 0, 1, 1], [], []>} : vector<16x80xbf16>, vector<80x256xbf16>, vector<16x256xf32> -> vector<16x256xf32>
    %234 = arith.addf %219, %233 : vector<16x256xf32>
    %c0_214 = arith.constant 0 : index
    %c144_215 = arith.constant 144 : index
    %235 = vector.load %arg14[%c0_214, %c144_215] : memref<96x512xbf16, #tpu.memory_space<vmem>>, vector<80x256xbf16>
    %c7_216 = arith.constant 7 : index
    %c0_217 = arith.constant 0 : index
    %c0_218 = arith.constant 0 : index
    %236 = vector.load %arg8[%c7_216, %c0_217, %c0_218] : memref<9x16x80xbf16, #tpu.memory_space<vmem>>, vector<1x16x80xbf16>
    %237 = vector.shape_cast %236 : vector<1x16x80xbf16> to vector<16x80xbf16>
    %cst_219 = arith.constant dense<0.000000e+00> : vector<16x256xf32>
    %238 = tpu.matmul %237, %235, %cst_219 {dimension_numbers = #tpu.dot_dimension_numbers<[1], [0], [0], [1], [0, 0, 1, 1], [], []>} : vector<16x80xbf16>, vector<80x256xbf16>, vector<16x256xf32> -> vector<16x256xf32>
    %239 = arith.addf %224, %238 : vector<16x256xf32>
    %c0_220 = arith.constant 0 : index
    %c145_221 = arith.constant 145 : index
    %240 = vector.load %arg14[%c0_220, %c145_221] : memref<96x512xbf16, #tpu.memory_space<vmem>>, vector<80x256xbf16>
    %c8_222 = arith.constant 8 : index
    %c0_223 = arith.constant 0 : index
    %c0_224 = arith.constant 0 : index
    %241 = vector.load %arg8[%c8_222, %c0_223, %c0_224] : memref<9x16x80xbf16, #tpu.memory_space<vmem>>, vector<1x16x80xbf16>
    %242 = vector.shape_cast %241 : vector<1x16x80xbf16> to vector<16x80xbf16>
    %cst_225 = arith.constant dense<0.000000e+00> : vector<16x256xf32>
    %243 = tpu.matmul %242, %240, %cst_225 {dimension_numbers = #tpu.dot_dimension_numbers<[1], [0], [0], [1], [0, 0, 1, 1], [], []>} : vector<16x80xbf16>, vector<80x256xbf16>, vector<16x256xf32> -> vector<16x256xf32>
    %244 = arith.addf %229, %243 : vector<16x256xf32>
    %245 = vector.broadcast %20 : vector<1x256xf32> to vector<16x256xf32>
    %246 = arith.mulf %234, %245 : vector<16x256xf32>
    %247 = arith.addf %239, %246 : vector<16x256xf32>
    %248 = vector.broadcast %24 : vector<1x256xf32> to vector<16x256xf32>
    %249 = arith.mulf %244, %248 : vector<16x256xf32>
    %250 = arith.addf %247, %249 : vector<16x256xf32>
    %c0_226 = arith.constant 0 : index
    %c0_227 = arith.constant 0 : index
    %251 = vector.load %arg9[%c0_226, %c0_227] : memref<16x1xf32, #tpu.memory_space<vmem>>, vector<16x1xf32>
    %252 = vector.broadcast %251 : vector<16x1xf32> to vector<16x256xf32>
    %253 = arith.addf %250, %252 : vector<16x256xf32>
    %cst_228 = arith.constant 2.000000e-01 : f32
    %254 = vector.broadcast %cst_228 : f32 to vector<16x256xf32>
    %255 = arith.mulf %254, %253 : vector<16x256xf32>
    %256 = arith.maximumf %253, %255 : vector<16x256xf32>
    %c48_229 = arith.constant 48 : index
    %c128_230 = arith.constant 128 : index
    %257 = vector.load %arg14[%c48_229, %c128_230] : memref<96x512xbf16, #tpu.memory_space<vmem>>, vector<16x256xbf16>
    %258 = arith.extf %257 : vector<16x256xbf16> to vector<16x256xf32>
    %259 = arith.addf %256, %258 : vector<16x256xf32>
    %260 = arith.truncf %259 : vector<16x256xf32> to vector<16x256xbf16>
    %c80 = arith.constant 80 : index
    %c128_231 = arith.constant 128 : index
    %261 = vector.load %arg14[%c80, %c128_231] : memref<96x512xbf16, #tpu.memory_space<vmem>>, vector<16x256xbf16>
    tpu.vector_store %arg14[%c80, %c128_231], %260 {strides = array<i32>} : memref<96x512xbf16, #tpu.memory_space<vmem>>, vector<16x256xbf16>,
    %c0_232 = arith.constant 0 : index
    %c111_233 = arith.constant 111 : index
    %262 = vector.load %arg14[%c0_232, %c111_233] : memref<96x512xbf16, #tpu.memory_space<vmem>>, vector<96x256xbf16>
    %c0_234 = arith.constant 0 : index
    %c0_235 = arith.constant 0 : index
    %c0_236 = arith.constant 0 : index
    %263 = vector.load %arg10[%c0_234, %c0_235, %c0_236] : memref<9x32x96xbf16, #tpu.memory_space<vmem>>, vector<1x32x96xbf16>
    %264 = vector.shape_cast %263 : vector<1x32x96xbf16> to vector<32x96xbf16>
    %cst_237 = arith.constant dense<0.000000e+00> : vector<32x256xf32>
    %265 = tpu.matmul %264, %262, %cst_237 {dimension_numbers = #tpu.dot_dimension_numbers<[1], [0], [0], [1], [0, 0, 1, 1], [], []>} : vector<32x96xbf16>, vector<96x256xbf16>, vector<32x256xf32> -> vector<32x256xf32>
    %c0_238 = arith.constant 0 : index
    %c112_239 = arith.constant 112 : index
    %266 = vector.load %arg14[%c0_238, %c112_239] : memref<96x512xbf16, #tpu.memory_space<vmem>>, vector<96x256xbf16>
    %c1_240 = arith.constant 1 : index
    %c0_241 = arith.constant 0 : index
    %c0_242 = arith.constant 0 : index
    %267 = vector.load %arg10[%c1_240, %c0_241, %c0_242] : memref<9x32x96xbf16, #tpu.memory_space<vmem>>, vector<1x32x96xbf16>
    %268 = vector.shape_cast %267 : vector<1x32x96xbf16> to vector<32x96xbf16>
    %cst_243 = arith.constant dense<0.000000e+00> : vector<32x256xf32>
    %269 = tpu.matmul %268, %266, %cst_243 {dimension_numbers = #tpu.dot_dimension_numbers<[1], [0], [0], [1], [0, 0, 1, 1], [], []>} : vector<32x96xbf16>, vector<96x256xbf16>, vector<32x256xf32> -> vector<32x256xf32>
    %c0_244 = arith.constant 0 : index
    %c113_245 = arith.constant 113 : index
    %270 = vector.load %arg14[%c0_244, %c113_245] : memref<96x512xbf16, #tpu.memory_space<vmem>>, vector<96x256xbf16>
    %c2_246 = arith.constant 2 : index
    %c0_247 = arith.constant 0 : index
    %c0_248 = arith.constant 0 : index
    %271 = vector.load %arg10[%c2_246, %c0_247, %c0_248] : memref<9x32x96xbf16, #tpu.memory_space<vmem>>, vector<1x32x96xbf16>
    %272 = vector.shape_cast %271 : vector<1x32x96xbf16> to vector<32x96xbf16>
    %cst_249 = arith.constant dense<0.000000e+00> : vector<32x256xf32>
    %273 = tpu.matmul %272, %270, %cst_249 {dimension_numbers = #tpu.dot_dimension_numbers<[1], [0], [0], [1], [0, 0, 1, 1], [], []>} : vector<32x96xbf16>, vector<96x256xbf16>, vector<32x256xf32> -> vector<32x256xf32>
    %c0_250 = arith.constant 0 : index
    %c127_251 = arith.constant 127 : index
    %274 = vector.load %arg14[%c0_250, %c127_251] : memref<96x512xbf16, #tpu.memory_space<vmem>>, vector<96x256xbf16>
    %c3_252 = arith.constant 3 : index
    %c0_253 = arith.constant 0 : index
    %c0_254 = arith.constant 0 : index
    %275 = vector.load %arg10[%c3_252, %c0_253, %c0_254] : memref<9x32x96xbf16, #tpu.memory_space<vmem>>, vector<1x32x96xbf16>
    %276 = vector.shape_cast %275 : vector<1x32x96xbf16> to vector<32x96xbf16>
    %cst_255 = arith.constant dense<0.000000e+00> : vector<32x256xf32>
    %277 = tpu.matmul %276, %274, %cst_255 {dimension_numbers = #tpu.dot_dimension_numbers<[1], [0], [0], [1], [0, 0, 1, 1], [], []>} : vector<32x96xbf16>, vector<96x256xbf16>, vector<32x256xf32> -> vector<32x256xf32>
    %278 = arith.addf %265, %277 : vector<32x256xf32>
    %c0_256 = arith.constant 0 : index
    %c128_257 = arith.constant 128 : index
    %279 = vector.load %arg14[%c0_256, %c128_257] : memref<96x512xbf16, #tpu.memory_space<vmem>>, vector<96x256xbf16>
    %c4_258 = arith.constant 4 : index
    %c0_259 = arith.constant 0 : index
    %c0_260 = arith.constant 0 : index
    %280 = vector.load %arg10[%c4_258, %c0_259, %c0_260] : memref<9x32x96xbf16, #tpu.memory_space<vmem>>, vector<1x32x96xbf16>
    %281 = vector.shape_cast %280 : vector<1x32x96xbf16> to vector<32x96xbf16>
    %cst_261 = arith.constant dense<0.000000e+00> : vector<32x256xf32>
    %282 = tpu.matmul %281, %279, %cst_261 {dimension_numbers = #tpu.dot_dimension_numbers<[1], [0], [0], [1], [0, 0, 1, 1], [], []>} : vector<32x96xbf16>, vector<96x256xbf16>, vector<32x256xf32> -> vector<32x256xf32>
    %283 = arith.addf %269, %282 : vector<32x256xf32>
    %c0_262 = arith.constant 0 : index
    %c129_263 = arith.constant 129 : index
    %284 = vector.load %arg14[%c0_262, %c129_263] : memref<96x512xbf16, #tpu.memory_space<vmem>>, vector<96x256xbf16>
    %c5_264 = arith.constant 5 : index
    %c0_265 = arith.constant 0 : index
    %c0_266 = arith.constant 0 : index
    %285 = vector.load %arg10[%c5_264, %c0_265, %c0_266] : memref<9x32x96xbf16, #tpu.memory_space<vmem>>, vector<1x32x96xbf16>
    %286 = vector.shape_cast %285 : vector<1x32x96xbf16> to vector<32x96xbf16>
    %cst_267 = arith.constant dense<0.000000e+00> : vector<32x256xf32>
    %287 = tpu.matmul %286, %284, %cst_267 {dimension_numbers = #tpu.dot_dimension_numbers<[1], [0], [0], [1], [0, 0, 1, 1], [], []>} : vector<32x96xbf16>, vector<96x256xbf16>, vector<32x256xf32> -> vector<32x256xf32>
    %288 = arith.addf %273, %287 : vector<32x256xf32>
    %c0_268 = arith.constant 0 : index
    %c143_269 = arith.constant 143 : index
    %289 = vector.load %arg14[%c0_268, %c143_269] : memref<96x512xbf16, #tpu.memory_space<vmem>>, vector<96x256xbf16>
    %c6_270 = arith.constant 6 : index
    %c0_271 = arith.constant 0 : index
    %c0_272 = arith.constant 0 : index
    %290 = vector.load %arg10[%c6_270, %c0_271, %c0_272] : memref<9x32x96xbf16, #tpu.memory_space<vmem>>, vector<1x32x96xbf16>
    %291 = vector.shape_cast %290 : vector<1x32x96xbf16> to vector<32x96xbf16>
    %cst_273 = arith.constant dense<0.000000e+00> : vector<32x256xf32>
    %292 = tpu.matmul %291, %289, %cst_273 {dimension_numbers = #tpu.dot_dimension_numbers<[1], [0], [0], [1], [0, 0, 1, 1], [], []>} : vector<32x96xbf16>, vector<96x256xbf16>, vector<32x256xf32> -> vector<32x256xf32>
    %293 = arith.addf %278, %292 : vector<32x256xf32>
    %c0_274 = arith.constant 0 : index
    %c144_275 = arith.constant 144 : index
    %294 = vector.load %arg14[%c0_274, %c144_275] : memref<96x512xbf16, #tpu.memory_space<vmem>>, vector<96x256xbf16>
    %c7_276 = arith.constant 7 : index
    %c0_277 = arith.constant 0 : index
    %c0_278 = arith.constant 0 : index
    %295 = vector.load %arg10[%c7_276, %c0_277, %c0_278] : memref<9x32x96xbf16, #tpu.memory_space<vmem>>, vector<1x32x96xbf16>
    %296 = vector.shape_cast %295 : vector<1x32x96xbf16> to vector<32x96xbf16>
    %cst_279 = arith.constant dense<0.000000e+00> : vector<32x256xf32>
    %297 = tpu.matmul %296, %294, %cst_279 {dimension_numbers = #tpu.dot_dimension_numbers<[1], [0], [0], [1], [0, 0, 1, 1], [], []>} : vector<32x96xbf16>, vector<96x256xbf16>, vector<32x256xf32> -> vector<32x256xf32>
    %298 = arith.addf %283, %297 : vector<32x256xf32>
    %c0_280 = arith.constant 0 : index
    %c145_281 = arith.constant 145 : index
    %299 = vector.load %arg14[%c0_280, %c145_281] : memref<96x512xbf16, #tpu.memory_space<vmem>>, vector<96x256xbf16>
    %c8_282 = arith.constant 8 : index
    %c0_283 = arith.constant 0 : index
    %c0_284 = arith.constant 0 : index
    %300 = vector.load %arg10[%c8_282, %c0_283, %c0_284] : memref<9x32x96xbf16, #tpu.memory_space<vmem>>, vector<1x32x96xbf16>
    %301 = vector.shape_cast %300 : vector<1x32x96xbf16> to vector<32x96xbf16>
    %cst_285 = arith.constant dense<0.000000e+00> : vector<32x256xf32>
    %302 = tpu.matmul %301, %299, %cst_285 {dimension_numbers = #tpu.dot_dimension_numbers<[1], [0], [0], [1], [0, 0, 1, 1], [], []>} : vector<32x96xbf16>, vector<96x256xbf16>, vector<32x256xf32> -> vector<32x256xf32>
    %303 = arith.addf %288, %302 : vector<32x256xf32>
    %304 = vector.broadcast %20 : vector<1x256xf32> to vector<32x256xf32>
    %305 = arith.mulf %293, %304 : vector<32x256xf32>
    %306 = arith.addf %298, %305 : vector<32x256xf32>
    %307 = vector.broadcast %24 : vector<1x256xf32> to vector<32x256xf32>
    %308 = arith.mulf %303, %307 : vector<32x256xf32>
    %309 = arith.addf %306, %308 : vector<32x256xf32>
    %c0_286 = arith.constant 0 : index
    %c0_287 = arith.constant 0 : index
    %310 = vector.load %arg11[%c0_286, %c0_287] : memref<32x1xf32, #tpu.memory_space<vmem>>, vector<32x1xf32>
    %311 = vector.broadcast %310 : vector<32x1xf32> to vector<32x256xf32>
    %312 = arith.addf %309, %311 : vector<32x256xf32>
    %cst_288 = arith.constant 2.000000e-01 : f32
    %313 = vector.broadcast %cst_288 : f32 to vector<32x256xf32>
    %314 = arith.mulf %312, %313 : vector<32x256xf32>
    %315 = arith.addf %314, %28 : vector<32x256xf32>
    %c0_289 = arith.constant 0 : index
    %c0_290 = arith.constant 0 : index
    %c0_291 = arith.constant 0 : index
    %316 = vector.load %arg13[%c0_289, %c0_290, %c0_291] : memref<1x32x256xf32, #tpu.memory_space<vmem>>, vector<1x32x256xf32>
    %317 = vector.shape_cast %316 : vector<1x32x256xf32> to vector<32x256xf32>
    %318 = vector.shape_cast %315 : vector<32x256xf32> to vector<1x32x256xf32>
    tpu.vector_store %arg13[%c0_289, %c0_290, %c0_291], %318 {strides = array<i32>} : memref<1x32x256xf32, #tpu.memory_space<vmem>>, vector<1x32x256xf32>,
    return
  }
  func.func @transform_0(%arg0: i32) -> (i32, i32, i32) {
    %c0_i32 = arith.constant 0 : i32
    %c0_i32_0 = arith.constant 0 : i32
    %c0_i32_1 = arith.constant 0 : i32
    return %arg0, %c0_i32, %c0_i32_0 : i32, i32, i32
  }
  func.func @transform_1(%arg0: i32) -> (i32, i32, i32) {
    %c0_i32 = arith.constant 0 : i32
    %c0_i32_0 = arith.constant 0 : i32
    %c0_i32_1 = arith.constant 0 : i32
    %c0_i32_2 = arith.constant 0 : i32
    return %c0_i32, %c0_i32_0, %c0_i32_1 : i32, i32, i32
  }
  func.func @transform_2(%arg0: i32) -> (i32, i32) {
    %c0_i32 = arith.constant 0 : i32
    %c0_i32_0 = arith.constant 0 : i32
    %c0_i32_1 = arith.constant 0 : i32
    return %c0_i32, %c0_i32_0 : i32, i32
  }
  func.func @transform_3(%arg0: i32) -> (i32, i32, i32) {
    %c0_i32 = arith.constant 0 : i32
    %c0_i32_0 = arith.constant 0 : i32
    %c0_i32_1 = arith.constant 0 : i32
    %c0_i32_2 = arith.constant 0 : i32
    return %c0_i32, %c0_i32_0, %c0_i32_1 : i32, i32, i32
  }
  func.func @transform_4(%arg0: i32) -> (i32, i32) {
    %c0_i32 = arith.constant 0 : i32
    %c0_i32_0 = arith.constant 0 : i32
    %c0_i32_1 = arith.constant 0 : i32
    return %c0_i32, %c0_i32_0 : i32, i32
  }
  func.func @transform_5(%arg0: i32) -> (i32, i32, i32) {
    %c0_i32 = arith.constant 0 : i32
    %c0_i32_0 = arith.constant 0 : i32
    %c0_i32_1 = arith.constant 0 : i32
    %c0_i32_2 = arith.constant 0 : i32
    return %c0_i32, %c0_i32_0, %c0_i32_1 : i32, i32, i32
  }
  func.func @transform_6(%arg0: i32) -> (i32, i32) {
    %c0_i32 = arith.constant 0 : i32
    %c0_i32_0 = arith.constant 0 : i32
    %c0_i32_1 = arith.constant 0 : i32
    return %c0_i32, %c0_i32_0 : i32, i32
  }
  func.func @transform_7(%arg0: i32) -> (i32, i32, i32) {
    %c0_i32 = arith.constant 0 : i32
    %c0_i32_0 = arith.constant 0 : i32
    %c0_i32_1 = arith.constant 0 : i32
    %c0_i32_2 = arith.constant 0 : i32
    return %c0_i32, %c0_i32_0, %c0_i32_1 : i32, i32, i32
  }
  func.func @transform_8(%arg0: i32) -> (i32, i32) {
    %c0_i32 = arith.constant 0 : i32
    %c0_i32_0 = arith.constant 0 : i32
    %c0_i32_1 = arith.constant 0 : i32
    return %c0_i32, %c0_i32_0 : i32, i32
  }
  func.func @transform_9(%arg0: i32) -> (i32, i32, i32) {
    %c0_i32 = arith.constant 0 : i32
    %c0_i32_0 = arith.constant 0 : i32
    %c0_i32_1 = arith.constant 0 : i32
    %c0_i32_2 = arith.constant 0 : i32
    return %c0_i32, %c0_i32_0, %c0_i32_1 : i32, i32, i32
  }
  func.func @transform_10(%arg0: i32) -> (i32, i32) {
    %c0_i32 = arith.constant 0 : i32
    %c0_i32_0 = arith.constant 0 : i32
    %c0_i32_1 = arith.constant 0 : i32
    return %c0_i32, %c0_i32_0 : i32, i32
  }
  func.func @transform_11(%arg0: i32) -> (i32, i32) {
    %c0_i32 = arith.constant 0 : i32
    %c0_i32_0 = arith.constant 0 : i32
    %c0_i32_1 = arith.constant 0 : i32
    return %c0_i32, %c0_i32_0 : i32, i32
  }
  func.func @transform_12(%arg0: i32) -> (i32, i32, i32) {
    %c0_i32 = arith.constant 0 : i32
    %c0_i32_0 = arith.constant 0 : i32
    %c0_i32_1 = arith.constant 0 : i32
    return %arg0, %c0_i32, %c0_i32_0 : i32, i32, i32
  }
}

</mosaic_0001>

<llo_original>
// kernel: residual_dense_block_5c.1
$region0: #{residual_dense_block_5c.1}
  #allocation0 [shape = 'u32[]', space=smem, size = 0x4, offset = 0x4, fixed_abs, tag = 'smem constant byte address 0x4 - core index']
  #allocation1 [shape = 'u32[144,128]{1,0:T(1,128)}', space=vmem, size = 0x12000, scoped, tag = 'internal scratch']
  #allocation2 [shape = 'bf16[96,512]{1,0:T(8,128)(2,1)}', space=vmem, size = 0x18000, scoped, tag = 'scratch operand']
  %s0 = inlined_call_operand.vmem [shape: f32[2,32,256], index: 0, kind: input, shape index: {}]
  %s1 = inlined_call_operand.vmem [shape: bf16[9,16,32], index: 1, kind: input, shape index: {}]
  %s2 = inlined_call_operand.vmem [shape: f32[16,1], index: 2, kind: input, shape index: {}]
  %s3 = inlined_call_operand.vmem [shape: bf16[9,16,48], index: 3, kind: input, shape index: {}]
  %s4 = inlined_call_operand.vmem [shape: f32[16,1], index: 4, kind: input, shape index: {}]
  %s5 = inlined_call_operand.vmem [shape: bf16[9,16,64], index: 5, kind: input, shape index: {}]
  %s6 = inlined_call_operand.vmem [shape: f32[16,1], index: 6, kind: input, shape index: {}]
  %s7 = inlined_call_operand.vmem [shape: bf16[9,16,80], index: 7, kind: input, shape index: {}]
  %s8 = inlined_call_operand.vmem [shape: f32[16,1], index: 8, kind: input, shape index: {}]
  %s9 = inlined_call_operand.vmem [shape: bf16[9,32,96], index: 9, kind: input, shape index: {}]
  %s10 = inlined_call_operand.vmem [shape: f32[32,1], index: 10, kind: input, shape index: {}]
  %s11 = inlined_call_operand.vmem [shape: bf16[16,32], index: 11, kind: input, shape index: {}]
  %s12 = inlined_call_operand.vmem [shape: f32[2,32,256], index: 12, kind: output, shape index: {}]
  %s13 = sld [smem:[#allocation0]]
  $region81: #{residual_dense_block_5c.1} parent=0
    _
  %s15 = ssub.s32 1, %s13
  %s16 = scalar_select 0, %s15, %s13
  loop: start=0, step=1, limit=4
  $region2: #{residual_dense_block_5c.1} parent=0 // loop_pre_header
    _
  $region3: #{residual_dense_block_5c.1} parent=0 // loop_header
    %s18 = sphi 0, %s22
    %p19 = scmp.ge.s32.totalorder %s18, 4
    %s28 = sphi 0, %s30
    %s31 = sphi 0, %s28
    %s32 = sphi 0, %s31
    %s48 = sphi 0, %s32
    %s52 = sphi 0, %s52
    %s54 = sphi 0, %s52
    %s55 = sphi 0, %s54
    %s69 = sphi 0, %s55
    %s73 = sphi 0, %s73
    %s75 = sphi 0, %s73
    %s76 = sphi 0, %s75
    %s90 = sphi 0, %s76
    %s94 = sphi 0, %s94
    %s96 = sphi 0, %s94
    %s97 = sphi 0, %s96
    %s111 = sphi 0, %s97
    %s115 = sphi 0, %s115
    %s117 = sphi 0, %s115
    %s118 = sphi 0, %s117
    %s132 = sphi 0, %s118
    %s136 = sphi 0, %s136
    %s138 = sphi 0, %s136
    %s139 = sphi 0, %s138
    %s153 = sphi 0, %s139
    %s157 = sphi 0, %s157
    %s159 = sphi 0, %s157
    %s160 = sphi 0, %s159
    %s174 = sphi 0, %s160
    %s178 = sphi 0, %s178
    %s180 = sphi 0, %s178
    %s181 = sphi 0, %s180
    %s195 = sphi 0, %s181
    %s199 = sphi 0, %s199
    %s201 = sphi 0, %s199
    %s202 = sphi 0, %s201
    %s216 = sphi 0, %s202
    %s220 = sphi 0, %s220
    %s222 = sphi 0, %s220
    %s223 = sphi 0, %s222
    %s237 = sphi 0, %s223
    %s241 = sphi 0, %s241
    %s243 = sphi 0, %s241
    %s244 = sphi 0, %s243
    %s258 = sphi 0, %s244
    %s262 = sphi 0, %s262
    %s264 = sphi 0, %s262
    %s265 = sphi 0, %s264
    %s279 = sphi 0, %s265
    %s285 = sphi 0, %s287
    %s288 = sphi 0, %s285
    %s289 = sphi 0, %s288
    %s305 = sphi 0, %s289
  $region4: #{residual_dense_block_5c.1} parent=0 // loop_header_branch
    %21 = sbr.rel (%p19) target = $region8
  $region5: #{residual_dense_block_5c.1} parent=0 // loop_body
    %s23 = ssub.s32 %s18, 1
    %s24 = ssub.s32 %s18, 2
    %s25 = sadd.s32 %s18, 1
    %s26 = ssub.s32 %s18, %s25
    %p27 = scmp.eq.s32.totalorder %s26, 0
    %s29 = sadd.s32 %s28, 1
    %s30 = scalar_select %p27, %s28, %s29
    %p33 = pneg %p27
    %p34 = scmp.eq.s32.totalorder %s18, 1
    %p35 = por %p33, %p34
    %p36 = scmp.ne.s32.totalorder %s28, %s31
    %p37 = scmp.eq.s32.totalorder %s18, 0
    %p38 = por %p36, %p37
    %p39 = scmp.ne.s32.totalorder %s28, %s31
    %p40 = scmp.eq.s32.totalorder %s23, 1
    %p41 = por %p39, %p40
    %p42 = scmp.ne.s32.totalorder %s31, %s32
    %p43 = scmp.eq.s32.totalorder %s23, 0
    %p44 = por %p42, %p43
    %p45 = scmp.ne.s32.totalorder %s31, %s32
    %p46 = scmp.eq.s32.totalorder %s24, 1
    %p47 = por %p45, %p46
    %p49 = scmp.ne.s32.totalorder %s32, %s48
    %p50 = scmp.eq.s32.totalorder %s24, 0
    %p51 = por %p49, %p50
    %s53 = sadd.s32 %s52, 1
    %p56 = scmp.eq.s32.totalorder %s18, 1
    %p57 = scmp.ne.s32.totalorder %s52, %s54
    %p58 = scmp.eq.s32.totalorder %s18, 0
    %p59 = por %p57, %p58
    %p60 = scmp.ne.s32.totalorder %s52, %s54
    %p61 = scmp.eq.s32.totalorder %s23, 1
    %p62 = por %p60, %p61
    %p63 = scmp.ne.s32.totalorder %s54, %s55
    %p64 = scmp.eq.s32.totalorder %s23, 0
    %p65 = por %p63, %p64
    %p66 = scmp.ne.s32.totalorder %s54, %s55
    %p67 = scmp.eq.s32.totalorder %s24, 1
    %p68 = por %p66, %p67
    %p70 = scmp.ne.s32.totalorder %s55, %s69
    %p71 = scmp.eq.s32.totalorder %s24, 0
    %p72 = por %p70, %p71
    %s74 = sadd.s32 %s73, 1
    %p77 = scmp.eq.s32.totalorder %s18, 1
    %p78 = scmp.ne.s32.totalorder %s73, %s75
    %p79 = scmp.eq.s32.totalorder %s18, 0
    %p80 = por %p78, %p79
    %p81 = scmp.ne.s32.totalorder %s73, %s75
    %p82 = scmp.eq.s32.totalorder %s23, 1
    %p83 = por %p81, %p82
    %p84 = scmp.ne.s32.totalorder %s75, %s76
    %p85 = scmp.eq.s32.totalorder %s23, 0
    %p86 = por %p84, %p85
    %p87 = scmp.ne.s32.totalorder %s75, %s76
    %p88 = scmp.eq.s32.totalorder %s24, 1
    %p89 = por %p87, %p88
    %p91 = scmp.ne.s32.totalorder %s76, %s90
    %p92 = scmp.eq.s32.totalorder %s24, 0
    %p93 = por %p91, %p92
    %s95 = sadd.s32 %s94, 1
    %p98 = scmp.eq.s32.totalorder %s18, 1
    %p99 = scmp.ne.s32.totalorder %s94, %s96
    %p100 = scmp.eq.s32.totalorder %s18, 0
    %p101 = por %p99, %p100
    %p102 = scmp.ne.s32.totalorder %s94, %s96
    %p103 = scmp.eq.s32.totalorder %s23, 1
    %p104 = por %p102, %p103
    %p105 = scmp.ne.s32.totalorder %s96, %s97
    %p106 = scmp.eq.s32.totalorder %s23, 0
    %p107 = por %p105, %p106
    %p108 = scmp.ne.s32.totalorder %s96, %s97
    %p109 = scmp.eq.s32.totalorder %s24, 1
    %p110 = por %p108, %p109
    %p112 = scmp.ne.s32.totalorder %s97, %s111
    %p113 = scmp.eq.s32.totalorder %s24, 0
    %p114 = por %p112, %p113
    %s116 = sadd.s32 %s115, 1
    %p119 = scmp.eq.s32.totalorder %s18, 1
    %p120 = scmp.ne.s32.totalorder %s115, %s117
    %p121 = scmp.eq.s32.totalorder %s18, 0
    %p122 = por %p120, %p121
    %p123 = scmp.ne.s32.totalorder %s115, %s117
    %p124 = scmp.eq.s32.totalorder %s23, 1
    %p125 = por %p123, %p124
    %p126 = scmp.ne.s32.totalorder %s117, %s118
    %p127 = scmp.eq.s32.totalorder %s23, 0
    %p128 = por %p126, %p127
    %p129 = scmp.ne.s32.totalorder %s117, %s118
    %p130 = scmp.eq.s32.totalorder %s24, 1
    %p131 = por %p129, %p130
    %p133 = scmp.ne.s32.totalorder %s118, %s132
    %p134 = scmp.eq.s32.totalorder %s24, 0
    %p135 = por %p133, %p134
    %s137 = sadd.s32 %s136, 1
    %p140 = scmp.eq.s32.totalorder %s18, 1
    %p141 = scmp.ne.s32.totalorder %s136, %s138
    %p142 = scmp.eq.s32.totalorder %s18, 0
    %p143 = por %p141, %p142
    %p144 = scmp.ne.s32.totalorder %s136, %s138
    %p145 = scmp.eq.s32.totalorder %s23, 1
    %p146 = por %p144, %p145
    %p147 = scmp.ne.s32.totalorder %s138, %s139
    %p148 = scmp.eq.s32.totalorder %s23, 0
    %p149 = por %p147, %p148
    %p150 = scmp.ne.s32.totalorder %s138, %s139
    %p151 = scmp.eq.s32.totalorder %s24, 1
    %p152 = por %p150, %p151
    %p154 = scmp.ne.s32.totalorder %s139, %s153
    %p155 = scmp.eq.s32.totalorder %s24, 0
    %p156 = por %p154, %p155
    %s158 = sadd.s32 %s157, 1
    %p161 = scmp.eq.s32.totalorder %s18, 1
    %p162 = scmp.ne.s32.totalorder %s157, %s159
    %p163 = scmp.eq.s32.totalorder %s18, 0
    %p164 = por %p162, %p163
    %p165 = scmp.ne.s32.totalorder %s157, %s159
    %p166 = scmp.eq.s32.totalorder %s23, 1
    %p167 = por %p165, %p166
    %p168 = scmp.ne.s32.totalorder %s159, %s160
    %p169 = scmp.eq.s32.totalorder %s23, 0
    %p170 = por %p168, %p169
    %p171 = scmp.ne.s32.totalorder %s159, %s160
    %p172 = scmp.eq.s32.totalorder %s24, 1
    %p173 = por %p171, %p172
    %p175 = scmp.ne.s32.totalorder %s160, %s174
    %p176 = scmp.eq.s32.totalorder %s24, 0
    %p177 = por %p175, %p176
    %s179 = sadd.s32 %s178, 1
    %p182 = scmp.eq.s32.totalorder %s18, 1
    %p183 = scmp.ne.s32.totalorder %s178, %s180
    %p184 = scmp.eq.s32.totalorder %s18, 0
    %p185 = por %p183, %p184
    %p186 = scmp.ne.s32.totalorder %s178, %s180
    %p187 = scmp.eq.s32.totalorder %s23, 1
    %p188 = por %p186, %p187
    %p189 = scmp.ne.s32.totalorder %s180, %s181
    %p190 = scmp.eq.s32.totalorder %s23, 0
    %p191 = por %p189, %p190
    %p192 = scmp.ne.s32.totalorder %s180, %s181
    %p193 = scmp.eq.s32.totalorder %s24, 1
    %p194 = por %p192, %p193
    %p196 = scmp.ne.s32.totalorder %s181, %s195
    %p197 = scmp.eq.s32.totalorder %s24, 0
    %p198 = por %p196, %p197
    %s200 = sadd.s32 %s199, 1
    %p203 = scmp.eq.s32.totalorder %s18, 1
    %p204 = scmp.ne.s32.totalorder %s199, %s201
    %p205 = scmp.eq.s32.totalorder %s18, 0
    %p206 = por %p204, %p205
    %p207 = scmp.ne.s32.totalorder %s199, %s201
    %p208 = scmp.eq.s32.totalorder %s23, 1
    %p209 = por %p207, %p208
    %p210 = scmp.ne.s32.totalorder %s201, %s202
    %p211 = scmp.eq.s32.totalorder %s23, 0
    %p212 = por %p210, %p211
    %p213 = scmp.ne.s32.totalorder %s201, %s202
    %p214 = scmp.eq.s32.totalorder %s24, 1
    %p215 = por %p213, %p214
    %p217 = scmp.ne.s32.totalorder %s202, %s216
    %p218 = scmp.eq.s32.totalorder %s24, 0
    %p219 = por %p217, %p218
    %s221 = sadd.s32 %s220, 1
    %p224 = scmp.eq.s32.totalorder %s18, 1
    %p225 = scmp.ne.s32.totalorder %s220, %s222
    %p226 = scmp.eq.s32.totalorder %s18, 0
    %p227 = por %p225, %p226
    %p228 = scmp.ne.s32.totalorder %s220, %s222
    %p229 = scmp.eq.s32.totalorder %s23, 1
    %p230 = por %p228, %p229
    %p231 = scmp.ne.s32.totalorder %s222, %s223
    %p232 = scmp.eq.s32.totalorder %s23, 0
    %p233 = por %p231, %p232
    %p234 = scmp.ne.s32.totalorder %s222, %s223
    %p235 = scmp.eq.s32.totalorder %s24, 1
    %p236 = por %p234, %p235
    %p238 = scmp.ne.s32.totalorder %s223, %s237
    %p239 = scmp.eq.s32.totalorder %s24, 0
    %p240 = por %p238, %p239
    %s242 = sadd.s32 %s241, 1
    %p245 = scmp.eq.s32.totalorder %s18, 1
    %p246 = scmp.ne.s32.totalorder %s241, %s243
    %p247 = scmp.eq.s32.totalorder %s18, 0
    %p248 = por %p246, %p247
    %p249 = scmp.ne.s32.totalorder %s241, %s243
    %p250 = scmp.eq.s32.totalorder %s23, 1
    %p251 = por %p249, %p250
    %p252 = scmp.ne.s32.totalorder %s243, %s244
    %p253 = scmp.eq.s32.totalorder %s23, 0
    %p254 = por %p252, %p253
    %p255 = scmp.ne.s32.totalorder %s243, %s244
    %p256 = scmp.eq.s32.totalorder %s24, 1
    %p257 = por %p255, %p256
    %p259 = scmp.ne.s32.totalorder %s244, %s258
    %p260 = scmp.eq.s32.totalorder %s24, 0
    %p261 = por %p259, %p260
    %s263 = sadd.s32 %s262, 1
    %p266 = scmp.eq.s32.totalorder %s18, 1
    %p267 = scmp.ne.s32.totalorder %s262, %s264
    %p268 = scmp.eq.s32.totalorder %s18, 0
    %p269 = por %p267, %p268
    %p270 = scmp.ne.s32.totalorder %s262, %s264
    %p271 = scmp.eq.s32.totalorder %s23, 1
    %p272 = por %p270, %p271
    %p273 = scmp.ne.s32.totalorder %s264, %s265
    %p274 = scmp.eq.s32.totalorder %s23, 0
    %p275 = por %p273, %p274
    %p276 = scmp.ne.s32.totalorder %s264, %s265
    %p277 = scmp.eq.s32.totalorder %s24, 1
    %p278 = por %p276, %p277
    %p280 = scmp.ne.s32.totalorder %s265, %s279
    %p281 = scmp.eq.s32.totalorder %s24, 0
    %p282 = por %p280, %p281
    %s283 = ssub.s32 %s18, %s25
    %p284 = scmp.eq.s32.totalorder %s283, 0
    %s286 = sadd.s32 %s285, 1
    %s287 = scalar_select %p284, %s285, %s286
    %p290 = pneg %p284
    %p291 = scmp.eq.s32.totalorder %s18, 1
    %p292 = por %p290, %p291
    %p293 = scmp.ne.s32.totalorder %s285, %s288
    %p294 = scmp.eq.s32.totalorder %s18, 0
    %p295 = por %p293, %p294
    %p296 = scmp.ne.s32.totalorder %s285, %s288
    %p297 = scmp.eq.s32.totalorder %s23, 1
    %p298 = por %p296, %p297
    %p299 = scmp.ne.s32.totalorder %s288, %s289
    %p300 = scmp.eq.s32.totalorder %s23, 0
    %p301 = por %p299, %p300
    %p302 = scmp.ne.s32.totalorder %s288, %s289
    %p303 = scmp.eq.s32.totalorder %s24, 1
    %p304 = por %p302, %p303
    %p306 = scmp.ne.s32.totalorder %s289, %s305
    %p307 = scmp.eq.s32.totalorder %s24, 0
    %p308 = por %p306, %p307
    %p309 = scmp.le.s32.totalorder 1, %s18
    %p310 = scmp.lt.s32.totalorder %s18, 3
    %p311 = pnand %p309, %p310
    %p312 = pneg %p311
    // Predicated region
    $region9: #{residual_dense_block_5c.1} parent=5 // pred_check
      _
    $region10: #{residual_dense_block_5c.1} parent=5 // pred_check_branch
      %314 = sbr.rel (%p311) target = $region12
    $region11: #{residual_dense_block_5c.1} parent=5 // pred_region
      %s315 = ssub.s32 %s18, 1
      // Predicated region
      $region13: #{residual_dense_block_5c.1} parent=11 // pred_check
        %p316 = pneg %p65
      $region14: #{residual_dense_block_5c.1} parent=11 // pred_check_branch
        %318 = sbr.rel (%p316) target = $region16
      $region15: #{residual_dense_block_5c.1} parent=11 // pred_region
        _
      $region16: #{residual_dense_block_5c.1} parent=11 // pred_fallthru
        _
      // Predicated region
      $region17: #{residual_dense_block_5c.1} parent=11 // pred_check
        %p319 = pneg %p86
      $region18: #{residual_dense_block_5c.1} parent=11 // pred_check_branch
        %321 = sbr.rel (%p319) target = $region20
      $region19: #{residual_dense_block_5c.1} parent=11 // pred_region
        _
      $region20: #{residual_dense_block_5c.1} parent=11 // pred_fallthru
        _
      // Predicated region
      $region21: #{residual_dense_block_5c.1} parent=11 // pred_check
        %p322 = pneg %p107
      $region22: #{residual_dense_block_5c.1} parent=11 // pred_check_branch
        %324 = sbr.rel (%p322) target = $region24
      $region23: #{residual_dense_block_5c.1} parent=11 // pred_region
        _
      $region24: #{residual_dense_block_5c.1} parent=11 // pred_fallthru
        _
      // Predicated region
      $region25: #{residual_dense_block_5c.1} parent=11 // pred_check
        %p325 = pneg %p128
      $region26: #{residual_dense_block_5c.1} parent=11 // pred_check_branch
        %327 = sbr.rel (%p325) target = $region28
      $region27: #{residual_dense_block_5c.1} parent=11 // pred_region
        _
      $region28: #{residual_dense_block_5c.1} parent=11 // pred_fallthru
        _
      // Predicated region
      $region29: #{residual_dense_block_5c.1} parent=11 // pred_check
        %p328 = pneg %p149
      $region30: #{residual_dense_block_5c.1} parent=11 // pred_check_branch
        %330 = sbr.rel (%p328) target = $region32
      $region31: #{residual_dense_block_5c.1} parent=11 // pred_region
        _
      $region32: #{residual_dense_block_5c.1} parent=11 // pred_fallthru
        _
      // Predicated region
      $region33: #{residual_dense_block_5c.1} parent=11 // pred_check
        %p331 = pneg %p170
      $region34: #{residual_dense_block_5c.1} parent=11 // pred_check_branch
        %333 = sbr.rel (%p331) target = $region36
      $region35: #{residual_dense_block_5c.1} parent=11 // pred_region
        _
      $region36: #{residual_dense_block_5c.1} parent=11 // pred_fallthru
        _
      // Predicated region
      $region37: #{residual_dense_block_5c.1} parent=11 // pred_check
        %p334 = pneg %p191
      $region38: #{residual_dense_block_5c.1} parent=11 // pred_check_branch
        %336 = sbr.rel (%p334) target = $region40
      $region39: #{residual_dense_block_5c.1} parent=11 // pred_region
        _
      $region40: #{residual_dense_block_5c.1} parent=11 // pred_fallthru
        _
      // Predicated region
      $region41: #{residual_dense_block_5c.1} parent=11 // pred_check
        %p337 = pneg %p212
      $region42: #{residual_dense_block_5c.1} parent=11 // pred_check_branch
        %339 = sbr.rel (%p337) target = $region44
      $region43: #{residual_dense_block_5c.1} parent=11 // pred_region
        _
      $region44: #{residual_dense_block_5c.1} parent=11 // pred_fallthru
        _
      // Predicated region
      $region45: #{residual_dense_block_5c.1} parent=11 // pred_check
        %p340 = pneg %p233
      $region46: #{residual_dense_block_5c.1} parent=11 // pred_check_branch
        %342 = sbr.rel (%p340) target = $region48
      $region47: #{residual_dense_block_5c.1} parent=11 // pred_region
        _
      $region48: #{residual_dense_block_5c.1} parent=11 // pred_fallthru
        _
      // Predicated region
      $region49: #{residual_dense_block_5c.1} parent=11 // pred_check
        %p343 = pneg %p254
      $region50: #{residual_dense_block_5c.1} parent=11 // pred_check_branch
        %345 = sbr.rel (%p343) target = $region52
      $region51: #{residual_dense_block_5c.1} parent=11 // pred_region
        _
      $region52: #{residual_dense_block_5c.1} parent=11 // pred_fallthru
        _
      // Predicated region
      $region53: #{residual_dense_block_5c.1} parent=11 // pred_check
        %p346 = pneg %p275
      $region54: #{residual_dense_block_5c.1} parent=11 // pred_check_branch
        %348 = sbr.rel (%p346) target = $region56
      $region55: #{residual_dense_block_5c.1} parent=11 // pred_region
        _
      $region56: #{residual_dense_block_5c.1} parent=11 // pred_fallthru
        _
    $region12: #{residual_dense_block_5c.1} parent=5 // pred_fallthru
      _
    %p349 = scmp.lt.s32.totalorder %s18, 2
    // Predicated region
    $region57: #{residual_dense_block_5c.1} parent=5 // pred_check
      %p350 = pneg %p349
    $region58: #{residual_dense_block_5c.1} parent=5 // pred_check_branch
      %352 = sbr.rel (%p350) target = $region60
    $region59: #{residual_dense_block_5c.1} parent=5 // pred_region
      // Predicated region
      $region61: #{residual_dense_block_5c.1} parent=59 // pred_check
        %p353 = pneg %p38
      $region62: #{residual_dense_block_5c.1} parent=59 // pred_check_branch
        %355 = sbr.rel (%p353) target = $region64
      $region63: #{residual_dense_block_5c.1} parent=59 // pred_region
        %p356 = scmp.lt.s32.totalorder %s18, 1
        %s357 = scalar_select %p356, %s18, 1
        %s358 = smul.addr %s357, 8
        %s359 = smul.addr %s358, 8
        %s360 = scalar_lea.vmem %s0, %s359
      $region64: #{residual_dense_block_5c.1} parent=59 // pred_fallthru
        _
    $region60: #{residual_dense_block_5c.1} parent=5 // pred_fallthru
      _
    %p361 = scmp.le.s32.totalorder 1, %s18
    %p362 = scmp.lt.s32.totalorder %s18, 3
    %p363 = pnand %p361, %p362
    %p364 = pneg %p363
    // Predicated region
    $region65: #{residual_dense_block_5c.1} parent=5 // pred_check
      _
    $region66: #{residual_dense_block_5c.1} parent=5 // pred_check_branch
      %366 = sbr.rel (%p363) target = $region68
    $region67: #{residual_dense_block_5c.1} parent=5 // pred_region
      %s367 = ssub.s32 %s18, 1
      %p368 = scmp.lt.s32.totalorder %s23, 1
      %s369 = scalar_select %p368, %s23, 1
      %s370 = smul.addr %s369, 8
      %s371 = smul.addr %s370, 8
      %s372 = scalar_lea.vmem %s0, %s371
      %p373 = pneg %p44
      %p374 = pneg %p41
      %p375 = pneg %p65
      %p376 = pneg %p62
      %p377 = pneg %p86
      %p378 = pneg %p83
      %p379 = pneg %p107
      %p380 = pneg %p104
      %p381 = pneg %p128
      %p382 = pneg %p125
      %p383 = pneg %p149
      %p384 = pneg %p146
      %p385 = pneg %p170
      %p386 = pneg %p167
      %p387 = pneg %p191
      %p388 = pneg %p188
      %p389 = pneg %p212
      %p390 = pneg %p209
      %p391 = pneg %p233
      %p392 = pneg %p230
      %p393 = pneg %p254
      %p394 = pneg %p251
      %p395 = pneg %p275
      %p396 = pneg %p272
      %p397 = pneg %p301
      %p398 = pneg %p298
      %p399 = scmp.lt.s32.totalorder %s23, 1
      %s400 = scalar_select %p399, %s23, 1
      %s401 = smul.addr %s400, 8
      %s402 = smul.addr %s401, 8
      %s403 = scalar_lea.vmem %s12, %s402
      %p404 = scmp.lt.s32.totalorder %s23, 1
      %s405 = scalar_select %p404, %s23, 1
      %s406 = smul.addr %s405, 8
      %s407 = smul.addr %s406, 8
      %s408 = scalar_lea.vmem %s0, %s407
      %p409 = scmp.lt.s32.totalorder %s23, 1
      %s410 = scalar_select %p409, %s23, 1
      %s411 = smul.addr %s410, 8
      %s412 = smul.addr %s411, 8
      %s413 = scalar_lea.vmem %s12, %s412
      %v415 = vlaneseq
      %v416 = vand.u32 %v415, 127
      %v417 = vadd.s32 %v416, 128
      %vm418 = vcmp.lt.s32.totalorder %v416, 0
      %v419 = vsub.s32 0, %v416
      %v420 = vsel %vm418, %v419, %v416
      %v421 = vshrl.u32 %v420, 4
      %v422 = vand.u32 %v420, 15
      %v423 = vsub.s32 0, %v422
      %v424 = vsel %vm418, %v423, %v422
      %vm425 = vcmp.lt.s32.totalorder %v417, 0
      %v426 = vsub.s32 0, %v417
      %v427 = vsel %vm425, %v426, %v417
      %v428 = vshrl.u32 %v427, 4
      %v429 = vand.u32 %v427, 15
      %v430 = vsub.s32 0, %v429
      %v431 = vsel %vm425, %v430, %v429
      %vm432 = vcmp.ne.s32.totalorder %v424, 0
      %vm433 = vcmp.ne.s32.totalorder %v431, 0
      %vm434 = vcmp.lt.s32.totalorder %v424, 0
      %vm435 = vcmp.lt.s32.totalorder %v431, 0
      %vm436 = vmand %vm434, %vm432
      %vm437 = vmand %vm435, %vm433
      %v438 = vadd.s32 %v424, 16
      %v439 = vadd.s32 %v431, 16
      %v440 = vsel %vm436, %v438, %v424
      %v441 = vsel %vm437, %v439, %v431
      %vm442 = vcmp.ne.s32.totalorder %v440, 0
      %vm443 = vcmp.ne.s32.totalorder %v441, 0
      %v444 = vsel %vm442, 1, 0
      %v445 = vsel %vm443, 1, 0
      %v446 = vcvt.s32.f32 %v444
      %v447 = vcvt.s32.f32 %v445
      %vm448 = vcmp.ne.s32.totalorder %v440, 15
      %vm449 = vcmp.ne.s32.totalorder %v441, 15
      %v450 = vsel %vm448, 1, 0
      %v451 = vsel %vm449, 1, 0
      %v452 = vcvt.s32.f32 %v450
      %v453 = vcvt.s32.f32 %v451
      %454 = vst [vmem:[#allocation2] sm:$0xff] 0
      %455 = vst [vmem:[#allocation2 + $0x8] sm:$0xff] 0
      %456 = vst [vmem:[#allocation2 + $0x10] sm:$0xff] 0
      %457 = vst [vmem:[#allocation2 + $0x18] sm:$0xff] 0
      %458 = vst [vmem:[#allocation2 + $0x20] sm:$0xff] 0
      %459 = vst [vmem:[#allocation2 + $0x28] sm:$0xff] 0
      %460 = vst [vmem:[#allocation2 + $0x30] sm:$0xff] 0
      %461 = vst [vmem:[#allocation2 + $0x38] sm:$0xff] 0
      %462 = vst [vmem:[#allocation2 + $0x40] sm:$0xff] 0
      %463 = vst [vmem:[#allocation2 + $0x48] sm:$0xff] 0
      %464 = vst [vmem:[#allocation2 + $0x50] sm:$0xff] 0
      %465 = vst [vmem:[#allocation2 + $0x58] sm:$0xff] 0
      %466 = vst [vmem:[#allocation2 + $0x60] sm:$0xff] 0
      %467 = vst [vmem:[#allocation2 + $0x68] sm:$0xff] 0
      %468 = vst [vmem:[#allocation2 + $0x70] sm:$0xff] 0
      %469 = vst [vmem:[#allocation2 + $0x78] sm:$0xff] 0
      %470 = vst [vmem:[#allocation2 + $0x80] sm:$0xff] 0
      %471 = vst [vmem:[#allocation2 + $0x88] sm:$0xff] 0
      %472 = vst [vmem:[#allocation2 + $0x90] sm:$0xff] 0
      %473 = vst [vmem:[#allocation2 + $0x98] sm:$0xff] 0
      %474 = vst [vmem:[#allocation2 + $0xa0] sm:$0xff] 0
      %475 = vst [vmem:[#allocation2 + $0xa8] sm:$0xff] 0
      %476 = vst [vmem:[#allocation2 + $0xb0] sm:$0xff] 0
      %477 = vst [vmem:[#allocation2 + $0xb8] sm:$0xff] 0
      %v478 = vld [vmem:[%s408] sm:$0xff]
      %v479 = vld [vmem:[%s408 + $0x8] sm:$0xff]
      %v480 = vld [vmem:[%s408 + $0x10] sm:$0xff]
      %v481 = vld [vmem:[%s408 + $0x18] sm:$0xff]
      %v482 = vld [vmem:[%s408 + $0x20] sm:$0xff]
      %v483 = vld [vmem:[%s408 + $0x28] sm:$0xff]
      %v484 = vld [vmem:[%s408 + $0x30] sm:$0xff]
      %v485 = vld [vmem:[%s408 + $0x38] sm:$0xff]
      %v486 = vpack.c.bf16 %v480, %v478
      %v487 = vpack.c.bf16 %v481, %v479
      %v488 = vpack.c.bf16 %v484, %v482
      %v489 = vpack.c.bf16 %v485, %v483
      %v494 = vunpack.c.l.b16 %v486
      %v495 = vunpack.c.l.b16 %v487
      %v496 = vunpack.c.h.b16 %v486
      %v497 = vunpack.c.h.b16 %v487
      %v498 = vunpack.c.l.b16 %v488
      %v499 = vunpack.c.l.b16 %v489
      %v500 = vunpack.c.h.b16 %v488
      %v501 = vunpack.c.h.b16 %v489
      %v502 = vpack.c.b16 %v495, %v494
      %v503 = vpack.c.b16 %v497, %v496
      %v504 = vpack.c.b16 %v499, %v498
      %v505 = vpack.c.b16 %v501, %v500
      %510 = vst [vmem:[#allocation2 + $0x4] sm:$0xff] %v502
      %511 = vst [vmem:[#allocation2 + $0x14] sm:$0xff] %v503
      %512 = vst [vmem:[#allocation2 + $0x24] sm:$0xff] %v504
      %513 = vst [vmem:[#allocation2 + $0x34] sm:$0xff] %v505
      %v514 = vld [vmem:[#allocation2] sm:$0xff]
      %v515 = vld [vmem:[#allocation2 + $0x8] sm:$0xf]
      %v516 = vld [vmem:[#allocation2 + $0x10] sm:$0xff]
      %v517 = vld [vmem:[#allocation2 + $0x18] sm:$0xf]
      %v518 = vld [vmem:[#allocation2 + $0x20] sm:$0xff]
      %v519 = vld [vmem:[#allocation2 + $0x28] sm:$0xf]
      %v520 = vld [vmem:[#allocation2 + $0x30] sm:$0xff]
      %v521 = vld [vmem:[#allocation2 + $0x38] sm:$0xf]
      %v522 = vld [vmem:[%s1] sm:$0xf]
      %v523 = vld [vmem:[%s1 + $0x4] sm:$0xf]
      %s524 = scalar_lea.vmem %s1, 8
      %v525 = vld [vmem:[%s524] sm:$0xf]
      %v526 = vld [vmem:[%s524 + $0x4] sm:$0xf]
      %s527 = scalar_lea.vmem %s1, 16
      %v528 = vld [vmem:[%s527] sm:$0xf]
      %v529 = vld [vmem:[%s527 + $0x4] sm:$0xf]
      %s530 = scalar_lea.vmem %s1, 24
      %v531 = vld [vmem:[%s530] sm:$0xf]
      %v532 = vld [vmem:[%s530 + $0x4] sm:$0xf]
      %v535 = vunpack.c.l.b16 %v531
      %v536 = vunpack.c.l.b16 %v532
      %v537 = vpack.c.b16 %v536, %v535
      %v546 = vunpack.c.l.b16 %v514
      %v547 = vunpack.c.h.b16 %v514
      %v548 = vunpack.c.l.b16 %v515
      %v549 = vunpack.c.l.b16 %v516
      %v550 = vunpack.c.h.b16 %v516
      %v551 = vunpack.c.l.b16 %v517
      %v552 = vunpack.c.l.b16 %v518
      %v553 = vunpack.c.h.b16 %v518
      %v554 = vunpack.c.l.b16 %v519
      %v555 = vunpack.c.l.b16 %v520
      %v556 = vunpack.c.h.b16 %v520
      %v557 = vunpack.c.l.b16 %v521
      %v558 = vpack.c.b16 %v549, %v546
      %v559 = vpack.c.b16 %v550, %v547
      %v560 = vpack.c.b16 %v551, %v548
      %v561 = vpack.c.b16 %v555, %v552
      %v562 = vpack.c.b16 %v556, %v553
      %v563 = vpack.c.b16 %v557, %v554
      %564 = vrot.lane.b32.xlu0 %v558, 1
      %v565 = vpop.permute.xlu0 %564
      %566 = vrot.lane.b32.xlu0 %v559, 1
      %v567 = vpop.permute.xlu0 %566
      %568 = vrot.lane.b32.xlu0 %v560, 1
      %v569 = vpop.permute.xlu0 %568
      %570 = vrot.lane.b32.xlu0 %v561, 1
      %v571 = vpop.permute.xlu0 %570
      %572 = vrot.lane.b32.xlu0 %v562, 1
      %v573 = vpop.permute.xlu0 %572
      %574 = vrot.lane.b32.xlu0 %v563, 1
      %v575 = vpop.permute.xlu0 %574
      %vm576 = vcmask 7168
      %v577 = vsel %vm576, %v565, %v567
      %v578 = vsel %vm576, %v567, %v569
      %v579 = vsel %vm576, %v571, %v573
      %v580 = vsel %vm576, %v573, %v575
      %vm585 = vcmask 261120
      %v587 = vsel %vm585, %v537, 0
      %589 = vmatprep.subr.bf16.mxu0 0
      %590 = vmatpush1.bf16.msra.mxu0 0
      %591 = vmatprep.subr.bf16.mxu0 0
      %592 = vmatpush1.bf16.msra.mxu0 0
      %593 = vmatprep.subr.bf16.mxu0 0
      %594 = vmatpush1.bf16.msra.mxu0 0
      %595 = vmatprep.subr.bf16.mxu0 0
      %596 = vmatpush1.bf16.msra.mxu0 0
      %597 = vmatprep.subr.bf16.mxu0 0
      %598 = vmatpush1.bf16.msra.mxu0 0
      %599 = vmatprep.subr.bf16.mxu0 0
      %600 = vmatpush1.bf16.msra.mxu0 0
      %601 = vmatprep.subr.bf16.mxu0 %v580
      %602 = vmatpush1.bf16.msra.mxu0 %v579
      %603 = vmatprep.subr.bf16.mxu0 %v578
      %604 = vmatpush1.bf16.msra.mxu0 %v577
      %605 = vmatprep.subr.bf16.mxu0 0
      %606 = vmatpush2.bf16.msra.mxu0 0
      %607 = vmatprep.subr.bf16.mxu0 0
      %608 = vmatpush2.bf16.msra.mxu0 0
      %609 = vmatprep.subr.bf16.mxu0 0
      %610 = vmatpush2.bf16.msra.mxu0 0
      %611 = vmatprep.subr.bf16.mxu0 0
      %612 = vmatpush2.bf16.msra.mxu0 0
      %613 = vmatprep.subr.bf16.mxu0 0
      %614 = vmatpush2.bf16.msra.mxu0 0
      %615 = vmatprep.subr.bf16.mxu0 0
      %616 = vmatpush2.bf16.msra.mxu0 0
      %617 = vmatprep.subr.bf16.mxu0 0
      %618 = vmatpush2.bf16.msra.mxu0 0
      %619 = vmatprep.subr.bf16.mxu0 0
      %620 = vmatpush2.bf16.msra.mxu0 0
      %621 = vmatprep.mubr.bf16.mxu0 0
      %622 = vmatmul.mubr.bf16.gmra.mxu0 %v587
      %v623 = vpop.f32.mrf.mxu0
      %v624 = vadd.f32 0.0, %v623
      %v625 = vpop.f32.mrf.mxu0
      %v626 = vadd.f32 0.0, %v625
      %v627 = vpop.f32.mrf.mxu0
      %v628 = vadd.f32 0.0, %v627
      %v629 = vpop.f32.mrf.mxu0
      %v630 = vadd.f32 0.0, %v629
      %631 = vdwg.mxu0
      %v634 = vunpack.c.l.b16 %v522
      %v635 = vunpack.c.l.b16 %v523
      %v636 = vpack.c.b16 %v635, %v634
      %637 = vrot.lane.b32.xlu0 %v558, 17
      %v638 = vpop.permute.xlu0 %637
      %639 = vrot.lane.b32.xlu0 %v559, 17
      %v640 = vpop.permute.xlu0 %639
      %641 = vrot.lane.b32.xlu0 %v560, 17
      %v642 = vpop.permute.xlu0 %641
      %643 = vrot.lane.b32.xlu0 %v561, 17
      %v644 = vpop.permute.xlu0 %643
      %645 = vrot.lane.b32.xlu0 %v562, 17
      %v646 = vpop.permute.xlu0 %645
      %647 = vrot.lane.b32.xlu0 %v563, 17
      %v648 = vpop.permute.xlu0 %647
      %vm649 = vcmask 138240
      %v650 = vsel %vm649, %v638, %v640
      %v651 = vsel %vm649, %v640, %v642
      %v652 = vsel %vm649, %v644, %v646
      %v653 = vsel %vm649, %v646, %v648
      %v659 = vsel %vm585, %v636, 0
      %661 = vmatprep.subr.bf16.mxu0 0
      %662 = vmatpush1.bf16.msra.mxu0 0
      %663 = vmatprep.subr.bf16.mxu0 0
      %664 = vmatpush1.bf16.msra.mxu0 0
      %665 = vmatprep.subr.bf16.mxu0 0
      %666 = vmatpush1.bf16.msra.mxu0 0
      %667 = vmatprep.subr.bf16.mxu0 0
      %668 = vmatpush1.bf16.msra.mxu0 0
      %669 = vmatprep.subr.bf16.mxu0 0
      %670 = vmatpush1.bf16.msra.mxu0 0
      %671 = vmatprep.subr.bf16.mxu0 0
      %672 = vmatpush1.bf16.msra.mxu0 0
      %673 = vmatprep.subr.bf16.mxu0 %v653
      %674 = vmatpush1.bf16.msra.mxu0 %v652
      %675 = vmatprep.subr.bf16.mxu0 %v651
      %676 = vmatpush1.bf16.msra.mxu0 %v650
      %677 = vmatprep.subr.bf16.mxu0 0
      %678 = vmatpush2.bf16.msra.mxu0 0
      %679 = vmatprep.subr.bf16.mxu0 0
      %680 = vmatpush2.bf16.msra.mxu0 0
      %681 = vmatprep.subr.bf16.mxu0 0
      %682 = vmatpush2.bf16.msra.mxu0 0
      %683 = vmatprep.subr.bf16.mxu0 0
      %684 = vmatpush2.bf16.msra.mxu0 0
      %685 = vmatprep.subr.bf16.mxu0 0
      %686 = vmatpush2.bf16.msra.mxu0 0
      %687 = vmatprep.subr.bf16.mxu0 0
      %688 = vmatpush2.bf16.msra.mxu0 0
      %689 = vmatprep.subr.bf16.mxu0 0
      %690 = vmatpush2.bf16.msra.mxu0 0
      %691 = vmatprep.subr.bf16.mxu0 0
      %692 = vmatpush2.bf16.msra.mxu0 0
      %693 = vmatprep.mubr.bf16.mxu0 0
      %694 = vmatmul.mubr.bf16.gmra.mxu0 %v659
      %v695 = vpop.f32.mrf.mxu0
      %v696 = vadd.f32 %v624, %v695
      %v697 = vpop.f32.mrf.mxu0
      %v698 = vadd.f32 %v626, %v697
      %v699 = vpop.f32.mrf.mxu0
      %v700 = vadd.f32 %v628, %v699
      %v701 = vpop.f32.mrf.mxu0
      %v702 = vadd.f32 %v630, %v701
      %703 = vdwg.mxu0
      %v704 = vld [vmem:[#allocation2 + $0x4] sm:$0xff]
      %v705 = vld [vmem:[#allocation2 + $0x14] sm:$0xff]
      %v706 = vld [vmem:[#allocation2 + $0x24] sm:$0xff]
      %v707 = vld [vmem:[#allocation2 + $0x34] sm:$0xff]
      %s708 = scalar_lea.vmem %s1, 32
      %v709 = vld [vmem:[%s708] sm:$0xf]
      %v710 = vld [vmem:[%s708 + $0x4] sm:$0xf]
      %v713 = vunpack.c.l.b16 %v709
      %v714 = vunpack.c.l.b16 %v710
      %v715 = vpack.c.b16 %v714, %v713
      %v720 = vunpack.c.l.b16 %v704
      %v721 = vunpack.c.h.b16 %v704
      %v722 = vunpack.c.l.b16 %v705
      %v723 = vunpack.c.h.b16 %v705
      %v724 = vunpack.c.l.b16 %v706
      %v725 = vunpack.c.h.b16 %v706
      %v726 = vunpack.c.l.b16 %v707
      %v727 = vunpack.c.h.b16 %v707
      %v728 = vpack.c.b16 %v722, %v720
      %v729 = vpack.c.b16 %v723, %v721
      %v730 = vpack.c.b16 %v726, %v724
      %v731 = vpack.c.b16 %v727, %v725
      %v737 = vsel %vm585, %v715, 0
      %739 = vmatprep.subr.bf16.mxu0 0
      %740 = vmatpush1.bf16.msra.mxu0 0
      %741 = vmatprep.subr.bf16.mxu0 0
      %742 = vmatpush1.bf16.msra.mxu0 0
      %743 = vmatprep.subr.bf16.mxu0 0
      %744 = vmatpush1.bf16.msra.mxu0 0
      %745 = vmatprep.subr.bf16.mxu0 0
      %746 = vmatpush1.bf16.msra.mxu0 0
      %747 = vmatprep.subr.bf16.mxu0 0
      %748 = vmatpush1.bf16.msra.mxu0 0
      %749 = vmatprep.subr.bf16.mxu0 0
      %750 = vmatpush1.bf16.msra.mxu0 0
      %751 = vmatprep.subr.bf16.mxu0 %v731
      %752 = vmatpush1.bf16.msra.mxu0 %v730
      %753 = vmatprep.subr.bf16.mxu0 %v729
      %754 = vmatpush1.bf16.msra.mxu0 %v728
      %755 = vmatprep.subr.bf16.mxu0 0
      %756 = vmatpush2.bf16.msra.mxu0 0
      %757 = vmatprep.subr.bf16.mxu0 0
      %758 = vmatpush2.bf16.msra.mxu0 0
      %759 = vmatprep.subr.bf16.mxu0 0
      %760 = vmatpush2.bf16.msra.mxu0 0
      %761 = vmatprep.subr.bf16.mxu0 0
      %762 = vmatpush2.bf16.msra.mxu0 0
      %763 = vmatprep.subr.bf16.mxu0 0
      %764 = vmatpush2.bf16.msra.mxu0 0
      %765 = vmatprep.subr.bf16.mxu0 0
      %766 = vmatpush2.bf16.msra.mxu0 0
      %767 = vmatprep.subr.bf16.mxu0 0
      %768 = vmatpush2.bf16.msra.mxu0 0
      %769 = vmatprep.subr.bf16.mxu0 0
      %770 = vmatpush2.bf16.msra.mxu0 0
      %771 = vmatprep.mubr.bf16.mxu0 0
      %772 = vmatmul.mubr.bf16.gmra.mxu0 %v737
      %v773 = vpop.f32.mrf.mxu0
      %v774 = vadd.f32 0.0, %v773
      %v775 = vpop.f32.mrf.mxu0
      %v776 = vadd.f32 0.0, %v775
      %v777 = vpop.f32.mrf.mxu0
      %v778 = vadd.f32 0.0, %v777
      %v779 = vpop.f32.mrf.mxu0
      %v780 = vadd.f32 0.0, %v779
      %781 = vdwg.mxu0
      %v784 = vunpack.c.l.b16 %v525
      %v785 = vunpack.c.l.b16 %v526
      %v786 = vpack.c.b16 %v785, %v784
      %787 = vrot.lane.b32.xlu0 %v558, 16
      %v788 = vpop.permute.xlu0 %787
      %789 = vrot.lane.b32.xlu0 %v559, 16
      %v790 = vpop.permute.xlu0 %789
      %791 = vrot.lane.b32.xlu0 %v560, 16
      %v792 = vpop.permute.xlu0 %791
      %793 = vrot.lane.b32.xlu0 %v561, 16
      %v794 = vpop.permute.xlu0 %793
      %795 = vrot.lane.b32.xlu0 %v562, 16
      %v796 = vpop.permute.xlu0 %795
      %797 = vrot.lane.b32.xlu0 %v563, 16
      %v798 = vpop.permute.xlu0 %797
      %vm799 = vcmask 130048
      %v800 = vsel %vm799, %v788, %v790
      %v801 = vsel %vm799, %v790, %v792
      %v802 = vsel %vm799, %v794, %v796
      %v803 = vsel %vm799, %v796, %v798
      %v809 = vsel %vm585, %v786, 0
      %811 = vmatprep.subr.bf16.mxu0 0
      %812 = vmatpush1.bf16.msra.mxu0 0
      %813 = vmatprep.subr.bf16.mxu0 0
      %814 = vmatpush1.bf16.msra.mxu0 0
      %815 = vmatprep.subr.bf16.mxu0 0
      %816 = vmatpush1.bf16.msra.mxu0 0
      %817 = vmatprep.subr.bf16.mxu0 0
      %818 = vmatpush1.bf16.msra.mxu0 0
      %819 = vmatprep.subr.bf16.mxu0 0
      %820 = vmatpush1.bf16.msra.mxu0 0
      %821 = vmatprep.subr.bf16.mxu0 0
      %822 = vmatpush1.bf16.msra.mxu0 0
      %823 = vmatprep.subr.bf16.mxu0 %v803
      %824 = vmatpush1.bf16.msra.mxu0 %v802
      %825 = vmatprep.subr.bf16.mxu0 %v801
      %826 = vmatpush1.bf16.msra.mxu0 %v800
      %827 = vmatprep.subr.bf16.mxu0 0
      %828 = vmatpush2.bf16.msra.mxu0 0
      %829 = vmatprep.subr.bf16.mxu0 0
      %830 = vmatpush2.bf16.msra.mxu0 0
      %831 = vmatprep.subr.bf16.mxu0 0
      %832 = vmatpush2.bf16.msra.mxu0 0
      %833 = vmatprep.subr.bf16.mxu0 0
      %834 = vmatpush2.bf16.msra.mxu0 0
      %835 = vmatprep.subr.bf16.mxu0 0
      %836 = vmatpush2.bf16.msra.mxu0 0
      %837 = vmatprep.subr.bf16.mxu0 0
      %838 = vmatpush2.bf16.msra.mxu0 0
      %839 = vmatprep.subr.bf16.mxu0 0
      %840 = vmatpush2.bf16.msra.mxu0 0
      %841 = vmatprep.subr.bf16.mxu0 0
      %842 = vmatpush2.bf16.msra.mxu0 0
      %843 = vmatprep.mubr.bf16.mxu0 0
      %844 = vmatmul.mubr.bf16.gmra.mxu0 %v809
      %v845 = vpop.f32.mrf.mxu0
      %v846 = vadd.f32 %v774, %v845
      %v847 = vpop.f32.mrf.mxu0
      %v848 = vadd.f32 %v776, %v847
      %v849 = vpop.f32.mrf.mxu0
      %v850 = vadd.f32 %v778, %v849
      %v851 = vpop.f32.mrf.mxu0
      %v852 = vadd.f32 %v780, %v851
      %853 = vdwg.mxu0
      %v854 = vld [vmem:[#allocation2 + $0x4] sm:$0xff]
      %v855 = vld [vmem:[#allocation2 + $0xc] sm:$0xf]
      %v856 = vld [vmem:[#allocation2 + $0x14] sm:$0xff]
      %v857 = vld [vmem:[#allocation2 + $0x1c] sm:$0xf]
      %v858 = vld [vmem:[#allocation2 + $0x24] sm:$0xff]
      %v859 = vld [vmem:[#allocation2 + $0x2c] sm:$0xf]
      %v860 = vld [vmem:[#allocation2 + $0x34] sm:$0xff]
      %v861 = vld [vmem:[#allocation2 + $0x3c] sm:$0xf]
      %s862 = scalar_lea.vmem %s1, 40
      %v863 = vld [vmem:[%s862] sm:$0xf]
      %v864 = vld [vmem:[%s862 + $0x4] sm:$0xf]
      %v867 = vunpack.c.l.b16 %v863
      %v868 = vunpack.c.l.b16 %v864
      %v869 = vpack.c.b16 %v868, %v867
      %v878 = vunpack.c.l.b16 %v854
      %v879 = vunpack.c.h.b16 %v854
      %v880 = vunpack.c.l.b16 %v855
      %v881 = vunpack.c.l.b16 %v856
      %v882 = vunpack.c.h.b16 %v856
      %v883 = vunpack.c.l.b16 %v857
      %v884 = vunpack.c.l.b16 %v858
      %v885 = vunpack.c.h.b16 %v858
      %v886 = vunpack.c.l.b16 %v859
      %v887 = vunpack.c.l.b16 %v860
      %v888 = vunpack.c.h.b16 %v860
      %v889 = vunpack.c.l.b16 %v861
      %v890 = vpack.c.b16 %v881, %v878
      %v891 = vpack.c.b16 %v882, %v879
      %v892 = vpack.c.b16 %v883, %v880
      %v893 = vpack.c.b16 %v887, %v884
      %v894 = vpack.c.b16 %v888, %v885
      %v895 = vpack.c.b16 %v889, %v886
      %896 = vrot.lane.b32.xlu0 %v890, 127
      %v897 = vpop.permute.xlu0 %896
      %898 = vrot.lane.b32.xlu0 %v891, 127
      %v899 = vpop.permute.xlu0 %898
      %900 = vrot.lane.b32.xlu0 %v892, 127
      %v901 = vpop.permute.xlu0 %900
      %902 = vrot.lane.b32.xlu0 %v893, 127
      %v903 = vpop.permute.xlu0 %902
      %904 = vrot.lane.b32.xlu0 %v894, 127
      %v905 = vpop.permute.xlu0 %904
      %906 = vrot.lane.b32.xlu0 %v895, 127
      %v907 = vpop.permute.xlu0 %906
      %vm908 = vcmask 1039360
      %v909 = vsel %vm908, %v897, %v899
      %v910 = vsel %vm908, %v899, %v901
      %v911 = vsel %vm908, %v903, %v905
      %v912 = vsel %vm908, %v905, %v907
      %v918 = vsel %vm585, %v869, 0
      %920 = vmatprep.subr.bf16.mxu0 0
      %921 = vmatpush1.bf16.msra.mxu0 0
      %922 = vmatprep.subr.bf16.mxu0 0
      %923 = vmatpush1.bf16.msra.mxu0 0
      %924 = vmatprep.subr.bf16.mxu0 0
      %925 = vmatpush1.bf16.msra.mxu0 0
      %926 = vmatprep.subr.bf16.mxu0 0
      %927 = vmatpush1.bf16.msra.mxu0 0
      %928 = vmatprep.subr.bf16.mxu0 0
      %929 = vmatpush1.bf16.msra.mxu0 0
      %930 = vmatprep.subr.bf16.mxu0 0
      %931 = vmatpush1.bf16.msra.mxu0 0
      %932 = vmatprep.subr.bf16.mxu0 %v912
      %933 = vmatpush1.bf16.msra.mxu0 %v911
      %934 = vmatprep.subr.bf16.mxu0 %v910
      %935 = vmatpush1.bf16.msra.mxu0 %v909
      %936 = vmatprep.subr.bf16.mxu0 0
      %937 = vmatpush2.bf16.msra.mxu0 0
      %938 = vmatprep.subr.bf16.mxu0 0
      %939 = vmatpush2.bf16.msra.mxu0 0
      %940 = vmatprep.subr.bf16.mxu0 0
      %941 = vmatpush2.bf16.msra.mxu0 0
      %942 = vmatprep.subr.bf16.mxu0 0
      %943 = vmatpush2.bf16.msra.mxu0 0
      %944 = vmatprep.subr.bf16.mxu0 0
      %945 = vmatpush2.bf16.msra.mxu0 0
      %946 = vmatprep.subr.bf16.mxu0 0
      %947 = vmatpush2.bf16.msra.mxu0 0
      %948 = vmatprep.subr.bf16.mxu0 0
      %949 = vmatpush2.bf16.msra.mxu0 0
      %950 = vmatprep.subr.bf16.mxu0 0
      %951 = vmatpush2.bf16.msra.mxu0 0
      %952 = vmatprep.mubr.bf16.mxu0 0
      %953 = vmatmul.mubr.bf16.gmra.mxu0 %v918
      %v954 = vpop.f32.mrf.mxu0
      %v955 = vadd.f32 0.0, %v954
      %v956 = vpop.f32.mrf.mxu0
      %v957 = vadd.f32 0.0, %v956
      %v958 = vpop.f32.mrf.mxu0
      %v959 = vadd.f32 0.0, %v958
      %v960 = vpop.f32.mrf.mxu0
      %v961 = vadd.f32 0.0, %v960
      %962 = vdwg.mxu0
      %v965 = vunpack.c.l.b16 %v528
      %v966 = vunpack.c.l.b16 %v529
      %v967 = vpack.c.b16 %v966, %v965
      %968 = vrot.lane.b32.xlu0 %v558, 15
      %v969 = vpop.permute.xlu0 %968
      %970 = vrot.lane.b32.xlu0 %v559, 15
      %v971 = vpop.permute.xlu0 %970
      %972 = vrot.lane.b32.xlu0 %v560, 15
      %v973 = vpop.permute.xlu0 %972
      %974 = vrot.lane.b32.xlu0 %v561, 15
      %v975 = vpop.permute.xlu0 %974
      %976 = vrot.lane.b32.xlu0 %v562, 15
      %v977 = vpop.permute.xlu0 %976
      %978 = vrot.lane.b32.xlu0 %v563, 15
      %v979 = vpop.permute.xlu0 %978
      %vm980 = vcmask 121856
      %v981 = vsel %vm980, %v969, %v971
      %v982 = vsel %vm980, %v971, %v973
      %v983 = vsel %vm980, %v975, %v977
      %v984 = vsel %vm980, %v977, %v979
      %v990 = vsel %vm585, %v967, 0
      %992 = vmatprep.subr.bf16.mxu0 0
      %993 = vmatpush1.bf16.msra.mxu0 0
      %994 = vmatprep.subr.bf16.mxu0 0
      %995 = vmatpush1.bf16.msra.mxu0 0
      %996 = vmatprep.subr.bf16.mxu0 0
      %997 = vmatpush1.bf16.msra.mxu0 0
      %998 = vmatprep.subr.bf16.mxu0 0
      %999 = vmatpush1.bf16.msra.mxu0 0
      %1000 = vmatprep.subr.bf16.mxu0 0
      %1001 = vmatpush1.bf16.msra.mxu0 0
      %1002 = vmatprep.subr.bf16.mxu0 0
      %1003 = vmatpush1.bf16.msra.mxu0 0
      %1004 = vmatprep.subr.bf16.mxu0 %v984
      %1005 = vmatpush1.bf16.msra.mxu0 %v983
      %1006 = vmatprep.subr.bf16.mxu0 %v982
      %1007 = vmatpush1.bf16.msra.mxu0 %v981
      %1008 = vmatprep.subr.bf16.mxu0 0
      %1009 = vmatpush2.bf16.msra.mxu0 0
      %1010 = vmatprep.subr.bf16.mxu0 0
      %1011 = vmatpush2.bf16.msra.mxu0 0
      %1012 = vmatprep.subr.bf16.mxu0 0
      %1013 = vmatpush2.bf16.msra.mxu0 0
      %1014 = vmatprep.subr.bf16.mxu0 0
      %1015 = vmatpush2.bf16.msra.mxu0 0
      %1016 = vmatprep.subr.bf16.mxu0 0
      %1017 = vmatpush2.bf16.msra.mxu0 0
      %1018 = vmatprep.subr.bf16.mxu0 0
      %1019 = vmatpush2.bf16.msra.mxu0 0
      %1020 = vmatprep.subr.bf16.mxu0 0
      %1021 = vmatpush2.bf16.msra.mxu0 0
      %1022 = vmatprep.subr.bf16.mxu0 0
      %1023 = vmatpush2.bf16.msra.mxu0 0
      %1024 = vmatprep.mubr.bf16.mxu0 0
      %1025 = vmatmul.mubr.bf16.gmra.mxu0 %v990
      %v1026 = vpop.f32.mrf.mxu0
      %v1027 = vadd.f32 %v955, %v1026
      %v1028 = vpop.f32.mrf.mxu0
      %v1029 = vadd.f32 %v957, %v1028
      %v1030 = vpop.f32.mrf.mxu0
      %v1031 = vadd.f32 %v959, %v1030
      %v1032 = vpop.f32.mrf.mxu0
      %v1033 = vadd.f32 %v961, %v1032
      %1034 = vdwg.mxu0
      %s1035 = scalar_lea.vmem %s1, 48
      %v1036 = vld [vmem:[%s1035] sm:$0xf]
      %v1037 = vld [vmem:[%s1035 + $0x4] sm:$0xf]
      %v1040 = vunpack.c.l.b16 %v1036
      %v1041 = vunpack.c.l.b16 %v1037
      %v1042 = vpack.c.b16 %v1041, %v1040
      %1043 = vrot.lane.b32.xlu0 %v890, 113
      %v1044 = vpop.permute.xlu0 %1043
      %1045 = vrot.lane.b32.xlu0 %v891, 113
      %v1046 = vpop.permute.xlu0 %1045
      %1047 = vrot.lane.b32.xlu0 %v892, 113
      %v1048 = vpop.permute.xlu0 %1047
      %1049 = vrot.lane.b32.xlu0 %v893, 113
      %v1050 = vpop.permute.xlu0 %1049
      %1051 = vrot.lane.b32.xlu0 %v894, 113
      %v1052 = vpop.permute.xlu0 %1051
      %1053 = vrot.lane.b32.xlu0 %v895, 113
      %v1054 = vpop.permute.xlu0 %1053
      %vm1055 = vcmask 924672
      %v1056 = vsel %vm1055, %v1044, %v1046
      %v1057 = vsel %vm1055, %v1046, %v1048
      %v1058 = vsel %vm1055, %v1050, %v1052
      %v1059 = vsel %vm1055, %v1052, %v1054
      %v1065 = vsel %vm585, %v1042, 0
      %1067 = vmatprep.subr.bf16.mxu0 0
      %1068 = vmatpush1.bf16.msra.mxu0 0
      %1069 = vmatprep.subr.bf16.mxu0 0
      %1070 = vmatpush1.bf16.msra.mxu0 0
      %1071 = vmatprep.subr.bf16.mxu0 0
      %1072 = vmatpush1.bf16.msra.mxu0 0
      %1073 = vmatprep.subr.bf16.mxu0 0
      %1074 = vmatpush1.bf16.msra.mxu0 0
      %1075 = vmatprep.subr.bf16.mxu0 0
      %1076 = vmatpush1.bf16.msra.mxu0 0
      %1077 = vmatprep.subr.bf16.mxu0 0
      %1078 = vmatpush1.bf16.msra.mxu0 0
      %1079 = vmatprep.subr.bf16.mxu0 %v1059
      %1080 = vmatpush1.bf16.msra.mxu0 %v1058
      %1081 = vmatprep.subr.bf16.mxu0 %v1057
      %1082 = vmatpush1.bf16.msra.mxu0 %v1056
      %1083 = vmatprep.subr.bf16.mxu0 0
      %1084 = vmatpush2.bf16.msra.mxu0 0
      %1085 = vmatprep.subr.bf16.mxu0 0
      %1086 = vmatpush2.bf16.msra.mxu0 0
      %1087 = vmatprep.subr.bf16.mxu0 0
      %1088 = vmatpush2.bf16.msra.mxu0 0
      %1089 = vmatprep.subr.bf16.mxu0 0
      %1090 = vmatpush2.bf16.msra.mxu0 0
      %1091 = vmatprep.subr.bf16.mxu0 0
      %1092 = vmatpush2.bf16.msra.mxu0 0
      %1093 = vmatprep.subr.bf16.mxu0 0
      %1094 = vmatpush2.bf16.msra.mxu0 0
      %1095 = vmatprep.subr.bf16.mxu0 0
      %1096 = vmatpush2.bf16.msra.mxu0 0
      %1097 = vmatprep.subr.bf16.mxu0 0
      %1098 = vmatpush2.bf16.msra.mxu0 0
      %1099 = vmatprep.mubr.bf16.mxu0 0
      %1100 = vmatmul.mubr.bf16.gmra.mxu0 %v1065
      %v1101 = vpop.f32.mrf.mxu0
      %v1102 = vadd.f32 0.0, %v1101
      %v1103 = vpop.f32.mrf.mxu0
      %v1104 = vadd.f32 0.0, %v1103
      %v1105 = vpop.f32.mrf.mxu0
      %v1106 = vadd.f32 0.0, %v1105
      %v1107 = vpop.f32.mrf.mxu0
      %v1108 = vadd.f32 0.0, %v1107
      %1109 = vdwg.mxu0
      %v1110 = vadd.f32 %v696, %v1102
      %v1111 = vadd.f32 %v698, %v1104
      %v1112 = vadd.f32 %v700, %v1106
      %v1113 = vadd.f32 %v702, %v1108
      %s1114 = scalar_lea.vmem %s1, 56
      %v1115 = vld [vmem:[%s1114] sm:$0xf]
      %v1116 = vld [vmem:[%s1114 + $0x4] sm:$0xf]
      %v1119 = vunpack.c.l.b16 %v1115
      %v1120 = vunpack.c.l.b16 %v1116
      %v1121 = vpack.c.b16 %v1120, %v1119
      %1122 = vrot.lane.b32.xlu0 %v890, 112
      %v1123 = vpop.permute.xlu0 %1122
      %1124 = vrot.lane.b32.xlu0 %v891, 112
      %v1125 = vpop.permute.xlu0 %1124
      %1126 = vrot.lane.b32.xlu0 %v892, 112
      %v1127 = vpop.permute.xlu0 %1126
      %1128 = vrot.lane.b32.xlu0 %v893, 112
      %v1129 = vpop.permute.xlu0 %1128
      %1130 = vrot.lane.b32.xlu0 %v894, 112
      %v1131 = vpop.permute.xlu0 %1130
      %1132 = vrot.lane.b32.xlu0 %v895, 112
      %v1133 = vpop.permute.xlu0 %1132
      %vm1134 = vcmask 916480
      %v1135 = vsel %vm1134, %v1123, %v1125
      %v1136 = vsel %vm1134, %v1125, %v1127
      %v1137 = vsel %vm1134, %v1129, %v1131
      %v1138 = vsel %vm1134, %v1131, %v1133
      %v1144 = vsel %vm585, %v1121, 0
      %1146 = vmatprep.subr.bf16.mxu0 0
      %1147 = vmatpush1.bf16.msra.mxu0 0
      %1148 = vmatprep.subr.bf16.mxu0 0
      %1149 = vmatpush1.bf16.msra.mxu0 0
      %1150 = vmatprep.subr.bf16.mxu0 0
      %1151 = vmatpush1.bf16.msra.mxu0 0
      %1152 = vmatprep.subr.bf16.mxu0 0
      %1153 = vmatpush1.bf16.msra.mxu0 0
      %1154 = vmatprep.subr.bf16.mxu0 0
      %1155 = vmatpush1.bf16.msra.mxu0 0
      %1156 = vmatprep.subr.bf16.mxu0 0
      %1157 = vmatpush1.bf16.msra.mxu0 0
      %1158 = vmatprep.subr.bf16.mxu0 %v1138
      %1159 = vmatpush1.bf16.msra.mxu0 %v1137
      %1160 = vmatprep.subr.bf16.mxu0 %v1136
      %1161 = vmatpush1.bf16.msra.mxu0 %v1135
      %1162 = vmatprep.subr.bf16.mxu0 0
      %1163 = vmatpush2.bf16.msra.mxu0 0
      %1164 = vmatprep.subr.bf16.mxu0 0
      %1165 = vmatpush2.bf16.msra.mxu0 0
      %1166 = vmatprep.subr.bf16.mxu0 0
      %1167 = vmatpush2.bf16.msra.mxu0 0
      %1168 = vmatprep.subr.bf16.mxu0 0
      %1169 = vmatpush2.bf16.msra.mxu0 0
      %1170 = vmatprep.subr.bf16.mxu0 0
      %1171 = vmatpush2.bf16.msra.mxu0 0
      %1172 = vmatprep.subr.bf16.mxu0 0
      %1173 = vmatpush2.bf16.msra.mxu0 0
      %1174 = vmatprep.subr.bf16.mxu0 0
      %1175 = vmatpush2.bf16.msra.mxu0 0
      %1176 = vmatprep.subr.bf16.mxu0 0
      %1177 = vmatpush2.bf16.msra.mxu0 0
      %1178 = vmatprep.mubr.bf16.mxu0 0
      %1179 = vmatmul.mubr.bf16.gmra.mxu0 %v1144
      %v1180 = vpop.f32.mrf.mxu0
      %v1181 = vadd.f32 0.0, %v1180
      %v1182 = vpop.f32.mrf.mxu0
      %v1183 = vadd.f32 0.0, %v1182
      %v1184 = vpop.f32.mrf.mxu0
      %v1185 = vadd.f32 0.0, %v1184
      %v1186 = vpop.f32.mrf.mxu0
      %v1187 = vadd.f32 0.0, %v1186
      %1188 = vdwg.mxu0
      %v1189 = vadd.f32 %v846, %v1181
      %v1190 = vadd.f32 %v848, %v1183
      %v1191 = vadd.f32 %v850, %v1185
      %v1192 = vadd.f32 %v852, %v1187
      %s1193 = scalar_lea.vmem %s1, 64
      %v1194 = vld [vmem:[%s1193] sm:$0xf]
      %v1195 = vld [vmem:[%s1193 + $0x4] sm:$0xf]
      %v1198 = vunpack.c.l.b16 %v1194
      %v1199 = vunpack.c.l.b16 %v1195
      %v1200 = vpack.c.b16 %v1199, %v1198
      %1201 = vrot.lane.b32.xlu0 %v890, 111
      %v1202 = vpop.permute.xlu0 %1201
      %1203 = vrot.lane.b32.xlu0 %v891, 111
      %v1204 = vpop.permute.xlu0 %1203
      %1205 = vrot.lane.b32.xlu0 %v892, 111
      %v1206 = vpop.permute.xlu0 %1205
      %1207 = vrot.lane.b32.xlu0 %v893, 111
      %v1208 = vpop.permute.xlu0 %1207
      %1209 = vrot.lane.b32.xlu0 %v894, 111
      %v1210 = vpop.permute.xlu0 %1209
      %1211 = vrot.lane.b32.xlu0 %v895, 111
      %v1212 = vpop.permute.xlu0 %1211
      %vm1213 = vcmask 908288
      %v1214 = vsel %vm1213, %v1202, %v1204
      %v1215 = vsel %vm1213, %v1204, %v1206
      %v1216 = vsel %vm1213, %v1208, %v1210
      %v1217 = vsel %vm1213, %v1210, %v1212
      %v1223 = vsel %vm585, %v1200, 0
      %1225 = vmatprep.subr.bf16.mxu0 0
      %1226 = vmatpush1.bf16.msra.mxu0 0
      %1227 = vmatprep.subr.bf16.mxu0 0
      %1228 = vmatpush1.bf16.msra.mxu0 0
      %1229 = vmatprep.subr.bf16.mxu0 0
      %1230 = vmatpush1.bf16.msra.mxu0 0
      %1231 = vmatprep.subr.bf16.mxu0 0
      %1232 = vmatpush1.bf16.msra.mxu0 0
      %1233 = vmatprep.subr.bf16.mxu0 0
      %1234 = vmatpush1.bf16.msra.mxu0 0
      %1235 = vmatprep.subr.bf16.mxu0 0
      %1236 = vmatpush1.bf16.msra.mxu0 0
      %1237 = vmatprep.subr.bf16.mxu0 %v1217
      %1238 = vmatpush1.bf16.msra.mxu0 %v1216
      %1239 = vmatprep.subr.bf16.mxu0 %v1215
      %1240 = vmatpush1.bf16.msra.mxu0 %v1214
      %1241 = vmatprep.subr.bf16.mxu0 0
      %1242 = vmatpush2.bf16.msra.mxu0 0
      %1243 = vmatprep.subr.bf16.mxu0 0
      %1244 = vmatpush2.bf16.msra.mxu0 0
      %1245 = vmatprep.subr.bf16.mxu0 0
      %1246 = vmatpush2.bf16.msra.mxu0 0
      %1247 = vmatprep.subr.bf16.mxu0 0
      %1248 = vmatpush2.bf16.msra.mxu0 0
      %1249 = vmatprep.subr.bf16.mxu0 0
      %1250 = vmatpush2.bf16.msra.mxu0 0
      %1251 = vmatprep.subr.bf16.mxu0 0
      %1252 = vmatpush2.bf16.msra.mxu0 0
      %1253 = vmatprep.subr.bf16.mxu0 0
      %1254 = vmatpush2.bf16.msra.mxu0 0
      %1255 = vmatprep.subr.bf16.mxu0 0
      %1256 = vmatpush2.bf16.msra.mxu0 0
      %1257 = vmatprep.mubr.bf16.mxu0 0
      %1258 = vmatmul.mubr.bf16.gmra.mxu0 %v1223
      %v1259 = vpop.f32.mrf.mxu0
      %v1260 = vadd.f32 0.0, %v1259
      %v1261 = vpop.f32.mrf.mxu0
      %v1262 = vadd.f32 0.0, %v1261
      %v1263 = vpop.f32.mrf.mxu0
      %v1264 = vadd.f32 0.0, %v1263
      %v1265 = vpop.f32.mrf.mxu0
      %v1266 = vadd.f32 0.0, %v1265
      %1267 = vdwg.mxu0
      %v1268 = vadd.f32 %v1027, %v1260
      %v1269 = vadd.f32 %v1029, %v1262
      %v1270 = vadd.f32 %v1031, %v1264
      %v1271 = vadd.f32 %v1033, %v1266
      %v1272 = vmul.f32 %v1110, %v446
      %v1273 = vmul.f32 %v1111, %v447
      %v1274 = vmul.f32 %v1112, %v446
      %v1275 = vmul.f32 %v1113, %v447
      %v1276 = vadd.f32 %v1189, %v1272
      %v1277 = vadd.f32 %v1190, %v1273
      %v1278 = vadd.f32 %v1191, %v1274
      %v1279 = vadd.f32 %v1192, %v1275
      %v1280 = vmul.f32 %v1268, %v452
      %v1281 = vmul.f32 %v1269, %v453
      %v1282 = vmul.f32 %v1270, %v452
      %v1283 = vmul.f32 %v1271, %v453
      %v1284 = vadd.f32 %v1276, %v1280
      %v1285 = vadd.f32 %v1277, %v1281
      %v1286 = vadd.f32 %v1278, %v1282
      %v1287 = vadd.f32 %v1279, %v1283
      %v1288 = vld [vmem:[%s2] sm:$0xff]
      %v1289 = vld [vmem:[%s2 + $0x8] sm:$0xff]
      %1291 = vset.pattern.permute.xlu0 0
      %1292 = vperm.xlu0 %1291, %v1288
      %v1293 = vpop.permute.xlu0 %1292
      %1296 = vset.pattern.permute.xlu0 0
      %1297 = vperm.xlu0 %1296, %v1289
      %v1298 = vpop.permute.xlu0 %1297
      %v1300 = vadd.f32 %v1284, %v1293
      %v1301 = vadd.f32 %v1285, %v1293
      %v1302 = vadd.f32 %v1286, %v1298
      %v1303 = vadd.f32 %v1287, %v1298
      %v1304 = vmul.f32 %v1300, 0.2
      %v1305 = vmul.f32 %v1301, 0.2
      %v1306 = vmul.f32 %v1302, 0.2
      %v1307 = vmul.f32 %v1303, 0.2
      %v1308 = vmax.f32 %v1300, %v1304
      %v1309 = vmax.f32 %v1301, %v1305
      %v1310 = vmax.f32 %v1302, %v1306
      %v1311 = vmax.f32 %v1303, %v1307
      %v1312 = vpack.c.bf16 %v1310, %v1308
      %v1313 = vpack.c.bf16 %v1311, %v1309
      %v1316 = vunpack.c.l.b16 %v1312
      %v1317 = vunpack.c.l.b16 %v1313
      %v1318 = vunpack.c.h.b16 %v1312
      %v1319 = vunpack.c.h.b16 %v1313
      %v1320 = vpack.c.b16 %v1317, %v1316
      %v1321 = vpack.c.b16 %v1319, %v1318
      %1324 = vst [vmem:[#allocation2 + $0x44] sm:$0xff] %v1320
      %1325 = vst [vmem:[#allocation2 + $0x54] sm:$0xff] %v1321
      %v1326 = vld [vmem:[%s11] sm:$0xf]
      %v1327 = vld [vmem:[%s11 + $0x4] sm:$0xf]
      %v1328 = vld [vmem:[#allocation2 + $0x4] sm:$0xff]
      %v1329 = vld [vmem:[#allocation2 + $0x14] sm:$0xff]
      %v1330 = vld [vmem:[#allocation2 + $0x24] sm:$0xff]
      %v1331 = vld [vmem:[#allocation2 + $0x34] sm:$0xff]
      %v1334 = vunpack.c.l.b16 %v1326
      %v1335 = vunpack.c.l.b16 %v1327
      %v1336 = vpack.c.b16 %v1335, %v1334
      %v1341 = vunpack.c.l.b16 %v1328
      %v1342 = vunpack.c.h.b16 %v1328
      %v1343 = vunpack.c.l.b16 %v1329
      %v1344 = vunpack.c.h.b16 %v1329
      %v1345 = vunpack.c.l.b16 %v1330
      %v1346 = vunpack.c.h.b16 %v1330
      %v1347 = vunpack.c.l.b16 %v1331
      %v1348 = vunpack.c.h.b16 %v1331
      %v1349 = vpack.c.b16 %v1343, %v1341
      %v1350 = vpack.c.b16 %v1344, %v1342
      %v1351 = vpack.c.b16 %v1347, %v1345
      %v1352 = vpack.c.b16 %v1348, %v1346
      %v1358 = vsel %vm585, %v1336, 0
      %1360 = vmatprep.subr.bf16.mxu0 0
      %1361 = vmatpush1.bf16.msra.mxu0 0
      %1362 = vmatprep.subr.bf16.mxu0 0
      %1363 = vmatpush1.bf16.msra.mxu0 0
      %1364 = vmatprep.subr.bf16.mxu0 0
      %1365 = vmatpush1.bf16.msra.mxu0 0
      %1366 = vmatprep.subr.bf16.mxu0 0
      %1367 = vmatpush1.bf16.msra.mxu0 0
      %1368 = vmatprep.subr.bf16.mxu0 0
      %1369 = vmatpush1.bf16.msra.mxu0 0
      %1370 = vmatprep.subr.bf16.mxu0 0
      %1371 = vmatpush1.bf16.msra.mxu0 0
      %1372 = vmatprep.subr.bf16.mxu0 %v1352
      %1373 = vmatpush1.bf16.msra.mxu0 %v1351
      %1374 = vmatprep.subr.bf16.mxu0 %v1350
      %1375 = vmatpush1.bf16.msra.mxu0 %v1349
      %1376 = vmatprep.subr.bf16.mxu0 0
      %1377 = vmatpush2.bf16.msra.mxu0 0
      %1378 = vmatprep.subr.bf16.mxu0 0
      %1379 = vmatpush2.bf16.msra.mxu0 0
      %1380 = vmatprep.subr.bf16.mxu0 0
      %1381 = vmatpush2.bf16.msra.mxu0 0
      %1382 = vmatprep.subr.bf16.mxu0 0
      %1383 = vmatpush2.bf16.msra.mxu0 0
      %1384 = vmatprep.subr.bf16.mxu0 0
      %1385 = vmatpush2.bf16.msra.mxu0 0
      %1386 = vmatprep.subr.bf16.mxu0 0
      %1387 = vmatpush2.bf16.msra.mxu0 0
      %1388 = vmatprep.subr.bf16.mxu0 0
      %1389 = vmatpush2.bf16.msra.mxu0 0
      %1390 = vmatprep.subr.bf16.mxu0 0
      %1391 = vmatpush2.bf16.msra.mxu0 0
      %1392 = vmatprep.mubr.bf16.mxu0 0
      %1393 = vmatmul.mubr.bf16.gmra.mxu0 %v1358
      %v1394 = vpop.f32.mrf.mxu0
      %v1395 = vadd.f32 0.0, %v1394
      %v1396 = vpop.f32.mrf.mxu0
      %v1397 = vadd.f32 0.0, %v1396
      %v1398 = vpop.f32.mrf.mxu0
      %v1399 = vadd.f32 0.0, %v1398
      %v1400 = vpop.f32.mrf.mxu0
      %v1401 = vadd.f32 0.0, %v1400
      %1402 = vdwg.mxu0
      %v1403 = vld [vmem:[#allocation2] sm:$0xff]
      %v1404 = vld [vmem:[#allocation2 + $0x8] sm:$0xf]
      %v1405 = vld [vmem:[#allocation2 + $0x10] sm:$0xff]
      %v1406 = vld [vmem:[#allocation2 + $0x18] sm:$0xf]
      %v1407 = vld [vmem:[#allocation2 + $0x20] sm:$0xff]
      %v1408 = vld [vmem:[#allocation2 + $0x28] sm:$0xf]
      %v1409 = vld [vmem:[#allocation2 + $0x30] sm:$0xff]
      %v1410 = vld [vmem:[#allocation2 + $0x38] sm:$0xf]
      %v1411 = vld [vmem:[#allocation2 + $0x40] sm:$0xff]
      %v1412 = vld [vmem:[#allocation2 + $0x48] sm:$0xf]
      %v1413 = vld [vmem:[#allocation2 + $0x50] sm:$0xff]
      %v1414 = vld [vmem:[#allocation2 + $0x58] sm:$0xf]
      %v1415 = vld [vmem:[%s3] sm:$0xf]
      %v1416 = vld [vmem:[%s3 + $0x4] sm:$0xf]
      %s1417 = scalar_lea.vmem %s3, 8
      %v1418 = vld [vmem:[%s1417] sm:$0xf]
      %v1419 = vld [vmem:[%s1417 + $0x4] sm:$0xf]
      %s1420 = scalar_lea.vmem %s3, 16
      %v1421 = vld [vmem:[%s1420] sm:$0xf]
      %v1422 = vld [vmem:[%s1420 + $0x4] sm:$0xf]
      %s1423 = scalar_lea.vmem %s3, 24
      %v1424 = vld [vmem:[%s1423] sm:$0xf]
      %v1425 = vld [vmem:[%s1423 + $0x4] sm:$0xf]
      %v1428 = vunpack.c.l.b16 %v1424
      %v1429 = vunpack.c.l.b16 %v1425
      %v1430 = vpack.c.b16 %v1429, %v1428
      %v1443 = vunpack.c.l.b16 %v1403
      %v1444 = vunpack.c.h.b16 %v1403
      %v1445 = vunpack.c.l.b16 %v1404
      %v1446 = vunpack.c.l.b16 %v1405
      %v1447 = vunpack.c.h.b16 %v1405
      %v1448 = vunpack.c.l.b16 %v1406
      %v1449 = vunpack.c.l.b16 %v1407
      %v1450 = vunpack.c.h.b16 %v1407
      %v1451 = vunpack.c.l.b16 %v1408
      %v1452 = vunpack.c.l.b16 %v1409
      %v1453 = vunpack.c.h.b16 %v1409
      %v1454 = vunpack.c.l.b16 %v1410
      %v1455 = vunpack.c.l.b16 %v1411
      %v1456 = vunpack.c.h.b16 %v1411
      %v1457 = vunpack.c.l.b16 %v1412
      %v1458 = vunpack.c.l.b16 %v1413
      %v1459 = vunpack.c.h.b16 %v1413
      %v1460 = vunpack.c.l.b16 %v1414
      %v1461 = vpack.c.b16 %v1446, %v1443
      %v1462 = vpack.c.b16 %v1447, %v1444
      %v1463 = vpack.c.b16 %v1448, %v1445
      %v1464 = vpack.c.b16 %v1452, %v1449
      %v1465 = vpack.c.b16 %v1453, %v1450
      %v1466 = vpack.c.b16 %v1454, %v1451
      %v1467 = vpack.c.b16 %v1458, %v1455
      %v1468 = vpack.c.b16 %v1459, %v1456
      %v1469 = vpack.c.b16 %v1460, %v1457
      %1470 = vrot.lane.b32.xlu0 %v1461, 1
      %v1471 = vpop.permute.xlu0 %1470
      %1472 = vrot.lane.b32.xlu0 %v1462, 1
      %v1473 = vpop.permute.xlu0 %1472
      %1474 = vrot.lane.b32.xlu0 %v1463, 1
      %v1475 = vpop.permute.xlu0 %1474
      %1476 = vrot.lane.b32.xlu0 %v1464, 1
      %v1477 = vpop.permute.xlu0 %1476
      %1478 = vrot.lane.b32.xlu0 %v1465, 1
      %v1479 = vpop.permute.xlu0 %1478
      %1480 = vrot.lane.b32.xlu0 %v1466, 1
      %v1481 = vpop.permute.xlu0 %1480
      %1482 = vrot.lane.b32.xlu0 %v1467, 1
      %v1483 = vpop.permute.xlu0 %1482
      %1484 = vrot.lane.b32.xlu0 %v1468, 1
      %v1485 = vpop.permute.xlu0 %1484
      %1486 = vrot.lane.b32.xlu0 %v1469, 1
      %v1487 = vpop.permute.xlu0 %1486
      %v1488 = vsel %vm576, %v1471, %v1473
      %v1489 = vsel %vm576, %v1473, %v1475
      %v1490 = vsel %vm576, %v1477, %v1479
      %v1491 = vsel %vm576, %v1479, %v1481
      %v1492 = vsel %vm576, %v1483, %v1485
      %v1493 = vsel %vm576, %v1485, %v1487
      %vm1500 = vcmask 392192
      %v1502 = vsel %vm1500, %v1430, 0
      %1504 = vmatprep.subr.bf16.mxu0 0
      %1505 = vmatpush1.bf16.msra.mxu0 0
      %1506 = vmatprep.subr.bf16.mxu0 0
      %1507 = vmatpush1.bf16.msra.mxu0 0
      %1508 = vmatprep.subr.bf16.mxu0 0
      %1509 = vmatpush1.bf16.msra.mxu0 0
      %1510 = vmatprep.subr.bf16.mxu0 0
      %1511 = vmatpush1.bf16.msra.mxu0 0
      %1512 = vmatprep.subr.bf16.mxu0 0
      %1513 = vmatpush1.bf16.msra.mxu0 0
      %1514 = vmatprep.subr.bf16.mxu0 %v1493
      %1515 = vmatpush1.bf16.msra.mxu0 %v1492
      %1516 = vmatprep.subr.bf16.mxu0 %v1491
      %1517 = vmatpush1.bf16.msra.mxu0 %v1490
      %1518 = vmatprep.subr.bf16.mxu0 %v1489
      %1519 = vmatpush1.bf16.msra.mxu0 %v1488
      %1520 = vmatprep.subr.bf16.mxu0 0
      %1521 = vmatpush2.bf16.msra.mxu0 0
      %1522 = vmatprep.subr.bf16.mxu0 0
      %1523 = vmatpush2.bf16.msra.mxu0 0
      %1524 = vmatprep.subr.bf16.mxu0 0
      %1525 = vmatpush2.bf16.msra.mxu0 0
      %1526 = vmatprep.subr.bf16.mxu0 0
      %1527 = vmatpush2.bf16.msra.mxu0 0
      %1528 = vmatprep.subr.bf16.mxu0 0
      %1529 = vmatpush2.bf16.msra.mxu0 0
      %1530 = vmatprep.subr.bf16.mxu0 0
      %1531 = vmatpush2.bf16.msra.mxu0 0
      %1532 = vmatprep.subr.bf16.mxu0 0
      %1533 = vmatpush2.bf16.msra.mxu0 0
      %1534 = vmatprep.subr.bf16.mxu0 0
      %1535 = vmatpush2.bf16.msra.mxu0 0
      %1536 = vmatprep.mubr.bf16.mxu0 0
      %1537 = vmatmul.mubr.bf16.gmra.mxu0 %v1502
      %v1538 = vpop.f32.mrf.mxu0
      %v1539 = vadd.f32 0.0, %v1538
      %v1540 = vpop.f32.mrf.mxu0
      %v1541 = vadd.f32 0.0, %v1540
      %v1542 = vpop.f32.mrf.mxu0
      %v1543 = vadd.f32 0.0, %v1542
      %v1544 = vpop.f32.mrf.mxu0
      %v1545 = vadd.f32 0.0, %v1544
      %1546 = vdwg.mxu0
      %v1549 = vunpack.c.l.b16 %v1415
      %v1550 = vunpack.c.l.b16 %v1416
      %v1551 = vpack.c.b16 %v1550, %v1549
      %1552 = vrot.lane.b32.xlu0 %v1461, 17
      %v1553 = vpop.permute.xlu0 %1552
      %1554 = vrot.lane.b32.xlu0 %v1462, 17
      %v1555 = vpop.permute.xlu0 %1554
      %1556 = vrot.lane.b32.xlu0 %v1463, 17
      %v1557 = vpop.permute.xlu0 %1556
      %1558 = vrot.lane.b32.xlu0 %v1464, 17
      %v1559 = vpop.permute.xlu0 %1558
      %1560 = vrot.lane.b32.xlu0 %v1465, 17
      %v1561 = vpop.permute.xlu0 %1560
      %1562 = vrot.lane.b32.xlu0 %v1466, 17
      %v1563 = vpop.permute.xlu0 %1562
      %1564 = vrot.lane.b32.xlu0 %v1467, 17
      %v1565 = vpop.permute.xlu0 %1564
      %1566 = vrot.lane.b32.xlu0 %v1468, 17
      %v1567 = vpop.permute.xlu0 %1566
      %1568 = vrot.lane.b32.xlu0 %v1469, 17
      %v1569 = vpop.permute.xlu0 %1568
      %v1570 = vsel %vm649, %v1553, %v1555
      %v1571 = vsel %vm649, %v1555, %v1557
      %v1572 = vsel %vm649, %v1559, %v1561
      %v1573 = vsel %vm649, %v1561, %v1563
      %v1574 = vsel %vm649, %v1565, %v1567
      %v1575 = vsel %vm649, %v1567, %v1569
      %v1583 = vsel %vm1500, %v1551, 0
      %1585 = vmatprep.subr.bf16.mxu0 0
      %1586 = vmatpush1.bf16.msra.mxu0 0
      %1587 = vmatprep.subr.bf16.mxu0 0
      %1588 = vmatpush1.bf16.msra.mxu0 0
      %1589 = vmatprep.subr.bf16.mxu0 0
      %1590 = vmatpush1.bf16.msra.mxu0 0
      %1591 = vmatprep.subr.bf16.mxu0 0
      %1592 = vmatpush1.bf16.msra.mxu0 0
      %1593 = vmatprep.subr.bf16.mxu0 0
      %1594 = vmatpush1.bf16.msra.mxu0 0
      %1595 = vmatprep.subr.bf16.mxu0 %v1575
      %1596 = vmatpush1.bf16.msra.mxu0 %v1574
      %1597 = vmatprep.subr.bf16.mxu0 %v1573
      %1598 = vmatpush1.bf16.msra.mxu0 %v1572
      %1599 = vmatprep.subr.bf16.mxu0 %v1571
      %1600 = vmatpush1.bf16.msra.mxu0 %v1570
      %1601 = vmatprep.subr.bf16.mxu0 0
      %1602 = vmatpush2.bf16.msra.mxu0 0
      %1603 = vmatprep.subr.bf16.mxu0 0
      %1604 = vmatpush2.bf16.msra.mxu0 0
      %1605 = vmatprep.subr.bf16.mxu0 0
      %1606 = vmatpush2.bf16.msra.mxu0 0
      %1607 = vmatprep.subr.bf16.mxu0 0
      %1608 = vmatpush2.bf16.msra.mxu0 0
      %1609 = vmatprep.subr.bf16.mxu0 0
      %1610 = vmatpush2.bf16.msra.mxu0 0
      %1611 = vmatprep.subr.bf16.mxu0 0
      %1612 = vmatpush2.bf16.msra.mxu0 0
      %1613 = vmatprep.subr.bf16.mxu0 0
      %1614 = vmatpush2.bf16.msra.mxu0 0
      %1615 = vmatprep.subr.bf16.mxu0 0
      %1616 = vmatpush2.bf16.msra.mxu0 0
      %1617 = vmatprep.mubr.bf16.mxu0 0
      %1618 = vmatmul.mubr.bf16.gmra.mxu0 %v1583
      %v1619 = vpop.f32.mrf.mxu0
      %v1620 = vadd.f32 %v1539, %v1619
      %v1621 = vpop.f32.mrf.mxu0
      %v1622 = vadd.f32 %v1541, %v1621
      %v1623 = vpop.f32.mrf.mxu0
      %v1624 = vadd.f32 %v1543, %v1623
      %v1625 = vpop.f32.mrf.mxu0
      %v1626 = vadd.f32 %v1545, %v1625
      %1627 = vdwg.mxu0
      %v1628 = vld [vmem:[#allocation2 + $0x4] sm:$0xff]
      %v1629 = vld [vmem:[#allocation2 + $0x14] sm:$0xff]
      %v1630 = vld [vmem:[#allocation2 + $0x24] sm:$0xff]
      %v1631 = vld [vmem:[#allocation2 + $0x34] sm:$0xff]
      %v1632 = vld [vmem:[#allocation2 + $0x44] sm:$0xff]
      %v1633 = vld [vmem:[#allocation2 + $0x54] sm:$0xff]
      %s1634 = scalar_lea.vmem %s3, 32
      %v1635 = vld [vmem:[%s1634] sm:$0xf]
      %v1636 = vld [vmem:[%s1634 + $0x4] sm:$0xf]
      %v1639 = vunpack.c.l.b16 %v1635
      %v1640 = vunpack.c.l.b16 %v1636
      %v1641 = vpack.c.b16 %v1640, %v1639
      %v1648 = vunpack.c.l.b16 %v1628
      %v1649 = vunpack.c.h.b16 %v1628
      %v1650 = vunpack.c.l.b16 %v1629
      %v1651 = vunpack.c.h.b16 %v1629
      %v1652 = vunpack.c.l.b16 %v1630
      %v1653 = vunpack.c.h.b16 %v1630
      %v1654 = vunpack.c.l.b16 %v1631
      %v1655 = vunpack.c.h.b16 %v1631
      %v1656 = vunpack.c.l.b16 %v1632
      %v1657 = vunpack.c.h.b16 %v1632
      %v1658 = vunpack.c.l.b16 %v1633
      %v1659 = vunpack.c.h.b16 %v1633
      %v1660 = vpack.c.b16 %v1650, %v1648
      %v1661 = vpack.c.b16 %v1651, %v1649
      %v1662 = vpack.c.b16 %v1654, %v1652
      %v1663 = vpack.c.b16 %v1655, %v1653
      %v1664 = vpack.c.b16 %v1658, %v1656
      %v1665 = vpack.c.b16 %v1659, %v1657
      %v1673 = vsel %vm1500, %v1641, 0
      %1675 = vmatprep.subr.bf16.mxu0 0
      %1676 = vmatpush1.bf16.msra.mxu0 0
      %1677 = vmatprep.subr.bf16.mxu0 0
      %1678 = vmatpush1.bf16.msra.mxu0 0
      %1679 = vmatprep.subr.bf16.mxu0 0
      %1680 = vmatpush1.bf16.msra.mxu0 0
      %1681 = vmatprep.subr.bf16.mxu0 0
      %1682 = vmatpush1.bf16.msra.mxu0 0
      %1683 = vmatprep.subr.bf16.mxu0 0
      %1684 = vmatpush1.bf16.msra.mxu0 0
      %1685 = vmatprep.subr.bf16.mxu0 %v1665
      %1686 = vmatpush1.bf16.msra.mxu0 %v1664
      %1687 = vmatprep.subr.bf16.mxu0 %v1663
      %1688 = vmatpush1.bf16.msra.mxu0 %v1662
      %1689 = vmatprep.subr.bf16.mxu0 %v1661
      %1690 = vmatpush1.bf16.msra.mxu0 %v1660
      %1691 = vmatprep.subr.bf16.mxu0 0
      %1692 = vmatpush2.bf16.msra.mxu0 0
      %1693 = vmatprep.subr.bf16.mxu0 0
      %1694 = vmatpush2.bf16.msra.mxu0 0
      %1695 = vmatprep.subr.bf16.mxu0 0
      %1696 = vmatpush2.bf16.msra.mxu0 0
      %1697 = vmatprep.subr.bf16.mxu0 0
      %1698 = vmatpush2.bf16.msra.mxu0 0
      %1699 = vmatprep.subr.bf16.mxu0 0
      %1700 = vmatpush2.bf16.msra.mxu0 0
      %1701 = vmatprep.subr.bf16.mxu0 0
      %1702 = vmatpush2.bf16.msra.mxu0 0
      %1703 = vmatprep.subr.bf16.mxu0 0
      %1704 = vmatpush2.bf16.msra.mxu0 0
      %1705 = vmatprep.subr.bf16.mxu0 0
      %1706 = vmatpush2.bf16.msra.mxu0 0
      %1707 = vmatprep.mubr.bf16.mxu0 0
      %1708 = vmatmul.mubr.bf16.gmra.mxu0 %v1673
      %v1709 = vpop.f32.mrf.mxu0
      %v1710 = vadd.f32 0.0, %v1709
      %v1711 = vpop.f32.mrf.mxu0
      %v1712 = vadd.f32 0.0, %v1711
      %v1713 = vpop.f32.mrf.mxu0
      %v1714 = vadd.f32 0.0, %v1713
      %v1715 = vpop.f32.mrf.mxu0
      %v1716 = vadd.f32 0.0, %v1715
      %1717 = vdwg.mxu0
      %v1720 = vunpack.c.l.b16 %v1418
      %v1721 = vunpack.c.l.b16 %v1419
      %v1722 = vpack.c.b16 %v1721, %v1720
      %1723 = vrot.lane.b32.xlu0 %v1461, 16
      %v1724 = vpop.permute.xlu0 %1723
      %1725 = vrot.lane.b32.xlu0 %v1462, 16
      %v1726 = vpop.permute.xlu0 %1725
      %1727 = vrot.lane.b32.xlu0 %v1463, 16
      %v1728 = vpop.permute.xlu0 %1727
      %1729 = vrot.lane.b32.xlu0 %v1464, 16
      %v1730 = vpop.permute.xlu0 %1729
      %1731 = vrot.lane.b32.xlu0 %v1465, 16
      %v1732 = vpop.permute.xlu0 %1731
      %1733 = vrot.lane.b32.xlu0 %v1466, 16
      %v1734 = vpop.permute.xlu0 %1733
      %1735 = vrot.lane.b32.xlu0 %v1467, 16
      %v1736 = vpop.permute.xlu0 %1735
      %1737 = vrot.lane.b32.xlu0 %v1468, 16
      %v1738 = vpop.permute.xlu0 %1737
      %1739 = vrot.lane.b32.xlu0 %v1469, 16
      %v1740 = vpop.permute.xlu0 %1739
      %v1741 = vsel %vm799, %v1724, %v1726
      %v1742 = vsel %vm799, %v1726, %v1728
      %v1743 = vsel %vm799, %v1730, %v1732
      %v1744 = vsel %vm799, %v1732, %v1734
      %v1745 = vsel %vm799, %v1736, %v1738
      %v1746 = vsel %vm799, %v1738, %v1740
      %v1754 = vsel %vm1500, %v1722, 0
      %1756 = vmatprep.subr.bf16.mxu0 0
      %1757 = vmatpush1.bf16.msra.mxu0 0
      %1758 = vmatprep.subr.bf16.mxu0 0
      %1759 = vmatpush1.bf16.msra.mxu0 0
      %1760 = vmatprep.subr.bf16.mxu0 0
      %1761 = vmatpush1.bf16.msra.mxu0 0
      %1762 = vmatprep.subr.bf16.mxu0 0
      %1763 = vmatpush1.bf16.msra.mxu0 0
      %1764 = vmatprep.subr.bf16.mxu0 0
      %1765 = vmatpush1.bf16.msra.mxu0 0
      %1766 = vmatprep.subr.bf16.mxu0 %v1746
      %1767 = vmatpush1.bf16.msra.mxu0 %v1745
      %1768 = vmatprep.subr.bf16.mxu0 %v1744
      %1769 = vmatpush1.bf16.msra.mxu0 %v1743
      %1770 = vmatprep.subr.bf16.mxu0 %v1742
      %1771 = vmatpush1.bf16.msra.mxu0 %v1741
      %1772 = vmatprep.subr.bf16.mxu0 0
      %1773 = vmatpush2.bf16.msra.mxu0 0
      %1774 = vmatprep.subr.bf16.mxu0 0
      %1775 = vmatpush2.bf16.msra.mxu0 0
      %1776 = vmatprep.subr.bf16.mxu0 0
      %1777 = vmatpush2.bf16.msra.mxu0 0
      %1778 = vmatprep.subr.bf16.mxu0 0
      %1779 = vmatpush2.bf16.msra.mxu0 0
      %1780 = vmatprep.subr.bf16.mxu0 0
      %1781 = vmatpush2.bf16.msra.mxu0 0
      %1782 = vmatprep.subr.bf16.mxu0 0
      %1783 = vmatpush2.bf16.msra.mxu0 0
      %1784 = vmatprep.subr.bf16.mxu0 0
      %1785 = vmatpush2.bf16.msra.mxu0 0
      %1786 = vmatprep.subr.bf16.mxu0 0
      %1787 = vmatpush2.bf16.msra.mxu0 0
      %1788 = vmatprep.mubr.bf16.mxu0 0
      %1789 = vmatmul.mubr.bf16.gmra.mxu0 %v1754
      %v1790 = vpop.f32.mrf.mxu0
      %v1791 = vadd.f32 %v1710, %v1790
      %v1792 = vpop.f32.mrf.mxu0
      %v1793 = vadd.f32 %v1712, %v1792
      %v1794 = vpop.f32.mrf.mxu0
      %v1795 = vadd.f32 %v1714, %v1794
      %v1796 = vpop.f32.mrf.mxu0
      %v1797 = vadd.f32 %v1716, %v1796
      %1798 = vdwg.mxu0
      %v1799 = vld [vmem:[#allocation2 + $0x4] sm:$0xff]
      %v1800 = vld [vmem:[#allocation2 + $0xc] sm:$0xf]
      %v1801 = vld [vmem:[#allocation2 + $0x14] sm:$0xff]
      %v1802 = vld [vmem:[#allocation2 + $0x1c] sm:$0xf]
      %v1803 = vld [vmem:[#allocation2 + $0x24] sm:$0xff]
      %v1804 = vld [vmem:[#allocation2 + $0x2c] sm:$0xf]
      %v1805 = vld [vmem:[#allocation2 + $0x34] sm:$0xff]
      %v1806 = vld [vmem:[#allocation2 + $0x3c] sm:$0xf]
      %v1807 = vld [vmem:[#allocation2 + $0x44] sm:$0xff]
      %v1808 = vld [vmem:[#allocation2 + $0x4c] sm:$0xf]
      %v1809 = vld [vmem:[#allocation2 + $0x54] sm:$0xff]
      %v1810 = vld [vmem:[#allocation2 + $0x5c] sm:$0xf]
      %s1811 = scalar_lea.vmem %s3, 40
      %v1812 = vld [vmem:[%s1811] sm:$0xf]
      %v1813 = vld [vmem:[%s1811 + $0x4] sm:$0xf]
      %v1816 = vunpack.c.l.b16 %v1812
      %v1817 = vunpack.c.l.b16 %v1813
      %v1818 = vpack.c.b16 %v1817, %v1816
      %v1831 = vunpack.c.l.b16 %v1799
      %v1832 = vunpack.c.h.b16 %v1799
      %v1833 = vunpack.c.l.b16 %v1800
      %v1834 = vunpack.c.l.b16 %v1801
      %v1835 = vunpack.c.h.b16 %v1801
      %v1836 = vunpack.c.l.b16 %v1802
      %v1837 = vunpack.c.l.b16 %v1803
      %v1838 = vunpack.c.h.b16 %v1803
      %v1839 = vunpack.c.l.b16 %v1804
      %v1840 = vunpack.c.l.b16 %v1805
      %v1841 = vunpack.c.h.b16 %v1805
      %v1842 = vunpack.c.l.b16 %v1806
      %v1843 = vunpack.c.l.b16 %v1807
      %v1844 = vunpack.c.h.b16 %v1807
      %v1845 = vunpack.c.l.b16 %v1808
      %v1846 = vunpack.c.l.b16 %v1809
      %v1847 = vunpack.c.h.b16 %v1809
      %v1848 = vunpack.c.l.b16 %v1810
      %v1849 = vpack.c.b16 %v1834, %v1831
      %v1850 = vpack.c.b16 %v1835, %v1832
      %v1851 = vpack.c.b16 %v1836, %v1833
      %v1852 = vpack.c.b16 %v1840, %v1837
      %v1853 = vpack.c.b16 %v1841, %v1838
      %v1854 = vpack.c.b16 %v1842, %v1839
      %v1855 = vpack.c.b16 %v1846, %v1843
      %v1856 = vpack.c.b16 %v1847, %v1844
      %v1857 = vpack.c.b16 %v1848, %v1845
      %1858 = vrot.lane.b32.xlu0 %v1849, 127
      %v1859 = vpop.permute.xlu0 %1858
      %1860 = vrot.lane.b32.xlu0 %v1850, 127
      %v1861 = vpop.permute.xlu0 %1860
      %1862 = vrot.lane.b32.xlu0 %v1851, 127
      %v1863 = vpop.permute.xlu0 %1862
      %1864 = vrot.lane.b32.xlu0 %v1852, 127
      %v1865 = vpop.permute.xlu0 %1864
      %1866 = vrot.lane.b32.xlu0 %v1853, 127
      %v1867 = vpop.permute.xlu0 %1866
      %1868 = vrot.lane.b32.xlu0 %v1854, 127
      %v1869 = vpop.permute.xlu0 %1868
      %1870 = vrot.lane.b32.xlu0 %v1855, 127
      %v1871 = vpop.permute.xlu0 %1870
      %1872 = vrot.lane.b32.xlu0 %v1856, 127
      %v1873 = vpop.permute.xlu0 %1872
      %1874 = vrot.lane.b32.xlu0 %v1857, 127
      %v1875 = vpop.permute.xlu0 %1874
      %v1876 = vsel %vm908, %v1859, %v1861
      %v1877 = vsel %vm908, %v1861, %v1863
      %v1878 = vsel %vm908, %v1865, %v1867
      %v1879 = vsel %vm908, %v1867, %v1869
      %v1880 = vsel %vm908, %v1871, %v1873
      %v1881 = vsel %vm908, %v1873, %v1875
      %v1889 = vsel %vm1500, %v1818, 0
      %1891 = vmatprep.subr.bf16.mxu0 0
      %1892 = vmatpush1.bf16.msra.mxu0 0
      %1893 = vmatprep.subr.bf16.mxu0 0
      %1894 = vmatpush1.bf16.msra.mxu0 0
      %1895 = vmatprep.subr.bf16.mxu0 0
      %1896 = vmatpush1.bf16.msra.mxu0 0
      %1897 = vmatprep.subr.bf16.mxu0 0
      %1898 = vmatpush1.bf16.msra.mxu0 0
      %1899 = vmatprep.subr.bf16.mxu0 0
      %1900 = vmatpush1.bf16.msra.mxu0 0
      %1901 = vmatprep.subr.bf16.mxu0 %v1881
      %1902 = vmatpush1.bf16.msra.mxu0 %v1880
      %1903 = vmatprep.subr.bf16.mxu0 %v1879
      %1904 = vmatpush1.bf16.msra.mxu0 %v1878
      %1905 = vmatprep.subr.bf16.mxu0 %v1877
      %1906 = vmatpush1.bf16.msra.mxu0 %v1876
      %1907 = vmatprep.subr.bf16.mxu0 0
      %1908 = vmatpush2.bf16.msra.mxu0 0
      %1909 = vmatprep.subr.bf16.mxu0 0
      %1910 = vmatpush2.bf16.msra.mxu0 0
      %1911 = vmatprep.subr.bf16.mxu0 0
      %1912 = vmatpush2.bf16.msra.mxu0 0
      %1913 = vmatprep.subr.bf16.mxu0 0
      %1914 = vmatpush2.bf16.msra.mxu0 0
      %1915 = vmatprep.subr.bf16.mxu0 0
      %1916 = vmatpush2.bf16.msra.mxu0 0
      %1917 = vmatprep.subr.bf16.mxu0 0
      %1918 = vmatpush2.bf16.msra.mxu0 0
      %1919 = vmatprep.subr.bf16.mxu0 0
      %1920 = vmatpush2.bf16.msra.mxu0 0
      %1921 = vmatprep.subr.bf16.mxu0 0
      %1922 = vmatpush2.bf16.msra.mxu0 0
      %1923 = vmatprep.mubr.bf16.mxu0 0
      %1924 = vmatmul.mubr.bf16.gmra.mxu0 %v1889
      %v1925 = vpop.f32.mrf.mxu0
      %v1926 = vadd.f32 0.0, %v1925
      %v1927 = vpop.f32.mrf.mxu0
      %v1928 = vadd.f32 0.0, %v1927
      %v1929 = vpop.f32.mrf.mxu0
      %v1930 = vadd.f32 0.0, %v1929
      %v1931 = vpop.f32.mrf.mxu0
      %v1932 = vadd.f32 0.0, %v1931
      %1933 = vdwg.mxu0
      %v1936 = vunpack.c.l.b16 %v1421
      %v1937 = vunpack.c.l.b16 %v1422
      %v1938 = vpack.c.b16 %v1937, %v1936
      %1939 = vrot.lane.b32.xlu0 %v1461, 15
      %v1940 = vpop.permute.xlu0 %1939
      %1941 = vrot.lane.b32.xlu0 %v1462, 15
      %v1942 = vpop.permute.xlu0 %1941
      %1943 = vrot.lane.b32.xlu0 %v1463, 15
      %v1944 = vpop.permute.xlu0 %1943
      %1945 = vrot.lane.b32.xlu0 %v1464, 15
      %v1946 = vpop.permute.xlu0 %1945
      %1947 = vrot.lane.b32.xlu0 %v1465, 15
      %v1948 = vpop.permute.xlu0 %1947
      %1949 = vrot.lane.b32.xlu0 %v1466, 15
      %v1950 = vpop.permute.xlu0 %1949
      %1951 = vrot.lane.b32.xlu0 %v1467, 15
      %v1952 = vpop.permute.xlu0 %1951
      %1953 = vrot.lane.b32.xlu0 %v1468, 15
      %v1954 = vpop.permute.xlu0 %1953
      %1955 = vrot.lane.b32.xlu0 %v1469, 15
      %v1956 = vpop.permute.xlu0 %1955
      %v1957 = vsel %vm980, %v1940, %v1942
      %v1958 = vsel %vm980, %v1942, %v1944
      %v1959 = vsel %vm980, %v1946, %v1948
      %v1960 = vsel %vm980, %v1948, %v1950
      %v1961 = vsel %vm980, %v1952, %v1954
      %v1962 = vsel %vm980, %v1954, %v1956
      %v1970 = vsel %vm1500, %v1938, 0
      %1972 = vmatprep.subr.bf16.mxu0 0
      %1973 = vmatpush1.bf16.msra.mxu0 0
      %1974 = vmatprep.subr.bf16.mxu0 0
      %1975 = vmatpush1.bf16.msra.mxu0 0
      %1976 = vmatprep.subr.bf16.mxu0 0
      %1977 = vmatpush1.bf16.msra.mxu0 0
      %1978 = vmatprep.subr.bf16.mxu0 0
      %1979 = vmatpush1.bf16.msra.mxu0 0
      %1980 = vmatprep.subr.bf16.mxu0 0
      %1981 = vmatpush1.bf16.msra.mxu0 0
      %1982 = vmatprep.subr.bf16.mxu0 %v1962
      %1983 = vmatpush1.bf16.msra.mxu0 %v1961
      %1984 = vmatprep.subr.bf16.mxu0 %v1960
      %1985 = vmatpush1.bf16.msra.mxu0 %v1959
      %1986 = vmatprep.subr.bf16.mxu0 %v1958
      %1987 = vmatpush1.bf16.msra.mxu0 %v1957
      %1988 = vmatprep.subr.bf16.mxu0 0
      %1989 = vmatpush2.bf16.msra.mxu0 0
      %1990 = vmatprep.subr.bf16.mxu0 0
      %1991 = vmatpush2.bf16.msra.mxu0 0
      %1992 = vmatprep.subr.bf16.mxu0 0
      %1993 = vmatpush2.bf16.msra.mxu0 0
      %1994 = vmatprep.subr.bf16.mxu0 0
      %1995 = vmatpush2.bf16.msra.mxu0 0
      %1996 = vmatprep.subr.bf16.mxu0 0
      %1997 = vmatpush2.bf16.msra.mxu0 0
      %1998 = vmatprep.subr.bf16.mxu0 0
      %1999 = vmatpush2.bf16.msra.mxu0 0
      %2000 = vmatprep.subr.bf16.mxu0 0
      %2001 = vmatpush2.bf16.msra.mxu0 0
      %2002 = vmatprep.subr.bf16.mxu0 0
      %2003 = vmatpush2.bf16.msra.mxu0 0
      %2004 = vmatprep.mubr.bf16.mxu0 0
      %2005 = vmatmul.mubr.bf16.gmra.mxu0 %v1970
      %v2006 = vpop.f32.mrf.mxu0
      %v2007 = vadd.f32 %v1926, %v2006
      %v2008 = vpop.f32.mrf.mxu0
      %v2009 = vadd.f32 %v1928, %v2008
      %v2010 = vpop.f32.mrf.mxu0
      %v2011 = vadd.f32 %v1930, %v2010
      %v2012 = vpop.f32.mrf.mxu0
      %v2013 = vadd.f32 %v1932, %v2012
      %2014 = vdwg.mxu0
      %s2015 = scalar_lea.vmem %s3, 48
      %v2016 = vld [vmem:[%s2015] sm:$0xf]
      %v2017 = vld [vmem:[%s2015 + $0x4] sm:$0xf]
      %v2020 = vunpack.c.l.b16 %v2016
      %v2021 = vunpack.c.l.b16 %v2017
      %v2022 = vpack.c.b16 %v2021, %v2020
      %2023 = vrot.lane.b32.xlu0 %v1849, 113
      %v2024 = vpop.permute.xlu0 %2023
      %2025 = vrot.lane.b32.xlu0 %v1850, 113
      %v2026 = vpop.permute.xlu0 %2025
      %2027 = vrot.lane.b32.xlu0 %v1851, 113
      %v2028 = vpop.permute.xlu0 %2027
      %2029 = vrot.lane.b32.xlu0 %v1852, 113
      %v2030 = vpop.permute.xlu0 %2029
      %2031 = vrot.lane.b32.xlu0 %v1853, 113
      %v2032 = vpop.permute.xlu0 %2031
      %2033 = vrot.lane.b32.xlu0 %v1854, 113
      %v2034 = vpop.permute.xlu0 %2033
      %2035 = vrot.lane.b32.xlu0 %v1855, 113
      %v2036 = vpop.permute.xlu0 %2035
      %2037 = vrot.lane.b32.xlu0 %v1856, 113
      %v2038 = vpop.permute.xlu0 %2037
      %2039 = vrot.lane.b32.xlu0 %v1857, 113
      %v2040 = vpop.permute.xlu0 %2039
      %v2041 = vsel %vm1055, %v2024, %v2026
      %v2042 = vsel %vm1055, %v2026, %v2028
      %v2043 = vsel %vm1055, %v2030, %v2032
      %v2044 = vsel %vm1055, %v2032, %v2034
      %v2045 = vsel %vm1055, %v2036, %v2038
      %v2046 = vsel %vm1055, %v2038, %v2040
      %v2054 = vsel %vm1500, %v2022, 0
      %2056 = vmatprep.subr.bf16.mxu0 0
      %2057 = vmatpush1.bf16.msra.mxu0 0
      %2058 = vmatprep.subr.bf16.mxu0 0
      %2059 = vmatpush1.bf16.msra.mxu0 0
      %2060 = vmatprep.subr.bf16.mxu0 0
      %2061 = vmatpush1.bf16.msra.mxu0 0
      %2062 = vmatprep.subr.bf16.mxu0 0
      %2063 = vmatpush1.bf16.msra.mxu0 0
      %2064 = vmatprep.subr.bf16.mxu0 0
      %2065 = vmatpush1.bf16.msra.mxu0 0
      %2066 = vmatprep.subr.bf16.mxu0 %v2046
      %2067 = vmatpush1.bf16.msra.mxu0 %v2045
      %2068 = vmatprep.subr.bf16.mxu0 %v2044
      %2069 = vmatpush1.bf16.msra.mxu0 %v2043
      %2070 = vmatprep.subr.bf16.mxu0 %v2042
      %2071 = vmatpush1.bf16.msra.mxu0 %v2041
      %2072 = vmatprep.subr.bf16.mxu0 0
      %2073 = vmatpush2.bf16.msra.mxu0 0
      %2074 = vmatprep.subr.bf16.mxu0 0
      %2075 = vmatpush2.bf16.msra.mxu0 0
      %2076 = vmatprep.subr.bf16.mxu0 0
      %2077 = vmatpush2.bf16.msra.mxu0 0
      %2078 = vmatprep.subr.bf16.mxu0 0
      %2079 = vmatpush2.bf16.msra.mxu0 0
      %2080 = vmatprep.subr.bf16.mxu0 0
      %2081 = vmatpush2.bf16.msra.mxu0 0
      %2082 = vmatprep.subr.bf16.mxu0 0
      %2083 = vmatpush2.bf16.msra.mxu0 0
      %2084 = vmatprep.subr.bf16.mxu0 0
      %2085 = vmatpush2.bf16.msra.mxu0 0
      %2086 = vmatprep.subr.bf16.mxu0 0
      %2087 = vmatpush2.bf16.msra.mxu0 0
      %2088 = vmatprep.mubr.bf16.mxu0 0
      %2089 = vmatmul.mubr.bf16.gmra.mxu0 %v2054
      %v2090 = vpop.f32.mrf.mxu0
      %v2091 = vadd.f32 0.0, %v2090
      %v2092 = vpop.f32.mrf.mxu0
      %v2093 = vadd.f32 0.0, %v2092
      %v2094 = vpop.f32.mrf.mxu0
      %v2095 = vadd.f32 0.0, %v2094
      %v2096 = vpop.f32.mrf.mxu0
      %v2097 = vadd.f32 0.0, %v2096
      %2098 = vdwg.mxu0
      %v2099 = vadd.f32 %v1620, %v2091
      %v2100 = vadd.f32 %v1622, %v2093
      %v2101 = vadd.f32 %v1624, %v2095
      %v2102 = vadd.f32 %v1626, %v2097
      %s2103 = scalar_lea.vmem %s3, 56
      %v2104 = vld [vmem:[%s2103] sm:$0xf]
      %v2105 = vld [vmem:[%s2103 + $0x4] sm:$0xf]
      %v2108 = vunpack.c.l.b16 %v2104
      %v2109 = vunpack.c.l.b16 %v2105
      %v2110 = vpack.c.b16 %v2109, %v2108
      %2111 = vrot.lane.b32.xlu0 %v1849, 112
      %v2112 = vpop.permute.xlu0 %2111
      %2113 = vrot.lane.b32.xlu0 %v1850, 112
      %v2114 = vpop.permute.xlu0 %2113
      %2115 = vrot.lane.b32.xlu0 %v1851, 112
      %v2116 = vpop.permute.xlu0 %2115
      %2117 = vrot.lane.b32.xlu0 %v1852, 112
      %v2118 = vpop.permute.xlu0 %2117
      %2119 = vrot.lane.b32.xlu0 %v1853, 112
      %v2120 = vpop.permute.xlu0 %2119
      %2121 = vrot.lane.b32.xlu0 %v1854, 112
      %v2122 = vpop.permute.xlu0 %2121
      %2123 = vrot.lane.b32.xlu0 %v1855, 112
      %v2124 = vpop.permute.xlu0 %2123
      %2125 = vrot.lane.b32.xlu0 %v1856, 112
      %v2126 = vpop.permute.xlu0 %2125
      %2127 = vrot.lane.b32.xlu0 %v1857, 112
      %v2128 = vpop.permute.xlu0 %2127
      %v2129 = vsel %vm1134, %v2112, %v2114
      %v2130 = vsel %vm1134, %v2114, %v2116
      %v2131 = vsel %vm1134, %v2118, %v2120
      %v2132 = vsel %vm1134, %v2120, %v2122
      %v2133 = vsel %vm1134, %v2124, %v2126
      %v2134 = vsel %vm1134, %v2126, %v2128
      %v2142 = vsel %vm1500, %v2110, 0
      %2144 = vmatprep.subr.bf16.mxu0 0
      %2145 = vmatpush1.bf16.msra.mxu0 0
      %2146 = vmatprep.subr.bf16.mxu0 0
      %2147 = vmatpush1.bf16.msra.mxu0 0
      %2148 = vmatprep.subr.bf16.mxu0 0
      %2149 = vmatpush1.bf16.msra.mxu0 0
      %2150 = vmatprep.subr.bf16.mxu0 0
      %2151 = vmatpush1.bf16.msra.mxu0 0
      %2152 = vmatprep.subr.bf16.mxu0 0
      %2153 = vmatpush1.bf16.msra.mxu0 0
      %2154 = vmatprep.subr.bf16.mxu0 %v2134
      %2155 = vmatpush1.bf16.msra.mxu0 %v2133
      %2156 = vmatprep.subr.bf16.mxu0 %v2132
      %2157 = vmatpush1.bf16.msra.mxu0 %v2131
      %2158 = vmatprep.subr.bf16.mxu0 %v2130
      %2159 = vmatpush1.bf16.msra.mxu0 %v2129
      %2160 = vmatprep.subr.bf16.mxu0 0
      %2161 = vmatpush2.bf16.msra.mxu0 0
      %2162 = vmatprep.subr.bf16.mxu0 0
      %2163 = vmatpush2.bf16.msra.mxu0 0
      %2164 = vmatprep.subr.bf16.mxu0 0
      %2165 = vmatpush2.bf16.msra.mxu0 0
      %2166 = vmatprep.subr.bf16.mxu0 0
      %2167 = vmatpush2.bf16.msra.mxu0 0
      %2168 = vmatprep.subr.bf16.mxu0 0
      %2169 = vmatpush2.bf16.msra.mxu0 0
      %2170 = vmatprep.subr.bf16.mxu0 0
      %2171 = vmatpush2.bf16.msra.mxu0 0
      %2172 = vmatprep.subr.bf16.mxu0 0
      %2173 = vmatpush2.bf16.msra.mxu0 0
      %2174 = vmatprep.subr.bf16.mxu0 0
      %2175 = vmatpush2.bf16.msra.mxu0 0
      %2176 = vmatprep.mubr.bf16.mxu0 0
      %2177 = vmatmul.mubr.bf16.gmra.mxu0 %v2142
      %v2178 = vpop.f32.mrf.mxu0
      %v2179 = vadd.f32 0.0, %v2178
      %v2180 = vpop.f32.mrf.mxu0
      %v2181 = vadd.f32 0.0, %v2180
      %v2182 = vpop.f32.mrf.mxu0
      %v2183 = vadd.f32 0.0, %v2182
      %v2184 = vpop.f32.mrf.mxu0
      %v2185 = vadd.f32 0.0, %v2184
      %2186 = vdwg.mxu0
      %v2187 = vadd.f32 %v1791, %v2179
      %v2188 = vadd.f32 %v1793, %v2181
      %v2189 = vadd.f32 %v1795, %v2183
      %v2190 = vadd.f32 %v1797, %v2185
      %s2191 = scalar_lea.vmem %s3, 64
      %v2192 = vld [vmem:[%s2191] sm:$0xf]
      %v2193 = vld [vmem:[%s2191 + $0x4] sm:$0xf]
      %v2196 = vunpack.c.l.b16 %v2192
      %v2197 = vunpack.c.l.b16 %v2193
      %v2198 = vpack.c.b16 %v2197, %v2196
      %2199 = vrot.lane.b32.xlu0 %v1849, 111
      %v2200 = vpop.permute.xlu0 %2199
      %2201 = vrot.lane.b32.xlu0 %v1850, 111
      %v2202 = vpop.permute.xlu0 %2201
      %2203 = vrot.lane.b32.xlu0 %v1851, 111
      %v2204 = vpop.permute.xlu0 %2203
      %2205 = vrot.lane.b32.xlu0 %v1852, 111
      %v2206 = vpop.permute.xlu0 %2205
      %2207 = vrot.lane.b32.xlu0 %v1853, 111
      %v2208 = vpop.permute.xlu0 %2207
      %2209 = vrot.lane.b32.xlu0 %v1854, 111
      %v2210 = vpop.permute.xlu0 %2209
      %2211 = vrot.lane.b32.xlu0 %v1855, 111
      %v2212 = vpop.permute.xlu0 %2211
      %2213 = vrot.lane.b32.xlu0 %v1856, 111
      %v2214 = vpop.permute.xlu0 %2213
      %2215 = vrot.lane.b32.xlu0 %v1857, 111
      %v2216 = vpop.permute.xlu0 %2215
      %v2217 = vsel %vm1213, %v2200, %v2202
      %v2218 = vsel %vm1213, %v2202, %v2204
      %v2219 = vsel %vm1213, %v2206, %v2208
      %v2220 = vsel %vm1213, %v2208, %v2210
      %v2221 = vsel %vm1213, %v2212, %v2214
      %v2222 = vsel %vm1213, %v2214, %v2216
      %v2230 = vsel %vm1500, %v2198, 0
      %2232 = vmatprep.subr.bf16.mxu0 0
      %2233 = vmatpush1.bf16.msra.mxu0 0
      %2234 = vmatprep.subr.bf16.mxu0 0
      %2235 = vmatpush1.bf16.msra.mxu0 0
      %2236 = vmatprep.subr.bf16.mxu0 0
      %2237 = vmatpush1.bf16.msra.mxu0 0
      %2238 = vmatprep.subr.bf16.mxu0 0
      %2239 = vmatpush1.bf16.msra.mxu0 0
      %2240 = vmatprep.subr.bf16.mxu0 0
      %2241 = vmatpush1.bf16.msra.mxu0 0
      %2242 = vmatprep.subr.bf16.mxu0 %v2222
      %2243 = vmatpush1.bf16.msra.mxu0 %v2221
      %2244 = vmatprep.subr.bf16.mxu0 %v2220
      %2245 = vmatpush1.bf16.msra.mxu0 %v2219
      %2246 = vmatprep.subr.bf16.mxu0 %v2218
      %2247 = vmatpush1.bf16.msra.mxu0 %v2217
      %2248 = vmatprep.subr.bf16.mxu0 0
      %2249 = vmatpush2.bf16.msra.mxu0 0
      %2250 = vmatprep.subr.bf16.mxu0 0
      %2251 = vmatpush2.bf16.msra.mxu0 0
      %2252 = vmatprep.subr.bf16.mxu0 0
      %2253 = vmatpush2.bf16.msra.mxu0 0
      %2254 = vmatprep.subr.bf16.mxu0 0
      %2255 = vmatpush2.bf16.msra.mxu0 0
      %2256 = vmatprep.subr.bf16.mxu0 0
      %2257 = vmatpush2.bf16.msra.mxu0 0
      %2258 = vmatprep.subr.bf16.mxu0 0
      %2259 = vmatpush2.bf16.msra.mxu0 0
      %2260 = vmatprep.subr.bf16.mxu0 0
      %2261 = vmatpush2.bf16.msra.mxu0 0
      %2262 = vmatprep.subr.bf16.mxu0 0
      %2263 = vmatpush2.bf16.msra.mxu0 0
      %2264 = vmatprep.mubr.bf16.mxu0 0
      %2265 = vmatmul.mubr.bf16.gmra.mxu0 %v2230
      %v2266 = vpop.f32.mrf.mxu0
      %v2267 = vadd.f32 0.0, %v2266
      %v2268 = vpop.f32.mrf.mxu0
      %v2269 = vadd.f32 0.0, %v2268
      %v2270 = vpop.f32.mrf.mxu0
      %v2271 = vadd.f32 0.0, %v2270
      %v2272 = vpop.f32.mrf.mxu0
      %v2273 = vadd.f32 0.0, %v2272
      %2274 = vdwg.mxu0
      %v2275 = vadd.f32 %v2007, %v2267
      %v2276 = vadd.f32 %v2009, %v2269
      %v2277 = vadd.f32 %v2011, %v2271
      %v2278 = vadd.f32 %v2013, %v2273
      %v2279 = vmul.f32 %v2099, %v446
      %v2280 = vmul.f32 %v2100, %v447
      %v2281 = vmul.f32 %v2101, %v446
      %v2282 = vmul.f32 %v2102, %v447
      %v2283 = vadd.f32 %v2187, %v2279
      %v2284 = vadd.f32 %v2188, %v2280
      %v2285 = vadd.f32 %v2189, %v2281
      %v2286 = vadd.f32 %v2190, %v2282
      %v2287 = vmul.f32 %v2275, %v452
      %v2288 = vmul.f32 %v2276, %v453
      %v2289 = vmul.f32 %v2277, %v452
      %v2290 = vmul.f32 %v2278, %v453
      %v2291 = vadd.f32 %v2283, %v2287
      %v2292 = vadd.f32 %v2284, %v2288
      %v2293 = vadd.f32 %v2285, %v2289
      %v2294 = vadd.f32 %v2286, %v2290
      %v2295 = vld [vmem:[%s4] sm:$0xff]
      %v2296 = vld [vmem:[%s4 + $0x8] sm:$0xff]
      %2298 = vset.pattern.permute.xlu0 0
      %2299 = vperm.xlu0 %2298, %v2295
      %v2300 = vpop.permute.xlu0 %2299
      %2303 = vset.pattern.permute.xlu0 0
      %2304 = vperm.xlu0 %2303, %v2296
      %v2305 = vpop.permute.xlu0 %2304
      %v2307 = vadd.f32 %v2291, %v2300
      %v2308 = vadd.f32 %v2292, %v2300
      %v2309 = vadd.f32 %v2293, %v2305
      %v2310 = vadd.f32 %v2294, %v2305
      %v2311 = vmul.f32 %v2307, 0.2
      %v2312 = vmul.f32 %v2308, 0.2
      %v2313 = vmul.f32 %v2309, 0.2
      %v2314 = vmul.f32 %v2310, 0.2
      %v2315 = vmax.f32 %v2307, %v2311
      %v2316 = vmax.f32 %v2308, %v2312
      %v2317 = vmax.f32 %v2309, %v2313
      %v2318 = vmax.f32 %v2310, %v2314
      %v2319 = vadd.f32 %v2315, %v1395
      %v2320 = vadd.f32 %v2316, %v1397
      %v2321 = vadd.f32 %v2317, %v1399
      %v2322 = vadd.f32 %v2318, %v1401
      %v2323 = vpack.c.bf16 %v2321, %v2319
      %v2324 = vpack.c.bf16 %v2322, %v2320
      %v2327 = vunpack.c.l.b16 %v2323
      %v2328 = vunpack.c.l.b16 %v2324
      %v2329 = vunpack.c.h.b16 %v2323
      %v2330 = vunpack.c.h.b16 %v2324
      %v2331 = vpack.c.b16 %v2328, %v2327
      %v2332 = vpack.c.b16 %v2330, %v2329
      %2335 = vst [vmem:[#allocation2 + $0x64] sm:$0xff] %v2331
      %2336 = vst [vmem:[#allocation2 + $0x74] sm:$0xff] %v2332
      %v2337 = vld [vmem:[#allocation2] sm:$0xff]
      %v2338 = vld [vmem:[#allocation2 + $0x8] sm:$0xf]
      %v2339 = vld [vmem:[#allocation2 + $0x10] sm:$0xff]
      %v2340 = vld [vmem:[#allocation2 + $0x18] sm:$0xf]
      %v2341 = vld [vmem:[#allocation2 + $0x20] sm:$0xff]
      %v2342 = vld [vmem:[#allocation2 + $0x28] sm:$0xf]
      %v2343 = vld [vmem:[#allocation2 + $0x30] sm:$0xff]
      %v2344 = vld [vmem:[#allocation2 + $0x38] sm:$0xf]
      %v2345 = vld [vmem:[#allocation2 + $0x40] sm:$0xff]
      %v2346 = vld [vmem:[#allocation2 + $0x48] sm:$0xf]
      %v2347 = vld [vmem:[#allocation2 + $0x50] sm:$0xff]
      %v2348 = vld [vmem:[#allocation2 + $0x58] sm:$0xf]
      %v2349 = vld [vmem:[#allocation2 + $0x60] sm:$0xff]
      %v2350 = vld [vmem:[#allocation2 + $0x68] sm:$0xf]
      %v2351 = vld [vmem:[#allocation2 + $0x70] sm:$0xff]
      %v2352 = vld [vmem:[#allocation2 + $0x78] sm:$0xf]
      %v2353 = vld [vmem:[%s5] sm:$0xf]
      %v2354 = vld [vmem:[%s5 + $0x4] sm:$0xf]
      %s2355 = scalar_lea.vmem %s5, 8
      %v2356 = vld [vmem:[%s2355] sm:$0xf]
      %v2357 = vld [vmem:[%s2355 + $0x4] sm:$0xf]
      %s2358 = scalar_lea.vmem %s5, 16
      %v2359 = vld [vmem:[%s2358] sm:$0xf]
      %v2360 = vld [vmem:[%s2358 + $0x4] sm:$0xf]
      %s2361 = scalar_lea.vmem %s5, 24
      %v2362 = vld [vmem:[%s2361] sm:$0xf]
      %v2363 = vld [vmem:[%s2361 + $0x4] sm:$0xf]
      %v2366 = vunpack.c.l.b16 %v2362
      %v2367 = vunpack.c.l.b16 %v2363
      %v2368 = vpack.c.b16 %v2367, %v2366
      %v2385 = vunpack.c.l.b16 %v2337
      %v2386 = vunpack.c.h.b16 %v2337
      %v2387 = vunpack.c.l.b16 %v2338
      %v2388 = vunpack.c.l.b16 %v2339
      %v2389 = vunpack.c.h.b16 %v2339
      %v2390 = vunpack.c.l.b16 %v2340
      %v2391 = vunpack.c.l.b16 %v2341
      %v2392 = vunpack.c.h.b16 %v2341
      %v2393 = vunpack.c.l.b16 %v2342
      %v2394 = vunpack.c.l.b16 %v2343
      %v2395 = vunpack.c.h.b16 %v2343
      %v2396 = vunpack.c.l.b16 %v2344
      %v2397 = vunpack.c.l.b16 %v2345
      %v2398 = vunpack.c.h.b16 %v2345
      %v2399 = vunpack.c.l.b16 %v2346
      %v2400 = vunpack.c.l.b16 %v2347
      %v2401 = vunpack.c.h.b16 %v2347
      %v2402 = vunpack.c.l.b16 %v2348
      %v2403 = vunpack.c.l.b16 %v2349
      %v2404 = vunpack.c.h.b16 %v2349
      %v2405 = vunpack.c.l.b16 %v2350
      %v2406 = vunpack.c.l.b16 %v2351
      %v2407 = vunpack.c.h.b16 %v2351
      %v2408 = vunpack.c.l.b16 %v2352
      %v2409 = vpack.c.b16 %v2388, %v2385
      %v2410 = vpack.c.b16 %v2389, %v2386
      %v2411 = vpack.c.b16 %v2390, %v2387
      %v2412 = vpack.c.b16 %v2394, %v2391
      %v2413 = vpack.c.b16 %v2395, %v2392
      %v2414 = vpack.c.b16 %v2396, %v2393
      %v2415 = vpack.c.b16 %v2400, %v2397
      %v2416 = vpack.c.b16 %v2401, %v2398
      %v2417 = vpack.c.b16 %v2402, %v2399
      %v2418 = vpack.c.b16 %v2406, %v2403
      %v2419 = vpack.c.b16 %v2407, %v2404
      %v2420 = vpack.c.b16 %v2408, %v2405
      %2421 = vrot.lane.b32.xlu0 %v2409, 1
      %v2422 = vpop.permute.xlu0 %2421
      %2423 = vrot.lane.b32.xlu0 %v2410, 1
      %v2424 = vpop.permute.xlu0 %2423
      %2425 = vrot.lane.b32.xlu0 %v2411, 1
      %v2426 = vpop.permute.xlu0 %2425
      %2427 = vrot.lane.b32.xlu0 %v2412, 1
      %v2428 = vpop.permute.xlu0 %2427
      %2429 = vrot.lane.b32.xlu0 %v2413, 1
      %v2430 = vpop.permute.xlu0 %2429
      %2431 = vrot.lane.b32.xlu0 %v2414, 1
      %v2432 = vpop.permute.xlu0 %2431
      %2433 = vrot.lane.b32.xlu0 %v2415, 1
      %v2434 = vpop.permute.xlu0 %2433
      %2435 = vrot.lane.b32.xlu0 %v2416, 1
      %v2436 = vpop.permute.xlu0 %2435
      %2437 = vrot.lane.b32.xlu0 %v2417, 1
      %v2438 = vpop.permute.xlu0 %2437
      %2439 = vrot.lane.b32.xlu0 %v2418, 1
      %v2440 = vpop.permute.xlu0 %2439
      %2441 = vrot.lane.b32.xlu0 %v2419, 1
      %v2442 = vpop.permute.xlu0 %2441
      %2443 = vrot.lane.b32.xlu0 %v2420, 1
      %v2444 = vpop.permute.xlu0 %2443
      %v2445 = vsel %vm576, %v2422, %v2424
      %v2446 = vsel %vm576, %v2424, %v2426
      %v2447 = vsel %vm576, %v2428, %v2430
      %v2448 = vsel %vm576, %v2430, %v2432
      %v2449 = vsel %vm576, %v2434, %v2436
      %v2450 = vsel %vm576, %v2436, %v2438
      %v2451 = vsel %vm576, %v2440, %v2442
      %v2452 = vsel %vm576, %v2442, %v2444
      %vm2461 = vcmask 523264
      %v2463 = vsel %vm2461, %v2368, 0
      %2465 = vmatprep.subr.bf16.mxu0 0
      %2466 = vmatpush1.bf16.msra.mxu0 0
      %2467 = vmatprep.subr.bf16.mxu0 0
      %2468 = vmatpush1.bf16.msra.mxu0 0
      %2469 = vmatprep.subr.bf16.mxu0 0
      %2470 = vmatpush1.bf16.msra.mxu0 0
      %2471 = vmatprep.subr.bf16.mxu0 0
      %2472 = vmatpush1.bf16.msra.mxu0 0
      %2473 = vmatprep.subr.bf16.mxu0 %v2452
      %2474 = vmatpush1.bf16.msra.mxu0 %v2451
      %2475 = vmatprep.subr.bf16.mxu0 %v2450
      %2476 = vmatpush1.bf16.msra.mxu0 %v2449
      %2477 = vmatprep.subr.bf16.mxu0 %v2448
      %2478 = vmatpush1.bf16.msra.mxu0 %v2447
      %2479 = vmatprep.subr.bf16.mxu0 %v2446
      %2480 = vmatpush1.bf16.msra.mxu0 %v2445
      %2481 = vmatprep.subr.bf16.mxu0 0
      %2482 = vmatpush2.bf16.msra.mxu0 0
      %2483 = vmatprep.subr.bf16.mxu0 0
      %2484 = vmatpush2.bf16.msra.mxu0 0
      %2485 = vmatprep.subr.bf16.mxu0 0
      %2486 = vmatpush2.bf16.msra.mxu0 0
      %2487 = vmatprep.subr.bf16.mxu0 0
      %2488 = vmatpush2.bf16.msra.mxu0 0
      %2489 = vmatprep.subr.bf16.mxu0 0
      %2490 = vmatpush2.bf16.msra.mxu0 0
      %2491 = vmatprep.subr.bf16.mxu0 0
      %2492 = vmatpush2.bf16.msra.mxu0 0
      %2493 = vmatprep.subr.bf16.mxu0 0
      %2494 = vmatpush2.bf16.msra.mxu0 0
      %2495 = vmatprep.subr.bf16.mxu0 0
      %2496 = vmatpush2.bf16.msra.mxu0 0
      %2497 = vmatprep.mubr.bf16.mxu0 0
      %2498 = vmatmul.mubr.bf16.gmra.mxu0 %v2463
      %v2499 = vpop.f32.mrf.mxu0
      %v2500 = vadd.f32 0.0, %v2499
      %v2501 = vpop.f32.mrf.mxu0
      %v2502 = vadd.f32 0.0, %v2501
      %v2503 = vpop.f32.mrf.mxu0
      %v2504 = vadd.f32 0.0, %v2503
      %v2505 = vpop.f32.mrf.mxu0
      %v2506 = vadd.f32 0.0, %v2505
      %2507 = vdwg.mxu0
      %v2510 = vunpack.c.l.b16 %v2353
      %v2511 = vunpack.c.l.b16 %v2354
      %v2512 = vpack.c.b16 %v2511, %v2510
      %2513 = vrot.lane.b32.xlu0 %v2409, 17
      %v2514 = vpop.permute.xlu0 %2513
      %2515 = vrot.lane.b32.xlu0 %v2410, 17
      %v2516 = vpop.permute.xlu0 %2515
      %2517 = vrot.lane.b32.xlu0 %v2411, 17
      %v2518 = vpop.permute.xlu0 %2517
      %2519 = vrot.lane.b32.xlu0 %v2412, 17
      %v2520 = vpop.permute.xlu0 %2519
      %2521 = vrot.lane.b32.xlu0 %v2413, 17
      %v2522 = vpop.permute.xlu0 %2521
      %2523 = vrot.lane.b32.xlu0 %v2414, 17
      %v2524 = vpop.permute.xlu0 %2523
      %2525 = vrot.lane.b32.xlu0 %v2415, 17
      %v2526 = vpop.permute.xlu0 %2525
      %2527 = vrot.lane.b32.xlu0 %v2416, 17
      %v2528 = vpop.permute.xlu0 %2527
      %2529 = vrot.lane.b32.xlu0 %v2417, 17
      %v2530 = vpop.permute.xlu0 %2529
      %2531 = vrot.lane.b32.xlu0 %v2418, 17
      %v2532 = vpop.permute.xlu0 %2531
      %2533 = vrot.lane.b32.xlu0 %v2419, 17
      %v2534 = vpop.permute.xlu0 %2533
      %2535 = vrot.lane.b32.xlu0 %v2420, 17
      %v2536 = vpop.permute.xlu0 %2535
      %v2537 = vsel %vm649, %v2514, %v2516
      %v2538 = vsel %vm649, %v2516, %v2518
      %v2539 = vsel %vm649, %v2520, %v2522
      %v2540 = vsel %vm649, %v2522, %v2524
      %v2541 = vsel %vm649, %v2526, %v2528
      %v2542 = vsel %vm649, %v2528, %v2530
      %v2543 = vsel %vm649, %v2532, %v2534
      %v2544 = vsel %vm649, %v2534, %v2536
      %v2554 = vsel %vm2461, %v2512, 0
      %2556 = vmatprep.subr.bf16.mxu0 0
      %2557 = vmatpush1.bf16.msra.mxu0 0
      %2558 = vmatprep.subr.bf16.mxu0 0
      %2559 = vmatpush1.bf16.msra.mxu0 0
      %2560 = vmatprep.subr.bf16.mxu0 0
      %2561 = vmatpush1.bf16.msra.mxu0 0
      %2562 = vmatprep.subr.bf16.mxu0 0
      %2563 = vmatpush1.bf16.msra.mxu0 0
      %2564 = vmatprep.subr.bf16.mxu0 %v2544
      %2565 = vmatpush1.bf16.msra.mxu0 %v2543
      %2566 = vmatprep.subr.bf16.mxu0 %v2542
      %2567 = vmatpush1.bf16.msra.mxu0 %v2541
      %2568 = vmatprep.subr.bf16.mxu0 %v2540
      %2569 = vmatpush1.bf16.msra.mxu0 %v2539
      %2570 = vmatprep.subr.bf16.mxu0 %v2538
      %2571 = vmatpush1.bf16.msra.mxu0 %v2537
      %2572 = vmatprep.subr.bf16.mxu0 0
      %2573 = vmatpush2.bf16.msra.mxu0 0
      %2574 = vmatprep.subr.bf16.mxu0 0
      %2575 = vmatpush2.bf16.msra.mxu0 0
      %2576 = vmatprep.subr.bf16.mxu0 0
      %2577 = vmatpush2.bf16.msra.mxu0 0
      %2578 = vmatprep.subr.bf16.mxu0 0
      %2579 = vmatpush2.bf16.msra.mxu0 0
      %2580 = vmatprep.subr.bf16.mxu0 0
      %2581 = vmatpush2.bf16.msra.mxu0 0
      %2582 = vmatprep.subr.bf16.mxu0 0
      %2583 = vmatpush2.bf16.msra.mxu0 0
      %2584 = vmatprep.subr.bf16.mxu0 0
      %2585 = vmatpush2.bf16.msra.mxu0 0
      %2586 = vmatprep.subr.bf16.mxu0 0
      %2587 = vmatpush2.bf16.msra.mxu0 0
      %2588 = vmatprep.mubr.bf16.mxu0 0
      %2589 = vmatmul.mubr.bf16.gmra.mxu0 %v2554
      %v2590 = vpop.f32.mrf.mxu0
      %v2591 = vadd.f32 %v2500, %v2590
      %v2592 = vpop.f32.mrf.mxu0
      %v2593 = vadd.f32 %v2502, %v2592
      %v2594 = vpop.f32.mrf.mxu0
      %v2595 = vadd.f32 %v2504, %v2594
      %v2596 = vpop.f32.mrf.mxu0
      %v2597 = vadd.f32 %v2506, %v2596
      %2598 = vdwg.mxu0
      %v2599 = vld [vmem:[#allocation2 + $0x4] sm:$0xff]
      %v2600 = vld [vmem:[#allocation2 + $0x14] sm:$0xff]
      %v2601 = vld [vmem:[#allocation2 + $0x24] sm:$0xff]
      %v2602 = vld [vmem:[#allocation2 + $0x34] sm:$0xff]
      %v2603 = vld [vmem:[#allocation2 + $0x44] sm:$0xff]
      %v2604 = vld [vmem:[#allocation2 + $0x54] sm:$0xff]
      %v2605 = vld [vmem:[#allocation2 + $0x64] sm:$0xff]
      %v2606 = vld [vmem:[#allocation2 + $0x74] sm:$0xff]
      %s2607 = scalar_lea.vmem %s5, 32
      %v2608 = vld [vmem:[%s2607] sm:$0xf]
      %v2609 = vld [vmem:[%s2607 + $0x4] sm:$0xf]
      %v2612 = vunpack.c.l.b16 %v2608
      %v2613 = vunpack.c.l.b16 %v2609
      %v2614 = vpack.c.b16 %v2613, %v2612
      %v2623 = vunpack.c.l.b16 %v2599
      %v2624 = vunpack.c.h.b16 %v2599
      %v2625 = vunpack.c.l.b16 %v2600
      %v2626 = vunpack.c.h.b16 %v2600
      %v2627 = vunpack.c.l.b16 %v2601
      %v2628 = vunpack.c.h.b16 %v2601
      %v2629 = vunpack.c.l.b16 %v2602
      %v2630 = vunpack.c.h.b16 %v2602
      %v2631 = vunpack.c.l.b16 %v2603
      %v2632 = vunpack.c.h.b16 %v2603
      %v2633 = vunpack.c.l.b16 %v2604
      %v2634 = vunpack.c.h.b16 %v2604
      %v2635 = vunpack.c.l.b16 %v2605
      %v2636 = vunpack.c.h.b16 %v2605
      %v2637 = vunpack.c.l.b16 %v2606
      %v2638 = vunpack.c.h.b16 %v2606
      %v2639 = vpack.c.b16 %v2625, %v2623
      %v2640 = vpack.c.b16 %v2626, %v2624
      %v2641 = vpack.c.b16 %v2629, %v2627
      %v2642 = vpack.c.b16 %v2630, %v2628
      %v2643 = vpack.c.b16 %v2633, %v2631
      %v2644 = vpack.c.b16 %v2634, %v2632
      %v2645 = vpack.c.b16 %v2637, %v2635
      %v2646 = vpack.c.b16 %v2638, %v2636
      %v2656 = vsel %vm2461, %v2614, 0
      %2658 = vmatprep.subr.bf16.mxu0 0
      %2659 = vmatpush1.bf16.msra.mxu0 0
      %2660 = vmatprep.subr.bf16.mxu0 0
      %2661 = vmatpush1.bf16.msra.mxu0 0
      %2662 = vmatprep.subr.bf16.mxu0 0
      %2663 = vmatpush1.bf16.msra.mxu0 0
      %2664 = vmatprep.subr.bf16.mxu0 0
      %2665 = vmatpush1.bf16.msra.mxu0 0
      %2666 = vmatprep.subr.bf16.mxu0 %v2646
      %2667 = vmatpush1.bf16.msra.mxu0 %v2645
      %2668 = vmatprep.subr.bf16.mxu0 %v2644
      %2669 = vmatpush1.bf16.msra.mxu0 %v2643
      %2670 = vmatprep.subr.bf16.mxu0 %v2642
      %2671 = vmatpush1.bf16.msra.mxu0 %v2641
      %2672 = vmatprep.subr.bf16.mxu0 %v2640
      %2673 = vmatpush1.bf16.msra.mxu0 %v2639
      %2674 = vmatprep.subr.bf16.mxu0 0
      %2675 = vmatpush2.bf16.msra.mxu0 0
      %2676 = vmatprep.subr.bf16.mxu0 0
      %2677 = vmatpush2.bf16.msra.mxu0 0
      %2678 = vmatprep.subr.bf16.mxu0 0
      %2679 = vmatpush2.bf16.msra.mxu0 0
      %2680 = vmatprep.subr.bf16.mxu0 0
      %2681 = vmatpush2.bf16.msra.mxu0 0
      %2682 = vmatprep.subr.bf16.mxu0 0
      %2683 = vmatpush2.bf16.msra.mxu0 0
      %2684 = vmatprep.subr.bf16.mxu0 0
      %2685 = vmatpush2.bf16.msra.mxu0 0
      %2686 = vmatprep.subr.bf16.mxu0 0
      %2687 = vmatpush2.bf16.msra.mxu0 0
      %2688 = vmatprep.subr.bf16.mxu0 0
      %2689 = vmatpush2.bf16.msra.mxu0 0
      %2690 = vmatprep.mubr.bf16.mxu0 0
      %2691 = vmatmul.mubr.bf16.gmra.mxu0 %v2656
      %v2692 = vpop.f32.mrf.mxu0
      %v2693 = vadd.f32 0.0, %v2692
      %v2694 = vpop.f32.mrf.mxu0
      %v2695 = vadd.f32 0.0, %v2694
      %v2696 = vpop.f32.mrf.mxu0
      %v2697 = vadd.f32 0.0, %v2696
      %v2698 = vpop.f32.mrf.mxu0
      %v2699 = vadd.f32 0.0, %v2698
      %2700 = vdwg.mxu0
      %v2703 = vunpack.c.l.b16 %v2356
      %v2704 = vunpack.c.l.b16 %v2357
      %v2705 = vpack.c.b16 %v2704, %v2703
      %2706 = vrot.lane.b32.xlu0 %v2409, 16
      %v2707 = vpop.permute.xlu0 %2706
      %2708 = vrot.lane.b32.xlu0 %v2410, 16
      %v2709 = vpop.permute.xlu0 %2708
      %2710 = vrot.lane.b32.xlu0 %v2411, 16
      %v2711 = vpop.permute.xlu0 %2710
      %2712 = vrot.lane.b32.xlu0 %v2412, 16
      %v2713 = vpop.permute.xlu0 %2712
      %2714 = vrot.lane.b32.xlu0 %v2413, 16
      %v2715 = vpop.permute.xlu0 %2714
      %2716 = vrot.lane.b32.xlu0 %v2414, 16
      %v2717 = vpop.permute.xlu0 %2716
      %2718 = vrot.lane.b32.xlu0 %v2415, 16
      %v2719 = vpop.permute.xlu0 %2718
      %2720 = vrot.lane.b32.xlu0 %v2416, 16
      %v2721 = vpop.permute.xlu0 %2720
      %2722 = vrot.lane.b32.xlu0 %v2417, 16
      %v2723 = vpop.permute.xlu0 %2722
      %2724 = vrot.lane.b32.xlu0 %v2418, 16
      %v2725 = vpop.permute.xlu0 %2724
      %2726 = vrot.lane.b32.xlu0 %v2419, 16
      %v2727 = vpop.permute.xlu0 %2726
      %2728 = vrot.lane.b32.xlu0 %v2420, 16
      %v2729 = vpop.permute.xlu0 %2728
      %v2730 = vsel %vm799, %v2707, %v2709
      %v2731 = vsel %vm799, %v2709, %v2711
      %v2732 = vsel %vm799, %v2713, %v2715
      %v2733 = vsel %vm799, %v2715, %v2717
      %v2734 = vsel %vm799, %v2719, %v2721
      %v2735 = vsel %vm799, %v2721, %v2723
      %v2736 = vsel %vm799, %v2725, %v2727
      %v2737 = vsel %vm799, %v2727, %v2729
      %v2747 = vsel %vm2461, %v2705, 0
      %2749 = vmatprep.subr.bf16.mxu0 0
      %2750 = vmatpush1.bf16.msra.mxu0 0
      %2751 = vmatprep.subr.bf16.mxu0 0
      %2752 = vmatpush1.bf16.msra.mxu0 0
      %2753 = vmatprep.subr.bf16.mxu0 0
      %2754 = vmatpush1.bf16.msra.mxu0 0
      %2755 = vmatprep.subr.bf16.mxu0 0
      %2756 = vmatpush1.bf16.msra.mxu0 0
      %2757 = vmatprep.subr.bf16.mxu0 %v2737
      %2758 = vmatpush1.bf16.msra.mxu0 %v2736
      %2759 = vmatprep.subr.bf16.mxu0 %v2735
      %2760 = vmatpush1.bf16.msra.mxu0 %v2734
      %2761 = vmatprep.subr.bf16.mxu0 %v2733
      %2762 = vmatpush1.bf16.msra.mxu0 %v2732
      %2763 = vmatprep.subr.bf16.mxu0 %v2731
      %2764 = vmatpush1.bf16.msra.mxu0 %v2730
      %2765 = vmatprep.subr.bf16.mxu0 0
      %2766 = vmatpush2.bf16.msra.mxu0 0
      %2767 = vmatprep.subr.bf16.mxu0 0
      %2768 = vmatpush2.bf16.msra.mxu0 0
      %2769 = vmatprep.subr.bf16.mxu0 0
      %2770 = vmatpush2.bf16.msra.mxu0 0
      %2771 = vmatprep.subr.bf16.mxu0 0
      %2772 = vmatpush2.bf16.msra.mxu0 0
      %2773 = vmatprep.subr.bf16.mxu0 0
      %2774 = vmatpush2.bf16.msra.mxu0 0
      %2775 = vmatprep.subr.bf16.mxu0 0
      %2776 = vmatpush2.bf16.msra.mxu0 0
      %2777 = vmatprep.subr.bf16.mxu0 0
      %2778 = vmatpush2.bf16.msra.mxu0 0
      %2779 = vmatprep.subr.bf16.mxu0 0
      %2780 = vmatpush2.bf16.msra.mxu0 0
      %2781 = vmatprep.mubr.bf16.mxu0 0
      %2782 = vmatmul.mubr.bf16.gmra.mxu0 %v2747
      %v2783 = vpop.f32.mrf.mxu0
      %v2784 = vadd.f32 %v2693, %v2783
      %v2785 = vpop.f32.mrf.mxu0
      %v2786 = vadd.f32 %v2695, %v2785
      %v2787 = vpop.f32.mrf.mxu0
      %v2788 = vadd.f32 %v2697, %v2787
      %v2789 = vpop.f32.mrf.mxu0
      %v2790 = vadd.f32 %v2699, %v2789
      %2791 = vdwg.mxu0
      %v2792 = vld [vmem:[#allocation2 + $0x4] sm:$0xff]
      %v2793 = vld [vmem:[#allocation2 + $0xc] sm:$0xf]
      %v2794 = vld [vmem:[#allocation2 + $0x14] sm:$0xff]
      %v2795 = vld [vmem:[#allocation2 + $0x1c] sm:$0xf]
      %v2796 = vld [vmem:[#allocation2 + $0x24] sm:$0xff]
      %v2797 = vld [vmem:[#allocation2 + $0x2c] sm:$0xf]
      %v2798 = vld [vmem:[#allocation2 + $0x34] sm:$0xff]
      %v2799 = vld [vmem:[#allocation2 + $0x3c] sm:$0xf]
      %v2800 = vld [vmem:[#allocation2 + $0x44] sm:$0xff]
      %v2801 = vld [vmem:[#allocation2 + $0x4c] sm:$0xf]
      %v2802 = vld [vmem:[#allocation2 + $0x54] sm:$0xff]
      %v2803 = vld [vmem:[#allocation2 + $0x5c] sm:$0xf]
      %v2804 = vld [vmem:[#allocation2 + $0x64] sm:$0xff]
      %v2805 = vld [vmem:[#allocation2 + $0x6c] sm:$0xf]
      %v2806 = vld [vmem:[#allocation2 + $0x74] sm:$0xff]
      %v2807 = vld [vmem:[#allocation2 + $0x7c] sm:$0xf]
      %s2808 = scalar_lea.vmem %s5, 40
      %v2809 = vld [vmem:[%s2808] sm:$0xf]
      %v2810 = vld [vmem:[%s2808 + $0x4] sm:$0xf]
      %v2813 = vunpack.c.l.b16 %v2809
      %v2814 = vunpack.c.l.b16 %v2810
      %v2815 = vpack.c.b16 %v2814, %v2813
      %v2832 = vunpack.c.l.b16 %v2792
      %v2833 = vunpack.c.h.b16 %v2792
      %v2834 = vunpack.c.l.b16 %v2793
      %v2835 = vunpack.c.l.b16 %v2794
      %v2836 = vunpack.c.h.b16 %v2794
      %v2837 = vunpack.c.l.b16 %v2795
      %v2838 = vunpack.c.l.b16 %v2796
      %v2839 = vunpack.c.h.b16 %v2796
      %v2840 = vunpack.c.l.b16 %v2797
      %v2841 = vunpack.c.l.b16 %v2798
      %v2842 = vunpack.c.h.b16 %v2798
      %v2843 = vunpack.c.l.b16 %v2799
      %v2844 = vunpack.c.l.b16 %v2800
      %v2845 = vunpack.c.h.b16 %v2800
      %v2846 = vunpack.c.l.b16 %v2801
      %v2847 = vunpack.c.l.b16 %v2802
      %v2848 = vunpack.c.h.b16 %v2802
      %v2849 = vunpack.c.l.b16 %v2803
      %v2850 = vunpack.c.l.b16 %v2804
      %v2851 = vunpack.c.h.b16 %v2804
      %v2852 = vunpack.c.l.b16 %v2805
      %v2853 = vunpack.c.l.b16 %v2806
      %v2854 = vunpack.c.h.b16 %v2806
      %v2855 = vunpack.c.l.b16 %v2807
      %v2856 = vpack.c.b16 %v2835, %v2832
      %v2857 = vpack.c.b16 %v2836, %v2833
      %v2858 = vpack.c.b16 %v2837, %v2834
      %v2859 = vpack.c.b16 %v2841, %v2838
      %v2860 = vpack.c.b16 %v2842, %v2839
      %v2861 = vpack.c.b16 %v2843, %v2840
      %v2862 = vpack.c.b16 %v2847, %v2844
      %v2863 = vpack.c.b16 %v2848, %v2845
      %v2864 = vpack.c.b16 %v2849, %v2846
      %v2865 = vpack.c.b16 %v2853, %v2850
      %v2866 = vpack.c.b16 %v2854, %v2851
      %v2867 = vpack.c.b16 %v2855, %v2852
      %2868 = vrot.lane.b32.xlu0 %v2856, 127
      %v2869 = vpop.permute.xlu0 %2868
      %2870 = vrot.lane.b32.xlu0 %v2857, 127
      %v2871 = vpop.permute.xlu0 %2870
      %2872 = vrot.lane.b32.xlu0 %v2858, 127
      %v2873 = vpop.permute.xlu0 %2872
      %2874 = vrot.lane.b32.xlu0 %v2859, 127
      %v2875 = vpop.permute.xlu0 %2874
      %2876 = vrot.lane.b32.xlu0 %v2860, 127
      %v2877 = vpop.permute.xlu0 %2876
      %2878 = vrot.lane.b32.xlu0 %v2861, 127
      %v2879 = vpop.permute.xlu0 %2878
      %2880 = vrot.lane.b32.xlu0 %v2862, 127
      %v2881 = vpop.permute.xlu0 %2880
      %2882 = vrot.lane.b32.xlu0 %v2863, 127
      %v2883 = vpop.permute.xlu0 %2882
      %2884 = vrot.lane.b32.xlu0 %v2864, 127
      %v2885 = vpop.permute.xlu0 %2884
      %2886 = vrot.lane.b32.xlu0 %v2865, 127
      %v2887 = vpop.permute.xlu0 %2886
      %2888 = vrot.lane.b32.xlu0 %v2866, 127
      %v2889 = vpop.permute.xlu0 %2888
      %2890 = vrot.lane.b32.xlu0 %v2867, 127
      %v2891 = vpop.permute.xlu0 %2890
      %v2892 = vsel %vm908, %v2869, %v2871
      %v2893 = vsel %vm908, %v2871, %v2873
      %v2894 = vsel %vm908, %v2875, %v2877
      %v2895 = vsel %vm908, %v2877, %v2879
      %v2896 = vsel %vm908, %v2881, %v2883
      %v2897 = vsel %vm908, %v2883, %v2885
      %v2898 = vsel %vm908, %v2887, %v2889
      %v2899 = vsel %vm908, %v2889, %v2891
      %v2909 = vsel %vm2461, %v2815, 0
      %2911 = vmatprep.subr.bf16.mxu0 0
      %2912 = vmatpush1.bf16.msra.mxu0 0
      %2913 = vmatprep.subr.bf16.mxu0 0
      %2914 = vmatpush1.bf16.msra.mxu0 0
      %2915 = vmatprep.subr.bf16.mxu0 0
      %2916 = vmatpush1.bf16.msra.mxu0 0
      %2917 = vmatprep.subr.bf16.mxu0 0
      %2918 = vmatpush1.bf16.msra.mxu0 0
      %2919 = vmatprep.subr.bf16.mxu0 %v2899
      %2920 = vmatpush1.bf16.msra.mxu0 %v2898
      %2921 = vmatprep.subr.bf16.mxu0 %v2897
      %2922 = vmatpush1.bf16.msra.mxu0 %v2896
      %2923 = vmatprep.subr.bf16.mxu0 %v2895
      %2924 = vmatpush1.bf16.msra.mxu0 %v2894
      %2925 = vmatprep.subr.bf16.mxu0 %v2893
      %2926 = vmatpush1.bf16.msra.mxu0 %v2892
      %2927 = vmatprep.subr.bf16.mxu0 0
      %2928 = vmatpush2.bf16.msra.mxu0 0
      %2929 = vmatprep.subr.bf16.mxu0 0
      %2930 = vmatpush2.bf16.msra.mxu0 0
      %2931 = vmatprep.subr.bf16.mxu0 0
      %2932 = vmatpush2.bf16.msra.mxu0 0
      %2933 = vmatprep.subr.bf16.mxu0 0
      %2934 = vmatpush2.bf16.msra.mxu0 0
      %2935 = vmatprep.subr.bf16.mxu0 0
      %2936 = vmatpush2.bf16.msra.mxu0 0
      %2937 = vmatprep.subr.bf16.mxu0 0
      %2938 = vmatpush2.bf16.msra.mxu0 0
      %2939 = vmatprep.subr.bf16.mxu0 0
      %2940 = vmatpush2.bf16.msra.mxu0 0
      %2941 = vmatprep.subr.bf16.mxu0 0
      %2942 = vmatpush2.bf16.msra.mxu0 0
      %2943 = vmatprep.mubr.bf16.mxu0 0
      %2944 = vmatmul.mubr.bf16.gmra.mxu0 %v2909
      %v2945 = vpop.f32.mrf.mxu0
      %v2946 = vadd.f32 0.0, %v2945
      %v2947 = vpop.f32.mrf.mxu0
      %v2948 = vadd.f32 0.0, %v2947
      %v2949 = vpop.f32.mrf.mxu0
      %v2950 = vadd.f32 0.0, %v2949
      %v2951 = vpop.f32.mrf.mxu0
      %v2952 = vadd.f32 0.0, %v2951
      %2953 = vdwg.mxu0
      %v2956 = vunpack.c.l.b16 %v2359
      %v2957 = vunpack.c.l.b16 %v2360
      %v2958 = vpack.c.b16 %v2957, %v2956
      %2959 = vrot.lane.b32.xlu0 %v2409, 15
      %v2960 = vpop.permute.xlu0 %2959
      %2961 = vrot.lane.b32.xlu0 %v2410, 15
      %v2962 = vpop.permute.xlu0 %2961
      %2963 = vrot.lane.b32.xlu0 %v2411, 15
      %v2964 = vpop.permute.xlu0 %2963
      %2965 = vrot.lane.b32.xlu0 %v2412, 15
      %v2966 = vpop.permute.xlu0 %2965
      %2967 = vrot.lane.b32.xlu0 %v2413, 15
      %v2968 = vpop.permute.xlu0 %2967
      %2969 = vrot.lane.b32.xlu0 %v2414, 15
      %v2970 = vpop.permute.xlu0 %2969
      %2971 = vrot.lane.b32.xlu0 %v2415, 15
      %v2972 = vpop.permute.xlu0 %2971
      %2973 = vrot.lane.b32.xlu0 %v2416, 15
      %v2974 = vpop.permute.xlu0 %2973
      %2975 = vrot.lane.b32.xlu0 %v2417, 15
      %v2976 = vpop.permute.xlu0 %2975
      %2977 = vrot.lane.b32.xlu0 %v2418, 15
      %v2978 = vpop.permute.xlu0 %2977
      %2979 = vrot.lane.b32.xlu0 %v2419, 15
      %v2980 = vpop.permute.xlu0 %2979
      %2981 = vrot.lane.b32.xlu0 %v2420, 15
      %v2982 = vpop.permute.xlu0 %2981
      %v2983 = vsel %vm980, %v2960, %v2962
      %v2984 = vsel %vm980, %v2962, %v2964
      %v2985 = vsel %vm980, %v2966, %v2968
      %v2986 = vsel %vm980, %v2968, %v2970
      %v2987 = vsel %vm980, %v2972, %v2974
      %v2988 = vsel %vm980, %v2974, %v2976
      %v2989 = vsel %vm980, %v2978, %v2980
      %v2990 = vsel %vm980, %v2980, %v2982
      %v3000 = vsel %vm2461, %v2958, 0
      %3002 = vmatprep.subr.bf16.mxu0 0
      %3003 = vmatpush1.bf16.msra.mxu0 0
      %3004 = vmatprep.subr.bf16.mxu0 0
      %3005 = vmatpush1.bf16.msra.mxu0 0
      %3006 = vmatprep.subr.bf16.mxu0 0
      %3007 = vmatpush1.bf16.msra.mxu0 0
      %3008 = vmatprep.subr.bf16.mxu0 0
      %3009 = vmatpush1.bf16.msra.mxu0 0
      %3010 = vmatprep.subr.bf16.mxu0 %v2990
      %3011 = vmatpush1.bf16.msra.mxu0 %v2989
      %3012 = vmatprep.subr.bf16.mxu0 %v2988
      %3013 = vmatpush1.bf16.msra.mxu0 %v2987
      %3014 = vmatprep.subr.bf16.mxu0 %v2986
      %3015 = vmatpush1.bf16.msra.mxu0 %v2985
      %3016 = vmatprep.subr.bf16.mxu0 %v2984
      %3017 = vmatpush1.bf16.msra.mxu0 %v2983
      %3018 = vmatprep.subr.bf16.mxu0 0
      %3019 = vmatpush2.bf16.msra.mxu0 0
      %3020 = vmatprep.subr.bf16.mxu0 0
      %3021 = vmatpush2.bf16.msra.mxu0 0
      %3022 = vmatprep.subr.bf16.mxu0 0
      %3023 = vmatpush2.bf16.msra.mxu0 0
      %3024 = vmatprep.subr.bf16.mxu0 0
      %3025 = vmatpush2.bf16.msra.mxu0 0
      %3026 = vmatprep.subr.bf16.mxu0 0
      %3027 = vmatpush2.bf16.msra.mxu0 0
      %3028 = vmatprep.subr.bf16.mxu0 0
      %3029 = vmatpush2.bf16.msra.mxu0 0
      %3030 = vmatprep.subr.bf16.mxu0 0
      %3031 = vmatpush2.bf16.msra.mxu0 0
      %3032 = vmatprep.subr.bf16.mxu0 0
      %3033 = vmatpush2.bf16.msra.mxu0 0
      %3034 = vmatprep.mubr.bf16.mxu0 0
      %3035 = vmatmul.mubr.bf16.gmra.mxu0 %v3000
      %v3036 = vpop.f32.mrf.mxu0
      %v3037 = vadd.f32 %v2946, %v3036
      %v3038 = vpop.f32.mrf.mxu0
      %v3039 = vadd.f32 %v2948, %v3038
      %v3040 = vpop.f32.mrf.mxu0
      %v3041 = vadd.f32 %v2950, %v3040
      %v3042 = vpop.f32.mrf.mxu0
      %v3043 = vadd.f32 %v2952, %v3042
      %3044 = vdwg.mxu0
      %s3045 = scalar_lea.vmem %s5, 48
      %v3046 = vld [vmem:[%s3045] sm:$0xf]
      %v3047 = vld [vmem:[%s3045 + $0x4] sm:$0xf]
      %v3050 = vunpack.c.l.b16 %v3046
      %v3051 = vunpack.c.l.b16 %v3047
      %v3052 = vpack.c.b16 %v3051, %v3050
      %3053 = vrot.lane.b32.xlu0 %v2856, 113
      %v3054 = vpop.permute.xlu0 %3053
      %3055 = vrot.lane.b32.xlu0 %v2857, 113
      %v3056 = vpop.permute.xlu0 %3055
      %3057 = vrot.lane.b32.xlu0 %v2858, 113
      %v3058 = vpop.permute.xlu0 %3057
      %3059 = vrot.lane.b32.xlu0 %v2859, 113
      %v3060 = vpop.permute.xlu0 %3059
      %3061 = vrot.lane.b32.xlu0 %v2860, 113
      %v3062 = vpop.permute.xlu0 %3061
      %3063 = vrot.lane.b32.xlu0 %v2861, 113
      %v3064 = vpop.permute.xlu0 %3063
      %3065 = vrot.lane.b32.xlu0 %v2862, 113
      %v3066 = vpop.permute.xlu0 %3065
      %3067 = vrot.lane.b32.xlu0 %v2863, 113
      %v3068 = vpop.permute.xlu0 %3067
      %3069 = vrot.lane.b32.xlu0 %v2864, 113
      %v3070 = vpop.permute.xlu0 %3069
      %3071 = vrot.lane.b32.xlu0 %v2865, 113
      %v3072 = vpop.permute.xlu0 %3071
      %3073 = vrot.lane.b32.xlu0 %v2866, 113
      %v3074 = vpop.permute.xlu0 %3073
      %3075 = vrot.lane.b32.xlu0 %v2867, 113
      %v3076 = vpop.permute.xlu0 %3075
      %v3077 = vsel %vm1055, %v3054, %v3056
      %v3078 = vsel %vm1055, %v3056, %v3058
      %v3079 = vsel %vm1055, %v3060, %v3062
      %v3080 = vsel %vm1055, %v3062, %v3064
      %v3081 = vsel %vm1055, %v3066, %v3068
      %v3082 = vsel %vm1055, %v3068, %v3070
      %v3083 = vsel %vm1055, %v3072, %v3074
      %v3084 = vsel %vm1055, %v3074, %v3076
      %v3094 = vsel %vm2461, %v3052, 0
      %3096 = vmatprep.subr.bf16.mxu0 0
      %3097 = vmatpush1.bf16.msra.mxu0 0
      %3098 = vmatprep.subr.bf16.mxu0 0
      %3099 = vmatpush1.bf16.msra.mxu0 0
      %3100 = vmatprep.subr.bf16.mxu0 0
      %3101 = vmatpush1.bf16.msra.mxu0 0
      %3102 = vmatprep.subr.bf16.mxu0 0
      %3103 = vmatpush1.bf16.msra.mxu0 0
      %3104 = vmatprep.subr.bf16.mxu0 %v3084
      %3105 = vmatpush1.bf16.msra.mxu0 %v3083
      %3106 = vmatprep.subr.bf16.mxu0 %v3082
      %3107 = vmatpush1.bf16.msra.mxu0 %v3081
      %3108 = vmatprep.subr.bf16.mxu0 %v3080
      %3109 = vmatpush1.bf16.msra.mxu0 %v3079
      %3110 = vmatprep.subr.bf16.mxu0 %v3078
      %3111 = vmatpush1.bf16.msra.mxu0 %v3077
      %3112 = vmatprep.subr.bf16.mxu0 0
      %3113 = vmatpush2.bf16.msra.mxu0 0
      %3114 = vmatprep.subr.bf16.mxu0 0
      %3115 = vmatpush2.bf16.msra.mxu0 0
      %3116 = vmatprep.subr.bf16.mxu0 0
      %3117 = vmatpush2.bf16.msra.mxu0 0
      %3118 = vmatprep.subr.bf16.mxu0 0
      %3119 = vmatpush2.bf16.msra.mxu0 0
      %3120 = vmatprep.subr.bf16.mxu0 0
      %3121 = vmatpush2.bf16.msra.mxu0 0
      %3122 = vmatprep.subr.bf16.mxu0 0
      %3123 = vmatpush2.bf16.msra.mxu0 0
      %3124 = vmatprep.subr.bf16.mxu0 0
      %3125 = vmatpush2.bf16.msra.mxu0 0
      %3126 = vmatprep.subr.bf16.mxu0 0
      %3127 = vmatpush2.bf16.msra.mxu0 0
      %3128 = vmatprep.mubr.bf16.mxu0 0
      %3129 = vmatmul.mubr.bf16.gmra.mxu0 %v3094
      %v3130 = vpop.f32.mrf.mxu0
      %v3131 = vadd.f32 0.0, %v3130
      %v3132 = vpop.f32.mrf.mxu0
      %v3133 = vadd.f32 0.0, %v3132
      %v3134 = vpop.f32.mrf.mxu0
      %v3135 = vadd.f32 0.0, %v3134
      %v3136 = vpop.f32.mrf.mxu0
      %v3137 = vadd.f32 0.0, %v3136
      %3138 = vdwg.mxu0
      %v3139 = vadd.f32 %v2591, %v3131
      %v3140 = vadd.f32 %v2593, %v3133
      %v3141 = vadd.f32 %v2595, %v3135
      %v3142 = vadd.f32 %v2597, %v3137
      %s3143 = scalar_lea.vmem %s5, 56
      %v3144 = vld [vmem:[%s3143] sm:$0xf]
      %v3145 = vld [vmem:[%s3143 + $0x4] sm:$0xf]
      %v3148 = vunpack.c.l.b16 %v3144
      %v3149 = vunpack.c.l.b16 %v3145
      %v3150 = vpack.c.b16 %v3149, %v3148
      %3151 = vrot.lane.b32.xlu0 %v2856, 112
      %v3152 = vpop.permute.xlu0 %3151
      %3153 = vrot.lane.b32.xlu0 %v2857, 112
      %v3154 = vpop.permute.xlu0 %3153
      %3155 = vrot.lane.b32.xlu0 %v2858, 112
      %v3156 = vpop.permute.xlu0 %3155
      %3157 = vrot.lane.b32.xlu0 %v2859, 112
      %v3158 = vpop.permute.xlu0 %3157
      %3159 = vrot.lane.b32.xlu0 %v2860, 112
      %v3160 = vpop.permute.xlu0 %3159
      %3161 = vrot.lane.b32.xlu0 %v2861, 112
      %v3162 = vpop.permute.xlu0 %3161
      %3163 = vrot.lane.b32.xlu0 %v2862, 112
      %v3164 = vpop.permute.xlu0 %3163
      %3165 = vrot.lane.b32.xlu0 %v2863, 112
      %v3166 = vpop.permute.xlu0 %3165
      %3167 = vrot.lane.b32.xlu0 %v2864, 112
      %v3168 = vpop.permute.xlu0 %3167
      %3169 = vrot.lane.b32.xlu0 %v2865, 112
      %v3170 = vpop.permute.xlu0 %3169
      %3171 = vrot.lane.b32.xlu0 %v2866, 112
      %v3172 = vpop.permute.xlu0 %3171
      %3173 = vrot.lane.b32.xlu0 %v2867, 112
      %v3174 = vpop.permute.xlu0 %3173
      %v3175 = vsel %vm1134, %v3152, %v3154
      %v3176 = vsel %vm1134, %v3154, %v3156
      %v3177 = vsel %vm1134, %v3158, %v3160
      %v3178 = vsel %vm1134, %v3160, %v3162
      %v3179 = vsel %vm1134, %v3164, %v3166
      %v3180 = vsel %vm1134, %v3166, %v3168
      %v3181 = vsel %vm1134, %v3170, %v3172
      %v3182 = vsel %vm1134, %v3172, %v3174
      %v3192 = vsel %vm2461, %v3150, 0
      %3194 = vmatprep.subr.bf16.mxu0 0
      %3195 = vmatpush1.bf16.msra.mxu0 0
      %3196 = vmatprep.subr.bf16.mxu0 0
      %3197 = vmatpush1.bf16.msra.mxu0 0
      %3198 = vmatprep.subr.bf16.mxu0 0
      %3199 = vmatpush1.bf16.msra.mxu0 0
      %3200 = vmatprep.subr.bf16.mxu0 0
      %3201 = vmatpush1.bf16.msra.mxu0 0
      %3202 = vmatprep.subr.bf16.mxu0 %v3182
      %3203 = vmatpush1.bf16.msra.mxu0 %v3181
      %3204 = vmatprep.subr.bf16.mxu0 %v3180
      %3205 = vmatpush1.bf16.msra.mxu0 %v3179
      %3206 = vmatprep.subr.bf16.mxu0 %v3178
      %3207 = vmatpush1.bf16.msra.mxu0 %v3177
      %3208 = vmatprep.subr.bf16.mxu0 %v3176
      %3209 = vmatpush1.bf16.msra.mxu0 %v3175
      %3210 = vmatprep.subr.bf16.mxu0 0
      %3211 = vmatpush2.bf16.msra.mxu0 0
      %3212 = vmatprep.subr.bf16.mxu0 0
      %3213 = vmatpush2.bf16.msra.mxu0 0
      %3214 = vmatprep.subr.bf16.mxu0 0
      %3215 = vmatpush2.bf16.msra.mxu0 0
      %3216 = vmatprep.subr.bf16.mxu0 0
      %3217 = vmatpush2.bf16.msra.mxu0 0
      %3218 = vmatprep.subr.bf16.mxu0 0
      %3219 = vmatpush2.bf16.msra.mxu0 0
      %3220 = vmatprep.subr.bf16.mxu0 0
      %3221 = vmatpush2.bf16.msra.mxu0 0
      %3222 = vmatprep.subr.bf16.mxu0 0
      %3223 = vmatpush2.bf16.msra.mxu0 0
      %3224 = vmatprep.subr.bf16.mxu0 0
      %3225 = vmatpush2.bf16.msra.mxu0 0
      %3226 = vmatprep.mubr.bf16.mxu0 0
      %3227 = vmatmul.mubr.bf16.gmra.mxu0 %v3192
      %v3228 = vpop.f32.mrf.mxu0
      %v3229 = vadd.f32 0.0, %v3228
      %v3230 = vpop.f32.mrf.mxu0
      %v3231 = vadd.f32 0.0, %v3230
      %v3232 = vpop.f32.mrf.mxu0
      %v3233 = vadd.f32 0.0, %v3232
      %v3234 = vpop.f32.mrf.mxu0
      %v3235 = vadd.f32 0.0, %v3234
      %3236 = vdwg.mxu0
      %v3237 = vadd.f32 %v2784, %v3229
      %v3238 = vadd.f32 %v2786, %v3231
      %v3239 = vadd.f32 %v2788, %v3233
      %v3240 = vadd.f32 %v2790, %v3235
      %s3241 = scalar_lea.vmem %s5, 64
      %v3242 = vld [vmem:[%s3241] sm:$0xf]
      %v3243 = vld [vmem:[%s3241 + $0x4] sm:$0xf]
      %v3246 = vunpack.c.l.b16 %v3242
      %v3247 = vunpack.c.l.b16 %v3243
      %v3248 = vpack.c.b16 %v3247, %v3246
      %3249 = vrot.lane.b32.xlu0 %v2856, 111
      %v3250 = vpop.permute.xlu0 %3249
      %3251 = vrot.lane.b32.xlu0 %v2857, 111
      %v3252 = vpop.permute.xlu0 %3251
      %3253 = vrot.lane.b32.xlu0 %v2858, 111
      %v3254 = vpop.permute.xlu0 %3253
      %3255 = vrot.lane.b32.xlu0 %v2859, 111
      %v3256 = vpop.permute.xlu0 %3255
      %3257 = vrot.lane.b32.xlu0 %v2860, 111
      %v3258 = vpop.permute.xlu0 %3257
      %3259 = vrot.lane.b32.xlu0 %v2861, 111
      %v3260 = vpop.permute.xlu0 %3259
      %3261 = vrot.lane.b32.xlu0 %v2862, 111
      %v3262 = vpop.permute.xlu0 %3261
      %3263 = vrot.lane.b32.xlu0 %v2863, 111
      %v3264 = vpop.permute.xlu0 %3263
      %3265 = vrot.lane.b32.xlu0 %v2864, 111
      %v3266 = vpop.permute.xlu0 %3265
      %3267 = vrot.lane.b32.xlu0 %v2865, 111
      %v3268 = vpop.permute.xlu0 %3267
      %3269 = vrot.lane.b32.xlu0 %v2866, 111
      %v3270 = vpop.permute.xlu0 %3269
      %3271 = vrot.lane.b32.xlu0 %v2867, 111
      %v3272 = vpop.permute.xlu0 %3271
      %v3273 = vsel %vm1213, %v3250, %v3252
      %v3274 = vsel %vm1213, %v3252, %v3254
      %v3275 = vsel %vm1213, %v3256, %v3258
      %v3276 = vsel %vm1213, %v3258, %v3260
      %v3277 = vsel %vm1213, %v3262, %v3264
      %v3278 = vsel %vm1213, %v3264, %v3266
      %v3279 = vsel %vm1213, %v3268, %v3270
      %v3280 = vsel %vm1213, %v3270, %v3272
      %v3290 = vsel %vm2461, %v3248, 0
      %3292 = vmatprep.subr.bf16.mxu0 0
      %3293 = vmatpush1.bf16.msra.mxu0 0
      %3294 = vmatprep.subr.bf16.mxu0 0
      %3295 = vmatpush1.bf16.msra.mxu0 0
      %3296 = vmatprep.subr.bf16.mxu0 0
      %3297 = vmatpush1.bf16.msra.mxu0 0
      %3298 = vmatprep.subr.bf16.mxu0 0
      %3299 = vmatpush1.bf16.msra.mxu0 0
      %3300 = vmatprep.subr.bf16.mxu0 %v3280
      %3301 = vmatpush1.bf16.msra.mxu0 %v3279
      %3302 = vmatprep.subr.bf16.mxu0 %v3278
      %3303 = vmatpush1.bf16.msra.mxu0 %v3277
      %3304 = vmatprep.subr.bf16.mxu0 %v3276
      %3305 = vmatpush1.bf16.msra.mxu0 %v3275
      %3306 = vmatprep.subr.bf16.mxu0 %v3274
      %3307 = vmatpush1.bf16.msra.mxu0 %v3273
      %3308 = vmatprep.subr.bf16.mxu0 0
      %3309 = vmatpush2.bf16.msra.mxu0 0
      %3310 = vmatprep.subr.bf16.mxu0 0
      %3311 = vmatpush2.bf16.msra.mxu0 0
      %3312 = vmatprep.subr.bf16.mxu0 0
      %3313 = vmatpush2.bf16.msra.mxu0 0
      %3314 = vmatprep.subr.bf16.mxu0 0
      %3315 = vmatpush2.bf16.msra.mxu0 0
      %3316 = vmatprep.subr.bf16.mxu0 0
      %3317 = vmatpush2.bf16.msra.mxu0 0
      %3318 = vmatprep.subr.bf16.mxu0 0
      %3319 = vmatpush2.bf16.msra.mxu0 0
      %3320 = vmatprep.subr.bf16.mxu0 0
      %3321 = vmatpush2.bf16.msra.mxu0 0
      %3322 = vmatprep.subr.bf16.mxu0 0
      %3323 = vmatpush2.bf16.msra.mxu0 0
      %3324 = vmatprep.mubr.bf16.mxu0 0
      %3325 = vmatmul.mubr.bf16.gmra.mxu0 %v3290
      %v3326 = vpop.f32.mrf.mxu0
      %v3327 = vadd.f32 0.0, %v3326
      %v3328 = vpop.f32.mrf.mxu0
      %v3329 = vadd.f32 0.0, %v3328
      %v3330 = vpop.f32.mrf.mxu0
      %v3331 = vadd.f32 0.0, %v3330
      %v3332 = vpop.f32.mrf.mxu0
      %v3333 = vadd.f32 0.0, %v3332
      %3334 = vdwg.mxu0
      %v3335 = vadd.f32 %v3037, %v3327
      %v3336 = vadd.f32 %v3039, %v3329
      %v3337 = vadd.f32 %v3041, %v3331
      %v3338 = vadd.f32 %v3043, %v3333
      %v3339 = vmul.f32 %v3139, %v446
      %v3340 = vmul.f32 %v3140, %v447
      %v3341 = vmul.f32 %v3141, %v446
      %v3342 = vmul.f32 %v3142, %v447
      %v3343 = vadd.f32 %v3237, %v3339
      %v3344 = vadd.f32 %v3238, %v3340
      %v3345 = vadd.f32 %v3239, %v3341
      %v3346 = vadd.f32 %v3240, %v3342
      %v3347 = vmul.f32 %v3335, %v452
      %v3348 = vmul.f32 %v3336, %v453
      %v3349 = vmul.f32 %v3337, %v452
      %v3350 = vmul.f32 %v3338, %v453
      %v3351 = vadd.f32 %v3343, %v3347
      %v3352 = vadd.f32 %v3344, %v3348
      %v3353 = vadd.f32 %v3345, %v3349
      %v3354 = vadd.f32 %v3346, %v3350
      %v3355 = vld [vmem:[%s6] sm:$0xff]
      %v3356 = vld [vmem:[%s6 + $0x8] sm:$0xff]
      %3358 = vset.pattern.permute.xlu0 0
      %3359 = vperm.xlu0 %3358, %v3355
      %v3360 = vpop.permute.xlu0 %3359
      %3363 = vset.pattern.permute.xlu0 0
      %3364 = vperm.xlu0 %3363, %v3356
      %v3365 = vpop.permute.xlu0 %3364
      %v3367 = vadd.f32 %v3351, %v3360
      %v3368 = vadd.f32 %v3352, %v3360
      %v3369 = vadd.f32 %v3353, %v3365
      %v3370 = vadd.f32 %v3354, %v3365
      %v3371 = vmul.f32 %v3367, 0.2
      %v3372 = vmul.f32 %v3368, 0.2
      %v3373 = vmul.f32 %v3369, 0.2
      %v3374 = vmul.f32 %v3370, 0.2
      %v3375 = vmax.f32 %v3367, %v3371
      %v3376 = vmax.f32 %v3368, %v3372
      %v3377 = vmax.f32 %v3369, %v3373
      %v3378 = vmax.f32 %v3370, %v3374
      %v3379 = vpack.c.bf16 %v3377, %v3375
      %v3380 = vpack.c.bf16 %v3378, %v3376
      %v3383 = vunpack.c.l.b16 %v3379
      %v3384 = vunpack.c.l.b16 %v3380
      %v3385 = vunpack.c.h.b16 %v3379
      %v3386 = vunpack.c.h.b16 %v3380
      %v3387 = vpack.c.b16 %v3384, %v3383
      %v3388 = vpack.c.b16 %v3386, %v3385
      %3391 = vst [vmem:[#allocation2 + $0x84] sm:$0xff] %v3387
      %3392 = vst [vmem:[#allocation2 + $0x94] sm:$0xff] %v3388
      %v3393 = vld [vmem:[#allocation2] sm:$0xff]
      %v3394 = vld [vmem:[#allocation2 + $0x8] sm:$0xf]
      %v3395 = vld [vmem:[#allocation2 + $0x10] sm:$0xff]
      %v3396 = vld [vmem:[#allocation2 + $0x18] sm:$0xf]
      %v3397 = vld [vmem:[#allocation2 + $0x20] sm:$0xff]
      %v3398 = vld [vmem:[#allocation2 + $0x28] sm:$0xf]
      %v3399 = vld [vmem:[#allocation2 + $0x30] sm:$0xff]
      %v3400 = vld [vmem:[#allocation2 + $0x38] sm:$0xf]
      %v3401 = vld [vmem:[#allocation2 + $0x40] sm:$0xff]
      %v3402 = vld [vmem:[#allocation2 + $0x48] sm:$0xf]
      %v3403 = vld [vmem:[#allocation2 + $0x50] sm:$0xff]
      %v3404 = vld [vmem:[#allocation2 + $0x58] sm:$0xf]
      %v3405 = vld [vmem:[#allocation2 + $0x60] sm:$0xff]
      %v3406 = vld [vmem:[#allocation2 + $0x68] sm:$0xf]
      %v3407 = vld [vmem:[#allocation2 + $0x70] sm:$0xff]
      %v3408 = vld [vmem:[#allocation2 + $0x78] sm:$0xf]
      %v3409 = vld [vmem:[#allocation2 + $0x80] sm:$0xff]
      %v3410 = vld [vmem:[#allocation2 + $0x88] sm:$0xf]
      %v3411 = vld [vmem:[#allocation2 + $0x90] sm:$0xff]
      %v3412 = vld [vmem:[#allocation2 + $0x98] sm:$0xf]
      %v3413 = vld [vmem:[%s7] sm:$0xf]
      %v3414 = vld [vmem:[%s7 + $0x4] sm:$0xf]
      %s3415 = scalar_lea.vmem %s7, 8
      %v3416 = vld [vmem:[%s3415] sm:$0xf]
      %v3417 = vld [vmem:[%s3415 + $0x4] sm:$0xf]
      %s3418 = scalar_lea.vmem %s7, 16
      %v3419 = vld [vmem:[%s3418] sm:$0xf]
      %v3420 = vld [vmem:[%s3418 + $0x4] sm:$0xf]
      %s3421 = scalar_lea.vmem %s7, 24
      %v3422 = vld [vmem:[%s3421] sm:$0xf]
      %v3423 = vld [vmem:[%s3421 + $0x4] sm:$0xf]
      %v3426 = vunpack.c.l.b16 %v3422
      %v3427 = vunpack.c.l.b16 %v3423
      %v3428 = vpack.c.b16 %v3427, %v3426
      %v3449 = vunpack.c.l.b16 %v3393
      %v3450 = vunpack.c.h.b16 %v3393
      %v3451 = vunpack.c.l.b16 %v3394
      %v3452 = vunpack.c.l.b16 %v3395
      %v3453 = vunpack.c.h.b16 %v3395
      %v3454 = vunpack.c.l.b16 %v3396
      %v3455 = vunpack.c.l.b16 %v3397
      %v3456 = vunpack.c.h.b16 %v3397
      %v3457 = vunpack.c.l.b16 %v3398
      %v3458 = vunpack.c.l.b16 %v3399
      %v3459 = vunpack.c.h.b16 %v3399
      %v3460 = vunpack.c.l.b16 %v3400
      %v3461 = vunpack.c.l.b16 %v3401
      %v3462 = vunpack.c.h.b16 %v3401
      %v3463 = vunpack.c.l.b16 %v3402
      %v3464 = vunpack.c.l.b16 %v3403
      %v3465 = vunpack.c.h.b16 %v3403
      %v3466 = vunpack.c.l.b16 %v3404
      %v3467 = vunpack.c.l.b16 %v3405
      %v3468 = vunpack.c.h.b16 %v3405
      %v3469 = vunpack.c.l.b16 %v3406
      %v3470 = vunpack.c.l.b16 %v3407
      %v3471 = vunpack.c.h.b16 %v3407
      %v3472 = vunpack.c.l.b16 %v3408
      %v3473 = vunpack.c.l.b16 %v3409
      %v3474 = vunpack.c.h.b16 %v3409
      %v3475 = vunpack.c.l.b16 %v3410
      %v3476 = vunpack.c.l.b16 %v3411
      %v3477 = vunpack.c.h.b16 %v3411
      %v3478 = vunpack.c.l.b16 %v3412
      %v3479 = vpack.c.b16 %v3452, %v3449
      %v3480 = vpack.c.b16 %v3453, %v3450
      %v3481 = vpack.c.b16 %v3454, %v3451
      %v3482 = vpack.c.b16 %v3458, %v3455
      %v3483 = vpack.c.b16 %v3459, %v3456
      %v3484 = vpack.c.b16 %v3460, %v3457
      %v3485 = vpack.c.b16 %v3464, %v3461
      %v3486 = vpack.c.b16 %v3465, %v3462
      %v3487 = vpack.c.b16 %v3466, %v3463
      %v3488 = vpack.c.b16 %v3470, %v3467
      %v3489 = vpack.c.b16 %v3471, %v3468
      %v3490 = vpack.c.b16 %v3472, %v3469
      %v3491 = vpack.c.b16 %v3476, %v3473
      %v3492 = vpack.c.b16 %v3477, %v3474
      %v3493 = vpack.c.b16 %v3478, %v3475
      %3494 = vrot.lane.b32.xlu0 %v3479, 1
      %v3495 = vpop.permute.xlu0 %3494
      %3496 = vrot.lane.b32.xlu0 %v3480, 1
      %v3497 = vpop.permute.xlu0 %3496
      %3498 = vrot.lane.b32.xlu0 %v3481, 1
      %v3499 = vpop.permute.xlu0 %3498
      %3500 = vrot.lane.b32.xlu0 %v3482, 1
      %v3501 = vpop.permute.xlu0 %3500
      %3502 = vrot.lane.b32.xlu0 %v3483, 1
      %v3503 = vpop.permute.xlu0 %3502
      %3504 = vrot.lane.b32.xlu0 %v3484, 1
      %v3505 = vpop.permute.xlu0 %3504
      %3506 = vrot.lane.b32.xlu0 %v3485, 1
      %v3507 = vpop.permute.xlu0 %3506
      %3508 = vrot.lane.b32.xlu0 %v3486, 1
      %v3509 = vpop.permute.xlu0 %3508
      %3510 = vrot.lane.b32.xlu0 %v3487, 1
      %v3511 = vpop.permute.xlu0 %3510
      %3512 = vrot.lane.b32.xlu0 %v3488, 1
      %v3513 = vpop.permute.xlu0 %3512
      %3514 = vrot.lane.b32.xlu0 %v3489, 1
      %v3515 = vpop.permute.xlu0 %3514
      %3516 = vrot.lane.b32.xlu0 %v3490, 1
      %v3517 = vpop.permute.xlu0 %3516
      %3518 = vrot.lane.b32.xlu0 %v3491, 1
      %v3519 = vpop.permute.xlu0 %3518
      %3520 = vrot.lane.b32.xlu0 %v3492, 1
      %v3521 = vpop.permute.xlu0 %3520
      %3522 = vrot.lane.b32.xlu0 %v3493, 1
      %v3523 = vpop.permute.xlu0 %3522
      %v3524 = vsel %vm576, %v3495, %v3497
      %v3525 = vsel %vm576, %v3497, %v3499
      %v3526 = vsel %vm576, %v3501, %v3503
      %v3527 = vsel %vm576, %v3503, %v3505
      %v3528 = vsel %vm576, %v3507, %v3509
      %v3529 = vsel %vm576, %v3509, %v3511
      %v3530 = vsel %vm576, %v3513, %v3515
      %v3531 = vsel %vm576, %v3515, %v3517
      %v3532 = vsel %vm576, %v3519, %v3521
      %v3533 = vsel %vm576, %v3521, %v3523
      %vm3544 = vcmask 654336
      %v3546 = vsel %vm3544, %v3428, 0
      %3548 = vmatprep.subr.bf16.mxu0 0
      %3549 = vmatpush1.bf16.msra.mxu0 0
      %3550 = vmatprep.subr.bf16.mxu0 0
      %3551 = vmatpush1.bf16.msra.mxu0 0
      %3552 = vmatprep.subr.bf16.mxu0 0
      %3553 = vmatpush1.bf16.msra.mxu0 0
      %3554 = vmatprep.subr.bf16.mxu0 %v3533
      %3555 = vmatpush1.bf16.msra.mxu0 %v3532
      %3556 = vmatprep.subr.bf16.mxu0 %v3531
      %3557 = vmatpush1.bf16.msra.mxu0 %v3530
      %3558 = vmatprep.subr.bf16.mxu0 %v3529
      %3559 = vmatpush1.bf16.msra.mxu0 %v3528
      %3560 = vmatprep.subr.bf16.mxu0 %v3527
      %3561 = vmatpush1.bf16.msra.mxu0 %v3526
      %3562 = vmatprep.subr.bf16.mxu0 %v3525
      %3563 = vmatpush1.bf16.msra.mxu0 %v3524
      %3564 = vmatprep.subr.bf16.mxu0 0
      %3565 = vmatpush2.bf16.msra.mxu0 0
      %3566 = vmatprep.subr.bf16.mxu0 0
      %3567 = vmatpush2.bf16.msra.mxu0 0
      %3568 = vmatprep.subr.bf16.mxu0 0
      %3569 = vmatpush2.bf16.msra.mxu0 0
      %3570 = vmatprep.subr.bf16.mxu0 0
      %3571 = vmatpush2.bf16.msra.mxu0 0
      %3572 = vmatprep.subr.bf16.mxu0 0
      %3573 = vmatpush2.bf16.msra.mxu0 0
      %3574 = vmatprep.subr.bf16.mxu0 0
      %3575 = vmatpush2.bf16.msra.mxu0 0
      %3576 = vmatprep.subr.bf16.mxu0 0
      %3577 = vmatpush2.bf16.msra.mxu0 0
      %3578 = vmatprep.subr.bf16.mxu0 0
      %3579 = vmatpush2.bf16.msra.mxu0 0
      %3580 = vmatprep.mubr.bf16.mxu0 0
      %3581 = vmatmul.mubr.bf16.gmra.mxu0 %v3546
      %v3582 = vpop.f32.mrf.mxu0
      %v3583 = vadd.f32 0.0, %v3582
      %v3584 = vpop.f32.mrf.mxu0
      %v3585 = vadd.f32 0.0, %v3584
      %v3586 = vpop.f32.mrf.mxu0
      %v3587 = vadd.f32 0.0, %v3586
      %v3588 = vpop.f32.mrf.mxu0
      %v3589 = vadd.f32 0.0, %v3588
      %3590 = vdwg.mxu0
      %v3593 = vunpack.c.l.b16 %v3413
      %v3594 = vunpack.c.l.b16 %v3414
      %v3595 = vpack.c.b16 %v3594, %v3593
      %3596 = vrot.lane.b32.xlu0 %v3479, 17
      %v3597 = vpop.permute.xlu0 %3596
      %3598 = vrot.lane.b32.xlu0 %v3480, 17
      %v3599 = vpop.permute.xlu0 %3598
      %3600 = vrot.lane.b32.xlu0 %v3481, 17
      %v3601 = vpop.permute.xlu0 %3600
      %3602 = vrot.lane.b32.xlu0 %v3482, 17
      %v3603 = vpop.permute.xlu0 %3602
      %3604 = vrot.lane.b32.xlu0 %v3483, 17
      %v3605 = vpop.permute.xlu0 %3604
      %3606 = vrot.lane.b32.xlu0 %v3484, 17
      %v3607 = vpop.permute.xlu0 %3606
      %3608 = vrot.lane.b32.xlu0 %v3485, 17
      %v3609 = vpop.permute.xlu0 %3608
      %3610 = vrot.lane.b32.xlu0 %v3486, 17
      %v3611 = vpop.permute.xlu0 %3610
      %3612 = vrot.lane.b32.xlu0 %v3487, 17
      %v3613 = vpop.permute.xlu0 %3612
      %3614 = vrot.lane.b32.xlu0 %v3488, 17
      %v3615 = vpop.permute.xlu0 %3614
      %3616 = vrot.lane.b32.xlu0 %v3489, 17
      %v3617 = vpop.permute.xlu0 %3616
      %3618 = vrot.lane.b32.xlu0 %v3490, 17
      %v3619 = vpop.permute.xlu0 %3618
      %3620 = vrot.lane.b32.xlu0 %v3491, 17
      %v3621 = vpop.permute.xlu0 %3620
      %3622 = vrot.lane.b32.xlu0 %v3492, 17
      %v3623 = vpop.permute.xlu0 %3622
      %3624 = vrot.lane.b32.xlu0 %v3493, 17
      %v3625 = vpop.permute.xlu0 %3624
      %v3626 = vsel %vm649, %v3597, %v3599
      %v3627 = vsel %vm649, %v3599, %v3601
      %v3628 = vsel %vm649, %v3603, %v3605
      %v3629 = vsel %vm649, %v3605, %v3607
      %v3630 = vsel %vm649, %v3609, %v3611
      %v3631 = vsel %vm649, %v3611, %v3613
      %v3632 = vsel %vm649, %v3615, %v3617
      %v3633 = vsel %vm649, %v3617, %v3619
      %v3634 = vsel %vm649, %v3621, %v3623
      %v3635 = vsel %vm649, %v3623, %v3625
      %v3647 = vsel %vm3544, %v3595, 0
      %3649 = vmatprep.subr.bf16.mxu0 0
      %3650 = vmatpush1.bf16.msra.mxu0 0
      %3651 = vmatprep.subr.bf16.mxu0 0
      %3652 = vmatpush1.bf16.msra.mxu0 0
      %3653 = vmatprep.subr.bf16.mxu0 0
      %3654 = vmatpush1.bf16.msra.mxu0 0
      %3655 = vmatprep.subr.bf16.mxu0 %v3635
      %3656 = vmatpush1.bf16.msra.mxu0 %v3634
      %3657 = vmatprep.subr.bf16.mxu0 %v3633
      %3658 = vmatpush1.bf16.msra.mxu0 %v3632
      %3659 = vmatprep.subr.bf16.mxu0 %v3631
      %3660 = vmatpush1.bf16.msra.mxu0 %v3630
      %3661 = vmatprep.subr.bf16.mxu0 %v3629
      %3662 = vmatpush1.bf16.msra.mxu0 %v3628
      %3663 = vmatprep.subr.bf16.mxu0 %v3627
      %3664 = vmatpush1.bf16.msra.mxu0 %v3626
      %3665 = vmatprep.subr.bf16.mxu0 0
      %3666 = vmatpush2.bf16.msra.mxu0 0
      %3667 = vmatprep.subr.bf16.mxu0 0
      %3668 = vmatpush2.bf16.msra.mxu0 0
      %3669 = vmatprep.subr.bf16.mxu0 0
      %3670 = vmatpush2.bf16.msra.mxu0 0
      %3671 = vmatprep.subr.bf16.mxu0 0
      %3672 = vmatpush2.bf16.msra.mxu0 0
      %3673 = vmatprep.subr.bf16.mxu0 0
      %3674 = vmatpush2.bf16.msra.mxu0 0
      %3675 = vmatprep.subr.bf16.mxu0 0
      %3676 = vmatpush2.bf16.msra.mxu0 0
      %3677 = vmatprep.subr.bf16.mxu0 0
      %3678 = vmatpush2.bf16.msra.mxu0 0
      %3679 = vmatprep.subr.bf16.mxu0 0
      %3680 = vmatpush2.bf16.msra.mxu0 0
      %3681 = vmatprep.mubr.bf16.mxu0 0
      %3682 = vmatmul.mubr.bf16.gmra.mxu0 %v3647
      %v3683 = vpop.f32.mrf.mxu0
      %v3684 = vadd.f32 %v3583, %v3683
      %v3685 = vpop.f32.mrf.mxu0
      %v3686 = vadd.f32 %v3585, %v3685
      %v3687 = vpop.f32.mrf.mxu0
      %v3688 = vadd.f32 %v3587, %v3687
      %v3689 = vpop.f32.mrf.mxu0
      %v3690 = vadd.f32 %v3589, %v3689
      %3691 = vdwg.mxu0
      %v3692 = vld [vmem:[#allocation2 + $0x4] sm:$0xff]
      %v3693 = vld [vmem:[#allocation2 + $0x14] sm:$0xff]
      %v3694 = vld [vmem:[#allocation2 + $0x24] sm:$0xff]
      %v3695 = vld [vmem:[#allocation2 + $0x34] sm:$0xff]
      %v3696 = vld [vmem:[#allocation2 + $0x44] sm:$0xff]
      %v3697 = vld [vmem:[#allocation2 + $0x54] sm:$0xff]
      %v3698 = vld [vmem:[#allocation2 + $0x64] sm:$0xff]
      %v3699 = vld [vmem:[#allocation2 + $0x74] sm:$0xff]
      %v3700 = vld [vmem:[#allocation2 + $0x84] sm:$0xff]
      %v3701 = vld [vmem:[#allocation2 + $0x94] sm:$0xff]
      %s3702 = scalar_lea.vmem %s7, 32
      %v3703 = vld [vmem:[%s3702] sm:$0xf]
      %v3704 = vld [vmem:[%s3702 + $0x4] sm:$0xf]
      %v3707 = vunpack.c.l.b16 %v3703
      %v3708 = vunpack.c.l.b16 %v3704
      %v3709 = vpack.c.b16 %v3708, %v3707
      %v3720 = vunpack.c.l.b16 %v3692
      %v3721 = vunpack.c.h.b16 %v3692
      %v3722 = vunpack.c.l.b16 %v3693
      %v3723 = vunpack.c.h.b16 %v3693
      %v3724 = vunpack.c.l.b16 %v3694
      %v3725 = vunpack.c.h.b16 %v3694
      %v3726 = vunpack.c.l.b16 %v3695
      %v3727 = vunpack.c.h.b16 %v3695
      %v3728 = vunpack.c.l.b16 %v3696
      %v3729 = vunpack.c.h.b16 %v3696
      %v3730 = vunpack.c.l.b16 %v3697
      %v3731 = vunpack.c.h.b16 %v3697
      %v3732 = vunpack.c.l.b16 %v3698
      %v3733 = vunpack.c.h.b16 %v3698
      %v3734 = vunpack.c.l.b16 %v3699
      %v3735 = vunpack.c.h.b16 %v3699
      %v3736 = vunpack.c.l.b16 %v3700
      %v3737 = vunpack.c.h.b16 %v3700
      %v3738 = vunpack.c.l.b16 %v3701
      %v3739 = vunpack.c.h.b16 %v3701
      %v3740 = vpack.c.b16 %v3722, %v3720
      %v3741 = vpack.c.b16 %v3723, %v3721
      %v3742 = vpack.c.b16 %v3726, %v3724
      %v3743 = vpack.c.b16 %v3727, %v3725
      %v3744 = vpack.c.b16 %v3730, %v3728
      %v3745 = vpack.c.b16 %v3731, %v3729
      %v3746 = vpack.c.b16 %v3734, %v3732
      %v3747 = vpack.c.b16 %v3735, %v3733
      %v3748 = vpack.c.b16 %v3738, %v3736
      %v3749 = vpack.c.b16 %v3739, %v3737
      %v3761 = vsel %vm3544, %v3709, 0
      %3763 = vmatprep.subr.bf16.mxu0 0
      %3764 = vmatpush1.bf16.msra.mxu0 0
      %3765 = vmatprep.subr.bf16.mxu0 0
      %3766 = vmatpush1.bf16.msra.mxu0 0
      %3767 = vmatprep.subr.bf16.mxu0 0
      %3768 = vmatpush1.bf16.msra.mxu0 0
      %3769 = vmatprep.subr.bf16.mxu0 %v3749
      %3770 = vmatpush1.bf16.msra.mxu0 %v3748
      %3771 = vmatprep.subr.bf16.mxu0 %v3747
      %3772 = vmatpush1.bf16.msra.mxu0 %v3746
      %3773 = vmatprep.subr.bf16.mxu0 %v3745
      %3774 = vmatpush1.bf16.msra.mxu0 %v3744
      %3775 = vmatprep.subr.bf16.mxu0 %v3743
      %3776 = vmatpush1.bf16.msra.mxu0 %v3742
      %3777 = vmatprep.subr.bf16.mxu0 %v3741
      %3778 = vmatpush1.bf16.msra.mxu0 %v3740
      %3779 = vmatprep.subr.bf16.mxu0 0
      %3780 = vmatpush2.bf16.msra.mxu0 0
      %3781 = vmatprep.subr.bf16.mxu0 0
      %3782 = vmatpush2.bf16.msra.mxu0 0
      %3783 = vmatprep.subr.bf16.mxu0 0
      %3784 = vmatpush2.bf16.msra.mxu0 0
      %3785 = vmatprep.subr.bf16.mxu0 0
      %3786 = vmatpush2.bf16.msra.mxu0 0
      %3787 = vmatprep.subr.bf16.mxu0 0
      %3788 = vmatpush2.bf16.msra.mxu0 0
      %3789 = vmatprep.subr.bf16.mxu0 0
      %3790 = vmatpush2.bf16.msra.mxu0 0
      %3791 = vmatprep.subr.bf16.mxu0 0
      %3792 = vmatpush2.bf16.msra.mxu0 0
      %3793 = vmatprep.subr.bf16.mxu0 0
      %3794 = vmatpush2.bf16.msra.mxu0 0
      %3795 = vmatprep.mubr.bf16.mxu0 0
      %3796 = vmatmul.mubr.bf16.gmra.mxu0 %v3761
      %v3797 = vpop.f32.mrf.mxu0
      %v3798 = vadd.f32 0.0, %v3797
      %v3799 = vpop.f32.mrf.mxu0
      %v3800 = vadd.f32 0.0, %v3799
      %v3801 = vpop.f32.mrf.mxu0
      %v3802 = vadd.f32 0.0, %v3801
      %v3803 = vpop.f32.mrf.mxu0
      %v3804 = vadd.f32 0.0, %v3803
      %3805 = vdwg.mxu0
      %v3808 = vunpack.c.l.b16 %v3416
      %v3809 = vunpack.c.l.b16 %v3417
      %v3810 = vpack.c.b16 %v3809, %v3808
      %3811 = vrot.lane.b32.xlu0 %v3479, 16
      %v3812 = vpop.permute.xlu0 %3811
      %3813 = vrot.lane.b32.xlu0 %v3480, 16
      %v3814 = vpop.permute.xlu0 %3813
      %3815 = vrot.lane.b32.xlu0 %v3481, 16
      %v3816 = vpop.permute.xlu0 %3815
      %3817 = vrot.lane.b32.xlu0 %v3482, 16
      %v3818 = vpop.permute.xlu0 %3817
      %3819 = vrot.lane.b32.xlu0 %v3483, 16
      %v3820 = vpop.permute.xlu0 %3819
      %3821 = vrot.lane.b32.xlu0 %v3484, 16
      %v3822 = vpop.permute.xlu0 %3821
      %3823 = vrot.lane.b32.xlu0 %v3485, 16
      %v3824 = vpop.permute.xlu0 %3823
      %3825 = vrot.lane.b32.xlu0 %v3486, 16
      %v3826 = vpop.permute.xlu0 %3825
      %3827 = vrot.lane.b32.xlu0 %v3487, 16
      %v3828 = vpop.permute.xlu0 %3827
      %3829 = vrot.lane.b32.xlu0 %v3488, 16
      %v3830 = vpop.permute.xlu0 %3829
      %3831 = vrot.lane.b32.xlu0 %v3489, 16
      %v3832 = vpop.permute.xlu0 %3831
      %3833 = vrot.lane.b32.xlu0 %v3490, 16
      %v3834 = vpop.permute.xlu0 %3833
      %3835 = vrot.lane.b32.xlu0 %v3491, 16
      %v3836 = vpop.permute.xlu0 %3835
      %3837 = vrot.lane.b32.xlu0 %v3492, 16
      %v3838 = vpop.permute.xlu0 %3837
      %3839 = vrot.lane.b32.xlu0 %v3493, 16
      %v3840 = vpop.permute.xlu0 %3839
      %v3841 = vsel %vm799, %v3812, %v3814
      %v3842 = vsel %vm799, %v3814, %v3816
      %v3843 = vsel %vm799, %v3818, %v3820
      %v3844 = vsel %vm799, %v3820, %v3822
      %v3845 = vsel %vm799, %v3824, %v3826
      %v3846 = vsel %vm799, %v3826, %v3828
      %v3847 = vsel %vm799, %v3830, %v3832
      %v3848 = vsel %vm799, %v3832, %v3834
      %v3849 = vsel %vm799, %v3836, %v3838
      %v3850 = vsel %vm799, %v3838, %v3840
      %v3862 = vsel %vm3544, %v3810, 0
      %3864 = vmatprep.subr.bf16.mxu0 0
      %3865 = vmatpush1.bf16.msra.mxu0 0
      %3866 = vmatprep.subr.bf16.mxu0 0
      %3867 = vmatpush1.bf16.msra.mxu0 0
      %3868 = vmatprep.subr.bf16.mxu0 0
      %3869 = vmatpush1.bf16.msra.mxu0 0
      %3870 = vmatprep.subr.bf16.mxu0 %v3850
      %3871 = vmatpush1.bf16.msra.mxu0 %v3849
      %3872 = vmatprep.subr.bf16.mxu0 %v3848
      %3873 = vmatpush1.bf16.msra.mxu0 %v3847
      %3874 = vmatprep.subr.bf16.mxu0 %v3846
      %3875 = vmatpush1.bf16.msra.mxu0 %v3845
      %3876 = vmatprep.subr.bf16.mxu0 %v3844
      %3877 = vmatpush1.bf16.msra.mxu0 %v3843
      %3878 = vmatprep.subr.bf16.mxu0 %v3842
      %3879 = vmatpush1.bf16.msra.mxu0 %v3841
      %3880 = vmatprep.subr.bf16.mxu0 0
      %3881 = vmatpush2.bf16.msra.mxu0 0
      %3882 = vmatprep.subr.bf16.mxu0 0
      %3883 = vmatpush2.bf16.msra.mxu0 0
      %3884 = vmatprep.subr.bf16.mxu0 0
      %3885 = vmatpush2.bf16.msra.mxu0 0
      %3886 = vmatprep.subr.bf16.mxu0 0
      %3887 = vmatpush2.bf16.msra.mxu0 0
      %3888 = vmatprep.subr.bf16.mxu0 0
      %3889 = vmatpush2.bf16.msra.mxu0 0
      %3890 = vmatprep.subr.bf16.mxu0 0
      %3891 = vmatpush2.bf16.msra.mxu0 0
      %3892 = vmatprep.subr.bf16.mxu0 0
      %3893 = vmatpush2.bf16.msra.mxu0 0
      %3894 = vmatprep.subr.bf16.mxu0 0
      %3895 = vmatpush2.bf16.msra.mxu0 0
      %3896 = vmatprep.mubr.bf16.mxu0 0
      %3897 = vmatmul.mubr.bf16.gmra.mxu0 %v3862
      %v3898 = vpop.f32.mrf.mxu0
      %v3899 = vadd.f32 %v3798, %v3898
      %v3900 = vpop.f32.mrf.mxu0
      %v3901 = vadd.f32 %v3800, %v3900
      %v3902 = vpop.f32.mrf.mxu0
      %v3903 = vadd.f32 %v3802, %v3902
      %v3904 = vpop.f32.mrf.mxu0
      %v3905 = vadd.f32 %v3804, %v3904
      %3906 = vdwg.mxu0
      %v3907 = vld [vmem:[#allocation2 + $0x4] sm:$0xff]
      %v3908 = vld [vmem:[#allocation2 + $0xc] sm:$0xf]
      %v3909 = vld [vmem:[#allocation2 + $0x14] sm:$0xff]
      %v3910 = vld [vmem:[#allocation2 + $0x1c] sm:$0xf]
      %v3911 = vld [vmem:[#allocation2 + $0x24] sm:$0xff]
      %v3912 = vld [vmem:[#allocation2 + $0x2c] sm:$0xf]
      %v3913 = vld [vmem:[#allocation2 + $0x34] sm:$0xff]
      %v3914 = vld [vmem:[#allocation2 + $0x3c] sm:$0xf]
      %v3915 = vld [vmem:[#allocation2 + $0x44] sm:$0xff]
      %v3916 = vld [vmem:[#allocation2 + $0x4c] sm:$0xf]
      %v3917 = vld [vmem:[#allocation2 + $0x54] sm:$0xff]
      %v3918 = vld [vmem:[#allocation2 + $0x5c] sm:$0xf]
      %v3919 = vld [vmem:[#allocation2 + $0x64] sm:$0xff]
      %v3920 = vld [vmem:[#allocation2 + $0x6c] sm:$0xf]
      %v3921 = vld [vmem:[#allocation2 + $0x74] sm:$0xff]
      %v3922 = vld [vmem:[#allocation2 + $0x7c] sm:$0xf]
      %v3923 = vld [vmem:[#allocation2 + $0x84] sm:$0xff]
      %v3924 = vld [vmem:[#allocation2 + $0x8c] sm:$0xf]
      %v3925 = vld [vmem:[#allocation2 + $0x94] sm:$0xff]
      %v3926 = vld [vmem:[#allocation2 + $0x9c] sm:$0xf]
      %s3927 = scalar_lea.vmem %s7, 40
      %v3928 = vld [vmem:[%s3927] sm:$0xf]
      %v3929 = vld [vmem:[%s3927 + $0x4] sm:$0xf]
      %v3932 = vunpack.c.l.b16 %v3928
      %v3933 = vunpack.c.l.b16 %v3929
      %v3934 = vpack.c.b16 %v3933, %v3932
      %v3955 = vunpack.c.l.b16 %v3907
      %v3956 = vunpack.c.h.b16 %v3907
      %v3957 = vunpack.c.l.b16 %v3908
      %v3958 = vunpack.c.l.b16 %v3909
      %v3959 = vunpack.c.h.b16 %v3909
      %v3960 = vunpack.c.l.b16 %v3910
      %v3961 = vunpack.c.l.b16 %v3911
      %v3962 = vunpack.c.h.b16 %v3911
      %v3963 = vunpack.c.l.b16 %v3912
      %v3964 = vunpack.c.l.b16 %v3913
      %v3965 = vunpack.c.h.b16 %v3913
      %v3966 = vunpack.c.l.b16 %v3914
      %v3967 = vunpack.c.l.b16 %v3915
      %v3968 = vunpack.c.h.b16 %v3915
      %v3969 = vunpack.c.l.b16 %v3916
      %v3970 = vunpack.c.l.b16 %v3917
      %v3971 = vunpack.c.h.b16 %v3917
      %v3972 = vunpack.c.l.b16 %v3918
      %v3973 = vunpack.c.l.b16 %v3919
      %v3974 = vunpack.c.h.b16 %v3919
      %v3975 = vunpack.c.l.b16 %v3920
      %v3976 = vunpack.c.l.b16 %v3921
      %v3977 = vunpack.c.h.b16 %v3921
      %v3978 = vunpack.c.l.b16 %v3922
      %v3979 = vunpack.c.l.b16 %v3923
      %v3980 = vunpack.c.h.b16 %v3923
      %v3981 = vunpack.c.l.b16 %v3924
      %v3982 = vunpack.c.l.b16 %v3925
      %v3983 = vunpack.c.h.b16 %v3925
      %v3984 = vunpack.c.l.b16 %v3926
      %v3985 = vpack.c.b16 %v3958, %v3955
      %v3986 = vpack.c.b16 %v3959, %v3956
      %v3987 = vpack.c.b16 %v3960, %v3957
      %v3988 = vpack.c.b16 %v3964, %v3961
      %v3989 = vpack.c.b16 %v3965, %v3962
      %v3990 = vpack.c.b16 %v3966, %v3963
      %v3991 = vpack.c.b16 %v3970, %v3967
      %v3992 = vpack.c.b16 %v3971, %v3968
      %v3993 = vpack.c.b16 %v3972, %v3969
      %v3994 = vpack.c.b16 %v3976, %v3973
      %v3995 = vpack.c.b16 %v3977, %v3974
      %v3996 = vpack.c.b16 %v3978, %v3975
      %v3997 = vpack.c.b16 %v3982, %v3979
      %v3998 = vpack.c.b16 %v3983, %v3980
      %v3999 = vpack.c.b16 %v3984, %v3981
      %4000 = vrot.lane.b32.xlu0 %v3985, 127
      %v4001 = vpop.permute.xlu0 %4000
      %4002 = vrot.lane.b32.xlu0 %v3986, 127
      %v4003 = vpop.permute.xlu0 %4002
      %4004 = vrot.lane.b32.xlu0 %v3987, 127
      %v4005 = vpop.permute.xlu0 %4004
      %4006 = vrot.lane.b32.xlu0 %v3988, 127
      %v4007 = vpop.permute.xlu0 %4006
      %4008 = vrot.lane.b32.xlu0 %v3989, 127
      %v4009 = vpop.permute.xlu0 %4008
      %4010 = vrot.lane.b32.xlu0 %v3990, 127
      %v4011 = vpop.permute.xlu0 %4010
      %4012 = vrot.lane.b32.xlu0 %v3991, 127
      %v4013 = vpop.permute.xlu0 %4012
      %4014 = vrot.lane.b32.xlu0 %v3992, 127
      %v4015 = vpop.permute.xlu0 %4014
      %4016 = vrot.lane.b32.xlu0 %v3993, 127
      %v4017 = vpop.permute.xlu0 %4016
      %4018 = vrot.lane.b32.xlu0 %v3994, 127
      %v4019 = vpop.permute.xlu0 %4018
      %4020 = vrot.lane.b32.xlu0 %v3995, 127
      %v4021 = vpop.permute.xlu0 %4020
      %4022 = vrot.lane.b32.xlu0 %v3996, 127
      %v4023 = vpop.permute.xlu0 %4022
      %4024 = vrot.lane.b32.xlu0 %v3997, 127
      %v4025 = vpop.permute.xlu0 %4024
      %4026 = vrot.lane.b32.xlu0 %v3998, 127
      %v4027 = vpop.permute.xlu0 %4026
      %4028 = vrot.lane.b32.xlu0 %v3999, 127
      %v4029 = vpop.permute.xlu0 %4028
      %v4030 = vsel %vm908, %v4001, %v4003
      %v4031 = vsel %vm908, %v4003, %v4005
      %v4032 = vsel %vm908, %v4007, %v4009
      %v4033 = vsel %vm908, %v4009, %v4011
      %v4034 = vsel %vm908, %v4013, %v4015
      %v4035 = vsel %vm908, %v4015, %v4017
      %v4036 = vsel %vm908, %v4019, %v4021
      %v4037 = vsel %vm908, %v4021, %v4023
      %v4038 = vsel %vm908, %v4025, %v4027
      %v4039 = vsel %vm908, %v4027, %v4029
      %v4051 = vsel %vm3544, %v3934, 0
      %4053 = vmatprep.subr.bf16.mxu0 0
      %4054 = vmatpush1.bf16.msra.mxu0 0
      %4055 = vmatprep.subr.bf16.mxu0 0
      %4056 = vmatpush1.bf16.msra.mxu0 0
      %4057 = vmatprep.subr.bf16.mxu0 0
      %4058 = vmatpush1.bf16.msra.mxu0 0
      %4059 = vmatprep.subr.bf16.mxu0 %v4039
      %4060 = vmatpush1.bf16.msra.mxu0 %v4038
      %4061 = vmatprep.subr.bf16.mxu0 %v4037
      %4062 = vmatpush1.bf16.msra.mxu0 %v4036
      %4063 = vmatprep.subr.bf16.mxu0 %v4035
      %4064 = vmatpush1.bf16.msra.mxu0 %v4034
      %4065 = vmatprep.subr.bf16.mxu0 %v4033
      %4066 = vmatpush1.bf16.msra.mxu0 %v4032
      %4067 = vmatprep.subr.bf16.mxu0 %v4031
      %4068 = vmatpush1.bf16.msra.mxu0 %v4030
      %4069 = vmatprep.subr.bf16.mxu0 0
      %4070 = vmatpush2.bf16.msra.mxu0 0
      %4071 = vmatprep.subr.bf16.mxu0 0
      %4072 = vmatpush2.bf16.msra.mxu0 0
      %4073 = vmatprep.subr.bf16.mxu0 0
      %4074 = vmatpush2.bf16.msra.mxu0 0
      %4075 = vmatprep.subr.bf16.mxu0 0
      %4076 = vmatpush2.bf16.msra.mxu0 0
      %4077 = vmatprep.subr.bf16.mxu0 0
      %4078 = vmatpush2.bf16.msra.mxu0 0
      %4079 = vmatprep.subr.bf16.mxu0 0
      %4080 = vmatpush2.bf16.msra.mxu0 0
      %4081 = vmatprep.subr.bf16.mxu0 0
      %4082 = vmatpush2.bf16.msra.mxu0 0
      %4083 = vmatprep.subr.bf16.mxu0 0
      %4084 = vmatpush2.bf16.msra.mxu0 0
      %4085 = vmatprep.mubr.bf16.mxu0 0
      %4086 = vmatmul.mubr.bf16.gmra.mxu0 %v4051
      %v4087 = vpop.f32.mrf.mxu0
      %v4088 = vadd.f32 0.0, %v4087
      %v4089 = vpop.f32.mrf.mxu0
      %v4090 = vadd.f32 0.0, %v4089
      %v4091 = vpop.f32.mrf.mxu0
      %v4092 = vadd.f32 0.0, %v4091
      %v4093 = vpop.f32.mrf.mxu0
      %v4094 = vadd.f32 0.0, %v4093
      %4095 = vdwg.mxu0
      %v4098 = vunpack.c.l.b16 %v3419
      %v4099 = vunpack.c.l.b16 %v3420
      %v4100 = vpack.c.b16 %v4099, %v4098
      %4101 = vrot.lane.b32.xlu0 %v3479, 15
      %v4102 = vpop.permute.xlu0 %4101
      %4103 = vrot.lane.b32.xlu0 %v3480, 15
      %v4104 = vpop.permute.xlu0 %4103
      %4105 = vrot.lane.b32.xlu0 %v3481, 15
      %v4106 = vpop.permute.xlu0 %4105
      %4107 = vrot.lane.b32.xlu0 %v3482, 15
      %v4108 = vpop.permute.xlu0 %4107
      %4109 = vrot.lane.b32.xlu0 %v3483, 15
      %v4110 = vpop.permute.xlu0 %4109
      %4111 = vrot.lane.b32.xlu0 %v3484, 15
      %v4112 = vpop.permute.xlu0 %4111
      %4113 = vrot.lane.b32.xlu0 %v3485, 15
      %v4114 = vpop.permute.xlu0 %4113
      %4115 = vrot.lane.b32.xlu0 %v3486, 15
      %v4116 = vpop.permute.xlu0 %4115
      %4117 = vrot.lane.b32.xlu0 %v3487, 15
      %v4118 = vpop.permute.xlu0 %4117
      %4119 = vrot.lane.b32.xlu0 %v3488, 15
      %v4120 = vpop.permute.xlu0 %4119
      %4121 = vrot.lane.b32.xlu0 %v3489, 15
      %v4122 = vpop.permute.xlu0 %4121
      %4123 = vrot.lane.b32.xlu0 %v3490, 15
      %v4124 = vpop.permute.xlu0 %4123
      %4125 = vrot.lane.b32.xlu0 %v3491, 15
      %v4126 = vpop.permute.xlu0 %4125
      %4127 = vrot.lane.b32.xlu0 %v3492, 15
      %v4128 = vpop.permute.xlu0 %4127
      %4129 = vrot.lane.b32.xlu0 %v3493, 15
      %v4130 = vpop.permute.xlu0 %4129
      %v4131 = vsel %vm980, %v4102, %v4104
      %v4132 = vsel %vm980, %v4104, %v4106
      %v4133 = vsel %vm980, %v4108, %v4110
      %v4134 = vsel %vm980, %v4110, %v4112
      %v4135 = vsel %vm980, %v4114, %v4116
      %v4136 = vsel %vm980, %v4116, %v4118
      %v4137 = vsel %vm980, %v4120, %v4122
      %v4138 = vsel %vm980, %v4122, %v4124
      %v4139 = vsel %vm980, %v4126, %v4128
      %v4140 = vsel %vm980, %v4128, %v4130
      %v4152 = vsel %vm3544, %v4100, 0
      %4154 = vmatprep.subr.bf16.mxu0 0
      %4155 = vmatpush1.bf16.msra.mxu0 0
      %4156 = vmatprep.subr.bf16.mxu0 0
      %4157 = vmatpush1.bf16.msra.mxu0 0
      %4158 = vmatprep.subr.bf16.mxu0 0
      %4159 = vmatpush1.bf16.msra.mxu0 0
      %4160 = vmatprep.subr.bf16.mxu0 %v4140
      %4161 = vmatpush1.bf16.msra.mxu0 %v4139
      %4162 = vmatprep.subr.bf16.mxu0 %v4138
      %4163 = vmatpush1.bf16.msra.mxu0 %v4137
      %4164 = vmatprep.subr.bf16.mxu0 %v4136
      %4165 = vmatpush1.bf16.msra.mxu0 %v4135
      %4166 = vmatprep.subr.bf16.mxu0 %v4134
      %4167 = vmatpush1.bf16.msra.mxu0 %v4133
      %4168 = vmatprep.subr.bf16.mxu0 %v4132
      %4169 = vmatpush1.bf16.msra.mxu0 %v4131
      %4170 = vmatprep.subr.bf16.mxu0 0
      %4171 = vmatpush2.bf16.msra.mxu0 0
      %4172 = vmatprep.subr.bf16.mxu0 0
      %4173 = vmatpush2.bf16.msra.mxu0 0
      %4174 = vmatprep.subr.bf16.mxu0 0
      %4175 = vmatpush2.bf16.msra.mxu0 0
      %4176 = vmatprep.subr.bf16.mxu0 0
      %4177 = vmatpush2.bf16.msra.mxu0 0
      %4178 = vmatprep.subr.bf16.mxu0 0
      %4179 = vmatpush2.bf16.msra.mxu0 0
      %4180 = vmatprep.subr.bf16.mxu0 0
      %4181 = vmatpush2.bf16.msra.mxu0 0
      %4182 = vmatprep.subr.bf16.mxu0 0
      %4183 = vmatpush2.bf16.msra.mxu0 0
      %4184 = vmatprep.subr.bf16.mxu0 0
      %4185 = vmatpush2.bf16.msra.mxu0 0
      %4186 = vmatprep.mubr.bf16.mxu0 0
      %4187 = vmatmul.mubr.bf16.gmra.mxu0 %v4152
      %v4188 = vpop.f32.mrf.mxu0
      %v4189 = vadd.f32 %v4088, %v4188
      %v4190 = vpop.f32.mrf.mxu0
      %v4191 = vadd.f32 %v4090, %v4190
      %v4192 = vpop.f32.mrf.mxu0
      %v4193 = vadd.f32 %v4092, %v4192
      %v4194 = vpop.f32.mrf.mxu0
      %v4195 = vadd.f32 %v4094, %v4194
      %4196 = vdwg.mxu0
      %s4197 = scalar_lea.vmem %s7, 48
      %v4198 = vld [vmem:[%s4197] sm:$0xf]
      %v4199 = vld [vmem:[%s4197 + $0x4] sm:$0xf]
      %v4202 = vunpack.c.l.b16 %v4198
      %v4203 = vunpack.c.l.b16 %v4199
      %v4204 = vpack.c.b16 %v4203, %v4202
      %4205 = vrot.lane.b32.xlu0 %v3985, 113
      %v4206 = vpop.permute.xlu0 %4205
      %4207 = vrot.lane.b32.xlu0 %v3986, 113
      %v4208 = vpop.permute.xlu0 %4207
      %4209 = vrot.lane.b32.xlu0 %v3987, 113
      %v4210 = vpop.permute.xlu0 %4209
      %4211 = vrot.lane.b32.xlu0 %v3988, 113
      %v4212 = vpop.permute.xlu0 %4211
      %4213 = vrot.lane.b32.xlu0 %v3989, 113
      %v4214 = vpop.permute.xlu0 %4213
      %4215 = vrot.lane.b32.xlu0 %v3990, 113
      %v4216 = vpop.permute.xlu0 %4215
      %4217 = vrot.lane.b32.xlu0 %v3991, 113
      %v4218 = vpop.permute.xlu0 %4217
      %4219 = vrot.lane.b32.xlu0 %v3992, 113
      %v4220 = vpop.permute.xlu0 %4219
      %4221 = vrot.lane.b32.xlu0 %v3993, 113
      %v4222 = vpop.permute.xlu0 %4221
      %4223 = vrot.lane.b32.xlu0 %v3994, 113
      %v4224 = vpop.permute.xlu0 %4223
      %4225 = vrot.lane.b32.xlu0 %v3995, 113
      %v4226 = vpop.permute.xlu0 %4225
      %4227 = vrot.lane.b32.xlu0 %v3996, 113
      %v4228 = vpop.permute.xlu0 %4227
      %4229 = vrot.lane.b32.xlu0 %v3997, 113
      %v4230 = vpop.permute.xlu0 %4229
      %4231 = vrot.lane.b32.xlu0 %v3998, 113
      %v4232 = vpop.permute.xlu0 %4231
      %4233 = vrot.lane.b32.xlu0 %v3999, 113
      %v4234 = vpop.permute.xlu0 %4233
      %v4235 = vsel %vm1055, %v4206, %v4208
      %v4236 = vsel %vm1055, %v4208, %v4210
      %v4237 = vsel %vm1055, %v4212, %v4214
      %v4238 = vsel %vm1055, %v4214, %v4216
      %v4239 = vsel %vm1055, %v4218, %v4220
      %v4240 = vsel %vm1055, %v4220, %v4222
      %v4241 = vsel %vm1055, %v4224, %v4226
      %v4242 = vsel %vm1055, %v4226, %v4228
      %v4243 = vsel %vm1055, %v4230, %v4232
      %v4244 = vsel %vm1055, %v4232, %v4234
      %v4256 = vsel %vm3544, %v4204, 0
      %4258 = vmatprep.subr.bf16.mxu0 0
      %4259 = vmatpush1.bf16.msra.mxu0 0
      %4260 = vmatprep.subr.bf16.mxu0 0
      %4261 = vmatpush1.bf16.msra.mxu0 0
      %4262 = vmatprep.subr.bf16.mxu0 0
      %4263 = vmatpush1.bf16.msra.mxu0 0
      %4264 = vmatprep.subr.bf16.mxu0 %v4244
      %4265 = vmatpush1.bf16.msra.mxu0 %v4243
      %4266 = vmatprep.subr.bf16.mxu0 %v4242
      %4267 = vmatpush1.bf16.msra.mxu0 %v4241
      %4268 = vmatprep.subr.bf16.mxu0 %v4240
      %4269 = vmatpush1.bf16.msra.mxu0 %v4239
      %4270 = vmatprep.subr.bf16.mxu0 %v4238
      %4271 = vmatpush1.bf16.msra.mxu0 %v4237
      %4272 = vmatprep.subr.bf16.mxu0 %v4236
      %4273 = vmatpush1.bf16.msra.mxu0 %v4235
      %4274 = vmatprep.subr.bf16.mxu0 0
      %4275 = vmatpush2.bf16.msra.mxu0 0
      %4276 = vmatprep.subr.bf16.mxu0 0
      %4277 = vmatpush2.bf16.msra.mxu0 0
      %4278 = vmatprep.subr.bf16.mxu0 0
      %4279 = vmatpush2.bf16.msra.mxu0 0
      %4280 = vmatprep.subr.bf16.mxu0 0
      %4281 = vmatpush2.bf16.msra.mxu0 0
      %4282 = vmatprep.subr.bf16.mxu0 0
      %4283 = vmatpush2.bf16.msra.mxu0 0
      %4284 = vmatprep.subr.bf16.mxu0 0
      %4285 = vmatpush2.bf16.msra.mxu0 0
      %4286 = vmatprep.subr.bf16.mxu0 0
      %4287 = vmatpush2.bf16.msra.mxu0 0
      %4288 = vmatprep.subr.bf16.mxu0 0
      %4289 = vmatpush2.bf16.msra.mxu0 0
      %4290 = vmatprep.mubr.bf16.mxu0 0
      %4291 = vmatmul.mubr.bf16.gmra.mxu0 %v4256
      %v4292 = vpop.f32.mrf.mxu0
      %v4293 = vadd.f32 0.0, %v4292
      %v4294 = vpop.f32.mrf.mxu0
      %v4295 = vadd.f32 0.0, %v4294
      %v4296 = vpop.f32.mrf.mxu0
      %v4297 = vadd.f32 0.0, %v4296
      %v4298 = vpop.f32.mrf.mxu0
      %v4299 = vadd.f32 0.0, %v4298
      %4300 = vdwg.mxu0
      %v4301 = vadd.f32 %v3684, %v4293
      %v4302 = vadd.f32 %v3686, %v4295
      %v4303 = vadd.f32 %v3688, %v4297
      %v4304 = vadd.f32 %v3690, %v4299
      %s4305 = scalar_lea.vmem %s7, 56
      %v4306 = vld [vmem:[%s4305] sm:$0xf]
      %v4307 = vld [vmem:[%s4305 + $0x4] sm:$0xf]
      %v4310 = vunpack.c.l.b16 %v4306
      %v4311 = vunpack.c.l.b16 %v4307
      %v4312 = vpack.c.b16 %v4311, %v4310
      %4313 = vrot.lane.b32.xlu0 %v3985, 112
      %v4314 = vpop.permute.xlu0 %4313
      %4315 = vrot.lane.b32.xlu0 %v3986, 112
      %v4316 = vpop.permute.xlu0 %4315
      %4317 = vrot.lane.b32.xlu0 %v3987, 112
      %v4318 = vpop.permute.xlu0 %4317
      %4319 = vrot.lane.b32.xlu0 %v3988, 112
      %v4320 = vpop.permute.xlu0 %4319
      %4321 = vrot.lane.b32.xlu0 %v3989, 112
      %v4322 = vpop.permute.xlu0 %4321
      %4323 = vrot.lane.b32.xlu0 %v3990, 112
      %v4324 = vpop.permute.xlu0 %4323
      %4325 = vrot.lane.b32.xlu0 %v3991, 112
      %v4326 = vpop.permute.xlu0 %4325
      %4327 = vrot.lane.b32.xlu0 %v3992, 112
      %v4328 = vpop.permute.xlu0 %4327
      %4329 = vrot.lane.b32.xlu0 %v3993, 112
      %v4330 = vpop.permute.xlu0 %4329
      %4331 = vrot.lane.b32.xlu0 %v3994, 112
      %v4332 = vpop.permute.xlu0 %4331
      %4333 = vrot.lane.b32.xlu0 %v3995, 112
      %v4334 = vpop.permute.xlu0 %4333
      %4335 = vrot.lane.b32.xlu0 %v3996, 112
      %v4336 = vpop.permute.xlu0 %4335
      %4337 = vrot.lane.b32.xlu0 %v3997, 112
      %v4338 = vpop.permute.xlu0 %4337
      %4339 = vrot.lane.b32.xlu0 %v3998, 112
      %v4340 = vpop.permute.xlu0 %4339
      %4341 = vrot.lane.b32.xlu0 %v3999, 112
      %v4342 = vpop.permute.xlu0 %4341
      %v4343 = vsel %vm1134, %v4314, %v4316
      %v4344 = vsel %vm1134, %v4316, %v4318
      %v4345 = vsel %vm1134, %v4320, %v4322
      %v4346 = vsel %vm1134, %v4322, %v4324
      %v4347 = vsel %vm1134, %v4326, %v4328
      %v4348 = vsel %vm1134, %v4328, %v4330
      %v4349 = vsel %vm1134, %v4332, %v4334
      %v4350 = vsel %vm1134, %v4334, %v4336
      %v4351 = vsel %vm1134, %v4338, %v4340
      %v4352 = vsel %vm1134, %v4340, %v4342
      %v4364 = vsel %vm3544, %v4312, 0
      %4366 = vmatprep.subr.bf16.mxu0 0
      %4367 = vmatpush1.bf16.msra.mxu0 0
      %4368 = vmatprep.subr.bf16.mxu0 0
      %4369 = vmatpush1.bf16.msra.mxu0 0
      %4370 = vmatprep.subr.bf16.mxu0 0
      %4371 = vmatpush1.bf16.msra.mxu0 0
      %4372 = vmatprep.subr.bf16.mxu0 %v4352
      %4373 = vmatpush1.bf16.msra.mxu0 %v4351
      %4374 = vmatprep.subr.bf16.mxu0 %v4350
      %4375 = vmatpush1.bf16.msra.mxu0 %v4349
      %4376 = vmatprep.subr.bf16.mxu0 %v4348
      %4377 = vmatpush1.bf16.msra.mxu0 %v4347
      %4378 = vmatprep.subr.bf16.mxu0 %v4346
      %4379 = vmatpush1.bf16.msra.mxu0 %v4345
      %4380 = vmatprep.subr.bf16.mxu0 %v4344
      %4381 = vmatpush1.bf16.msra.mxu0 %v4343
      %4382 = vmatprep.subr.bf16.mxu0 0
      %4383 = vmatpush2.bf16.msra.mxu0 0
      %4384 = vmatprep.subr.bf16.mxu0 0
      %4385 = vmatpush2.bf16.msra.mxu0 0
      %4386 = vmatprep.subr.bf16.mxu0 0
      %4387 = vmatpush2.bf16.msra.mxu0 0
      %4388 = vmatprep.subr.bf16.mxu0 0
      %4389 = vmatpush2.bf16.msra.mxu0 0
      %4390 = vmatprep.subr.bf16.mxu0 0
      %4391 = vmatpush2.bf16.msra.mxu0 0
      %4392 = vmatprep.subr.bf16.mxu0 0
      %4393 = vmatpush2.bf16.msra.mxu0 0
      %4394 = vmatprep.subr.bf16.mxu0 0
      %4395 = vmatpush2.bf16.msra.mxu0 0
      %4396 = vmatprep.subr.bf16.mxu0 0
      %4397 = vmatpush2.bf16.msra.mxu0 0
      %4398 = vmatprep.mubr.bf16.mxu0 0
      %4399 = vmatmul.mubr.bf16.gmra.mxu0 %v4364
      %v4400 = vpop.f32.mrf.mxu0
      %v4401 = vadd.f32 0.0, %v4400
      %v4402 = vpop.f32.mrf.mxu0
      %v4403 = vadd.f32 0.0, %v4402
      %v4404 = vpop.f32.mrf.mxu0
      %v4405 = vadd.f32 0.0, %v4404
      %v4406 = vpop.f32.mrf.mxu0
      %v4407 = vadd.f32 0.0, %v4406
      %4408 = vdwg.mxu0
      %v4409 = vadd.f32 %v3899, %v4401
      %v4410 = vadd.f32 %v3901, %v4403
      %v4411 = vadd.f32 %v3903, %v4405
      %v4412 = vadd.f32 %v3905, %v4407
      %s4413 = scalar_lea.vmem %s7, 64
      %v4414 = vld [vmem:[%s4413] sm:$0xf]
      %v4415 = vld [vmem:[%s4413 + $0x4] sm:$0xf]
      %v4418 = vunpack.c.l.b16 %v4414
      %v4419 = vunpack.c.l.b16 %v4415
      %v4420 = vpack.c.b16 %v4419, %v4418
      %4421 = vrot.lane.b32.xlu0 %v3985, 111
      %v4422 = vpop.permute.xlu0 %4421
      %4423 = vrot.lane.b32.xlu0 %v3986, 111
      %v4424 = vpop.permute.xlu0 %4423
      %4425 = vrot.lane.b32.xlu0 %v3987, 111
      %v4426 = vpop.permute.xlu0 %4425
      %4427 = vrot.lane.b32.xlu0 %v3988, 111
      %v4428 = vpop.permute.xlu0 %4427
      %4429 = vrot.lane.b32.xlu0 %v3989, 111
      %v4430 = vpop.permute.xlu0 %4429
      %4431 = vrot.lane.b32.xlu0 %v3990, 111
      %v4432 = vpop.permute.xlu0 %4431
      %4433 = vrot.lane.b32.xlu0 %v3991, 111
      %v4434 = vpop.permute.xlu0 %4433
      %4435 = vrot.lane.b32.xlu0 %v3992, 111
      %v4436 = vpop.permute.xlu0 %4435
      %4437 = vrot.lane.b32.xlu0 %v3993, 111
      %v4438 = vpop.permute.xlu0 %4437
      %4439 = vrot.lane.b32.xlu0 %v3994, 111
      %v4440 = vpop.permute.xlu0 %4439
      %4441 = vrot.lane.b32.xlu0 %v3995, 111
      %v4442 = vpop.permute.xlu0 %4441
      %4443 = vrot.lane.b32.xlu0 %v3996, 111
      %v4444 = vpop.permute.xlu0 %4443
      %4445 = vrot.lane.b32.xlu0 %v3997, 111
      %v4446 = vpop.permute.xlu0 %4445
      %4447 = vrot.lane.b32.xlu0 %v3998, 111
      %v4448 = vpop.permute.xlu0 %4447
      %4449 = vrot.lane.b32.xlu0 %v3999, 111
      %v4450 = vpop.permute.xlu0 %4449
      %v4451 = vsel %vm1213, %v4422, %v4424
      %v4452 = vsel %vm1213, %v4424, %v4426
      %v4453 = vsel %vm1213, %v4428, %v4430
      %v4454 = vsel %vm1213, %v4430, %v4432
      %v4455 = vsel %vm1213, %v4434, %v4436
      %v4456 = vsel %vm1213, %v4436, %v4438
      %v4457 = vsel %vm1213, %v4440, %v4442
      %v4458 = vsel %vm1213, %v4442, %v4444
      %v4459 = vsel %vm1213, %v4446, %v4448
      %v4460 = vsel %vm1213, %v4448, %v4450
      %v4472 = vsel %vm3544, %v4420, 0
      %4474 = vmatprep.subr.bf16.mxu0 0
      %4475 = vmatpush1.bf16.msra.mxu0 0
      %4476 = vmatprep.subr.bf16.mxu0 0
      %4477 = vmatpush1.bf16.msra.mxu0 0
      %4478 = vmatprep.subr.bf16.mxu0 0
      %4479 = vmatpush1.bf16.msra.mxu0 0
      %4480 = vmatprep.subr.bf16.mxu0 %v4460
      %4481 = vmatpush1.bf16.msra.mxu0 %v4459
      %4482 = vmatprep.subr.bf16.mxu0 %v4458
      %4483 = vmatpush1.bf16.msra.mxu0 %v4457
      %4484 = vmatprep.subr.bf16.mxu0 %v4456
      %4485 = vmatpush1.bf16.msra.mxu0 %v4455
      %4486 = vmatprep.subr.bf16.mxu0 %v4454
      %4487 = vmatpush1.bf16.msra.mxu0 %v4453
      %4488 = vmatprep.subr.bf16.mxu0 %v4452
      %4489 = vmatpush1.bf16.msra.mxu0 %v4451
      %4490 = vmatprep.subr.bf16.mxu0 0
      %4491 = vmatpush2.bf16.msra.mxu0 0
      %4492 = vmatprep.subr.bf16.mxu0 0
      %4493 = vmatpush2.bf16.msra.mxu0 0
      %4494 = vmatprep.subr.bf16.mxu0 0
      %4495 = vmatpush2.bf16.msra.mxu0 0
      %4496 = vmatprep.subr.bf16.mxu0 0
      %4497 = vmatpush2.bf16.msra.mxu0 0
      %4498 = vmatprep.subr.bf16.mxu0 0
      %4499 = vmatpush2.bf16.msra.mxu0 0
      %4500 = vmatprep.subr.bf16.mxu0 0
      %4501 = vmatpush2.bf16.msra.mxu0 0
      %4502 = vmatprep.subr.bf16.mxu0 0
      %4503 = vmatpush2.bf16.msra.mxu0 0
      %4504 = vmatprep.subr.bf16.mxu0 0
      %4505 = vmatpush2.bf16.msra.mxu0 0
      %4506 = vmatprep.mubr.bf16.mxu0 0
      %4507 = vmatmul.mubr.bf16.gmra.mxu0 %v4472
      %v4508 = vpop.f32.mrf.mxu0
      %v4509 = vadd.f32 0.0, %v4508
      %v4510 = vpop.f32.mrf.mxu0
      %v4511 = vadd.f32 0.0, %v4510
      %v4512 = vpop.f32.mrf.mxu0
      %v4513 = vadd.f32 0.0, %v4512
      %v4514 = vpop.f32.mrf.mxu0
      %v4515 = vadd.f32 0.0, %v4514
      %4516 = vdwg.mxu0
      %v4517 = vadd.f32 %v4189, %v4509
      %v4518 = vadd.f32 %v4191, %v4511
      %v4519 = vadd.f32 %v4193, %v4513
      %v4520 = vadd.f32 %v4195, %v4515
      %v4521 = vmul.f32 %v4301, %v446
      %v4522 = vmul.f32 %v4302, %v447
      %v4523 = vmul.f32 %v4303, %v446
      %v4524 = vmul.f32 %v4304, %v447
      %v4525 = vadd.f32 %v4409, %v4521
      %v4526 = vadd.f32 %v4410, %v4522
      %v4527 = vadd.f32 %v4411, %v4523
      %v4528 = vadd.f32 %v4412, %v4524
      %v4529 = vmul.f32 %v4517, %v452
      %v4530 = vmul.f32 %v4518, %v453
      %v4531 = vmul.f32 %v4519, %v452
      %v4532 = vmul.f32 %v4520, %v453
      %v4533 = vadd.f32 %v4525, %v4529
      %v4534 = vadd.f32 %v4526, %v4530
      %v4535 = vadd.f32 %v4527, %v4531
      %v4536 = vadd.f32 %v4528, %v4532
      %v4537 = vld [vmem:[%s8] sm:$0xff]
      %v4538 = vld [vmem:[%s8 + $0x8] sm:$0xff]
      %4540 = vset.pattern.permute.xlu0 0
      %4541 = vperm.xlu0 %4540, %v4537
      %v4542 = vpop.permute.xlu0 %4541
      %4545 = vset.pattern.permute.xlu0 0
      %4546 = vperm.xlu0 %4545, %v4538
      %v4547 = vpop.permute.xlu0 %4546
      %v4549 = vadd.f32 %v4533, %v4542
      %v4550 = vadd.f32 %v4534, %v4542
      %v4551 = vadd.f32 %v4535, %v4547
      %v4552 = vadd.f32 %v4536, %v4547
      %v4553 = vmul.f32 %v4549, 0.2
      %v4554 = vmul.f32 %v4550, 0.2
      %v4555 = vmul.f32 %v4551, 0.2
      %v4556 = vmul.f32 %v4552, 0.2
      %v4557 = vmax.f32 %v4549, %v4553
      %v4558 = vmax.f32 %v4550, %v4554
      %v4559 = vmax.f32 %v4551, %v4555
      %v4560 = vmax.f32 %v4552, %v4556
      %v4561 = vld [vmem:[#allocation2 + $0x64] sm:$0xff]
      %v4562 = vld [vmem:[#allocation2 + $0x74] sm:$0xff]
      %v4563 = vunpack.c.l.bf16 %v4561
      %v4564 = vunpack.c.h.bf16 %v4561
      %v4565 = vunpack.c.l.bf16 %v4562
      %v4566 = vunpack.c.h.bf16 %v4562
      %v4567 = vadd.f32 %v4557, %v4563
      %v4568 = vadd.f32 %v4558, %v4564
      %v4569 = vadd.f32 %v4559, %v4565
      %v4570 = vadd.f32 %v4560, %v4566
      %v4571 = vpack.c.bf16 %v4569, %v4567
      %v4572 = vpack.c.bf16 %v4570, %v4568
      %v4575 = vunpack.c.l.b16 %v4571
      %v4576 = vunpack.c.l.b16 %v4572
      %v4577 = vunpack.c.h.b16 %v4571
      %v4578 = vunpack.c.h.b16 %v4572
      %v4579 = vpack.c.b16 %v4576, %v4575
      %v4580 = vpack.c.b16 %v4578, %v4577
      %4583 = vst [vmem:[#allocation2 + $0xa4] sm:$0xff] %v4579
      %4584 = vst [vmem:[#allocation2 + $0xb4] sm:$0xff] %v4580
      %v4585 = vld [vmem:[#allocation2] sm:$0xff]
      %v4586 = vld [vmem:[#allocation2 + $0x8] sm:$0xf]
      %v4587 = vld [vmem:[#allocation2 + $0x10] sm:$0xff]
      %v4588 = vld [vmem:[#allocation2 + $0x18] sm:$0xf]
      %v4589 = vld [vmem:[#allocation2 + $0x20] sm:$0xff]
      %v4590 = vld [vmem:[#allocation2 + $0x28] sm:$0xf]
      %v4591 = vld [vmem:[#allocation2 + $0x30] sm:$0xff]
      %v4592 = vld [vmem:[#allocation2 + $0x38] sm:$0xf]
      %v4593 = vld [vmem:[#allocation2 + $0x40] sm:$0xff]
      %v4594 = vld [vmem:[#allocation2 + $0x48] sm:$0xf]
      %v4595 = vld [vmem:[#allocation2 + $0x50] sm:$0xff]
      %v4596 = vld [vmem:[#allocation2 + $0x58] sm:$0xf]
      %v4597 = vld [vmem:[#allocation2 + $0x60] sm:$0xff]
      %v4598 = vld [vmem:[#allocation2 + $0x68] sm:$0xf]
      %v4599 = vld [vmem:[#allocation2 + $0x70] sm:$0xff]
      %v4600 = vld [vmem:[#allocation2 + $0x78] sm:$0xf]
      %v4601 = vld [vmem:[#allocation2 + $0x80] sm:$0xff]
      %v4602 = vld [vmem:[#allocation2 + $0x88] sm:$0xf]
      %v4603 = vld [vmem:[#allocation2 + $0x90] sm:$0xff]
      %v4604 = vld [vmem:[#allocation2 + $0x98] sm:$0xf]
      %v4605 = vld [vmem:[#allocation2 + $0xa0] sm:$0xff]
      %v4606 = vld [vmem:[#allocation2 + $0xa8] sm:$0xf]
      %v4607 = vld [vmem:[#allocation2 + $0xb0] sm:$0xff]
      %v4608 = vld [vmem:[#allocation2 + $0xb8] sm:$0xf]
      %v4609 = vld [vmem:[%s9] sm:$0xf]
      %v4610 = vld [vmem:[%s9 + $0x4] sm:$0xf]
      %v4611 = vld [vmem:[%s9 + $0x8] sm:$0xf]
      %v4612 = vld [vmem:[%s9 + $0xc] sm:$0xf]
      %s4613 = scalar_lea.vmem %s9, 16
      %v4614 = vld [vmem:[%s4613] sm:$0xf]
      %v4615 = vld [vmem:[%s4613 + $0x4] sm:$0xf]
      %v4616 = vld [vmem:[%s4613 + $0x8] sm:$0xf]
      %v4617 = vld [vmem:[%s4613 + $0xc] sm:$0xf]
      %s4618 = scalar_lea.vmem %s9, 32
      %v4619 = vld [vmem:[%s4618] sm:$0xf]
      %v4620 = vld [vmem:[%s4618 + $0x4] sm:$0xf]
      %v4621 = vld [vmem:[%s4618 + $0x8] sm:$0xf]
      %v4622 = vld [vmem:[%s4618 + $0xc] sm:$0xf]
      %s4623 = scalar_lea.vmem %s9, 48
      %v4624 = vld [vmem:[%s4623] sm:$0xf]
      %v4625 = vld [vmem:[%s4623 + $0x4] sm:$0xf]
      %v4626 = vld [vmem:[%s4623 + $0x8] sm:$0xf]
      %v4627 = vld [vmem:[%s4623 + $0xc] sm:$0xf]
      %v4632 = vunpack.c.l.b16 %v4624
      %v4633 = vunpack.c.l.b16 %v4625
      %v4634 = vunpack.c.l.b16 %v4626
      %v4635 = vunpack.c.l.b16 %v4627
      %v4636 = vpack.c.b16 %v4633, %v4632
      %v4637 = vpack.c.b16 %v4635, %v4634
      %v4662 = vunpack.c.l.b16 %v4585
      %v4663 = vunpack.c.h.b16 %v4585
      %v4664 = vunpack.c.l.b16 %v4586
      %v4665 = vunpack.c.l.b16 %v4587
      %v4666 = vunpack.c.h.b16 %v4587
      %v4667 = vunpack.c.l.b16 %v4588
      %v4668 = vunpack.c.l.b16 %v4589
      %v4669 = vunpack.c.h.b16 %v4589
      %v4670 = vunpack.c.l.b16 %v4590
      %v4671 = vunpack.c.l.b16 %v4591
      %v4672 = vunpack.c.h.b16 %v4591
      %v4673 = vunpack.c.l.b16 %v4592
      %v4674 = vunpack.c.l.b16 %v4593
      %v4675 = vunpack.c.h.b16 %v4593
      %v4676 = vunpack.c.l.b16 %v4594
      %v4677 = vunpack.c.l.b16 %v4595
      %v4678 = vunpack.c.h.b16 %v4595
      %v4679 = vunpack.c.l.b16 %v4596
      %v4680 = vunpack.c.l.b16 %v4597
      %v4681 = vunpack.c.h.b16 %v4597
      %v4682 = vunpack.c.l.b16 %v4598
      %v4683 = vunpack.c.l.b16 %v4599
      %v4684 = vunpack.c.h.b16 %v4599
      %v4685 = vunpack.c.l.b16 %v4600
      %v4686 = vunpack.c.l.b16 %v4601
      %v4687 = vunpack.c.h.b16 %v4601
      %v4688 = vunpack.c.l.b16 %v4602
      %v4689 = vunpack.c.l.b16 %v4603
      %v4690 = vunpack.c.h.b16 %v4603
      %v4691 = vunpack.c.l.b16 %v4604
      %v4692 = vunpack.c.l.b16 %v4605
      %v4693 = vunpack.c.h.b16 %v4605
      %v4694 = vunpack.c.l.b16 %v4606
      %v4695 = vunpack.c.l.b16 %v4607
      %v4696 = vunpack.c.h.b16 %v4607
      %v4697 = vunpack.c.l.b16 %v4608
      %v4698 = vpack.c.b16 %v4665, %v4662
      %v4699 = vpack.c.b16 %v4666, %v4663
      %v4700 = vpack.c.b16 %v4667, %v4664
      %v4701 = vpack.c.b16 %v4671, %v4668
      %v4702 = vpack.c.b16 %v4672, %v4669
      %v4703 = vpack.c.b16 %v4673, %v4670
      %v4704 = vpack.c.b16 %v4677, %v4674
      %v4705 = vpack.c.b16 %v4678, %v4675
      %v4706 = vpack.c.b16 %v4679, %v4676
      %v4707 = vpack.c.b16 %v4683, %v4680
      %v4708 = vpack.c.b16 %v4684, %v4681
      %v4709 = vpack.c.b16 %v4685, %v4682
      %v4710 = vpack.c.b16 %v4689, %v4686
      %v4711 = vpack.c.b16 %v4690, %v4687
      %v4712 = vpack.c.b16 %v4691, %v4688
      %v4713 = vpack.c.b16 %v4695, %v4692
      %v4714 = vpack.c.b16 %v4696, %v4693
      %v4715 = vpack.c.b16 %v4697, %v4694
      %4716 = vrot.lane.b32.xlu0 %v4698, 1
      %v4717 = vpop.permute.xlu0 %4716
      %4718 = vrot.lane.b32.xlu0 %v4699, 1
      %v4719 = vpop.permute.xlu0 %4718
      %4720 = vrot.lane.b32.xlu0 %v4700, 1
      %v4721 = vpop.permute.xlu0 %4720
      %4722 = vrot.lane.b32.xlu0 %v4701, 1
      %v4723 = vpop.permute.xlu0 %4722
      %4724 = vrot.lane.b32.xlu0 %v4702, 1
      %v4725 = vpop.permute.xlu0 %4724
      %4726 = vrot.lane.b32.xlu0 %v4703, 1
      %v4727 = vpop.permute.xlu0 %4726
      %4728 = vrot.lane.b32.xlu0 %v4704, 1
      %v4729 = vpop.permute.xlu0 %4728
      %4730 = vrot.lane.b32.xlu0 %v4705, 1
      %v4731 = vpop.permute.xlu0 %4730
      %4732 = vrot.lane.b32.xlu0 %v4706, 1
      %v4733 = vpop.permute.xlu0 %4732
      %4734 = vrot.lane.b32.xlu0 %v4707, 1
      %v4735 = vpop.permute.xlu0 %4734
      %4736 = vrot.lane.b32.xlu0 %v4708, 1
      %v4737 = vpop.permute.xlu0 %4736
      %4738 = vrot.lane.b32.xlu0 %v4709, 1
      %v4739 = vpop.permute.xlu0 %4738
      %4740 = vrot.lane.b32.xlu0 %v4710, 1
      %v4741 = vpop.permute.xlu0 %4740
      %4742 = vrot.lane.b32.xlu0 %v4711, 1
      %v4743 = vpop.permute.xlu0 %4742
      %4744 = vrot.lane.b32.xlu0 %v4712, 1
      %v4745 = vpop.permute.xlu0 %4744
      %4746 = vrot.lane.b32.xlu0 %v4713, 1
      %v4747 = vpop.permute.xlu0 %4746
      %4748 = vrot.lane.b32.xlu0 %v4714, 1
      %v4749 = vpop.permute.xlu0 %4748
      %4750 = vrot.lane.b32.xlu0 %v4715, 1
      %v4751 = vpop.permute.xlu0 %4750
      %v4752 = vsel %vm576, %v4717, %v4719
      %v4753 = vsel %vm576, %v4719, %v4721
      %v4754 = vsel %vm576, %v4723, %v4725
      %v4755 = vsel %vm576, %v4725, %v4727
      %v4756 = vsel %vm576, %v4729, %v4731
      %v4757 = vsel %vm576, %v4731, %v4733
      %v4758 = vsel %vm576, %v4735, %v4737
      %v4759 = vsel %vm576, %v4737, %v4739
      %v4760 = vsel %vm576, %v4741, %v4743
      %v4761 = vsel %vm576, %v4743, %v4745
      %v4762 = vsel %vm576, %v4747, %v4749
      %v4763 = vsel %vm576, %v4749, %v4751
      %vm4776 = vcmask 785408
      %v4778 = vsel %vm4776, %v4636, 0
      %v4781 = vsel %vm4776, %v4637, 0
      %4783 = vmatprep.subr.bf16.mxu0 0
      %4784 = vmatpush1.bf16.msra.mxu0 0
      %4785 = vmatprep.subr.bf16.mxu0 0
      %4786 = vmatpush1.bf16.msra.mxu0 0
      %4787 = vmatprep.subr.bf16.mxu0 %v4763
      %4788 = vmatpush1.bf16.msra.mxu0 %v4762
      %4789 = vmatprep.subr.bf16.mxu0 %v4761
      %4790 = vmatpush1.bf16.msra.mxu0 %v4760
      %4791 = vmatprep.subr.bf16.mxu0 %v4759
      %4792 = vmatpush1.bf16.msra.mxu0 %v4758
      %4793 = vmatprep.subr.bf16.mxu0 %v4757
      %4794 = vmatpush1.bf16.msra.mxu0 %v4756
      %4795 = vmatprep.subr.bf16.mxu0 %v4755
      %4796 = vmatpush1.bf16.msra.mxu0 %v4754
      %4797 = vmatprep.subr.bf16.mxu0 %v4753
      %4798 = vmatpush1.bf16.msra.mxu0 %v4752
      %4799 = vmatprep.subr.bf16.mxu0 0
      %4800 = vmatpush2.bf16.msra.mxu0 0
      %4801 = vmatprep.subr.bf16.mxu0 0
      %4802 = vmatpush2.bf16.msra.mxu0 0
      %4803 = vmatprep.subr.bf16.mxu0 0
      %4804 = vmatpush2.bf16.msra.mxu0 0
      %4805 = vmatprep.subr.bf16.mxu0 0
      %4806 = vmatpush2.bf16.msra.mxu0 0
      %4807 = vmatprep.subr.bf16.mxu0 0
      %4808 = vmatpush2.bf16.msra.mxu0 0
      %4809 = vmatprep.subr.bf16.mxu0 0
      %4810 = vmatpush2.bf16.msra.mxu0 0
      %4811 = vmatprep.subr.bf16.mxu0 0
      %4812 = vmatpush2.bf16.msra.mxu0 0
      %4813 = vmatprep.subr.bf16.mxu0 0
      %4814 = vmatpush2.bf16.msra.mxu0 0
      %4815 = vmatprep.mubr.bf16.mxu0 0
      %4816 = vmatmul.mubr.bf16.gmra.mxu0 %v4778
      %v4817 = vpop.f32.mrf.mxu0
      %v4818 = vadd.f32 0.0, %v4817
      %v4819 = vpop.f32.mrf.mxu0
      %v4820 = vadd.f32 0.0, %v4819
      %v4821 = vpop.f32.mrf.mxu0
      %v4822 = vadd.f32 0.0, %v4821
      %v4823 = vpop.f32.mrf.mxu0
      %v4824 = vadd.f32 0.0, %v4823
      %4825 = vmatprep.mubr.bf16.mxu0 0
      %4826 = vmatmul.mubr.bf16.gmra.mxu0 %v4781
      %v4827 = vpop.f32.mrf.mxu0
      %v4828 = vadd.f32 0.0, %v4827
      %v4829 = vpop.f32.mrf.mxu0
      %v4830 = vadd.f32 0.0, %v4829
      %v4831 = vpop.f32.mrf.mxu0
      %v4832 = vadd.f32 0.0, %v4831
      %v4833 = vpop.f32.mrf.mxu0
      %v4834 = vadd.f32 0.0, %v4833
      %4835 = vdwg.mxu0
      %v4840 = vunpack.c.l.b16 %v4609
      %v4841 = vunpack.c.l.b16 %v4610
      %v4842 = vunpack.c.l.b16 %v4611
      %v4843 = vunpack.c.l.b16 %v4612
      %v4844 = vpack.c.b16 %v4841, %v4840
      %v4845 = vpack.c.b16 %v4843, %v4842
      %4846 = vrot.lane.b32.xlu0 %v4698, 17
      %v4847 = vpop.permute.xlu0 %4846
      %4848 = vrot.lane.b32.xlu0 %v4699, 17
      %v4849 = vpop.permute.xlu0 %4848
      %4850 = vrot.lane.b32.xlu0 %v4700, 17
      %v4851 = vpop.permute.xlu0 %4850
      %4852 = vrot.lane.b32.xlu0 %v4701, 17
      %v4853 = vpop.permute.xlu0 %4852
      %4854 = vrot.lane.b32.xlu0 %v4702, 17
      %v4855 = vpop.permute.xlu0 %4854
      %4856 = vrot.lane.b32.xlu0 %v4703, 17
      %v4857 = vpop.permute.xlu0 %4856
      %4858 = vrot.lane.b32.xlu0 %v4704, 17
      %v4859 = vpop.permute.xlu0 %4858
      %4860 = vrot.lane.b32.xlu0 %v4705, 17
      %v4861 = vpop.permute.xlu0 %4860
      %4862 = vrot.lane.b32.xlu0 %v4706, 17
      %v4863 = vpop.permute.xlu0 %4862
      %4864 = vrot.lane.b32.xlu0 %v4707, 17
      %v4865 = vpop.permute.xlu0 %4864
      %4866 = vrot.lane.b32.xlu0 %v4708, 17
      %v4867 = vpop.permute.xlu0 %4866
      %4868 = vrot.lane.b32.xlu0 %v4709, 17
      %v4869 = vpop.permute.xlu0 %4868
      %4870 = vrot.lane.b32.xlu0 %v4710, 17
      %v4871 = vpop.permute.xlu0 %4870
      %4872 = vrot.lane.b32.xlu0 %v4711, 17
      %v4873 = vpop.permute.xlu0 %4872
      %4874 = vrot.lane.b32.xlu0 %v4712, 17
      %v4875 = vpop.permute.xlu0 %4874
      %4876 = vrot.lane.b32.xlu0 %v4713, 17
      %v4877 = vpop.permute.xlu0 %4876
      %4878 = vrot.lane.b32.xlu0 %v4714, 17
      %v4879 = vpop.permute.xlu0 %4878
      %4880 = vrot.lane.b32.xlu0 %v4715, 17
      %v4881 = vpop.permute.xlu0 %4880
      %v4882 = vsel %vm649, %v4847, %v4849
      %v4883 = vsel %vm649, %v4849, %v4851
      %v4884 = vsel %vm649, %v4853, %v4855
      %v4885 = vsel %vm649, %v4855, %v4857
      %v4886 = vsel %vm649, %v4859, %v4861
      %v4887 = vsel %vm649, %v4861, %v4863
      %v4888 = vsel %vm649, %v4865, %v4867
      %v4889 = vsel %vm649, %v4867, %v4869
      %v4890 = vsel %vm649, %v4871, %v4873
      %v4891 = vsel %vm649, %v4873, %v4875
      %v4892 = vsel %vm649, %v4877, %v4879
      %v4893 = vsel %vm649, %v4879, %v4881
      %v4907 = vsel %vm4776, %v4844, 0
      %v4910 = vsel %vm4776, %v4845, 0
      %4912 = vmatprep.subr.bf16.mxu0 0
      %4913 = vmatpush1.bf16.msra.mxu0 0
      %4914 = vmatprep.subr.bf16.mxu0 0
      %4915 = vmatpush1.bf16.msra.mxu0 0
      %4916 = vmatprep.subr.bf16.mxu0 %v4893
      %4917 = vmatpush1.bf16.msra.mxu0 %v4892
      %4918 = vmatprep.subr.bf16.mxu0 %v4891
      %4919 = vmatpush1.bf16.msra.mxu0 %v4890
      %4920 = vmatprep.subr.bf16.mxu0 %v4889
      %4921 = vmatpush1.bf16.msra.mxu0 %v4888
      %4922 = vmatprep.subr.bf16.mxu0 %v4887
      %4923 = vmatpush1.bf16.msra.mxu0 %v4886
      %4924 = vmatprep.subr.bf16.mxu0 %v4885
      %4925 = vmatpush1.bf16.msra.mxu0 %v4884
      %4926 = vmatprep.subr.bf16.mxu0 %v4883
      %4927 = vmatpush1.bf16.msra.mxu0 %v4882
      %4928 = vmatprep.subr.bf16.mxu0 0
      %4929 = vmatpush2.bf16.msra.mxu0 0
      %4930 = vmatprep.subr.bf16.mxu0 0
      %4931 = vmatpush2.bf16.msra.mxu0 0
      %4932 = vmatprep.subr.bf16.mxu0 0
      %4933 = vmatpush2.bf16.msra.mxu0 0
      %4934 = vmatprep.subr.bf16.mxu0 0
      %4935 = vmatpush2.bf16.msra.mxu0 0
      %4936 = vmatprep.subr.bf16.mxu0 0
      %4937 = vmatpush2.bf16.msra.mxu0 0
      %4938 = vmatprep.subr.bf16.mxu0 0
      %4939 = vmatpush2.bf16.msra.mxu0 0
      %4940 = vmatprep.subr.bf16.mxu0 0
      %4941 = vmatpush2.bf16.msra.mxu0 0
      %4942 = vmatprep.subr.bf16.mxu0 0
      %4943 = vmatpush2.bf16.msra.mxu0 0
      %4944 = vmatprep.mubr.bf16.mxu0 0
      %4945 = vmatmul.mubr.bf16.gmra.mxu0 %v4907
      %v4946 = vpop.f32.mrf.mxu0
      %v4947 = vadd.f32 %v4818, %v4946
      %v4948 = vpop.f32.mrf.mxu0
      %v4949 = vadd.f32 %v4820, %v4948
      %v4950 = vpop.f32.mrf.mxu0
      %v4951 = vadd.f32 %v4822, %v4950
      %v4952 = vpop.f32.mrf.mxu0
      %v4953 = vadd.f32 %v4824, %v4952
      %4954 = vmatprep.mubr.bf16.mxu0 0
      %4955 = vmatmul.mubr.bf16.gmra.mxu0 %v4910
      %v4956 = vpop.f32.mrf.mxu0
      %v4957 = vadd.f32 %v4828, %v4956
      %v4958 = vpop.f32.mrf.mxu0
      %v4959 = vadd.f32 %v4830, %v4958
      %v4960 = vpop.f32.mrf.mxu0
      %v4961 = vadd.f32 %v4832, %v4960
      %v4962 = vpop.f32.mrf.mxu0
      %v4963 = vadd.f32 %v4834, %v4962
      %4964 = vdwg.mxu0
      %v4965 = vld [vmem:[#allocation2 + $0x4] sm:$0xff]
      %v4966 = vld [vmem:[#allocation2 + $0x14] sm:$0xff]
      %v4967 = vld [vmem:[#allocation2 + $0x24] sm:$0xff]
      %v4968 = vld [vmem:[#allocation2 + $0x34] sm:$0xff]
      %v4969 = vld [vmem:[#allocation2 + $0x44] sm:$0xff]
      %v4970 = vld [vmem:[#allocation2 + $0x54] sm:$0xff]
      %v4971 = vld [vmem:[#allocation2 + $0x64] sm:$0xff]
      %v4972 = vld [vmem:[#allocation2 + $0x74] sm:$0xff]
      %v4973 = vld [vmem:[#allocation2 + $0x84] sm:$0xff]
      %v4974 = vld [vmem:[#allocation2 + $0x94] sm:$0xff]
      %v4975 = vld [vmem:[#allocation2 + $0xa4] sm:$0xff]
      %v4976 = vld [vmem:[#allocation2 + $0xb4] sm:$0xff]
      %s4977 = scalar_lea.vmem %s9, 64
      %v4978 = vld [vmem:[%s4977] sm:$0xf]
      %v4979 = vld [vmem:[%s4977 + $0x4] sm:$0xf]
      %v4980 = vld [vmem:[%s4977 + $0x8] sm:$0xf]
      %v4981 = vld [vmem:[%s4977 + $0xc] sm:$0xf]
      %v4986 = vunpack.c.l.b16 %v4978
      %v4987 = vunpack.c.l.b16 %v4979
      %v4988 = vunpack.c.l.b16 %v4980
      %v4989 = vunpack.c.l.b16 %v4981
      %v4990 = vpack.c.b16 %v4987, %v4986
      %v4991 = vpack.c.b16 %v4989, %v4988
      %v5004 = vunpack.c.l.b16 %v4965
      %v5005 = vunpack.c.h.b16 %v4965
      %v5006 = vunpack.c.l.b16 %v4966
      %v5007 = vunpack.c.h.b16 %v4966
      %v5008 = vunpack.c.l.b16 %v4967
      %v5009 = vunpack.c.h.b16 %v4967
      %v5010 = vunpack.c.l.b16 %v4968
      %v5011 = vunpack.c.h.b16 %v4968
      %v5012 = vunpack.c.l.b16 %v4969
      %v5013 = vunpack.c.h.b16 %v4969
      %v5014 = vunpack.c.l.b16 %v4970
      %v5015 = vunpack.c.h.b16 %v4970
      %v5016 = vunpack.c.l.b16 %v4971
      %v5017 = vunpack.c.h.b16 %v4971
      %v5018 = vunpack.c.l.b16 %v4972
      %v5019 = vunpack.c.h.b16 %v4972
      %v5020 = vunpack.c.l.b16 %v4973
      %v5021 = vunpack.c.h.b16 %v4973
      %v5022 = vunpack.c.l.b16 %v4974
      %v5023 = vunpack.c.h.b16 %v4974
      %v5024 = vunpack.c.l.b16 %v4975
      %v5025 = vunpack.c.h.b16 %v4975
      %v5026 = vunpack.c.l.b16 %v4976
      %v5027 = vunpack.c.h.b16 %v4976
      %v5028 = vpack.c.b16 %v5006, %v5004
      %v5029 = vpack.c.b16 %v5007, %v5005
      %v5030 = vpack.c.b16 %v5010, %v5008
      %v5031 = vpack.c.b16 %v5011, %v5009
      %v5032 = vpack.c.b16 %v5014, %v5012
      %v5033 = vpack.c.b16 %v5015, %v5013
      %v5034 = vpack.c.b16 %v5018, %v5016
      %v5035 = vpack.c.b16 %v5019, %v5017
      %v5036 = vpack.c.b16 %v5022, %v5020
      %v5037 = vpack.c.b16 %v5023, %v5021
      %v5038 = vpack.c.b16 %v5026, %v5024
      %v5039 = vpack.c.b16 %v5027, %v5025
      %v5053 = vsel %vm4776, %v4990, 0
      %v5056 = vsel %vm4776, %v4991, 0
      %5058 = vmatprep.subr.bf16.mxu0 0
      %5059 = vmatpush1.bf16.msra.mxu0 0
      %5060 = vmatprep.subr.bf16.mxu0 0
      %5061 = vmatpush1.bf16.msra.mxu0 0
      %5062 = vmatprep.subr.bf16.mxu0 %v5039
      %5063 = vmatpush1.bf16.msra.mxu0 %v5038
      %5064 = vmatprep.subr.bf16.mxu0 %v5037
      %5065 = vmatpush1.bf16.msra.mxu0 %v5036
      %5066 = vmatprep.subr.bf16.mxu0 %v5035
      %5067 = vmatpush1.bf16.msra.mxu0 %v5034
      %5068 = vmatprep.subr.bf16.mxu0 %v5033
      %5069 = vmatpush1.bf16.msra.mxu0 %v5032
      %5070 = vmatprep.subr.bf16.mxu0 %v5031
      %5071 = vmatpush1.bf16.msra.mxu0 %v5030
      %5072 = vmatprep.subr.bf16.mxu0 %v5029
      %5073 = vmatpush1.bf16.msra.mxu0 %v5028
      %5074 = vmatprep.subr.bf16.mxu0 0
      %5075 = vmatpush2.bf16.msra.mxu0 0
      %5076 = vmatprep.subr.bf16.mxu0 0
      %5077 = vmatpush2.bf16.msra.mxu0 0
      %5078 = vmatprep.subr.bf16.mxu0 0
      %5079 = vmatpush2.bf16.msra.mxu0 0
      %5080 = vmatprep.subr.bf16.mxu0 0
      %5081 = vmatpush2.bf16.msra.mxu0 0
      %5082 = vmatprep.subr.bf16.mxu0 0
      %5083 = vmatpush2.bf16.msra.mxu0 0
      %5084 = vmatprep.subr.bf16.mxu0 0
      %5085 = vmatpush2.bf16.msra.mxu0 0
      %5086 = vmatprep.subr.bf16.mxu0 0
      %5087 = vmatpush2.bf16.msra.mxu0 0
      %5088 = vmatprep.subr.bf16.mxu0 0
      %5089 = vmatpush2.bf16.msra.mxu0 0
      %5090 = vmatprep.mubr.bf16.mxu0 0
      %5091 = vmatmul.mubr.bf16.gmra.mxu0 %v5053
      %v5092 = vpop.f32.mrf.mxu0
      %v5093 = vadd.f32 0.0, %v5092
      %v5094 = vpop.f32.mrf.mxu0
      %v5095 = vadd.f32 0.0, %v5094
      %v5096 = vpop.f32.mrf.mxu0
      %v5097 = vadd.f32 0.0, %v5096
      %v5098 = vpop.f32.mrf.mxu0
      %v5099 = vadd.f32 0.0, %v5098
      %5100 = vmatprep.mubr.bf16.mxu0 0
      %5101 = vmatmul.mubr.bf16.gmra.mxu0 %v5056
      %v5102 = vpop.f32.mrf.mxu0
      %v5103 = vadd.f32 0.0, %v5102
      %v5104 = vpop.f32.mrf.mxu0
      %v5105 = vadd.f32 0.0, %v5104
      %v5106 = vpop.f32.mrf.mxu0
      %v5107 = vadd.f32 0.0, %v5106
      %v5108 = vpop.f32.mrf.mxu0
      %v5109 = vadd.f32 0.0, %v5108
      %5110 = vdwg.mxu0
      %v5115 = vunpack.c.l.b16 %v4614
      %v5116 = vunpack.c.l.b16 %v4615
      %v5117 = vunpack.c.l.b16 %v4616
      %v5118 = vunpack.c.l.b16 %v4617
      %v5119 = vpack.c.b16 %v5116, %v5115
      %v5120 = vpack.c.b16 %v5118, %v5117
      %5121 = vrot.lane.b32.xlu0 %v4698, 16
      %v5122 = vpop.permute.xlu0 %5121
      %5123 = vrot.lane.b32.xlu0 %v4699, 16
      %v5124 = vpop.permute.xlu0 %5123
      %5125 = vrot.lane.b32.xlu0 %v4700, 16
      %v5126 = vpop.permute.xlu0 %5125
      %5127 = vrot.lane.b32.xlu0 %v4701, 16
      %v5128 = vpop.permute.xlu0 %5127
      %5129 = vrot.lane.b32.xlu0 %v4702, 16
      %v5130 = vpop.permute.xlu0 %5129
      %5131 = vrot.lane.b32.xlu0 %v4703, 16
      %v5132 = vpop.permute.xlu0 %5131
      %5133 = vrot.lane.b32.xlu0 %v4704, 16
      %v5134 = vpop.permute.xlu0 %5133
      %5135 = vrot.lane.b32.xlu0 %v4705, 16
      %v5136 = vpop.permute.xlu0 %5135
      %5137 = vrot.lane.b32.xlu0 %v4706, 16
      %v5138 = vpop.permute.xlu0 %5137
      %5139 = vrot.lane.b32.xlu0 %v4707, 16
      %v5140 = vpop.permute.xlu0 %5139
      %5141 = vrot.lane.b32.xlu0 %v4708, 16
      %v5142 = vpop.permute.xlu0 %5141
      %5143 = vrot.lane.b32.xlu0 %v4709, 16
      %v5144 = vpop.permute.xlu0 %5143
      %5145 = vrot.lane.b32.xlu0 %v4710, 16
      %v5146 = vpop.permute.xlu0 %5145
      %5147 = vrot.lane.b32.xlu0 %v4711, 16
      %v5148 = vpop.permute.xlu0 %5147
      %5149 = vrot.lane.b32.xlu0 %v4712, 16
      %v5150 = vpop.permute.xlu0 %5149
      %5151 = vrot.lane.b32.xlu0 %v4713, 16
      %v5152 = vpop.permute.xlu0 %5151
      %5153 = vrot.lane.b32.xlu0 %v4714, 16
      %v5154 = vpop.permute.xlu0 %5153
      %5155 = vrot.lane.b32.xlu0 %v4715, 16
      %v5156 = vpop.permute.xlu0 %5155
      %v5157 = vsel %vm799, %v5122, %v5124
      %v5158 = vsel %vm799, %v5124, %v5126
      %v5159 = vsel %vm799, %v5128, %v5130
      %v5160 = vsel %vm799, %v5130, %v5132
      %v5161 = vsel %vm799, %v5134, %v5136
      %v5162 = vsel %vm799, %v5136, %v5138
      %v5163 = vsel %vm799, %v5140, %v5142
      %v5164 = vsel %vm799, %v5142, %v5144
      %v5165 = vsel %vm799, %v5146, %v5148
      %v5166 = vsel %vm799, %v5148, %v5150
      %v5167 = vsel %vm799, %v5152, %v5154
      %v5168 = vsel %vm799, %v5154, %v5156
      %v5182 = vsel %vm4776, %v5119, 0
      %v5185 = vsel %vm4776, %v5120, 0
      %5187 = vmatprep.subr.bf16.mxu0 0
      %5188 = vmatpush1.bf16.msra.mxu0 0
      %5189 = vmatprep.subr.bf16.mxu0 0
      %5190 = vmatpush1.bf16.msra.mxu0 0
      %5191 = vmatprep.subr.bf16.mxu0 %v5168
      %5192 = vmatpush1.bf16.msra.mxu0 %v5167
      %5193 = vmatprep.subr.bf16.mxu0 %v5166
      %5194 = vmatpush1.bf16.msra.mxu0 %v5165
      %5195 = vmatprep.subr.bf16.mxu0 %v5164
      %5196 = vmatpush1.bf16.msra.mxu0 %v5163
      %5197 = vmatprep.subr.bf16.mxu0 %v5162
      %5198 = vmatpush1.bf16.msra.mxu0 %v5161
      %5199 = vmatprep.subr.bf16.mxu0 %v5160
      %5200 = vmatpush1.bf16.msra.mxu0 %v5159
      %5201 = vmatprep.subr.bf16.mxu0 %v5158
      %5202 = vmatpush1.bf16.msra.mxu0 %v5157
      %5203 = vmatprep.subr.bf16.mxu0 0
      %5204 = vmatpush2.bf16.msra.mxu0 0
      %5205 = vmatprep.subr.bf16.mxu0 0
      %5206 = vmatpush2.bf16.msra.mxu0 0
      %5207 = vmatprep.subr.bf16.mxu0 0
      %5208 = vmatpush2.bf16.msra.mxu0 0
      %5209 = vmatprep.subr.bf16.mxu0 0
      %5210 = vmatpush2.bf16.msra.mxu0 0
      %5211 = vmatprep.subr.bf16.mxu0 0
      %5212 = vmatpush2.bf16.msra.mxu0 0
      %5213 = vmatprep.subr.bf16.mxu0 0
      %5214 = vmatpush2.bf16.msra.mxu0 0
      %5215 = vmatprep.subr.bf16.mxu0 0
      %5216 = vmatpush2.bf16.msra.mxu0 0
      %5217 = vmatprep.subr.bf16.mxu0 0
      %5218 = vmatpush2.bf16.msra.mxu0 0
      %5219 = vmatprep.mubr.bf16.mxu0 0
      %5220 = vmatmul.mubr.bf16.gmra.mxu0 %v5182
      %v5221 = vpop.f32.mrf.mxu0
      %v5222 = vadd.f32 %v5093, %v5221
      %v5223 = vpop.f32.mrf.mxu0
      %v5224 = vadd.f32 %v5095, %v5223
      %v5225 = vpop.f32.mrf.mxu0
      %v5226 = vadd.f32 %v5097, %v5225
      %v5227 = vpop.f32.mrf.mxu0
      %v5228 = vadd.f32 %v5099, %v5227
      %5229 = vmatprep.mubr.bf16.mxu0 0
      %5230 = vmatmul.mubr.bf16.gmra.mxu0 %v5185
      %v5231 = vpop.f32.mrf.mxu0
      %v5232 = vadd.f32 %v5103, %v5231
      %v5233 = vpop.f32.mrf.mxu0
      %v5234 = vadd.f32 %v5105, %v5233
      %v5235 = vpop.f32.mrf.mxu0
      %v5236 = vadd.f32 %v5107, %v5235
      %v5237 = vpop.f32.mrf.mxu0
      %v5238 = vadd.f32 %v5109, %v5237
      %5239 = vdwg.mxu0
      %v5240 = vld [vmem:[#allocation2 + $0x4] sm:$0xff]
      %v5241 = vld [vmem:[#allocation2 + $0xc] sm:$0xf]
      %v5242 = vld [vmem:[#allocation2 + $0x14] sm:$0xff]
      %v5243 = vld [vmem:[#allocation2 + $0x1c] sm:$0xf]
      %v5244 = vld [vmem:[#allocation2 + $0x24] sm:$0xff]
      %v5245 = vld [vmem:[#allocation2 + $0x2c] sm:$0xf]
      %v5246 = vld [vmem:[#allocation2 + $0x34] sm:$0xff]
      %v5247 = vld [vmem:[#allocation2 + $0x3c] sm:$0xf]
      %v5248 = vld [vmem:[#allocation2 + $0x44] sm:$0xff]
      %v5249 = vld [vmem:[#allocation2 + $0x4c] sm:$0xf]
      %v5250 = vld [vmem:[#allocation2 + $0x54] sm:$0xff]
      %v5251 = vld [vmem:[#allocation2 + $0x5c] sm:$0xf]
      %v5252 = vld [vmem:[#allocation2 + $0x64] sm:$0xff]
      %v5253 = vld [vmem:[#allocation2 + $0x6c] sm:$0xf]
      %v5254 = vld [vmem:[#allocation2 + $0x74] sm:$0xff]
      %v5255 = vld [vmem:[#allocation2 + $0x7c] sm:$0xf]
      %v5256 = vld [vmem:[#allocation2 + $0x84] sm:$0xff]
      %v5257 = vld [vmem:[#allocation2 + $0x8c] sm:$0xf]
      %v5258 = vld [vmem:[#allocation2 + $0x94] sm:$0xff]
      %v5259 = vld [vmem:[#allocation2 + $0x9c] sm:$0xf]
      %v5260 = vld [vmem:[#allocation2 + $0xa4] sm:$0xff]
      %v5261 = vld [vmem:[#allocation2 + $0xac] sm:$0xf]
      %v5262 = vld [vmem:[#allocation2 + $0xb4] sm:$0xff]
      %v5263 = vld [vmem:[#allocation2 + $0xbc] sm:$0xf]
      %s5264 = scalar_lea.vmem %s9, 80
      %v5265 = vld [vmem:[%s5264] sm:$0xf]
      %v5266 = vld [vmem:[%s5264 + $0x4] sm:$0xf]
      %v5267 = vld [vmem:[%s5264 + $0x8] sm:$0xf]
      %v5268 = vld [vmem:[%s5264 + $0xc] sm:$0xf]
      %v5273 = vunpack.c.l.b16 %v5265
      %v5274 = vunpack.c.l.b16 %v5266
      %v5275 = vunpack.c.l.b16 %v5267
      %v5276 = vunpack.c.l.b16 %v5268
      %v5277 = vpack.c.b16 %v5274, %v5273
      %v5278 = vpack.c.b16 %v5276, %v5275
      %v5303 = vunpack.c.l.b16 %v5240
      %v5304 = vunpack.c.h.b16 %v5240
      %v5305 = vunpack.c.l.b16 %v5241
      %v5306 = vunpack.c.l.b16 %v5242
      %v5307 = vunpack.c.h.b16 %v5242
      %v5308 = vunpack.c.l.b16 %v5243
      %v5309 = vunpack.c.l.b16 %v5244
      %v5310 = vunpack.c.h.b16 %v5244
      %v5311 = vunpack.c.l.b16 %v5245
      %v5312 = vunpack.c.l.b16 %v5246
      %v5313 = vunpack.c.h.b16 %v5246
      %v5314 = vunpack.c.l.b16 %v5247
      %v5315 = vunpack.c.l.b16 %v5248
      %v5316 = vunpack.c.h.b16 %v5248
      %v5317 = vunpack.c.l.b16 %v5249
      %v5318 = vunpack.c.l.b16 %v5250
      %v5319 = vunpack.c.h.b16 %v5250
      %v5320 = vunpack.c.l.b16 %v5251
      %v5321 = vunpack.c.l.b16 %v5252
      %v5322 = vunpack.c.h.b16 %v5252
      %v5323 = vunpack.c.l.b16 %v5253
      %v5324 = vunpack.c.l.b16 %v5254
      %v5325 = vunpack.c.h.b16 %v5254
      %v5326 = vunpack.c.l.b16 %v5255
      %v5327 = vunpack.c.l.b16 %v5256
      %v5328 = vunpack.c.h.b16 %v5256
      %v5329 = vunpack.c.l.b16 %v5257
      %v5330 = vunpack.c.l.b16 %v5258
      %v5331 = vunpack.c.h.b16 %v5258
      %v5332 = vunpack.c.l.b16 %v5259
      %v5333 = vunpack.c.l.b16 %v5260
      %v5334 = vunpack.c.h.b16 %v5260
      %v5335 = vunpack.c.l.b16 %v5261
      %v5336 = vunpack.c.l.b16 %v5262
      %v5337 = vunpack.c.h.b16 %v5262
      %v5338 = vunpack.c.l.b16 %v5263
      %v5339 = vpack.c.b16 %v5306, %v5303
      %v5340 = vpack.c.b16 %v5307, %v5304
      %v5341 = vpack.c.b16 %v5308, %v5305
      %v5342 = vpack.c.b16 %v5312, %v5309
      %v5343 = vpack.c.b16 %v5313, %v5310
      %v5344 = vpack.c.b16 %v5314, %v5311
      %v5345 = vpack.c.b16 %v5318, %v5315
      %v5346 = vpack.c.b16 %v5319, %v5316
      %v5347 = vpack.c.b16 %v5320, %v5317
      %v5348 = vpack.c.b16 %v5324, %v5321
      %v5349 = vpack.c.b16 %v5325, %v5322
      %v5350 = vpack.c.b16 %v5326, %v5323
      %v5351 = vpack.c.b16 %v5330, %v5327
      %v5352 = vpack.c.b16 %v5331, %v5328
      %v5353 = vpack.c.b16 %v5332, %v5329
      %v5354 = vpack.c.b16 %v5336, %v5333
      %v5355 = vpack.c.b16 %v5337, %v5334
      %v5356 = vpack.c.b16 %v5338, %v5335
      %5357 = vrot.lane.b32.xlu0 %v5339, 127
      %v5358 = vpop.permute.xlu0 %5357
      %5359 = vrot.lane.b32.xlu0 %v5340, 127
      %v5360 = vpop.permute.xlu0 %5359
      %5361 = vrot.lane.b32.xlu0 %v5341, 127
      %v5362 = vpop.permute.xlu0 %5361
      %5363 = vrot.lane.b32.xlu0 %v5342, 127
      %v5364 = vpop.permute.xlu0 %5363
      %5365 = vrot.lane.b32.xlu0 %v5343, 127
      %v5366 = vpop.permute.xlu0 %5365
      %5367 = vrot.lane.b32.xlu0 %v5344, 127
      %v5368 = vpop.permute.xlu0 %5367
      %5369 = vrot.lane.b32.xlu0 %v5345, 127
      %v5370 = vpop.permute.xlu0 %5369
      %5371 = vrot.lane.b32.xlu0 %v5346, 127
      %v5372 = vpop.permute.xlu0 %5371
      %5373 = vrot.lane.b32.xlu0 %v5347, 127
      %v5374 = vpop.permute.xlu0 %5373
      %5375 = vrot.lane.b32.xlu0 %v5348, 127
      %v5376 = vpop.permute.xlu0 %5375
      %5377 = vrot.lane.b32.xlu0 %v5349, 127
      %v5378 = vpop.permute.xlu0 %5377
      %5379 = vrot.lane.b32.xlu0 %v5350, 127
      %v5380 = vpop.permute.xlu0 %5379
      %5381 = vrot.lane.b32.xlu0 %v5351, 127
      %v5382 = vpop.permute.xlu0 %5381
      %5383 = vrot.lane.b32.xlu0 %v5352, 127
      %v5384 = vpop.permute.xlu0 %5383
      %5385 = vrot.lane.b32.xlu0 %v5353, 127
      %v5386 = vpop.permute.xlu0 %5385
      %5387 = vrot.lane.b32.xlu0 %v5354, 127
      %v5388 = vpop.permute.xlu0 %5387
      %5389 = vrot.lane.b32.xlu0 %v5355, 127
      %v5390 = vpop.permute.xlu0 %5389
      %5391 = vrot.lane.b32.xlu0 %v5356, 127
      %v5392 = vpop.permute.xlu0 %5391
      %v5393 = vsel %vm908, %v5358, %v5360
      %v5394 = vsel %vm908, %v5360, %v5362
      %v5395 = vsel %vm908, %v5364, %v5366
      %v5396 = vsel %vm908, %v5366, %v5368
      %v5397 = vsel %vm908, %v5370, %v5372
      %v5398 = vsel %vm908, %v5372, %v5374
      %v5399 = vsel %vm908, %v5376, %v5378
      %v5400 = vsel %vm908, %v5378, %v5380
      %v5401 = vsel %vm908, %v5382, %v5384
      %v5402 = vsel %vm908, %v5384, %v5386
      %v5403 = vsel %vm908, %v5388, %v5390
      %v5404 = vsel %vm908, %v5390, %v5392
      %v5418 = vsel %vm4776, %v5277, 0
      %v5421 = vsel %vm4776, %v5278, 0
      %5423 = vmatprep.subr.bf16.mxu0 0
      %5424 = vmatpush1.bf16.msra.mxu0 0
      %5425 = vmatprep.subr.bf16.mxu0 0
      %5426 = vmatpush1.bf16.msra.mxu0 0
      %5427 = vmatprep.subr.bf16.mxu0 %v5404
      %5428 = vmatpush1.bf16.msra.mxu0 %v5403
      %5429 = vmatprep.subr.bf16.mxu0 %v5402
      %5430 = vmatpush1.bf16.msra.mxu0 %v5401
      %5431 = vmatprep.subr.bf16.mxu0 %v5400
      %5432 = vmatpush1.bf16.msra.mxu0 %v5399
      %5433 = vmatprep.subr.bf16.mxu0 %v5398
      %5434 = vmatpush1.bf16.msra.mxu0 %v5397
      %5435 = vmatprep.subr.bf16.mxu0 %v5396
      %5436 = vmatpush1.bf16.msra.mxu0 %v5395
      %5437 = vmatprep.subr.bf16.mxu0 %v5394
      %5438 = vmatpush1.bf16.msra.mxu0 %v5393
      %5439 = vmatprep.subr.bf16.mxu0 0
      %5440 = vmatpush2.bf16.msra.mxu0 0
      %5441 = vmatprep.subr.bf16.mxu0 0
      %5442 = vmatpush2.bf16.msra.mxu0 0
      %5443 = vmatprep.subr.bf16.mxu0 0
      %5444 = vmatpush2.bf16.msra.mxu0 0
      %5445 = vmatprep.subr.bf16.mxu0 0
      %5446 = vmatpush2.bf16.msra.mxu0 0
      %5447 = vmatprep.subr.bf16.mxu0 0
      %5448 = vmatpush2.bf16.msra.mxu0 0
      %5449 = vmatprep.subr.bf16.mxu0 0
      %5450 = vmatpush2.bf16.msra.mxu0 0
      %5451 = vmatprep.subr.bf16.mxu0 0
      %5452 = vmatpush2.bf16.msra.mxu0 0
      %5453 = vmatprep.subr.bf16.mxu0 0
      %5454 = vmatpush2.bf16.msra.mxu0 0
      %5455 = vmatprep.mubr.bf16.mxu0 0
      %5456 = vmatmul.mubr.bf16.gmra.mxu0 %v5418
      %v5457 = vpop.f32.mrf.mxu0
      %v5458 = vadd.f32 0.0, %v5457
      %v5459 = vpop.f32.mrf.mxu0
      %v5460 = vadd.f32 0.0, %v5459
      %v5461 = vpop.f32.mrf.mxu0
      %v5462 = vadd.f32 0.0, %v5461
      %v5463 = vpop.f32.mrf.mxu0
      %v5464 = vadd.f32 0.0, %v5463
      %5465 = vmatprep.mubr.bf16.mxu0 0
      %5466 = vmatmul.mubr.bf16.gmra.mxu0 %v5421
      %v5467 = vpop.f32.mrf.mxu0
      %v5468 = vadd.f32 0.0, %v5467
      %v5469 = vpop.f32.mrf.mxu0
      %v5470 = vadd.f32 0.0, %v5469
      %v5471 = vpop.f32.mrf.mxu0
      %v5472 = vadd.f32 0.0, %v5471
      %v5473 = vpop.f32.mrf.mxu0
      %v5474 = vadd.f32 0.0, %v5473
      %5475 = vdwg.mxu0
      %v5480 = vunpack.c.l.b16 %v4619
      %v5481 = vunpack.c.l.b16 %v4620
      %v5482 = vunpack.c.l.b16 %v4621
      %v5483 = vunpack.c.l.b16 %v4622
      %v5484 = vpack.c.b16 %v5481, %v5480
      %v5485 = vpack.c.b16 %v5483, %v5482
      %5486 = vrot.lane.b32.xlu0 %v4698, 15
      %v5487 = vpop.permute.xlu0 %5486
      %5488 = vrot.lane.b32.xlu0 %v4699, 15
      %v5489 = vpop.permute.xlu0 %5488
      %5490 = vrot.lane.b32.xlu0 %v4700, 15
      %v5491 = vpop.permute.xlu0 %5490
      %5492 = vrot.lane.b32.xlu0 %v4701, 15
      %v5493 = vpop.permute.xlu0 %5492
      %5494 = vrot.lane.b32.xlu0 %v4702, 15
      %v5495 = vpop.permute.xlu0 %5494
      %5496 = vrot.lane.b32.xlu0 %v4703, 15
      %v5497 = vpop.permute.xlu0 %5496
      %5498 = vrot.lane.b32.xlu0 %v4704, 15
      %v5499 = vpop.permute.xlu0 %5498
      %5500 = vrot.lane.b32.xlu0 %v4705, 15
      %v5501 = vpop.permute.xlu0 %5500
      %5502 = vrot.lane.b32.xlu0 %v4706, 15
      %v5503 = vpop.permute.xlu0 %5502
      %5504 = vrot.lane.b32.xlu0 %v4707, 15
      %v5505 = vpop.permute.xlu0 %5504
      %5506 = vrot.lane.b32.xlu0 %v4708, 15
      %v5507 = vpop.permute.xlu0 %5506
      %5508 = vrot.lane.b32.xlu0 %v4709, 15
      %v5509 = vpop.permute.xlu0 %5508
      %5510 = vrot.lane.b32.xlu0 %v4710, 15
      %v5511 = vpop.permute.xlu0 %5510
      %5512 = vrot.lane.b32.xlu0 %v4711, 15
      %v5513 = vpop.permute.xlu0 %5512
      %5514 = vrot.lane.b32.xlu0 %v4712, 15
      %v5515 = vpop.permute.xlu0 %5514
      %5516 = vrot.lane.b32.xlu0 %v4713, 15
      %v5517 = vpop.permute.xlu0 %5516
      %5518 = vrot.lane.b32.xlu0 %v4714, 15
      %v5519 = vpop.permute.xlu0 %5518
      %5520 = vrot.lane.b32.xlu0 %v4715, 15
      %v5521 = vpop.permute.xlu0 %5520
      %v5522 = vsel %vm980, %v5487, %v5489
      %v5523 = vsel %vm980, %v5489, %v5491
      %v5524 = vsel %vm980, %v5493, %v5495
      %v5525 = vsel %vm980, %v5495, %v5497
      %v5526 = vsel %vm980, %v5499, %v5501
      %v5527 = vsel %vm980, %v5501, %v5503
      %v5528 = vsel %vm980, %v5505, %v5507
      %v5529 = vsel %vm980, %v5507, %v5509
      %v5530 = vsel %vm980, %v5511, %v5513
      %v5531 = vsel %vm980, %v5513, %v5515
      %v5532 = vsel %vm980, %v5517, %v5519
      %v5533 = vsel %vm980, %v5519, %v5521
      %v5547 = vsel %vm4776, %v5484, 0
      %v5550 = vsel %vm4776, %v5485, 0
      %5552 = vmatprep.subr.bf16.mxu0 0
      %5553 = vmatpush1.bf16.msra.mxu0 0
      %5554 = vmatprep.subr.bf16.mxu0 0
      %5555 = vmatpush1.bf16.msra.mxu0 0
      %5556 = vmatprep.subr.bf16.mxu0 %v5533
      %5557 = vmatpush1.bf16.msra.mxu0 %v5532
      %5558 = vmatprep.subr.bf16.mxu0 %v5531
      %5559 = vmatpush1.bf16.msra.mxu0 %v5530
      %5560 = vmatprep.subr.bf16.mxu0 %v5529
      %5561 = vmatpush1.bf16.msra.mxu0 %v5528
      %5562 = vmatprep.subr.bf16.mxu0 %v5527
      %5563 = vmatpush1.bf16.msra.mxu0 %v5526
      %5564 = vmatprep.subr.bf16.mxu0 %v5525
      %5565 = vmatpush1.bf16.msra.mxu0 %v5524
      %5566 = vmatprep.subr.bf16.mxu0 %v5523
      %5567 = vmatpush1.bf16.msra.mxu0 %v5522
      %5568 = vmatprep.subr.bf16.mxu0 0
      %5569 = vmatpush2.bf16.msra.mxu0 0
      %5570 = vmatprep.subr.bf16.mxu0 0
      %5571 = vmatpush2.bf16.msra.mxu0 0
      %5572 = vmatprep.subr.bf16.mxu0 0
      %5573 = vmatpush2.bf16.msra.mxu0 0
      %5574 = vmatprep.subr.bf16.mxu0 0
      %5575 = vmatpush2.bf16.msra.mxu0 0
      %5576 = vmatprep.subr.bf16.mxu0 0
      %5577 = vmatpush2.bf16.msra.mxu0 0
      %5578 = vmatprep.subr.bf16.mxu0 0
      %5579 = vmatpush2.bf16.msra.mxu0 0
      %5580 = vmatprep.subr.bf16.mxu0 0
      %5581 = vmatpush2.bf16.msra.mxu0 0
      %5582 = vmatprep.subr.bf16.mxu0 0
      %5583 = vmatpush2.bf16.msra.mxu0 0
      %5584 = vmatprep.mubr.bf16.mxu0 0
      %5585 = vmatmul.mubr.bf16.gmra.mxu0 %v5547
      %v5586 = vpop.f32.mrf.mxu0
      %v5587 = vadd.f32 %v5458, %v5586
      %v5588 = vpop.f32.mrf.mxu0
      %v5589 = vadd.f32 %v5460, %v5588
      %v5590 = vpop.f32.mrf.mxu0
      %v5591 = vadd.f32 %v5462, %v5590
      %v5592 = vpop.f32.mrf.mxu0
      %v5593 = vadd.f32 %v5464, %v5592
      %5594 = vmatprep.mubr.bf16.mxu0 0
      %5595 = vmatmul.mubr.bf16.gmra.mxu0 %v5550
      %v5596 = vpop.f32.mrf.mxu0
      %v5597 = vadd.f32 %v5468, %v5596
      %v5598 = vpop.f32.mrf.mxu0
      %v5599 = vadd.f32 %v5470, %v5598
      %v5600 = vpop.f32.mrf.mxu0
      %v5601 = vadd.f32 %v5472, %v5600
      %v5602 = vpop.f32.mrf.mxu0
      %v5603 = vadd.f32 %v5474, %v5602
      %5604 = vdwg.mxu0
      %s5605 = scalar_lea.vmem %s9, 96
      %v5606 = vld [vmem:[%s5605] sm:$0xf]
      %v5607 = vld [vmem:[%s5605 + $0x4] sm:$0xf]
      %v5608 = vld [vmem:[%s5605 + $0x8] sm:$0xf]
      %v5609 = vld [vmem:[%s5605 + $0xc] sm:$0xf]
      %v5614 = vunpack.c.l.b16 %v5606
      %v5615 = vunpack.c.l.b16 %v5607
      %v5616 = vunpack.c.l.b16 %v5608
      %v5617 = vunpack.c.l.b16 %v5609
      %v5618 = vpack.c.b16 %v5615, %v5614
      %v5619 = vpack.c.b16 %v5617, %v5616
      %5620 = vrot.lane.b32.xlu0 %v5339, 113
      %v5621 = vpop.permute.xlu0 %5620
      %5622 = vrot.lane.b32.xlu0 %v5340, 113
      %v5623 = vpop.permute.xlu0 %5622
      %5624 = vrot.lane.b32.xlu0 %v5341, 113
      %v5625 = vpop.permute.xlu0 %5624
      %5626 = vrot.lane.b32.xlu0 %v5342, 113
      %v5627 = vpop.permute.xlu0 %5626
      %5628 = vrot.lane.b32.xlu0 %v5343, 113
      %v5629 = vpop.permute.xlu0 %5628
      %5630 = vrot.lane.b32.xlu0 %v5344, 113
      %v5631 = vpop.permute.xlu0 %5630
      %5632 = vrot.lane.b32.xlu0 %v5345, 113
      %v5633 = vpop.permute.xlu0 %5632
      %5634 = vrot.lane.b32.xlu0 %v5346, 113
      %v5635 = vpop.permute.xlu0 %5634
      %5636 = vrot.lane.b32.xlu0 %v5347, 113
      %v5637 = vpop.permute.xlu0 %5636
      %5638 = vrot.lane.b32.xlu0 %v5348, 113
      %v5639 = vpop.permute.xlu0 %5638
      %5640 = vrot.lane.b32.xlu0 %v5349, 113
      %v5641 = vpop.permute.xlu0 %5640
      %5642 = vrot.lane.b32.xlu0 %v5350, 113
      %v5643 = vpop.permute.xlu0 %5642
      %5644 = vrot.lane.b32.xlu0 %v5351, 113
      %v5645 = vpop.permute.xlu0 %5644
      %5646 = vrot.lane.b32.xlu0 %v5352, 113
      %v5647 = vpop.permute.xlu0 %5646
      %5648 = vrot.lane.b32.xlu0 %v5353, 113
      %v5649 = vpop.permute.xlu0 %5648
      %5650 = vrot.lane.b32.xlu0 %v5354, 113
      %v5651 = vpop.permute.xlu0 %5650
      %5652 = vrot.lane.b32.xlu0 %v5355, 113
      %v5653 = vpop.permute.xlu0 %5652
      %5654 = vrot.lane.b32.xlu0 %v5356, 113
      %v5655 = vpop.permute.xlu0 %5654
      %v5656 = vsel %vm1055, %v5621, %v5623
      %v5657 = vsel %vm1055, %v5623, %v5625
      %v5658 = vsel %vm1055, %v5627, %v5629
      %v5659 = vsel %vm1055, %v5629, %v5631
      %v5660 = vsel %vm1055, %v5633, %v5635
      %v5661 = vsel %vm1055, %v5635, %v5637
      %v5662 = vsel %vm1055, %v5639, %v5641
      %v5663 = vsel %vm1055, %v5641, %v5643
      %v5664 = vsel %vm1055, %v5645, %v5647
      %v5665 = vsel %vm1055, %v5647, %v5649
      %v5666 = vsel %vm1055, %v5651, %v5653
      %v5667 = vsel %vm1055, %v5653, %v5655
      %v5681 = vsel %vm4776, %v5618, 0
      %v5684 = vsel %vm4776, %v5619, 0
      %5686 = vmatprep.subr.bf16.mxu0 0
      %5687 = vmatpush1.bf16.msra.mxu0 0
      %5688 = vmatprep.subr.bf16.mxu0 0
      %5689 = vmatpush1.bf16.msra.mxu0 0
      %5690 = vmatprep.subr.bf16.mxu0 %v5667
      %5691 = vmatpush1.bf16.msra.mxu0 %v5666
      %5692 = vmatprep.subr.bf16.mxu0 %v5665
      %5693 = vmatpush1.bf16.msra.mxu0 %v5664
      %5694 = vmatprep.subr.bf16.mxu0 %v5663
      %5695 = vmatpush1.bf16.msra.mxu0 %v5662
      %5696 = vmatprep.subr.bf16.mxu0 %v5661
      %5697 = vmatpush1.bf16.msra.mxu0 %v5660
      %5698 = vmatprep.subr.bf16.mxu0 %v5659
      %5699 = vmatpush1.bf16.msra.mxu0 %v5658
      %5700 = vmatprep.subr.bf16.mxu0 %v5657
      %5701 = vmatpush1.bf16.msra.mxu0 %v5656
      %5702 = vmatprep.subr.bf16.mxu0 0
      %5703 = vmatpush2.bf16.msra.mxu0 0
      %5704 = vmatprep.subr.bf16.mxu0 0
      %5705 = vmatpush2.bf16.msra.mxu0 0
      %5706 = vmatprep.subr.bf16.mxu0 0
      %5707 = vmatpush2.bf16.msra.mxu0 0
      %5708 = vmatprep.subr.bf16.mxu0 0
      %5709 = vmatpush2.bf16.msra.mxu0 0
      %5710 = vmatprep.subr.bf16.mxu0 0
      %5711 = vmatpush2.bf16.msra.mxu0 0
      %5712 = vmatprep.subr.bf16.mxu0 0
      %5713 = vmatpush2.bf16.msra.mxu0 0
      %5714 = vmatprep.subr.bf16.mxu0 0
      %5715 = vmatpush2.bf16.msra.mxu0 0
      %5716 = vmatprep.subr.bf16.mxu0 0
      %5717 = vmatpush2.bf16.msra.mxu0 0
      %5718 = vmatprep.mubr.bf16.mxu0 0
      %5719 = vmatmul.mubr.bf16.gmra.mxu0 %v5681
      %v5720 = vpop.f32.mrf.mxu0
      %v5721 = vadd.f32 0.0, %v5720
      %v5722 = vpop.f32.mrf.mxu0
      %v5723 = vadd.f32 0.0, %v5722
      %v5724 = vpop.f32.mrf.mxu0
      %v5725 = vadd.f32 0.0, %v5724
      %v5726 = vpop.f32.mrf.mxu0
      %v5727 = vadd.f32 0.0, %v5726
      %5728 = vmatprep.mubr.bf16.mxu0 0
      %5729 = vmatmul.mubr.bf16.gmra.mxu0 %v5684
      %v5730 = vpop.f32.mrf.mxu0
      %v5731 = vadd.f32 0.0, %v5730
      %v5732 = vpop.f32.mrf.mxu0
      %v5733 = vadd.f32 0.0, %v5732
      %v5734 = vpop.f32.mrf.mxu0
      %v5735 = vadd.f32 0.0, %v5734
      %v5736 = vpop.f32.mrf.mxu0
      %v5737 = vadd.f32 0.0, %v5736
      %5738 = vdwg.mxu0
      %v5739 = vadd.f32 %v4947, %v5721
      %v5740 = vadd.f32 %v4949, %v5723
      %v5741 = vadd.f32 %v4951, %v5725
      %v5742 = vadd.f32 %v4953, %v5727
      %v5743 = vadd.f32 %v4957, %v5731
      %v5744 = vadd.f32 %v4959, %v5733
      %v5745 = vadd.f32 %v4961, %v5735
      %v5746 = vadd.f32 %v4963, %v5737
      %s5747 = scalar_lea.vmem %s9, 112
      %v5748 = vld [vmem:[%s5747] sm:$0xf]
      %v5749 = vld [vmem:[%s5747 + $0x4] sm:$0xf]
      %v5750 = vld [vmem:[%s5747 + $0x8] sm:$0xf]
      %v5751 = vld [vmem:[%s5747 + $0xc] sm:$0xf]
      %v5756 = vunpack.c.l.b16 %v5748
      %v5757 = vunpack.c.l.b16 %v5749
      %v5758 = vunpack.c.l.b16 %v5750
      %v5759 = vunpack.c.l.b16 %v5751
      %v5760 = vpack.c.b16 %v5757, %v5756
      %v5761 = vpack.c.b16 %v5759, %v5758
      %5762 = vrot.lane.b32.xlu0 %v5339, 112
      %v5763 = vpop.permute.xlu0 %5762
      %5764 = vrot.lane.b32.xlu0 %v5340, 112
      %v5765 = vpop.permute.xlu0 %5764
      %5766 = vrot.lane.b32.xlu0 %v5341, 112
      %v5767 = vpop.permute.xlu0 %5766
      %5768 = vrot.lane.b32.xlu0 %v5342, 112
      %v5769 = vpop.permute.xlu0 %5768
      %5770 = vrot.lane.b32.xlu0 %v5343, 112
      %v5771 = vpop.permute.xlu0 %5770
      %5772 = vrot.lane.b32.xlu0 %v5344, 112
      %v5773 = vpop.permute.xlu0 %5772
      %5774 = vrot.lane.b32.xlu0 %v5345, 112
      %v5775 = vpop.permute.xlu0 %5774
      %5776 = vrot.lane.b32.xlu0 %v5346, 112
      %v5777 = vpop.permute.xlu0 %5776
      %5778 = vrot.lane.b32.xlu0 %v5347, 112
      %v5779 = vpop.permute.xlu0 %5778
      %5780 = vrot.lane.b32.xlu0 %v5348, 112
      %v5781 = vpop.permute.xlu0 %5780
      %5782 = vrot.lane.b32.xlu0 %v5349, 112
      %v5783 = vpop.permute.xlu0 %5782
      %5784 = vrot.lane.b32.xlu0 %v5350, 112
      %v5785 = vpop.permute.xlu0 %5784
      %5786 = vrot.lane.b32.xlu0 %v5351, 112
      %v5787 = vpop.permute.xlu0 %5786
      %5788 = vrot.lane.b32.xlu0 %v5352, 112
      %v5789 = vpop.permute.xlu0 %5788
      %5790 = vrot.lane.b32.xlu0 %v5353, 112
      %v5791 = vpop.permute.xlu0 %5790
      %5792 = vrot.lane.b32.xlu0 %v5354, 112
      %v5793 = vpop.permute.xlu0 %5792
      %5794 = vrot.lane.b32.xlu0 %v5355, 112
      %v5795 = vpop.permute.xlu0 %5794
      %5796 = vrot.lane.b32.xlu0 %v5356, 112
      %v5797 = vpop.permute.xlu0 %5796
      %v5798 = vsel %vm1134, %v5763, %v5765
      %v5799 = vsel %vm1134, %v5765, %v5767
      %v5800 = vsel %vm1134, %v5769, %v5771
      %v5801 = vsel %vm1134, %v5771, %v5773
      %v5802 = vsel %vm1134, %v5775, %v5777
      %v5803 = vsel %vm1134, %v5777, %v5779
      %v5804 = vsel %vm1134, %v5781, %v5783
      %v5805 = vsel %vm1134, %v5783, %v5785
      %v5806 = vsel %vm1134, %v5787, %v5789
      %v5807 = vsel %vm1134, %v5789, %v5791
      %v5808 = vsel %vm1134, %v5793, %v5795
      %v5809 = vsel %vm1134, %v5795, %v5797
      %v5823 = vsel %vm4776, %v5760, 0
      %v5826 = vsel %vm4776, %v5761, 0
      %5828 = vmatprep.subr.bf16.mxu0 0
      %5829 = vmatpush1.bf16.msra.mxu0 0
      %5830 = vmatprep.subr.bf16.mxu0 0
      %5831 = vmatpush1.bf16.msra.mxu0 0
      %5832 = vmatprep.subr.bf16.mxu0 %v5809
      %5833 = vmatpush1.bf16.msra.mxu0 %v5808
      %5834 = vmatprep.subr.bf16.mxu0 %v5807
      %5835 = vmatpush1.bf16.msra.mxu0 %v5806
      %5836 = vmatprep.subr.bf16.mxu0 %v5805
      %5837 = vmatpush1.bf16.msra.mxu0 %v5804
      %5838 = vmatprep.subr.bf16.mxu0 %v5803
      %5839 = vmatpush1.bf16.msra.mxu0 %v5802
      %5840 = vmatprep.subr.bf16.mxu0 %v5801
      %5841 = vmatpush1.bf16.msra.mxu0 %v5800
      %5842 = vmatprep.subr.bf16.mxu0 %v5799
      %5843 = vmatpush1.bf16.msra.mxu0 %v5798
      %5844 = vmatprep.subr.bf16.mxu0 0
      %5845 = vmatpush2.bf16.msra.mxu0 0
      %5846 = vmatprep.subr.bf16.mxu0 0
      %5847 = vmatpush2.bf16.msra.mxu0 0
      %5848 = vmatprep.subr.bf16.mxu0 0
      %5849 = vmatpush2.bf16.msra.mxu0 0
      %5850 = vmatprep.subr.bf16.mxu0 0
      %5851 = vmatpush2.bf16.msra.mxu0 0
      %5852 = vmatprep.subr.bf16.mxu0 0
      %5853 = vmatpush2.bf16.msra.mxu0 0
      %5854 = vmatprep.subr.bf16.mxu0 0
      %5855 = vmatpush2.bf16.msra.mxu0 0
      %5856 = vmatprep.subr.bf16.mxu0 0
      %5857 = vmatpush2.bf16.msra.mxu0 0
      %5858 = vmatprep.subr.bf16.mxu0 0
      %5859 = vmatpush2.bf16.msra.mxu0 0
      %5860 = vmatprep.mubr.bf16.mxu0 0
      %5861 = vmatmul.mubr.bf16.gmra.mxu0 %v5823
      %v5862 = vpop.f32.mrf.mxu0
      %v5863 = vadd.f32 0.0, %v5862
      %v5864 = vpop.f32.mrf.mxu0
      %v5865 = vadd.f32 0.0, %v5864
      %v5866 = vpop.f32.mrf.mxu0
      %v5867 = vadd.f32 0.0, %v5866
      %v5868 = vpop.f32.mrf.mxu0
      %v5869 = vadd.f32 0.0, %v5868
      %5870 = vmatprep.mubr.bf16.mxu0 0
      %5871 = vmatmul.mubr.bf16.gmra.mxu0 %v5826
      %v5872 = vpop.f32.mrf.mxu0
      %v5873 = vadd.f32 0.0, %v5872
      %v5874 = vpop.f32.mrf.mxu0
      %v5875 = vadd.f32 0.0, %v5874
      %v5876 = vpop.f32.mrf.mxu0
      %v5877 = vadd.f32 0.0, %v5876
      %v5878 = vpop.f32.mrf.mxu0
      %v5879 = vadd.f32 0.0, %v5878
      %5880 = vdwg.mxu0
      %v5881 = vadd.f32 %v5222, %v5863
      %v5882 = vadd.f32 %v5224, %v5865
      %v5883 = vadd.f32 %v5226, %v5867
      %v5884 = vadd.f32 %v5228, %v5869
      %v5885 = vadd.f32 %v5232, %v5873
      %v5886 = vadd.f32 %v5234, %v5875
      %v5887 = vadd.f32 %v5236, %v5877
      %v5888 = vadd.f32 %v5238, %v5879
      %s5889 = scalar_lea.vmem %s9, 128
      %v5890 = vld [vmem:[%s5889] sm:$0xf]
      %v5891 = vld [vmem:[%s5889 + $0x4] sm:$0xf]
      %v5892 = vld [vmem:[%s5889 + $0x8] sm:$0xf]
      %v5893 = vld [vmem:[%s5889 + $0xc] sm:$0xf]
      %v5898 = vunpack.c.l.b16 %v5890
      %v5899 = vunpack.c.l.b16 %v5891
      %v5900 = vunpack.c.l.b16 %v5892
      %v5901 = vunpack.c.l.b16 %v5893
      %v5902 = vpack.c.b16 %v5899, %v5898
      %v5903 = vpack.c.b16 %v5901, %v5900
      %5904 = vrot.lane.b32.xlu0 %v5339, 111
      %v5905 = vpop.permute.xlu0 %5904
      %5906 = vrot.lane.b32.xlu0 %v5340, 111
      %v5907 = vpop.permute.xlu0 %5906
      %5908 = vrot.lane.b32.xlu0 %v5341, 111
      %v5909 = vpop.permute.xlu0 %5908
      %5910 = vrot.lane.b32.xlu0 %v5342, 111
      %v5911 = vpop.permute.xlu0 %5910
      %5912 = vrot.lane.b32.xlu0 %v5343, 111
      %v5913 = vpop.permute.xlu0 %5912
      %5914 = vrot.lane.b32.xlu0 %v5344, 111
      %v5915 = vpop.permute.xlu0 %5914
      %5916 = vrot.lane.b32.xlu0 %v5345, 111
      %v5917 = vpop.permute.xlu0 %5916
      %5918 = vrot.lane.b32.xlu0 %v5346, 111
      %v5919 = vpop.permute.xlu0 %5918
      %5920 = vrot.lane.b32.xlu0 %v5347, 111
      %v5921 = vpop.permute.xlu0 %5920
      %5922 = vrot.lane.b32.xlu0 %v5348, 111
      %v5923 = vpop.permute.xlu0 %5922
      %5924 = vrot.lane.b32.xlu0 %v5349, 111
      %v5925 = vpop.permute.xlu0 %5924
      %5926 = vrot.lane.b32.xlu0 %v5350, 111
      %v5927 = vpop.permute.xlu0 %5926
      %5928 = vrot.lane.b32.xlu0 %v5351, 111
      %v5929 = vpop.permute.xlu0 %5928
      %5930 = vrot.lane.b32.xlu0 %v5352, 111
      %v5931 = vpop.permute.xlu0 %5930
      %5932 = vrot.lane.b32.xlu0 %v5353, 111
      %v5933 = vpop.permute.xlu0 %5932
      %5934 = vrot.lane.b32.xlu0 %v5354, 111
      %v5935 = vpop.permute.xlu0 %5934
      %5936 = vrot.lane.b32.xlu0 %v5355, 111
      %v5937 = vpop.permute.xlu0 %5936
      %5938 = vrot.lane.b32.xlu0 %v5356, 111
      %v5939 = vpop.permute.xlu0 %5938
      %v5940 = vsel %vm1213, %v5905, %v5907
      %v5941 = vsel %vm1213, %v5907, %v5909
      %v5942 = vsel %vm1213, %v5911, %v5913
      %v5943 = vsel %vm1213, %v5913, %v5915
      %v5944 = vsel %vm1213, %v5917, %v5919
      %v5945 = vsel %vm1213, %v5919, %v5921
      %v5946 = vsel %vm1213, %v5923, %v5925
      %v5947 = vsel %vm1213, %v5925, %v5927
      %v5948 = vsel %vm1213, %v5929, %v5931
      %v5949 = vsel %vm1213, %v5931, %v5933
      %v5950 = vsel %vm1213, %v5935, %v5937
      %v5951 = vsel %vm1213, %v5937, %v5939
      %v5965 = vsel %vm4776, %v5902, 0
      %v5968 = vsel %vm4776, %v5903, 0
      %5970 = vmatprep.subr.bf16.mxu0 0
      %5971 = vmatpush1.bf16.msra.mxu0 0
      %5972 = vmatprep.subr.bf16.mxu0 0
      %5973 = vmatpush1.bf16.msra.mxu0 0
      %5974 = vmatprep.subr.bf16.mxu0 %v5951
      %5975 = vmatpush1.bf16.msra.mxu0 %v5950
      %5976 = vmatprep.subr.bf16.mxu0 %v5949
      %5977 = vmatpush1.bf16.msra.mxu0 %v5948
      %5978 = vmatprep.subr.bf16.mxu0 %v5947
      %5979 = vmatpush1.bf16.msra.mxu0 %v5946
      %5980 = vmatprep.subr.bf16.mxu0 %v5945
      %5981 = vmatpush1.bf16.msra.mxu0 %v5944
      %5982 = vmatprep.subr.bf16.mxu0 %v5943
      %5983 = vmatpush1.bf16.msra.mxu0 %v5942
      %5984 = vmatprep.subr.bf16.mxu0 %v5941
      %5985 = vmatpush1.bf16.msra.mxu0 %v5940
      %5986 = vmatprep.subr.bf16.mxu0 0
      %5987 = vmatpush2.bf16.msra.mxu0 0
      %5988 = vmatprep.subr.bf16.mxu0 0
      %5989 = vmatpush2.bf16.msra.mxu0 0
      %5990 = vmatprep.subr.bf16.mxu0 0
      %5991 = vmatpush2.bf16.msra.mxu0 0
      %5992 = vmatprep.subr.bf16.mxu0 0
      %5993 = vmatpush2.bf16.msra.mxu0 0
      %5994 = vmatprep.subr.bf16.mxu0 0
      %5995 = vmatpush2.bf16.msra.mxu0 0
      %5996 = vmatprep.subr.bf16.mxu0 0
      %5997 = vmatpush2.bf16.msra.mxu0 0
      %5998 = vmatprep.subr.bf16.mxu0 0
      %5999 = vmatpush2.bf16.msra.mxu0 0
      %6000 = vmatprep.subr.bf16.mxu0 0
      %6001 = vmatpush2.bf16.msra.mxu0 0
      %6002 = vmatprep.mubr.bf16.mxu0 0
      %6003 = vmatmul.mubr.bf16.gmra.mxu0 %v5965
      %v6004 = vpop.f32.mrf.mxu0
      %v6005 = vadd.f32 0.0, %v6004
      %v6006 = vpop.f32.mrf.mxu0
      %v6007 = vadd.f32 0.0, %v6006
      %v6008 = vpop.f32.mrf.mxu0
      %v6009 = vadd.f32 0.0, %v6008
      %v6010 = vpop.f32.mrf.mxu0
      %v6011 = vadd.f32 0.0, %v6010
      %6012 = vmatprep.mubr.bf16.mxu0 0
      %6013 = vmatmul.mubr.bf16.gmra.mxu0 %v5968
      %v6014 = vpop.f32.mrf.mxu0
      %v6015 = vadd.f32 0.0, %v6014
      %v6016 = vpop.f32.mrf.mxu0
      %v6017 = vadd.f32 0.0, %v6016
      %v6018 = vpop.f32.mrf.mxu0
      %v6019 = vadd.f32 0.0, %v6018
      %v6020 = vpop.f32.mrf.mxu0
      %v6021 = vadd.f32 0.0, %v6020
      %6022 = vdwg.mxu0
      %v6023 = vadd.f32 %v5587, %v6005
      %v6024 = vadd.f32 %v5589, %v6007
      %v6025 = vadd.f32 %v5591, %v6009
      %v6026 = vadd.f32 %v5593, %v6011
      %v6027 = vadd.f32 %v5597, %v6015
      %v6028 = vadd.f32 %v5599, %v6017
      %v6029 = vadd.f32 %v5601, %v6019
      %v6030 = vadd.f32 %v5603, %v6021
      %v6031 = vmul.f32 %v5739, %v446
      %v6032 = vmul.f32 %v5740, %v447
      %v6033 = vmul.f32 %v5741, %v446
      %v6034 = vmul.f32 %v5742, %v447
      %v6035 = vmul.f32 %v5743, %v446
      %v6036 = vmul.f32 %v5744, %v447
      %v6037 = vmul.f32 %v5745, %v446
      %v6038 = vmul.f32 %v5746, %v447
      %v6039 = vadd.f32 %v5881, %v6031
      %v6040 = vadd.f32 %v5882, %v6032
      %v6041 = vadd.f32 %v5883, %v6033
      %v6042 = vadd.f32 %v5884, %v6034
      %v6043 = vadd.f32 %v5885, %v6035
      %v6044 = vadd.f32 %v5886, %v6036
      %v6045 = vadd.f32 %v5887, %v6037
      %v6046 = vadd.f32 %v5888, %v6038
      %v6047 = vmul.f32 %v6023, %v452
      %v6048 = vmul.f32 %v6024, %v453
      %v6049 = vmul.f32 %v6025, %v452
      %v6050 = vmul.f32 %v6026, %v453
      %v6051 = vmul.f32 %v6027, %v452
      %v6052 = vmul.f32 %v6028, %v453
      %v6053 = vmul.f32 %v6029, %v452
      %v6054 = vmul.f32 %v6030, %v453
      %v6055 = vadd.f32 %v6039, %v6047
      %v6056 = vadd.f32 %v6040, %v6048
      %v6057 = vadd.f32 %v6041, %v6049
      %v6058 = vadd.f32 %v6042, %v6050
      %v6059 = vadd.f32 %v6043, %v6051
      %v6060 = vadd.f32 %v6044, %v6052
      %v6061 = vadd.f32 %v6045, %v6053
      %v6062 = vadd.f32 %v6046, %v6054
      %v6063 = vld [vmem:[%s10] sm:$0xff]
      %v6064 = vld [vmem:[%s10 + $0x8] sm:$0xff]
      %v6065 = vld [vmem:[%s10 + $0x10] sm:$0xff]
      %v6066 = vld [vmem:[%s10 + $0x18] sm:$0xff]
      %6068 = vset.pattern.permute.xlu0 0
      %6069 = vperm.xlu0 %6068, %v6063
      %v6070 = vpop.permute.xlu0 %6069
      %6073 = vset.pattern.permute.xlu0 0
      %6074 = vperm.xlu0 %6073, %v6064
      %v6075 = vpop.permute.xlu0 %6074
      %6078 = vset.pattern.permute.xlu0 0
      %6079 = vperm.xlu0 %6078, %v6065
      %v6080 = vpop.permute.xlu0 %6079
      %6083 = vset.pattern.permute.xlu0 0
      %6084 = vperm.xlu0 %6083, %v6066
      %v6085 = vpop.permute.xlu0 %6084
      %v6087 = vadd.f32 %v6055, %v6070
      %v6088 = vadd.f32 %v6056, %v6070
      %v6089 = vadd.f32 %v6057, %v6075
      %v6090 = vadd.f32 %v6058, %v6075
      %v6091 = vadd.f32 %v6059, %v6080
      %v6092 = vadd.f32 %v6060, %v6080
      %v6093 = vadd.f32 %v6061, %v6085
      %v6094 = vadd.f32 %v6062, %v6085
      %v6095 = vmul.f32 %v6087, 0.2
      %v6096 = vmul.f32 %v6088, 0.2
      %v6097 = vmul.f32 %v6089, 0.2
      %v6098 = vmul.f32 %v6090, 0.2
      %v6099 = vmul.f32 %v6091, 0.2
      %v6100 = vmul.f32 %v6092, 0.2
      %v6101 = vmul.f32 %v6093, 0.2
      %v6102 = vmul.f32 %v6094, 0.2
      %v6103 = vadd.f32 %v6095, %v478
      %v6104 = vadd.f32 %v6096, %v479
      %v6105 = vadd.f32 %v6097, %v480
      %v6106 = vadd.f32 %v6098, %v481
      %v6107 = vadd.f32 %v6099, %v482
      %v6108 = vadd.f32 %v6100, %v483
      %v6109 = vadd.f32 %v6101, %v484
      %v6110 = vadd.f32 %v6102, %v485
      %6111 = vst [vmem:[%s413] sm:$0xff] %v6103
      %6112 = vst [vmem:[%s413 + $0x8] sm:$0xff] %v6104
      %6113 = vst [vmem:[%s413 + $0x10] sm:$0xff] %v6105
      %6114 = vst [vmem:[%s413 + $0x18] sm:$0xff] %v6106
      %6115 = vst [vmem:[%s413 + $0x20] sm:$0xff] %v6107
      %6116 = vst [vmem:[%s413 + $0x28] sm:$0xff] %v6108
      %6117 = vst [vmem:[%s413 + $0x30] sm:$0xff] %v6109
      %6118 = vst [vmem:[%s413 + $0x38] sm:$0xff] %v6110
      %p6119 = scmp.lt.s32.totalorder %s23, 1
      %s6120 = scalar_select %p6119, %s23, 1
      %s6121 = smul.addr %s6120, 8
      %s6122 = smul.addr %s6121, 8
      %s6123 = scalar_lea.vmem %s12, %s6122
      // Predicated region
      $region69: #{residual_dense_block_5c.1} parent=67 // pred_check
        %p6124 = pneg %p298
      $region70: #{residual_dense_block_5c.1} parent=67 // pred_check_branch
        %6126 = sbr.rel (%p6124) target = $region72
      $region71: #{residual_dense_block_5c.1} parent=67 // pred_region
        _
      $region72: #{residual_dense_block_5c.1} parent=67 // pred_fallthru
        _
    $region68: #{residual_dense_block_5c.1} parent=5 // pred_fallthru
      _
    %p6127 = scmp.le.s32.totalorder 2, %s18
    // Predicated region
    $region73: #{residual_dense_block_5c.1} parent=5 // pred_check
      %p6128 = pneg %p6127
    $region74: #{residual_dense_block_5c.1} parent=5 // pred_check_branch
      %6130 = sbr.rel (%p6128) target = $region76
    $region75: #{residual_dense_block_5c.1} parent=5 // pred_region
      %s6131 = ssub.s32 %s18, 2
      // Predicated region
      $region77: #{residual_dense_block_5c.1} parent=75 // pred_check
        %p6132 = pneg %p304
      $region78: #{residual_dense_block_5c.1} parent=75 // pred_check_branch
        %6134 = sbr.rel (%p6132) target = $region80
      $region79: #{residual_dense_block_5c.1} parent=75 // pred_region
        %p6135 = scmp.lt.s32.totalorder %s24, 1
        %s6136 = scalar_select %p6135, %s24, 1
        %s6137 = smul.addr %s6136, 8
        %s6138 = smul.addr %s6137, 8
        %s6139 = scalar_lea.vmem %s12, %s6138
      $region80: #{residual_dense_block_5c.1} parent=75 // pred_fallthru
        _
    $region76: #{residual_dense_block_5c.1} parent=5 // pred_fallthru
      _
  $region6: #{residual_dense_block_5c.1} parent=0 // loop_footer
    %s22 = sadd.s32 1, %s18
  $region7: #{residual_dense_block_5c.1} parent=0 // loop_footer_branch
    %17 = sbr.rel target = $region3
  $region8: #{residual_dense_block_5c.1} parent=0 // loop_exit
    _

</llo_original>
